<compile_context>
chip_gen: v6e
topology: v6e:2x2x1
jax: 0.10.0
libtpu: 0.0.40
codegen_flags: <defaults>
</compile_context>

<pallas_src>
import functools

import jax
import jax.numpy as jnp
from jax import lax
from jax.experimental import pallas as pl
from jax.experimental.pallas import tpu as pltpu


def fused_attention_kernel(x_ref, wq_ref, wkv_ref, wproj_ref, b_ref, o_ref, kv_ref,
                           *, num_heads, scale, tq):
    """Fused MHSA for one (batch, query-tile) grid step.

    x_ref:     (1, N, C)  bf16  full sequence for this batch element
    wq_ref:    (C, C)     bf16  pre-transposed Q weight
    wkv_ref:   (C, 2C)    bf16  pre-transposed [K | V] weight
    wproj_ref: (C, C)     bf16  pre-transposed output-projection weight
    b_ref:     (1, C)     f32   output-projection bias
    o_ref:     (1, tq, C)       output query tile (lane-dense, heads already merged)
    kv_ref:    (N, 2C)    bf16  VMEM scratch: cached [K | V], persists across qi
    """
    qi = pl.program_id(1)
    _, N, C = x_ref.shape
    hd = C // num_heads

    # K|V projection once per batch element (query axis is sequential/"arbitrary").
    @pl.when(qi == 0)
    def _():
        kv = jnp.dot(x_ref[0], wkv_ref[...], preferred_element_type=jnp.float32)  # (N, 2C)
        kv_ref[...] = kv.astype(kv_ref.dtype)

    # Q projection for this query tile; scale applied to f32 activations, then bf16.
    row0 = pl.multiple_of(qi * tq, tq)
    x_q = x_ref[0, pl.ds(row0, tq), :]                                   # (tq, C) bf16
    q = jnp.dot(x_q, wq_ref[...], preferred_element_type=jnp.float32)    # (tq, C) f32
    q = (q * scale).astype(jnp.bfloat16)

    kv = kv_ref[...]                      # (N, 2C) bf16
    wproj = wproj_ref[...]                # (C, C)  bf16  (hoisted out of the head loop)

    acc = jnp.zeros((tq, C), jnp.float32)
    for h in range(num_heads):            # static Python loop (num_heads is static)
        lo = h * hd
        qh = q[:, lo:lo + hd]             # (tq, hd) bf16
        kh = kv[:, lo:lo + hd]            # (N, hd)  bf16
        vh = kv[:, C + lo:C + lo + hd]    # (N, hd)  bf16

        # NT matmul: contract last dims directly, no explicit k.T relayout.
        s = lax.dot_general(qh, kh, (((1,), (1,)), ((), ())),
                            preferred_element_type=jnp.float32)          # (tq, N) f32
        s = s - jnp.max(s, axis=-1, keepdims=True)
        p = jnp.exp(s)                                                   # f32 exp (EUP)
        denom = jnp.sum(p, axis=-1, keepdims=True)

        # Unnormalized PV matmul in bf16, f32 accumulation; normalize the small
        # (tq, hd) result instead of the (tq, N) score tile (deferred softmax div).
        ov = jnp.dot(p.astype(jnp.bfloat16), vh,
                     preferred_element_type=jnp.float32)                 # (tq, hd) f32
        ov = ov * pl.reciprocal(denom, approx=True)                      # EUP slot

        # Per-head fused output projection -> lane-dense (tq, C) accumulator.
        acc = acc + jnp.dot(ov.astype(jnp.bfloat16), wproj[lo:lo + hd, :],
                            preferred_element_type=jnp.float32)          # (tq, C) f32

    # attn_drop / proj_drop are identity (p = 0.0).
    o_ref[0] = (acc + b_ref[...]).astype(o_ref.dtype)


def _vmem_limit_bytes(N, C, tq, out_itemsize):
    """Per-step VMEM footprint estimate (with double-buffering + slack)."""
    bf16, f32 = 2, 4
    weights = (C * C + C * 2 * C + C * C) * bf16 + C * f32        # wq, wkv, wproj, bias
    x_blk = N * C * bf16
    out_blk = tq * C * out_itemsize
    kv_scratch = N * 2 * C * bf16
    interm = (N * 2 * C + 2 * tq * C + tq * N + 2 * tq * C) * f32  # kv f32, q, scores, acc
    est = 2 * (weights + x_blk + out_blk) + kv_scratch + interm
    est = int(est * 1.5)
    return max(min(est, 64 << 20), 16 << 20)   # stay within v7x physical 64 MiB


def attention_forward(x, w_qkv, w_proj, b_proj, num_heads, tq=None):
    """Equivalent of Attention.forward.  x: (B, N, C)."""
    B, N, C = x.shape
    assert C % num_heads == 0
    hd = C // num_heads
    scale = hd ** (-0.5)

    if tq is None:
        tq = min(N, 128)
    assert N % tq == 0, "sequence length must be a multiple of the query tile"
    nq = N // tq

    # PyTorch Linear weight is (out, in); kernels compute x @ W, so pre-transpose.
    # bf16 operands everywhere; f32 accumulation happens inside the kernel.
    w_qkv_t = w_qkv.T.astype(jnp.bfloat16)          # (C, 3C): [Q | K | V]
    w_q_t = w_qkv_t[:, :C]                          # (C, C)
    w_kv_t = w_qkv_t[:, C:]                         # (C, 2C)
    w_proj_t = w_proj.T.astype(jnp.bfloat16)        # (C, C)
    b2 = b_proj.reshape(1, C).astype(jnp.float32)
    x_bf = x.astype(jnp.bfloat16)

    kernel = functools.partial(fused_attention_kernel,
                               num_heads=num_heads, scale=scale, tq=tq)

    # TODO(synk): for very long sequences, flash-tile over KV blocks (online
    # softmax) — the bf16 KV scratch + x block are ~4*N*C bytes, so at C=1024
    # this kernel's footprint passes ~32 MiB around N~8k (half that budget on
    # v7x's 64 MiB VMEM); the (tq, N) f32 score tile adds 512*N bytes.
    # TODO(synk): on v7x, mark the grid-invariant weight specs
    # pipeline_mode=pl.Buffered(1) to avoid double-buffering constant blocks.
    vmem_limit = _vmem_limit_bytes(N, C, tq, jnp.dtype(x.dtype).itemsize)

    out = pl.pallas_call(
        kernel,
        out_shape=jax.ShapeDtypeStruct((B, N, C), x.dtype),
        grid=(B, nq),
        in_specs=[
            pl.BlockSpec((1, N, C), lambda b, qi: (b, 0, 0)),      # full seq, DMA'd once per b
            pl.BlockSpec((C, C), lambda b, qi: (0, 0)),
            pl.BlockSpec((C, 2 * C), lambda b, qi: (0, 0)),
            pl.BlockSpec((C, C), lambda b, qi: (0, 0)),
            pl.BlockSpec((1, C), lambda b, qi: (0, 0)),
        ],
        out_specs=pl.BlockSpec((1, tq, C), lambda b, qi: (b, qi, 0)),
        scratch_shapes=[pltpu.VMEM((N, 2 * C), jnp.bfloat16)],     # cached K|V per batch
        compiler_params=pltpu.CompilerParams(
            # query axis must be sequential ("arbitrary"): it reuses the K|V
            # scratch written at qi == 0; batch axis shards across TCs.
            dimension_semantics=("parallel", "arbitrary"),
            vmem_limit_bytes=vmem_limit),
    )(x_bf, w_q_t, w_kv_t, w_proj_t, b2)
    return out


def attention_reference(x, w_qkv, w_proj, b_proj, num_heads):
    """Pure-JAX f32 reference mirroring the PyTorch forward."""
    B, N, C = x.shape
    hd = C // num_heads
    scale = hd ** (-0.5)
    qkv = x @ w_qkv.T                                            # (B, N, 3C)
    qkv = qkv.reshape(B, N, 3, num_heads, hd).transpose(2, 0, 3, 1, 4)
    q, k, v = qkv[0], qkv[1], qkv[2]                             # (B, H, N, hd)
    attn = jnp.einsum("bhnd,bhmd->bhnm", q, k) * scale
    attn = jax.nn.softmax(attn, axis=-1)
    o = jnp.einsum("bhnm,bhmd->bhnd", attn, v)                   # (B, H, N, hd)
    o = o.transpose(0, 2, 1, 3).reshape(B, N, C)
    return o @ w_proj.T + b_proj


if __name__ == "__main__":
    B, N, C = 2, 256, 128
    num_heads = 8

    key = jax.random.PRNGKey(0)
    kx, kqkv, kp, kb = jax.random.split(key, 4)

    x = jax.random.normal(kx, (B, N, C), dtype=jnp.float32)
    w_qkv = jax.random.normal(kqkv, (3 * C, C), dtype=jnp.float32) * 0.05
    w_proj = jax.random.normal(kp, (C, C), dtype=jnp.float32) * 0.05
    b_proj = jax.random.normal(kb, (C,), dtype=jnp.float32) * 0.05

    out = attention_forward(x, w_qkv, w_proj, b_proj, num_heads)
    out = jax.block_until_ready(out)

    ref = attention_reference(x, w_qkv, w_proj, b_proj, num_heads)
    assert out.shape == (B, N, C)
    # Tolerance covers bf16 matmul operands (f32 accumulation) and the EUP
    # approximate reciprocal used for the deferred softmax normalization.
    assert jnp.allclose(out, ref, atol=2e-2, rtol=2e-2), float(jnp.max(jnp.abs(out - ref)))

    print("KERNEL_OK")
</pallas_src>

<mosaic_0001>
module attributes {stable_mosaic.version = 11 : i64} {
  func.func @fused_attention_kernel(%arg0: i32, %arg1: i32, %arg2: memref<1x256x128xbf16, #tpu.memory_space<vmem>>, %arg3: memref<128x128xbf16, #tpu.memory_space<vmem>>, %arg4: memref<128x256xbf16, #tpu.memory_space<vmem>>, %arg5: memref<128x128xbf16, #tpu.memory_space<vmem>>, %arg6: memref<1x128xf32, #tpu.memory_space<vmem>>, %arg7: memref<1x128x128xf32, #tpu.memory_space<vmem>>, %arg8: memref<256x256xbf16, #tpu.memory_space<vmem>>) attributes {dimension_semantics = [#tpu.dimension_semantics<parallel>, #tpu.dimension_semantics<arbitrary>], iteration_bounds = array<i64: 2, 2>, scalar_prefetch = 0 : i64, scratch_operands = 1 : i64, tpu.core_type = #tpu.core_type<tc>, window_params = [{transform_indices = @transform_0, window_bounds = array<i64: 1, 256, 128>}, {pipeline_mode = #tpu.pipeline_mode<synchronous>, transform_indices = @transform_1, window_bounds = array<i64: 128, 128>}, {pipeline_mode = #tpu.pipeline_mode<synchronous>, transform_indices = @transform_2, window_bounds = array<i64: 128, 256>}, {pipeline_mode = #tpu.pipeline_mode<synchronous>, transform_indices = @transform_3, window_bounds = array<i64: 128, 128>}, {pipeline_mode = #tpu.pipeline_mode<synchronous>, transform_indices = @transform_4, window_bounds = array<i64: 1, 128>}, {transform_indices = @transform_5, window_bounds = array<i64: 1, 128, 128>}]} {
    %c0_i32 = arith.constant 0 : i32
    %0 = arith.cmpi eq, %arg1, %c0_i32 : i32
    %1 = arith.extui %0 : i1 to i32
    %c0_i32_0 = arith.constant 0 : i32
    %2 = arith.cmpi ne, %1, %c0_i32_0 : i32
    scf.if %2 {
      %c0_55 = arith.constant 0 : index
      %c0_56 = arith.constant 0 : index
      %c0_57 = arith.constant 0 : index
      %182 = vector.load %arg2[%c0_55, %c0_56, %c0_57] : memref<1x256x128xbf16, #tpu.memory_space<vmem>>, vector<1x256x128xbf16>
      %183 = vector.shape_cast %182 : vector<1x256x128xbf16> to vector<256x128xbf16>
      %c0_58 = arith.constant 0 : index
      %c0_59 = arith.constant 0 : index
      %184 = vector.load %arg4[%c0_58, %c0_59] : memref<128x256xbf16, #tpu.memory_space<vmem>>, vector<128x256xbf16>
      %cst_60 = arith.constant dense<0.000000e+00> : vector<256x256xf32>
      %185 = tpu.matmul %183, %184, %cst_60 {dimension_numbers = #tpu.dot_dimension_numbers<[1], [0], [0], [1], [0, 0, 1, 1], [], []>} : vector<256x128xbf16>, vector<128x256xbf16>, vector<256x256xf32> -> vector<256x256xf32>
      %186 = arith.truncf %185 : vector<256x256xf32> to vector<256x256xbf16>
      %c0_61 = arith.constant 0 : index
      %c0_62 = arith.constant 0 : index
      %187 = vector.load %arg8[%c0_61, %c0_62] : memref<256x256xbf16, #tpu.memory_space<vmem>>, vector<256x256xbf16>
      tpu.vector_store %arg8[%c0_61, %c0_62], %186 {strides = array<i32>} : memref<256x256xbf16, #tpu.memory_space<vmem>>, vector<256x256xbf16>,
    } else {
    }
    %c128_i32 = arith.constant 128 : i32
    %3 = arith.muli %arg1, %c128_i32 : i32
    %4 = tpu.assume_multiple %3, 128 : i32
    %c0 = arith.constant 0 : index
    %5 = arith.index_cast %4 : i32 to index
    %c0_1 = arith.constant 0 : index
    %6 = vector.load %arg2[%c0, %5, %c0_1] : memref<1x256x128xbf16, #tpu.memory_space<vmem>>, vector<1x128x128xbf16>
    %7 = vector.shape_cast %6 : vector<1x128x128xbf16> to vector<128x128xbf16>
    %c0_2 = arith.constant 0 : index
    %c0_3 = arith.constant 0 : index
    %8 = vector.load %arg3[%c0_2, %c0_3] : memref<128x128xbf16, #tpu.memory_space<vmem>>, vector<128x128xbf16>
    %cst = arith.constant dense<0.000000e+00> : vector<128x128xf32>
    %9 = tpu.matmul %7, %8, %cst {dimension_numbers = #tpu.dot_dimension_numbers<[1], [0], [0], [1], [0, 0, 1, 1], [], []>} : vector<128x128xbf16>, vector<128x128xbf16>, vector<128x128xf32> -> vector<128x128xf32>
    %cst_4 = arith.constant 2.500000e-01 : f32
    %10 = vector.broadcast %cst_4 : f32 to vector<128x128xf32>
    %11 = arith.mulf %9, %10 : vector<128x128xf32>
    %12 = arith.truncf %11 : vector<128x128xf32> to vector<128x128xbf16>
    %c0_5 = arith.constant 0 : index
    %c0_6 = arith.constant 0 : index
    %13 = vector.load %arg8[%c0_5, %c0_6] : memref<256x256xbf16, #tpu.memory_space<vmem>>, vector<256x256xbf16>
    %c0_7 = arith.constant 0 : index
    %c0_8 = arith.constant 0 : index
    %14 = vector.load %arg5[%c0_7, %c0_8] : memref<128x128xbf16, #tpu.memory_space<vmem>>, vector<128x128xbf16>
    %cst_9 = arith.constant 0.000000e+00 : f32
    %15 = vector.broadcast %cst_9 : f32 to vector<128x128xf32>
    %16 = vector.extract_strided_slice %12 {offsets = [0, 0], sizes = [128, 16], strides = [1, 1]} : vector<128x128xbf16> to vector<128x16xbf16>
    %17 = vector.extract_strided_slice %13 {offsets = [0, 0], sizes = [256, 16], strides = [1, 1]} : vector<256x256xbf16> to vector<256x16xbf16>
    %18 = vector.extract_strided_slice %13 {offsets = [0, 128], sizes = [256, 16], strides = [1, 1]} : vector<256x256xbf16> to vector<256x16xbf16>
    %cst_10 = arith.constant dense<0.000000e+00> : vector<128x256xf32>
    %19 = tpu.matmul %16, %17, %cst_10 {dimension_numbers = #tpu.dot_dimension_numbers<[1], [1], [0], [0], [0, 0, 1, 0], [], []>} : vector<128x16xbf16>, vector<256x16xbf16>, vector<128x256xf32> -> vector<128x256xf32>
    %cst_11 = arith.constant dense<0xFF800000> : vector<128xf32>
    %20 = vector.multi_reduction <maximumf>, %19, %cst_11 [1] : vector<128x256xf32> to vector<128xf32>
    %21 = vector.shape_cast %20 : vector<128xf32> to vector<128x1xf32>
    %22 = vector.broadcast %21 : vector<128x1xf32> to vector<128x256xf32>
    %23 = arith.subf %19, %22 : vector<128x256xf32>
    %24 = math.exp %23 : vector<128x256xf32>
    %cst_12 = arith.constant dense<0.000000e+00> : vector<128xf32>
    %25 = vector.multi_reduction <add>, %24, %cst_12 [1] : vector<128x256xf32> to vector<128xf32>
    %26 = vector.shape_cast %25 : vector<128xf32> to vector<128x1xf32>
    %27 = arith.truncf %24 : vector<128x256xf32> to vector<128x256xbf16>
    %cst_13 = arith.constant dense<0.000000e+00> : vector<128x16xf32>
    %28 = tpu.matmul %27, %18, %cst_13 {dimension_numbers = #tpu.dot_dimension_numbers<[1], [0], [0], [1], [0, 0, 1, 1], [], []>} : vector<128x256xbf16>, vector<256x16xbf16>, vector<128x16xf32> -> vector<128x16xf32>
    %29 = tpu.reciprocal %26 {approx = true} : vector<128x1xf32> -> vector<128x1xf32>
    %30 = vector.broadcast %29 : vector<128x1xf32> to vector<128x16xf32>
    %31 = arith.mulf %28, %30 : vector<128x16xf32>
    %32 = arith.truncf %31 : vector<128x16xf32> to vector<128x16xbf16>
    %33 = vector.extract_strided_slice %14 {offsets = [0, 0], sizes = [16, 128], strides = [1, 1]} : vector<128x128xbf16> to vector<16x128xbf16>
    %cst_14 = arith.constant dense<0.000000e+00> : vector<128x128xf32>
    %34 = tpu.matmul %32, %33, %cst_14 {dimension_numbers = #tpu.dot_dimension_numbers<[1], [0], [0], [1], [0, 0, 1, 1], [], []>} : vector<128x16xbf16>, vector<16x128xbf16>, vector<128x128xf32> -> vector<128x128xf32>
    %35 = arith.addf %15, %34 : vector<128x128xf32>
    %36 = vector.extract_strided_slice %12 {offsets = [0, 16], sizes = [128, 16], strides = [1, 1]} : vector<128x128xbf16> to vector<128x16xbf16>
    %37 = vector.extract_strided_slice %13 {offsets = [0, 16], sizes = [256, 16], strides = [1, 1]} : vector<256x256xbf16> to vector<256x16xbf16>
    %38 = vector.extract_strided_slice %13 {offsets = [0, 144], sizes = [256, 16], strides = [1, 1]} : vector<256x256xbf16> to vector<256x16xbf16>
    %cst_15 = arith.constant dense<0.000000e+00> : vector<128x256xf32>
    %39 = tpu.matmul %36, %37, %cst_15 {dimension_numbers = #tpu.dot_dimension_numbers<[1], [1], [0], [0], [0, 0, 1, 0], [], []>} : vector<128x16xbf16>, vector<256x16xbf16>, vector<128x256xf32> -> vector<128x256xf32>
    %cst_16 = arith.constant dense<0xFF800000> : vector<128xf32>
    %40 = vector.multi_reduction <maximumf>, %39, %cst_16 [1] : vector<128x256xf32> to vector<128xf32>
    %41 = vector.shape_cast %40 : vector<128xf32> to vector<128x1xf32>
    %42 = vector.broadcast %41 : vector<128x1xf32> to vector<128x256xf32>
    %43 = arith.subf %39, %42 : vector<128x256xf32>
    %44 = math.exp %43 : vector<128x256xf32>
    %cst_17 = arith.constant dense<0.000000e+00> : vector<128xf32>
    %45 = vector.multi_reduction <add>, %44, %cst_17 [1] : vector<128x256xf32> to vector<128xf32>
    %46 = vector.shape_cast %45 : vector<128xf32> to vector<128x1xf32>
    %47 = arith.truncf %44 : vector<128x256xf32> to vector<128x256xbf16>
    %cst_18 = arith.constant dense<0.000000e+00> : vector<128x16xf32>
    %48 = tpu.matmul %47, %38, %cst_18 {dimension_numbers = #tpu.dot_dimension_numbers<[1], [0], [0], [1], [0, 0, 1, 1], [], []>} : vector<128x256xbf16>, vector<256x16xbf16>, vector<128x16xf32> -> vector<128x16xf32>
    %49 = tpu.reciprocal %46 {approx = true} : vector<128x1xf32> -> vector<128x1xf32>
    %50 = vector.broadcast %49 : vector<128x1xf32> to vector<128x16xf32>
    %51 = arith.mulf %48, %50 : vector<128x16xf32>
    %52 = arith.truncf %51 : vector<128x16xf32> to vector<128x16xbf16>
    %53 = vector.extract_strided_slice %14 {offsets = [16, 0], sizes = [16, 128], strides = [1, 1]} : vector<128x128xbf16> to vector<16x128xbf16>
    %cst_19 = arith.constant dense<0.000000e+00> : vector<128x128xf32>
    %54 = tpu.matmul %52, %53, %cst_19 {dimension_numbers = #tpu.dot_dimension_numbers<[1], [0], [0], [1], [0, 0, 1, 1], [], []>} : vector<128x16xbf16>, vector<16x128xbf16>, vector<128x128xf32> -> vector<128x128xf32>
    %55 = arith.addf %35, %54 : vector<128x128xf32>
    %56 = vector.extract_strided_slice %12 {offsets = [0, 32], sizes = [128, 16], strides = [1, 1]} : vector<128x128xbf16> to vector<128x16xbf16>
    %57 = vector.extract_strided_slice %13 {offsets = [0, 32], sizes = [256, 16], strides = [1, 1]} : vector<256x256xbf16> to vector<256x16xbf16>
    %58 = vector.extract_strided_slice %13 {offsets = [0, 160], sizes = [256, 16], strides = [1, 1]} : vector<256x256xbf16> to vector<256x16xbf16>
    %cst_20 = arith.constant dense<0.000000e+00> : vector<128x256xf32>
    %59 = tpu.matmul %56, %57, %cst_20 {dimension_numbers = #tpu.dot_dimension_numbers<[1], [1], [0], [0], [0, 0, 1, 0], [], []>} : vector<128x16xbf16>, vector<256x16xbf16>, vector<128x256xf32> -> vector<128x256xf32>
    %cst_21 = arith.constant dense<0xFF800000> : vector<128xf32>
    %60 = vector.multi_reduction <maximumf>, %59, %cst_21 [1] : vector<128x256xf32> to vector<128xf32>
    %61 = vector.shape_cast %60 : vector<128xf32> to vector<128x1xf32>
    %62 = vector.broadcast %61 : vector<128x1xf32> to vector<128x256xf32>
    %63 = arith.subf %59, %62 : vector<128x256xf32>
    %64 = math.exp %63 : vector<128x256xf32>
    %cst_22 = arith.constant dense<0.000000e+00> : vector<128xf32>
    %65 = vector.multi_reduction <add>, %64, %cst_22 [1] : vector<128x256xf32> to vector<128xf32>
    %66 = vector.shape_cast %65 : vector<128xf32> to vector<128x1xf32>
    %67 = arith.truncf %64 : vector<128x256xf32> to vector<128x256xbf16>
    %cst_23 = arith.constant dense<0.000000e+00> : vector<128x16xf32>
    %68 = tpu.matmul %67, %58, %cst_23 {dimension_numbers = #tpu.dot_dimension_numbers<[1], [0], [0], [1], [0, 0, 1, 1], [], []>} : vector<128x256xbf16>, vector<256x16xbf16>, vector<128x16xf32> -> vector<128x16xf32>
    %69 = tpu.reciprocal %66 {approx = true} : vector<128x1xf32> -> vector<128x1xf32>
    %70 = vector.broadcast %69 : vector<128x1xf32> to vector<128x16xf32>
    %71 = arith.mulf %68, %70 : vector<128x16xf32>
    %72 = arith.truncf %71 : vector<128x16xf32> to vector<128x16xbf16>
    %73 = vector.extract_strided_slice %14 {offsets = [32, 0], sizes = [16, 128], strides = [1, 1]} : vector<128x128xbf16> to vector<16x128xbf16>
    %cst_24 = arith.constant dense<0.000000e+00> : vector<128x128xf32>
    %74 = tpu.matmul %72, %73, %cst_24 {dimension_numbers = #tpu.dot_dimension_numbers<[1], [0], [0], [1], [0, 0, 1, 1], [], []>} : vector<128x16xbf16>, vector<16x128xbf16>, vector<128x128xf32> -> vector<128x128xf32>
    %75 = arith.addf %55, %74 : vector<128x128xf32>
    %76 = vector.extract_strided_slice %12 {offsets = [0, 48], sizes = [128, 16], strides = [1, 1]} : vector<128x128xbf16> to vector<128x16xbf16>
    %77 = vector.extract_strided_slice %13 {offsets = [0, 48], sizes = [256, 16], strides = [1, 1]} : vector<256x256xbf16> to vector<256x16xbf16>
    %78 = vector.extract_strided_slice %13 {offsets = [0, 176], sizes = [256, 16], strides = [1, 1]} : vector<256x256xbf16> to vector<256x16xbf16>
    %cst_25 = arith.constant dense<0.000000e+00> : vector<128x256xf32>
    %79 = tpu.matmul %76, %77, %cst_25 {dimension_numbers = #tpu.dot_dimension_numbers<[1], [1], [0], [0], [0, 0, 1, 0], [], []>} : vector<128x16xbf16>, vector<256x16xbf16>, vector<128x256xf32> -> vector<128x256xf32>
    %cst_26 = arith.constant dense<0xFF800000> : vector<128xf32>
    %80 = vector.multi_reduction <maximumf>, %79, %cst_26 [1] : vector<128x256xf32> to vector<128xf32>
    %81 = vector.shape_cast %80 : vector<128xf32> to vector<128x1xf32>
    %82 = vector.broadcast %81 : vector<128x1xf32> to vector<128x256xf32>
    %83 = arith.subf %79, %82 : vector<128x256xf32>
    %84 = math.exp %83 : vector<128x256xf32>
    %cst_27 = arith.constant dense<0.000000e+00> : vector<128xf32>
    %85 = vector.multi_reduction <add>, %84, %cst_27 [1] : vector<128x256xf32> to vector<128xf32>
    %86 = vector.shape_cast %85 : vector<128xf32> to vector<128x1xf32>
    %87 = arith.truncf %84 : vector<128x256xf32> to vector<128x256xbf16>
    %cst_28 = arith.constant dense<0.000000e+00> : vector<128x16xf32>
    %88 = tpu.matmul %87, %78, %cst_28 {dimension_numbers = #tpu.dot_dimension_numbers<[1], [0], [0], [1], [0, 0, 1, 1], [], []>} : vector<128x256xbf16>, vector<256x16xbf16>, vector<128x16xf32> -> vector<128x16xf32>
    %89 = tpu.reciprocal %86 {approx = true} : vector<128x1xf32> -> vector<128x1xf32>
    %90 = vector.broadcast %89 : vector<128x1xf32> to vector<128x16xf32>
    %91 = arith.mulf %88, %90 : vector<128x16xf32>
    %92 = arith.truncf %91 : vector<128x16xf32> to vector<128x16xbf16>
    %93 = vector.extract_strided_slice %14 {offsets = [48, 0], sizes = [16, 128], strides = [1, 1]} : vector<128x128xbf16> to vector<16x128xbf16>
    %cst_29 = arith.constant dense<0.000000e+00> : vector<128x128xf32>
    %94 = tpu.matmul %92, %93, %cst_29 {dimension_numbers = #tpu.dot_dimension_numbers<[1], [0], [0], [1], [0, 0, 1, 1], [], []>} : vector<128x16xbf16>, vector<16x128xbf16>, vector<128x128xf32> -> vector<128x128xf32>
    %95 = arith.addf %75, %94 : vector<128x128xf32>
    %96 = vector.extract_strided_slice %12 {offsets = [0, 64], sizes = [128, 16], strides = [1, 1]} : vector<128x128xbf16> to vector<128x16xbf16>
    %97 = vector.extract_strided_slice %13 {offsets = [0, 64], sizes = [256, 16], strides = [1, 1]} : vector<256x256xbf16> to vector<256x16xbf16>
    %98 = vector.extract_strided_slice %13 {offsets = [0, 192], sizes = [256, 16], strides = [1, 1]} : vector<256x256xbf16> to vector<256x16xbf16>
    %cst_30 = arith.constant dense<0.000000e+00> : vector<128x256xf32>
    %99 = tpu.matmul %96, %97, %cst_30 {dimension_numbers = #tpu.dot_dimension_numbers<[1], [1], [0], [0], [0, 0, 1, 0], [], []>} : vector<128x16xbf16>, vector<256x16xbf16>, vector<128x256xf32> -> vector<128x256xf32>
    %cst_31 = arith.constant dense<0xFF800000> : vector<128xf32>
    %100 = vector.multi_reduction <maximumf>, %99, %cst_31 [1] : vector<128x256xf32> to vector<128xf32>
    %101 = vector.shape_cast %100 : vector<128xf32> to vector<128x1xf32>
    %102 = vector.broadcast %101 : vector<128x1xf32> to vector<128x256xf32>
    %103 = arith.subf %99, %102 : vector<128x256xf32>
    %104 = math.exp %103 : vector<128x256xf32>
    %cst_32 = arith.constant dense<0.000000e+00> : vector<128xf32>
    %105 = vector.multi_reduction <add>, %104, %cst_32 [1] : vector<128x256xf32> to vector<128xf32>
    %106 = vector.shape_cast %105 : vector<128xf32> to vector<128x1xf32>
    %107 = arith.truncf %104 : vector<128x256xf32> to vector<128x256xbf16>
    %cst_33 = arith.constant dense<0.000000e+00> : vector<128x16xf32>
    %108 = tpu.matmul %107, %98, %cst_33 {dimension_numbers = #tpu.dot_dimension_numbers<[1], [0], [0], [1], [0, 0, 1, 1], [], []>} : vector<128x256xbf16>, vector<256x16xbf16>, vector<128x16xf32> -> vector<128x16xf32>
    %109 = tpu.reciprocal %106 {approx = true} : vector<128x1xf32> -> vector<128x1xf32>
    %110 = vector.broadcast %109 : vector<128x1xf32> to vector<128x16xf32>
    %111 = arith.mulf %108, %110 : vector<128x16xf32>
    %112 = arith.truncf %111 : vector<128x16xf32> to vector<128x16xbf16>
    %113 = vector.extract_strided_slice %14 {offsets = [64, 0], sizes = [16, 128], strides = [1, 1]} : vector<128x128xbf16> to vector<16x128xbf16>
    %cst_34 = arith.constant dense<0.000000e+00> : vector<128x128xf32>
    %114 = tpu.matmul %112, %113, %cst_34 {dimension_numbers = #tpu.dot_dimension_numbers<[1], [0], [0], [1], [0, 0, 1, 1], [], []>} : vector<128x16xbf16>, vector<16x128xbf16>, vector<128x128xf32> -> vector<128x128xf32>
    %115 = arith.addf %95, %114 : vector<128x128xf32>
    %116 = vector.extract_strided_slice %12 {offsets = [0, 80], sizes = [128, 16], strides = [1, 1]} : vector<128x128xbf16> to vector<128x16xbf16>
    %117 = vector.extract_strided_slice %13 {offsets = [0, 80], sizes = [256, 16], strides = [1, 1]} : vector<256x256xbf16> to vector<256x16xbf16>
    %118 = vector.extract_strided_slice %13 {offsets = [0, 208], sizes = [256, 16], strides = [1, 1]} : vector<256x256xbf16> to vector<256x16xbf16>
    %cst_35 = arith.constant dense<0.000000e+00> : vector<128x256xf32>
    %119 = tpu.matmul %116, %117, %cst_35 {dimension_numbers = #tpu.dot_dimension_numbers<[1], [1], [0], [0], [0, 0, 1, 0], [], []>} : vector<128x16xbf16>, vector<256x16xbf16>, vector<128x256xf32> -> vector<128x256xf32>
    %cst_36 = arith.constant dense<0xFF800000> : vector<128xf32>
    %120 = vector.multi_reduction <maximumf>, %119, %cst_36 [1] : vector<128x256xf32> to vector<128xf32>
    %121 = vector.shape_cast %120 : vector<128xf32> to vector<128x1xf32>
    %122 = vector.broadcast %121 : vector<128x1xf32> to vector<128x256xf32>
    %123 = arith.subf %119, %122 : vector<128x256xf32>
    %124 = math.exp %123 : vector<128x256xf32>
    %cst_37 = arith.constant dense<0.000000e+00> : vector<128xf32>
    %125 = vector.multi_reduction <add>, %124, %cst_37 [1] : vector<128x256xf32> to vector<128xf32>
    %126 = vector.shape_cast %125 : vector<128xf32> to vector<128x1xf32>
    %127 = arith.truncf %124 : vector<128x256xf32> to vector<128x256xbf16>
    %cst_38 = arith.constant dense<0.000000e+00> : vector<128x16xf32>
    %128 = tpu.matmul %127, %118, %cst_38 {dimension_numbers = #tpu.dot_dimension_numbers<[1], [0], [0], [1], [0, 0, 1, 1], [], []>} : vector<128x256xbf16>, vector<256x16xbf16>, vector<128x16xf32> -> vector<128x16xf32>
    %129 = tpu.reciprocal %126 {approx = true} : vector<128x1xf32> -> vector<128x1xf32>
    %130 = vector.broadcast %129 : vector<128x1xf32> to vector<128x16xf32>
    %131 = arith.mulf %128, %130 : vector<128x16xf32>
    %132 = arith.truncf %131 : vector<128x16xf32> to vector<128x16xbf16>
    %133 = vector.extract_strided_slice %14 {offsets = [80, 0], sizes = [16, 128], strides = [1, 1]} : vector<128x128xbf16> to vector<16x128xbf16>
    %cst_39 = arith.constant dense<0.000000e+00> : vector<128x128xf32>
    %134 = tpu.matmul %132, %133, %cst_39 {dimension_numbers = #tpu.dot_dimension_numbers<[1], [0], [0], [1], [0, 0, 1, 1], [], []>} : vector<128x16xbf16>, vector<16x128xbf16>, vector<128x128xf32> -> vector<128x128xf32>
    %135 = arith.addf %115, %134 : vector<128x128xf32>
    %136 = vector.extract_strided_slice %12 {offsets = [0, 96], sizes = [128, 16], strides = [1, 1]} : vector<128x128xbf16> to vector<128x16xbf16>
    %137 = vector.extract_strided_slice %13 {offsets = [0, 96], sizes = [256, 16], strides = [1, 1]} : vector<256x256xbf16> to vector<256x16xbf16>
    %138 = vector.extract_strided_slice %13 {offsets = [0, 224], sizes = [256, 16], strides = [1, 1]} : vector<256x256xbf16> to vector<256x16xbf16>
    %cst_40 = arith.constant dense<0.000000e+00> : vector<128x256xf32>
    %139 = tpu.matmul %136, %137, %cst_40 {dimension_numbers = #tpu.dot_dimension_numbers<[1], [1], [0], [0], [0, 0, 1, 0], [], []>} : vector<128x16xbf16>, vector<256x16xbf16>, vector<128x256xf32> -> vector<128x256xf32>
    %cst_41 = arith.constant dense<0xFF800000> : vector<128xf32>
    %140 = vector.multi_reduction <maximumf>, %139, %cst_41 [1] : vector<128x256xf32> to vector<128xf32>
    %141 = vector.shape_cast %140 : vector<128xf32> to vector<128x1xf32>
    %142 = vector.broadcast %141 : vector<128x1xf32> to vector<128x256xf32>
    %143 = arith.subf %139, %142 : vector<128x256xf32>
    %144 = math.exp %143 : vector<128x256xf32>
    %cst_42 = arith.constant dense<0.000000e+00> : vector<128xf32>
    %145 = vector.multi_reduction <add>, %144, %cst_42 [1] : vector<128x256xf32> to vector<128xf32>
    %146 = vector.shape_cast %145 : vector<128xf32> to vector<128x1xf32>
    %147 = arith.truncf %144 : vector<128x256xf32> to vector<128x256xbf16>
    %cst_43 = arith.constant dense<0.000000e+00> : vector<128x16xf32>
    %148 = tpu.matmul %147, %138, %cst_43 {dimension_numbers = #tpu.dot_dimension_numbers<[1], [0], [0], [1], [0, 0, 1, 1], [], []>} : vector<128x256xbf16>, vector<256x16xbf16>, vector<128x16xf32> -> vector<128x16xf32>
    %149 = tpu.reciprocal %146 {approx = true} : vector<128x1xf32> -> vector<128x1xf32>
    %150 = vector.broadcast %149 : vector<128x1xf32> to vector<128x16xf32>
    %151 = arith.mulf %148, %150 : vector<128x16xf32>
    %152 = arith.truncf %151 : vector<128x16xf32> to vector<128x16xbf16>
    %153 = vector.extract_strided_slice %14 {offsets = [96, 0], sizes = [16, 128], strides = [1, 1]} : vector<128x128xbf16> to vector<16x128xbf16>
    %cst_44 = arith.constant dense<0.000000e+00> : vector<128x128xf32>
    %154 = tpu.matmul %152, %153, %cst_44 {dimension_numbers = #tpu.dot_dimension_numbers<[1], [0], [0], [1], [0, 0, 1, 1], [], []>} : vector<128x16xbf16>, vector<16x128xbf16>, vector<128x128xf32> -> vector<128x128xf32>
    %155 = arith.addf %135, %154 : vector<128x128xf32>
    %156 = vector.extract_strided_slice %12 {offsets = [0, 112], sizes = [128, 16], strides = [1, 1]} : vector<128x128xbf16> to vector<128x16xbf16>
    %157 = vector.extract_strided_slice %13 {offsets = [0, 112], sizes = [256, 16], strides = [1, 1]} : vector<256x256xbf16> to vector<256x16xbf16>
    %158 = vector.extract_strided_slice %13 {offsets = [0, 240], sizes = [256, 16], strides = [1, 1]} : vector<256x256xbf16> to vector<256x16xbf16>
    %cst_45 = arith.constant dense<0.000000e+00> : vector<128x256xf32>
    %159 = tpu.matmul %156, %157, %cst_45 {dimension_numbers = #tpu.dot_dimension_numbers<[1], [1], [0], [0], [0, 0, 1, 0], [], []>} : vector<128x16xbf16>, vector<256x16xbf16>, vector<128x256xf32> -> vector<128x256xf32>
    %cst_46 = arith.constant dense<0xFF800000> : vector<128xf32>
    %160 = vector.multi_reduction <maximumf>, %159, %cst_46 [1] : vector<128x256xf32> to vector<128xf32>
    %161 = vector.shape_cast %160 : vector<128xf32> to vector<128x1xf32>
    %162 = vector.broadcast %161 : vector<128x1xf32> to vector<128x256xf32>
    %163 = arith.subf %159, %162 : vector<128x256xf32>
    %164 = math.exp %163 : vector<128x256xf32>
    %cst_47 = arith.constant dense<0.000000e+00> : vector<128xf32>
    %165 = vector.multi_reduction <add>, %164, %cst_47 [1] : vector<128x256xf32> to vector<128xf32>
    %166 = vector.shape_cast %165 : vector<128xf32> to vector<128x1xf32>
    %167 = arith.truncf %164 : vector<128x256xf32> to vector<128x256xbf16>
    %cst_48 = arith.constant dense<0.000000e+00> : vector<128x16xf32>
    %168 = tpu.matmul %167, %158, %cst_48 {dimension_numbers = #tpu.dot_dimension_numbers<[1], [0], [0], [1], [0, 0, 1, 1], [], []>} : vector<128x256xbf16>, vector<256x16xbf16>, vector<128x16xf32> -> vector<128x16xf32>
    %169 = tpu.reciprocal %166 {approx = true} : vector<128x1xf32> -> vector<128x1xf32>
    %170 = vector.broadcast %169 : vector<128x1xf32> to vector<128x16xf32>
    %171 = arith.mulf %168, %170 : vector<128x16xf32>
    %172 = arith.truncf %171 : vector<128x16xf32> to vector<128x16xbf16>
    %173 = vector.extract_strided_slice %14 {offsets = [112, 0], sizes = [16, 128], strides = [1, 1]} : vector<128x128xbf16> to vector<16x128xbf16>
    %cst_49 = arith.constant dense<0.000000e+00> : vector<128x128xf32>
    %174 = tpu.matmul %172, %173, %cst_49 {dimension_numbers = #tpu.dot_dimension_numbers<[1], [0], [0], [1], [0, 0, 1, 1], [], []>} : vector<128x16xbf16>, vector<16x128xbf16>, vector<128x128xf32> -> vector<128x128xf32>
    %175 = arith.addf %155, %174 : vector<128x128xf32>
    %c0_50 = arith.constant 0 : index
    %c0_51 = arith.constant 0 : index
    %176 = vector.load %arg6[%c0_50, %c0_51] : memref<1x128xf32, #tpu.memory_space<vmem>>, vector<1x128xf32>
    %177 = vector.broadcast %176 : vector<1x128xf32> to vector<128x128xf32>
    %178 = arith.addf %175, %177 : vector<128x128xf32>
    %c0_52 = arith.constant 0 : index
    %c0_53 = arith.constant 0 : index
    %c0_54 = arith.constant 0 : index
    %179 = vector.load %arg7[%c0_52, %c0_53, %c0_54] : memref<1x128x128xf32, #tpu.memory_space<vmem>>, vector<1x128x128xf32>
    %180 = vector.shape_cast %179 : vector<1x128x128xf32> to vector<128x128xf32>
    %181 = vector.shape_cast %178 : vector<128x128xf32> to vector<1x128x128xf32>
    tpu.vector_store %arg7[%c0_52, %c0_53, %c0_54], %181 {strides = array<i32>} : memref<1x128x128xf32, #tpu.memory_space<vmem>>, vector<1x128x128xf32>,
    return
  }
  func.func @transform_0(%arg0: i32, %arg1: i32) -> (i32, i32, i32) {
    %c0_i32 = arith.constant 0 : i32
    %c0_i32_0 = arith.constant 0 : i32
    %c0_i32_1 = arith.constant 0 : i32
    return %arg0, %c0_i32, %c0_i32_0 : i32, i32, i32
  }
  func.func @transform_1(%arg0: i32, %arg1: i32) -> (i32, i32) {
    %c0_i32 = arith.constant 0 : i32
    %c0_i32_0 = arith.constant 0 : i32
    %c0_i32_1 = arith.constant 0 : i32
    return %c0_i32, %c0_i32_0 : i32, i32
  }
  func.func @transform_2(%arg0: i32, %arg1: i32) -> (i32, i32) {
    %c0_i32 = arith.constant 0 : i32
    %c0_i32_0 = arith.constant 0 : i32
    %c0_i32_1 = arith.constant 0 : i32
    return %c0_i32, %c0_i32_0 : i32, i32
  }
  func.func @transform_3(%arg0: i32, %arg1: i32) -> (i32, i32) {
    %c0_i32 = arith.constant 0 : i32
    %c0_i32_0 = arith.constant 0 : i32
    %c0_i32_1 = arith.constant 0 : i32
    return %c0_i32, %c0_i32_0 : i32, i32
  }
  func.func @transform_4(%arg0: i32, %arg1: i32) -> (i32, i32) {
    %c0_i32 = arith.constant 0 : i32
    %c0_i32_0 = arith.constant 0 : i32
    %c0_i32_1 = arith.constant 0 : i32
    return %c0_i32, %c0_i32_0 : i32, i32
  }
  func.func @transform_5(%arg0: i32, %arg1: i32) -> (i32, i32, i32) {
    %c0_i32 = arith.constant 0 : i32
    %c0_i32_0 = arith.constant 0 : i32
    return %arg0, %arg1, %c0_i32 : i32, i32, i32
  }
}

</mosaic_0001>

<llo_original>
// kernel: tpu_custom_call.1
$region0: #{tpu_custom_call.1}
  #allocation0 [shape = 'u32[]', space=smem, size = 0x4, offset = 0x4, fixed_abs, tag = 'smem constant byte address 0x4 - core index']
  #allocation1 [shape = 'u32[144,128]{1,0:T(1,128)}', space=vmem, size = 0x12000, scoped, tag = 'internal scratch']
  #allocation2 [shape = 'bf16[256,256]{1,0:T(8,128)(2,1)}', space=vmem, size = 0x20000, scoped, tag = 'scratch operand']
  %s0 = inlined_call_operand.hbm [shape: bf16[2,256,128], index: 0, kind: input, shape index: {}]
  %s1 = inlined_call_operand.hbm [shape: bf16[128,128], index: 1, kind: input, shape index: {}]
  %s2 = inlined_call_operand.hbm [shape: bf16[128,256], index: 2, kind: input, shape index: {}]
  %s3 = inlined_call_operand.hbm [shape: bf16[128,128], index: 3, kind: input, shape index: {}]
  %s4 = inlined_call_operand.vmem [shape: f32[1,128], index: 4, kind: input, shape index: {}]
  %s5 = inlined_call_operand.hbm [shape: f32[2,256,128], index: 5, kind: output, shape index: {}]
  %s6 = sld [smem:[#allocation0]]
  $region73: #{tpu_custom_call.1} parent=0
    _
  %s8 = ssub.s32 1, %s6
  %s9 = scalar_select 0, %s8, %s6
  $region1: #{tpu_custom_call.1} parent=0
    #allocation3 [shape = 'u8[131072]{0}', space=vmem, size = 0x20000, scoped, tag = 'input window, operand 0']
    #allocation4 [shape = 's32[2]{0}', space=sflag, size = 0x8, scoped, tag = 'scoped memory for tpu_custom_call.1']
    #allocation5 [shape = 's32[2]{0}', space=sflag, size = 0x8, scoped, tag = 'scoped memory for tpu_custom_call.1']
    #allocation6 [shape = 'u8[32768]{0}', space=vmem, size = 0x8000, scoped, tag = 'input window, operand 1, single buffered']
    #allocation7 [shape = 's32[1]{0}', space=sflag, size = 0x4, scoped, tag = 'scoped memory for tpu_custom_call.1']
    #allocation8 [shape = 'u8[65536]{0}', space=vmem, size = 0x10000, scoped, tag = 'input window, operand 2, single buffered']
    #allocation9 [shape = 'u8[32768]{0}', space=vmem, size = 0x8000, scoped, tag = 'input window, operand 3, single buffered']
    #allocation10 [shape = 's32[1]{0}', space=sflag, size = 0x4, scoped, tag = 'scoped memory for tpu_custom_call.1']
    #allocation11 [shape = 'u8[131072]{0}', space=vmem, size = 0x20000, scoped, tag = 'output window, operand 0']
    %10 = vsyncpa [#allocation4], 0
    %s11 = scalar_lea.sflag [#allocation4], 1
    %12 = vsyncpa %s11, 0
    %13 = vsyncpa [#allocation7], 0
    %14 = vsyncpa [#allocation10], 0
    %15 = vsyncpa [#allocation5], 0
    %s16 = scalar_lea.sflag [#allocation5], 1
    %17 = vsyncpa %s16, 0
    loop: start=0, step=1, limit=6
    $region2: #{tpu_custom_call.1} parent=1 // loop_pre_header
      _
    $region3: #{tpu_custom_call.1} parent=1 // loop_header
      %s19 = sphi 0, %s23
      %p20 = scmp.ge.s32.totalorder %s19, 6
      %s26 = sphi 0, %s38
      %s27 = sphi 0, %s34
      %s28 = sphi 0, %s26
      %s29 = sphi 0, %s27
      %s30 = sphi 0, %s28
      %s31 = sphi 0, %s29
      %s41 = sphi 0, %s43
      %s44 = sphi 0, %s41
      %s45 = sphi 0, %s44
      %s61 = sphi 0, %s45
      %s65 = sphi 0, %s65
      %s67 = sphi 0, %s65
      %s68 = sphi 0, %s67
      %s82 = sphi 0, %s68
      %s86 = sphi 0, %s86
      %s88 = sphi 0, %s86
      %s89 = sphi 0, %s88
      %s103 = sphi 0, %s89
      %s107 = sphi 0, %s107
      %s109 = sphi 0, %s107
      %s110 = sphi 0, %s109
      %s124 = sphi 0, %s110
      %s128 = sphi 0, %s128
      %s130 = sphi 0, %s128
      %s131 = sphi 0, %s130
      %s145 = sphi 0, %s131
      %s153 = sphi 0, %s155
      %s156 = sphi 0, %s153
      %s157 = sphi 0, %s156
      %s173 = sphi 0, %s157
    $region4: #{tpu_custom_call.1} parent=1 // loop_header_branch
      %22 = sbr.rel (%p20) target = $region8
    $region5: #{tpu_custom_call.1} parent=1 // loop_body
      %s24 = ssub.s32 %s19, 1
      %s25 = ssub.s32 %s19, 2
      %s32 = sadd.s32 1, %s27
      %p33 = scmp.ge.s32.totalorder %s32, 2
      %s34 = scalar_select %p33, 0, %s32
      %s35 = sadd.s32 1, %s26
      %s36 = scalar_select %p33, %s35, %s26
      %p37 = scmp.ge.s32.totalorder %s36, 2
      %s38 = scalar_select %p37, 0, %s36
      %s39 = ssub.s32 %s26, %s38
      %p40 = scmp.eq.s32.totalorder %s39, 0
      %s42 = sadd.s32 %s41, 1
      %s43 = scalar_select %p40, %s41, %s42
      %p46 = pneg %p40
      %p47 = scmp.eq.s32.totalorder %s19, 3
      %p48 = por %p46, %p47
      %p49 = scmp.ne.s32.totalorder %s41, %s44
      %p50 = scmp.eq.s32.totalorder %s19, 0
      %p51 = por %p49, %p50
      %p52 = scmp.ne.s32.totalorder %s41, %s44
      %p53 = scmp.eq.s32.totalorder %s24, 3
      %p54 = por %p52, %p53
      %p55 = scmp.ne.s32.totalorder %s44, %s45
      %p56 = scmp.eq.s32.totalorder %s24, 0
      %p57 = por %p55, %p56
      %p58 = scmp.ne.s32.totalorder %s44, %s45
      %p59 = scmp.eq.s32.totalorder %s25, 3
      %p60 = por %p58, %p59
      %p62 = scmp.ne.s32.totalorder %s45, %s61
      %p63 = scmp.eq.s32.totalorder %s25, 0
      %p64 = por %p62, %p63
      %s66 = sadd.s32 %s65, 1
      %p69 = scmp.eq.s32.totalorder %s19, 3
      %p70 = scmp.ne.s32.totalorder %s65, %s67
      %p71 = scmp.eq.s32.totalorder %s19, 0
      %p72 = por %p70, %p71
      %p73 = scmp.ne.s32.totalorder %s65, %s67
      %p74 = scmp.eq.s32.totalorder %s24, 3
      %p75 = por %p73, %p74
      %p76 = scmp.ne.s32.totalorder %s67, %s68
      %p77 = scmp.eq.s32.totalorder %s24, 0
      %p78 = por %p76, %p77
      %p79 = scmp.ne.s32.totalorder %s67, %s68
      %p80 = scmp.eq.s32.totalorder %s25, 3
      %p81 = por %p79, %p80
      %p83 = scmp.ne.s32.totalorder %s68, %s82
      %p84 = scmp.eq.s32.totalorder %s25, 0
      %p85 = por %p83, %p84
      %s87 = sadd.s32 %s86, 1
      %p90 = scmp.eq.s32.totalorder %s19, 3
      %p91 = scmp.ne.s32.totalorder %s86, %s88
      %p92 = scmp.eq.s32.totalorder %s19, 0
      %p93 = por %p91, %p92
      %p94 = scmp.ne.s32.totalorder %s86, %s88
      %p95 = scmp.eq.s32.totalorder %s24, 3
      %p96 = por %p94, %p95
      %p97 = scmp.ne.s32.totalorder %s88, %s89
      %p98 = scmp.eq.s32.totalorder %s24, 0
      %p99 = por %p97, %p98
      %p100 = scmp.ne.s32.totalorder %s88, %s89
      %p101 = scmp.eq.s32.totalorder %s25, 3
      %p102 = por %p100, %p101
      %p104 = scmp.ne.s32.totalorder %s89, %s103
      %p105 = scmp.eq.s32.totalorder %s25, 0
      %p106 = por %p104, %p105
      %s108 = sadd.s32 %s107, 1
      %p111 = scmp.eq.s32.totalorder %s19, 3
      %p112 = scmp.ne.s32.totalorder %s107, %s109
      %p113 = scmp.eq.s32.totalorder %s19, 0
      %p114 = por %p112, %p113
      %p115 = scmp.ne.s32.totalorder %s107, %s109
      %p116 = scmp.eq.s32.totalorder %s24, 3
      %p117 = por %p115, %p116
      %p118 = scmp.ne.s32.totalorder %s109, %s110
      %p119 = scmp.eq.s32.totalorder %s24, 0
      %p120 = por %p118, %p119
      %p121 = scmp.ne.s32.totalorder %s109, %s110
      %p122 = scmp.eq.s32.totalorder %s25, 3
      %p123 = por %p121, %p122
      %p125 = scmp.ne.s32.totalorder %s110, %s124
      %p126 = scmp.eq.s32.totalorder %s25, 0
      %p127 = por %p125, %p126
      %s129 = sadd.s32 %s128, 1
      %p132 = scmp.eq.s32.totalorder %s19, 3
      %p133 = scmp.ne.s32.totalorder %s128, %s130
      %p134 = scmp.eq.s32.totalorder %s19, 0
      %p135 = por %p133, %p134
      %p136 = scmp.ne.s32.totalorder %s128, %s130
      %p137 = scmp.eq.s32.totalorder %s24, 3
      %p138 = por %p136, %p137
      %p139 = scmp.ne.s32.totalorder %s130, %s131
      %p140 = scmp.eq.s32.totalorder %s24, 0
      %p141 = por %p139, %p140
      %p142 = scmp.ne.s32.totalorder %s130, %s131
      %p143 = scmp.eq.s32.totalorder %s25, 3
      %p144 = por %p142, %p143
      %p146 = scmp.ne.s32.totalorder %s131, %s145
      %p147 = scmp.eq.s32.totalorder %s25, 0
      %p148 = por %p146, %p147
      %s149 = ssub.s32 %s26, %s38
      %s150 = ssub.s32 %s27, %s34
      %s151 = sor.u32 %s149, %s150
      %p152 = scmp.eq.s32.totalorder %s151, 0
      %s154 = sadd.s32 %s153, 1
      %s155 = scalar_select %p152, %s153, %s154
      %p158 = pneg %p152
      %p159 = scmp.eq.s32.totalorder %s19, 3
      %p160 = por %p158, %p159
      %p161 = scmp.ne.s32.totalorder %s153, %s156
      %p162 = scmp.eq.s32.totalorder %s19, 0
      %p163 = por %p161, %p162
      %p164 = scmp.ne.s32.totalorder %s153, %s156
      %p165 = scmp.eq.s32.totalorder %s24, 3
      %p166 = por %p164, %p165
      %p167 = scmp.ne.s32.totalorder %s156, %s157
      %p168 = scmp.eq.s32.totalorder %s24, 0
      %p169 = por %p167, %p168
      %p170 = scmp.ne.s32.totalorder %s156, %s157
      %p171 = scmp.eq.s32.totalorder %s25, 3
      %p172 = por %p170, %p171
      %p174 = scmp.ne.s32.totalorder %s157, %s173
      %p175 = scmp.eq.s32.totalorder %s25, 0
      %p176 = por %p174, %p175
      %p177 = scmp.le.s32.totalorder 1, %s19
      %p178 = scmp.lt.s32.totalorder %s19, 5
      %p179 = pnand %p177, %p178
      %p180 = pneg %p179
      // Predicated region
      $region9: #{tpu_custom_call.1} parent=5 // pred_check
        _
      $region10: #{tpu_custom_call.1} parent=5 // pred_check_branch
        %182 = sbr.rel (%p179) target = $region12
      $region11: #{tpu_custom_call.1} parent=5 // pred_region
        %s183 = ssub.s32 %s19, 1
        // Predicated region
        $region13: #{tpu_custom_call.1} parent=11 // pred_check
          %p184 = pneg %p78
        $region14: #{tpu_custom_call.1} parent=11 // pred_check_branch
          %186 = sbr.rel (%p184) target = $region16
        $region15: #{tpu_custom_call.1} parent=11 // pred_region
          %s188 = ssub.s32 1024, 1024
          %189 = vsyncadd [#allocation7], %s188
          %s190 = sshll.u32 [#allocation6], 4
          %s191 = int_to_ptr.vmem [resolvable:$true] %s190
          %196 = dma.hbm_to_vmem [thread:$0]  %s1, 1024, %s191, [#allocation7], 64, 64, 4
        $region16: #{tpu_custom_call.1} parent=11 // pred_fallthru
          _
        // Predicated region
        $region17: #{tpu_custom_call.1} parent=11 // pred_check
          %p197 = pneg %p99
        $region18: #{tpu_custom_call.1} parent=11 // pred_check_branch
          %199 = sbr.rel (%p197) target = $region20
        $region19: #{tpu_custom_call.1} parent=11 // pred_region
          %s201 = ssub.s32 2048, 2048
          %202 = vsyncadd [#allocation7], %s201
          %s203 = sshll.u32 [#allocation8], 4
          %s204 = int_to_ptr.vmem [resolvable:$true] %s203
          %209 = dma.hbm_to_vmem [thread:$0]  %s2, 2048, %s204, [#allocation7], 128, 128, 8
        $region20: #{tpu_custom_call.1} parent=11 // pred_fallthru
          _
        // Predicated region
        $region21: #{tpu_custom_call.1} parent=11 // pred_check
          %p210 = pneg %p120
        $region22: #{tpu_custom_call.1} parent=11 // pred_check_branch
          %212 = sbr.rel (%p210) target = $region24
        $region23: #{tpu_custom_call.1} parent=11 // pred_region
          %s214 = ssub.s32 1024, 1024
          %215 = vsyncadd [#allocation10], %s214
          %s216 = sshll.u32 [#allocation9], 4
          %s217 = int_to_ptr.vmem [resolvable:$true] %s216
          %222 = dma.hbm_to_vmem [thread:$0]  %s3, 1024, %s217, [#allocation10], 64, 64, 4
        $region24: #{tpu_custom_call.1} parent=11 // pred_fallthru
          _
        // Predicated region
        $region25: #{tpu_custom_call.1} parent=11 // pred_check
          %p223 = pneg %p141
        $region26: #{tpu_custom_call.1} parent=11 // pred_check_branch
          %225 = sbr.rel (%p223) target = $region28
        $region27: #{tpu_custom_call.1} parent=11 // pred_region
          _
        $region28: #{tpu_custom_call.1} parent=11 // pred_fallthru
          _
      $region12: #{tpu_custom_call.1} parent=5 // pred_fallthru
        _
      %p226 = scmp.lt.s32.totalorder %s19, 4
      // Predicated region
      $region29: #{tpu_custom_call.1} parent=5 // pred_check
        %p227 = pneg %p226
      $region30: #{tpu_custom_call.1} parent=5 // pred_check_branch
        %229 = sbr.rel (%p227) target = $region32
      $region31: #{tpu_custom_call.1} parent=5 // pred_region
        // Predicated region
        $region33: #{tpu_custom_call.1} parent=31 // pred_check
          %p230 = pneg %p51
        $region34: #{tpu_custom_call.1} parent=31 // pred_check_branch
          %232 = sbr.rel (%p230) target = $region36
        $region35: #{tpu_custom_call.1} parent=31 // pred_region
          %s233 = sand.u32 %s41, 1
          %s234 = scalar_lea.sflag [#allocation4], %s233
          %s235 = sand.u32 %s41, 1
          %s236 = smul.addr %s235, 128
          %s237 = scalar_lea.vmem [#allocation3], %s236
          %s239 = ssub.s32 2048, 2048
          %240 = vsyncadd %s234, %s239
          %s241 = smul.addr %s26, 32
          %s242 = smul.addr %s241, 64
          %s243 = scalar_lea.hbm %s0, %s242
          %s244 = sshll.u32 %s237, 4
          %s245 = int_to_ptr.vmem [resolvable:$true] %s244
          %250 = dma.hbm_to_vmem [thread:$0]  %s243, 2048, %s245, %s234, 64, 64, 4
        $region36: #{tpu_custom_call.1} parent=31 // pred_fallthru
          _
      $region32: #{tpu_custom_call.1} parent=5 // pred_fallthru
        _
      %p251 = scmp.le.s32.totalorder 1, %s19
      %p252 = scmp.lt.s32.totalorder %s19, 5
      %p253 = pnand %p251, %p252
      %p254 = pneg %p253
      // Predicated region
      $region37: #{tpu_custom_call.1} parent=5 // pred_check
        _
      $region38: #{tpu_custom_call.1} parent=5 // pred_check_branch
        %256 = sbr.rel (%p253) target = $region40
      $region39: #{tpu_custom_call.1} parent=5 // pred_region
        %s257 = ssub.s32 %s19, 1
        %s258 = sand.u32 %s44, 1
        %s259 = scalar_lea.sflag [#allocation4], %s258
        %s260 = sand.u32 %s44, 1
        %s261 = smul.addr %s260, 128
        %s262 = scalar_lea.vmem [#allocation3], %s261
        // Predicated region
        $region41: #{tpu_custom_call.1} parent=39 // pred_check
          %p263 = pneg %p57
        $region42: #{tpu_custom_call.1} parent=39 // pred_check_branch
          %265 = sbr.rel (%p263) target = $region44
        $region43: #{tpu_custom_call.1} parent=39 // pred_region
          %266 = dma.done %s259, 2048
        $region44: #{tpu_custom_call.1} parent=39 // pred_fallthru
          _
        // Predicated region
        $region45: #{tpu_custom_call.1} parent=39 // pred_check
          %p267 = pneg %p78
        $region46: #{tpu_custom_call.1} parent=39 // pred_check_branch
          %269 = sbr.rel (%p267) target = $region48
        $region47: #{tpu_custom_call.1} parent=39 // pred_region
          %270 = dma.done [#allocation7], 1024
        $region48: #{tpu_custom_call.1} parent=39 // pred_fallthru
          _
        // Predicated region
        $region49: #{tpu_custom_call.1} parent=39 // pred_check
          %p271 = pneg %p99
        $region50: #{tpu_custom_call.1} parent=39 // pred_check_branch
          %273 = sbr.rel (%p271) target = $region52
        $region51: #{tpu_custom_call.1} parent=39 // pred_region
          %274 = dma.done [#allocation7], 2048
        $region52: #{tpu_custom_call.1} parent=39 // pred_fallthru
          _
        // Predicated region
        $region53: #{tpu_custom_call.1} parent=39 // pred_check
          %p275 = pneg %p120
        $region54: #{tpu_custom_call.1} parent=39 // pred_check_branch
          %277 = sbr.rel (%p275) target = $region56
        $region55: #{tpu_custom_call.1} parent=39 // pred_region
          %278 = dma.done [#allocation10], 1024
        $region56: #{tpu_custom_call.1} parent=39 // pred_fallthru
          _
        %s279 = sand.u32 %s44, 1
        %s280 = scalar_lea.sflag [#allocation4], %s279
        %s281 = sand.u32 %s44, 1
        %s282 = smul.addr %s281, 128
        %s283 = scalar_lea.vmem [#allocation3], %s282
        %p284 = pneg %p57
        %p285 = pneg %p54
        %p286 = pneg %p78
        %p287 = pneg %p75
        %p288 = pneg %p99
        %p289 = pneg %p96
        %p290 = pneg %p120
        %p291 = pneg %p117
        %p292 = pneg %p141
        %p293 = pneg %p138
        %p294 = pneg %p169
        %p295 = pneg %p166
        %s296 = sand.u32 %s156, 1
        %s297 = scalar_lea.sflag [#allocation5], %s296
        %s298 = sand.u32 %s156, 1
        %s299 = smul.addr %s298, 128
        %s300 = scalar_lea.vmem [#allocation11], %s299
        %s301 = smul.u32 16, %s29
        %p303 = scmp.eq.s32.totalorder %s29, 0
        // Predicated region
        $region57: #{tpu_custom_call.1} parent=39 // pred_check
          %p304 = pneg %p303
        $region58: #{tpu_custom_call.1} parent=39 // pred_check_branch
          %306 = sbr.rel (%p304) target = $region60
        $region59: #{tpu_custom_call.1} parent=39 // pred_region
          %v307 = vld [vmem:[%s262] sm:$0xf]
          %v308 = vld [vmem:[%s262 + $0x4] sm:$0xf]
          %v309 = vld [vmem:[%s262 + $0x8] sm:$0xf]
          %v310 = vld [vmem:[%s262 + $0xc] sm:$0xf]
          %v311 = vld [vmem:[%s262 + $0x10] sm:$0xf]
          %v312 = vld [vmem:[%s262 + $0x14] sm:$0xf]
          %v313 = vld [vmem:[%s262 + $0x18] sm:$0xf]
          %v314 = vld [vmem:[%s262 + $0x1c] sm:$0xf]
          %v315 = vld [vmem:[%s262 + $0x20] sm:$0xf]
          %v316 = vld [vmem:[%s262 + $0x24] sm:$0xf]
          %v317 = vld [vmem:[%s262 + $0x28] sm:$0xf]
          %v318 = vld [vmem:[%s262 + $0x2c] sm:$0xf]
          %v319 = vld [vmem:[%s262 + $0x30] sm:$0xf]
          %v320 = vld [vmem:[%s262 + $0x34] sm:$0xf]
          %v321 = vld [vmem:[%s262 + $0x38] sm:$0xf]
          %v322 = vld [vmem:[%s262 + $0x3c] sm:$0xf]
          %v323 = vld [vmem:[%s262 + $0x40] sm:$0xf]
          %v324 = vld [vmem:[%s262 + $0x44] sm:$0xf]
          %v325 = vld [vmem:[%s262 + $0x48] sm:$0xf]
          %v326 = vld [vmem:[%s262 + $0x4c] sm:$0xf]
          %v327 = vld [vmem:[%s262 + $0x50] sm:$0xf]
          %v328 = vld [vmem:[%s262 + $0x54] sm:$0xf]
          %v329 = vld [vmem:[%s262 + $0x58] sm:$0xf]
          %v330 = vld [vmem:[%s262 + $0x5c] sm:$0xf]
          %v331 = vld [vmem:[%s262 + $0x60] sm:$0xf]
          %v332 = vld [vmem:[%s262 + $0x64] sm:$0xf]
          %v333 = vld [vmem:[%s262 + $0x68] sm:$0xf]
          %v334 = vld [vmem:[%s262 + $0x6c] sm:$0xf]
          %v335 = vld [vmem:[%s262 + $0x70] sm:$0xf]
          %v336 = vld [vmem:[%s262 + $0x74] sm:$0xf]
          %v337 = vld [vmem:[%s262 + $0x78] sm:$0xf]
          %v338 = vld [vmem:[%s262 + $0x7c] sm:$0xf]
          %v339 = vld [vmem:[#allocation8] sm:$0xff]
          %v340 = vld [vmem:[#allocation8 + $0x8] sm:$0xff]
          %v341 = vld [vmem:[#allocation8 + $0x10] sm:$0xff]
          %v342 = vld [vmem:[#allocation8 + $0x18] sm:$0xff]
          %v343 = vld [vmem:[#allocation8 + $0x20] sm:$0xff]
          %v344 = vld [vmem:[#allocation8 + $0x28] sm:$0xff]
          %v345 = vld [vmem:[#allocation8 + $0x30] sm:$0xff]
          %v346 = vld [vmem:[#allocation8 + $0x38] sm:$0xff]
          %v347 = vld [vmem:[#allocation8 + $0x40] sm:$0xff]
          %v348 = vld [vmem:[#allocation8 + $0x48] sm:$0xff]
          %v349 = vld [vmem:[#allocation8 + $0x50] sm:$0xff]
          %v350 = vld [vmem:[#allocation8 + $0x58] sm:$0xff]
          %v351 = vld [vmem:[#allocation8 + $0x60] sm:$0xff]
          %v352 = vld [vmem:[#allocation8 + $0x68] sm:$0xff]
          %v353 = vld [vmem:[#allocation8 + $0x70] sm:$0xff]
          %v354 = vld [vmem:[#allocation8 + $0x78] sm:$0xff]
          %v387 = vunpack.c.l.b16 %v307
          %v388 = vunpack.c.l.b16 %v308
          %v389 = vunpack.c.l.b16 %v309
          %v390 = vunpack.c.l.b16 %v310
          %v391 = vunpack.c.l.b16 %v311
          %v392 = vunpack.c.l.b16 %v312
          %v393 = vunpack.c.l.b16 %v313
          %v394 = vunpack.c.l.b16 %v314
          %v395 = vunpack.c.l.b16 %v315
          %v396 = vunpack.c.l.b16 %v316
          %v397 = vunpack.c.l.b16 %v317
          %v398 = vunpack.c.l.b16 %v318
          %v399 = vunpack.c.l.b16 %v319
          %v400 = vunpack.c.l.b16 %v320
          %v401 = vunpack.c.l.b16 %v321
          %v402 = vunpack.c.l.b16 %v322
          %v403 = vunpack.c.l.b16 %v323
          %v404 = vunpack.c.l.b16 %v324
          %v405 = vunpack.c.l.b16 %v325
          %v406 = vunpack.c.l.b16 %v326
          %v407 = vunpack.c.l.b16 %v327
          %v408 = vunpack.c.l.b16 %v328
          %v409 = vunpack.c.l.b16 %v329
          %v410 = vunpack.c.l.b16 %v330
          %v411 = vunpack.c.l.b16 %v331
          %v412 = vunpack.c.l.b16 %v332
          %v413 = vunpack.c.l.b16 %v333
          %v414 = vunpack.c.l.b16 %v334
          %v415 = vunpack.c.l.b16 %v335
          %v416 = vunpack.c.l.b16 %v336
          %v417 = vunpack.c.l.b16 %v337
          %v418 = vunpack.c.l.b16 %v338
          %v419 = vpack.c.b16 %v388, %v387
          %v420 = vpack.c.b16 %v390, %v389
          %v421 = vpack.c.b16 %v392, %v391
          %v422 = vpack.c.b16 %v394, %v393
          %v423 = vpack.c.b16 %v396, %v395
          %v424 = vpack.c.b16 %v398, %v397
          %v425 = vpack.c.b16 %v400, %v399
          %v426 = vpack.c.b16 %v402, %v401
          %v427 = vpack.c.b16 %v404, %v403
          %v428 = vpack.c.b16 %v406, %v405
          %v429 = vpack.c.b16 %v408, %v407
          %v430 = vpack.c.b16 %v410, %v409
          %v431 = vpack.c.b16 %v412, %v411
          %v432 = vpack.c.b16 %v414, %v413
          %v433 = vpack.c.b16 %v416, %v415
          %v434 = vpack.c.b16 %v418, %v417
          %v467 = vunpack.c.l.b16 %v339
          %v468 = vunpack.c.h.b16 %v339
          %v469 = vunpack.c.l.b16 %v340
          %v470 = vunpack.c.h.b16 %v340
          %v471 = vunpack.c.l.b16 %v341
          %v472 = vunpack.c.h.b16 %v341
          %v473 = vunpack.c.l.b16 %v342
          %v474 = vunpack.c.h.b16 %v342
          %v475 = vunpack.c.l.b16 %v343
          %v476 = vunpack.c.h.b16 %v343
          %v477 = vunpack.c.l.b16 %v344
          %v478 = vunpack.c.h.b16 %v344
          %v479 = vunpack.c.l.b16 %v345
          %v480 = vunpack.c.h.b16 %v345
          %v481 = vunpack.c.l.b16 %v346
          %v482 = vunpack.c.h.b16 %v346
          %v483 = vunpack.c.l.b16 %v347
          %v484 = vunpack.c.h.b16 %v347
          %v485 = vunpack.c.l.b16 %v348
          %v486 = vunpack.c.h.b16 %v348
          %v487 = vunpack.c.l.b16 %v349
          %v488 = vunpack.c.h.b16 %v349
          %v489 = vunpack.c.l.b16 %v350
          %v490 = vunpack.c.h.b16 %v350
          %v491 = vunpack.c.l.b16 %v351
          %v492 = vunpack.c.h.b16 %v351
          %v493 = vunpack.c.l.b16 %v352
          %v494 = vunpack.c.h.b16 %v352
          %v495 = vunpack.c.l.b16 %v353
          %v496 = vunpack.c.h.b16 %v353
          %v497 = vunpack.c.l.b16 %v354
          %v498 = vunpack.c.h.b16 %v354
          %v499 = vpack.c.b16 %v469, %v467
          %v500 = vpack.c.b16 %v470, %v468
          %v501 = vpack.c.b16 %v473, %v471
          %v502 = vpack.c.b16 %v474, %v472
          %v503 = vpack.c.b16 %v477, %v475
          %v504 = vpack.c.b16 %v478, %v476
          %v505 = vpack.c.b16 %v481, %v479
          %v506 = vpack.c.b16 %v482, %v480
          %v507 = vpack.c.b16 %v485, %v483
          %v508 = vpack.c.b16 %v486, %v484
          %v509 = vpack.c.b16 %v489, %v487
          %v510 = vpack.c.b16 %v490, %v488
          %v511 = vpack.c.b16 %v493, %v491
          %v512 = vpack.c.b16 %v494, %v492
          %v513 = vpack.c.b16 %v497, %v495
          %v514 = vpack.c.b16 %v498, %v496
          %531 = vmatprep.subr.bf16.mxu0 %v514
          %532 = vmatpush1.bf16.msra.mxu0 %v513
          %533 = vmatprep.subr.bf16.mxu0 %v512
          %534 = vmatpush1.bf16.msra.mxu0 %v511
          %535 = vmatprep.subr.bf16.mxu0 %v510
          %536 = vmatpush1.bf16.msra.mxu0 %v509
          %537 = vmatprep.subr.bf16.mxu0 %v508
          %538 = vmatpush1.bf16.msra.mxu0 %v507
          %539 = vmatprep.subr.bf16.mxu0 %v506
          %540 = vmatpush1.bf16.msra.mxu0 %v505
          %541 = vmatprep.subr.bf16.mxu0 %v504
          %542 = vmatpush1.bf16.msra.mxu0 %v503
          %543 = vmatprep.subr.bf16.mxu0 %v502
          %544 = vmatpush1.bf16.msra.mxu0 %v501
          %545 = vmatprep.subr.bf16.mxu0 %v500
          %546 = vmatpush1.bf16.msra.mxu0 %v499
          %547 = vmatprep.subr.bf16.mxu0 0
          %548 = vmatpush2.bf16.msra.mxu0 0
          %549 = vmatprep.subr.bf16.mxu0 0
          %550 = vmatpush2.bf16.msra.mxu0 0
          %551 = vmatprep.subr.bf16.mxu0 0
          %552 = vmatpush2.bf16.msra.mxu0 0
          %553 = vmatprep.subr.bf16.mxu0 0
          %554 = vmatpush2.bf16.msra.mxu0 0
          %555 = vmatprep.subr.bf16.mxu0 0
          %556 = vmatpush2.bf16.msra.mxu0 0
          %557 = vmatprep.subr.bf16.mxu0 0
          %558 = vmatpush2.bf16.msra.mxu0 0
          %559 = vmatprep.subr.bf16.mxu0 0
          %560 = vmatpush2.bf16.msra.mxu0 0
          %561 = vmatprep.subr.bf16.mxu0 0
          %562 = vmatpush2.bf16.msra.mxu0 0
          %563 = vmatprep.mubr.bf16.mxu0 0
          %564 = vmatmul.mubr.bf16.gmra.mxu0 %v419
          %v565 = vpop.f32.mrf.mxu0
          %v566 = vadd.f32 0.0, %v565
          %v567 = vpop.f32.mrf.mxu0
          %v568 = vadd.f32 0.0, %v567
          %v569 = vpop.f32.mrf.mxu0
          %v570 = vadd.f32 0.0, %v569
          %v571 = vpop.f32.mrf.mxu0
          %v572 = vadd.f32 0.0, %v571
          %573 = vmatprep.mubr.bf16.mxu0 0
          %574 = vmatmul.mubr.bf16.gmra.mxu0 %v420
          %v575 = vpop.f32.mrf.mxu0
          %v576 = vadd.f32 0.0, %v575
          %v577 = vpop.f32.mrf.mxu0
          %v578 = vadd.f32 0.0, %v577
          %v579 = vpop.f32.mrf.mxu0
          %v580 = vadd.f32 0.0, %v579
          %v581 = vpop.f32.mrf.mxu0
          %v582 = vadd.f32 0.0, %v581
          %583 = vmatprep.mubr.bf16.mxu0 0
          %584 = vmatmul.mubr.bf16.gmra.mxu0 %v421
          %v585 = vpop.f32.mrf.mxu0
          %v586 = vadd.f32 0.0, %v585
          %v587 = vpop.f32.mrf.mxu0
          %v588 = vadd.f32 0.0, %v587
          %v589 = vpop.f32.mrf.mxu0
          %v590 = vadd.f32 0.0, %v589
          %v591 = vpop.f32.mrf.mxu0
          %v592 = vadd.f32 0.0, %v591
          %593 = vmatprep.mubr.bf16.mxu0 0
          %594 = vmatmul.mubr.bf16.gmra.mxu0 %v422
          %v595 = vpop.f32.mrf.mxu0
          %v596 = vadd.f32 0.0, %v595
          %v597 = vpop.f32.mrf.mxu0
          %v598 = vadd.f32 0.0, %v597
          %v599 = vpop.f32.mrf.mxu0
          %v600 = vadd.f32 0.0, %v599
          %v601 = vpop.f32.mrf.mxu0
          %v602 = vadd.f32 0.0, %v601
          %603 = vmatprep.mubr.bf16.mxu0 0
          %604 = vmatmul.mubr.bf16.gmra.mxu0 %v423
          %v605 = vpop.f32.mrf.mxu0
          %v606 = vadd.f32 0.0, %v605
          %v607 = vpop.f32.mrf.mxu0
          %v608 = vadd.f32 0.0, %v607
          %v609 = vpop.f32.mrf.mxu0
          %v610 = vadd.f32 0.0, %v609
          %v611 = vpop.f32.mrf.mxu0
          %v612 = vadd.f32 0.0, %v611
          %613 = vmatprep.mubr.bf16.mxu0 0
          %614 = vmatmul.mubr.bf16.gmra.mxu0 %v424
          %v615 = vpop.f32.mrf.mxu0
          %v616 = vadd.f32 0.0, %v615
          %v617 = vpop.f32.mrf.mxu0
          %v618 = vadd.f32 0.0, %v617
          %v619 = vpop.f32.mrf.mxu0
          %v620 = vadd.f32 0.0, %v619
          %v621 = vpop.f32.mrf.mxu0
          %v622 = vadd.f32 0.0, %v621
          %623 = vmatprep.mubr.bf16.mxu0 0
          %624 = vmatmul.mubr.bf16.gmra.mxu0 %v425
          %v625 = vpop.f32.mrf.mxu0
          %v626 = vadd.f32 0.0, %v625
          %v627 = vpop.f32.mrf.mxu0
          %v628 = vadd.f32 0.0, %v627
          %v629 = vpop.f32.mrf.mxu0
          %v630 = vadd.f32 0.0, %v629
          %v631 = vpop.f32.mrf.mxu0
          %v632 = vadd.f32 0.0, %v631
          %633 = vmatprep.mubr.bf16.mxu0 0
          %634 = vmatmul.mubr.bf16.gmra.mxu0 %v426
          %v635 = vpop.f32.mrf.mxu0
          %v636 = vadd.f32 0.0, %v635
          %v637 = vpop.f32.mrf.mxu0
          %v638 = vadd.f32 0.0, %v637
          %v639 = vpop.f32.mrf.mxu0
          %v640 = vadd.f32 0.0, %v639
          %v641 = vpop.f32.mrf.mxu0
          %v642 = vadd.f32 0.0, %v641
          %643 = vmatprep.mubr.bf16.mxu0 0
          %644 = vmatmul.mubr.bf16.gmra.mxu0 %v427
          %v645 = vpop.f32.mrf.mxu0
          %v646 = vadd.f32 0.0, %v645
          %v647 = vpop.f32.mrf.mxu0
          %v648 = vadd.f32 0.0, %v647
          %v649 = vpop.f32.mrf.mxu0
          %v650 = vadd.f32 0.0, %v649
          %v651 = vpop.f32.mrf.mxu0
          %v652 = vadd.f32 0.0, %v651
          %653 = vmatprep.mubr.bf16.mxu0 0
          %654 = vmatmul.mubr.bf16.gmra.mxu0 %v428
          %v655 = vpop.f32.mrf.mxu0
          %v656 = vadd.f32 0.0, %v655
          %v657 = vpop.f32.mrf.mxu0
          %v658 = vadd.f32 0.0, %v657
          %v659 = vpop.f32.mrf.mxu0
          %v660 = vadd.f32 0.0, %v659
          %v661 = vpop.f32.mrf.mxu0
          %v662 = vadd.f32 0.0, %v661
          %663 = vmatprep.mubr.bf16.mxu0 0
          %664 = vmatmul.mubr.bf16.gmra.mxu0 %v429
          %v665 = vpop.f32.mrf.mxu0
          %v666 = vadd.f32 0.0, %v665
          %v667 = vpop.f32.mrf.mxu0
          %v668 = vadd.f32 0.0, %v667
          %v669 = vpop.f32.mrf.mxu0
          %v670 = vadd.f32 0.0, %v669
          %v671 = vpop.f32.mrf.mxu0
          %v672 = vadd.f32 0.0, %v671
          %673 = vmatprep.mubr.bf16.mxu0 0
          %674 = vmatmul.mubr.bf16.gmra.mxu0 %v430
          %v675 = vpop.f32.mrf.mxu0
          %v676 = vadd.f32 0.0, %v675
          %v677 = vpop.f32.mrf.mxu0
          %v678 = vadd.f32 0.0, %v677
          %v679 = vpop.f32.mrf.mxu0
          %v680 = vadd.f32 0.0, %v679
          %v681 = vpop.f32.mrf.mxu0
          %v682 = vadd.f32 0.0, %v681
          %683 = vmatprep.mubr.bf16.mxu0 0
          %684 = vmatmul.mubr.bf16.gmra.mxu0 %v431
          %v685 = vpop.f32.mrf.mxu0
          %v686 = vadd.f32 0.0, %v685
          %v687 = vpop.f32.mrf.mxu0
          %v688 = vadd.f32 0.0, %v687
          %v689 = vpop.f32.mrf.mxu0
          %v690 = vadd.f32 0.0, %v689
          %v691 = vpop.f32.mrf.mxu0
          %v692 = vadd.f32 0.0, %v691
          %693 = vmatprep.mubr.bf16.mxu0 0
          %694 = vmatmul.mubr.bf16.gmra.mxu0 %v432
          %v695 = vpop.f32.mrf.mxu0
          %v696 = vadd.f32 0.0, %v695
          %v697 = vpop.f32.mrf.mxu0
          %v698 = vadd.f32 0.0, %v697
          %v699 = vpop.f32.mrf.mxu0
          %v700 = vadd.f32 0.0, %v699
          %v701 = vpop.f32.mrf.mxu0
          %v702 = vadd.f32 0.0, %v701
          %703 = vmatprep.mubr.bf16.mxu0 0
          %704 = vmatmul.mubr.bf16.gmra.mxu0 %v433
          %v705 = vpop.f32.mrf.mxu0
          %v706 = vadd.f32 0.0, %v705
          %v707 = vpop.f32.mrf.mxu0
          %v708 = vadd.f32 0.0, %v707
          %v709 = vpop.f32.mrf.mxu0
          %v710 = vadd.f32 0.0, %v709
          %v711 = vpop.f32.mrf.mxu0
          %v712 = vadd.f32 0.0, %v711
          %713 = vmatprep.mubr.bf16.mxu0 0
          %714 = vmatmul.mubr.bf16.gmra.mxu0 %v434
          %v715 = vpop.f32.mrf.mxu0
          %v716 = vadd.f32 0.0, %v715
          %v717 = vpop.f32.mrf.mxu0
          %v718 = vadd.f32 0.0, %v717
          %v719 = vpop.f32.mrf.mxu0
          %v720 = vadd.f32 0.0, %v719
          %v721 = vpop.f32.mrf.mxu0
          %v722 = vadd.f32 0.0, %v721
          %723 = vdwg.mxu0
          %v724 = vpack.c.bf16 %v570, %v566
          %v725 = vpack.c.bf16 %v572, %v568
          %v726 = vpack.c.bf16 %v580, %v576
          %v727 = vpack.c.bf16 %v582, %v578
          %v728 = vpack.c.bf16 %v590, %v586
          %v729 = vpack.c.bf16 %v592, %v588
          %v730 = vpack.c.bf16 %v600, %v596
          %v731 = vpack.c.bf16 %v602, %v598
          %v732 = vpack.c.bf16 %v610, %v606
          %v733 = vpack.c.bf16 %v612, %v608
          %v734 = vpack.c.bf16 %v620, %v616
          %v735 = vpack.c.bf16 %v622, %v618
          %v736 = vpack.c.bf16 %v630, %v626
          %v737 = vpack.c.bf16 %v632, %v628
          %v738 = vpack.c.bf16 %v640, %v636
          %v739 = vpack.c.bf16 %v642, %v638
          %v740 = vpack.c.bf16 %v650, %v646
          %v741 = vpack.c.bf16 %v652, %v648
          %v742 = vpack.c.bf16 %v660, %v656
          %v743 = vpack.c.bf16 %v662, %v658
          %v744 = vpack.c.bf16 %v670, %v666
          %v745 = vpack.c.bf16 %v672, %v668
          %v746 = vpack.c.bf16 %v680, %v676
          %v747 = vpack.c.bf16 %v682, %v678
          %v748 = vpack.c.bf16 %v690, %v686
          %v749 = vpack.c.bf16 %v692, %v688
          %v750 = vpack.c.bf16 %v700, %v696
          %v751 = vpack.c.bf16 %v702, %v698
          %v752 = vpack.c.bf16 %v710, %v706
          %v753 = vpack.c.bf16 %v712, %v708
          %v754 = vpack.c.bf16 %v720, %v716
          %v755 = vpack.c.bf16 %v722, %v718
          %v788 = vunpack.c.l.b16 %v724
          %v789 = vunpack.c.l.b16 %v725
          %v790 = vunpack.c.h.b16 %v724
          %v791 = vunpack.c.h.b16 %v725
          %v792 = vunpack.c.l.b16 %v726
          %v793 = vunpack.c.l.b16 %v727
          %v794 = vunpack.c.h.b16 %v726
          %v795 = vunpack.c.h.b16 %v727
          %v796 = vunpack.c.l.b16 %v728
          %v797 = vunpack.c.l.b16 %v729
          %v798 = vunpack.c.h.b16 %v728
          %v799 = vunpack.c.h.b16 %v729
          %v800 = vunpack.c.l.b16 %v730
          %v801 = vunpack.c.l.b16 %v731
          %v802 = vunpack.c.h.b16 %v730
          %v803 = vunpack.c.h.b16 %v731
          %v804 = vunpack.c.l.b16 %v732
          %v805 = vunpack.c.l.b16 %v733
          %v806 = vunpack.c.h.b16 %v732
          %v807 = vunpack.c.h.b16 %v733
          %v808 = vunpack.c.l.b16 %v734
          %v809 = vunpack.c.l.b16 %v735
          %v810 = vunpack.c.h.b16 %v734
          %v811 = vunpack.c.h.b16 %v735
          %v812 = vunpack.c.l.b16 %v736
          %v813 = vunpack.c.l.b16 %v737
          %v814 = vunpack.c.h.b16 %v736
          %v815 = vunpack.c.h.b16 %v737
          %v816 = vunpack.c.l.b16 %v738
          %v817 = vunpack.c.l.b16 %v739
          %v818 = vunpack.c.h.b16 %v738
          %v819 = vunpack.c.h.b16 %v739
          %v820 = vunpack.c.l.b16 %v740
          %v821 = vunpack.c.l.b16 %v741
          %v822 = vunpack.c.h.b16 %v740
          %v823 = vunpack.c.h.b16 %v741
          %v824 = vunpack.c.l.b16 %v742
          %v825 = vunpack.c.l.b16 %v743
          %v826 = vunpack.c.h.b16 %v742
          %v827 = vunpack.c.h.b16 %v743
          %v828 = vunpack.c.l.b16 %v744
          %v829 = vunpack.c.l.b16 %v745
          %v830 = vunpack.c.h.b16 %v744
          %v831 = vunpack.c.h.b16 %v745
          %v832 = vunpack.c.l.b16 %v746
          %v833 = vunpack.c.l.b16 %v747
          %v834 = vunpack.c.h.b16 %v746
          %v835 = vunpack.c.h.b16 %v747
          %v836 = vunpack.c.l.b16 %v748
          %v837 = vunpack.c.l.b16 %v749
          %v838 = vunpack.c.h.b16 %v748
          %v839 = vunpack.c.h.b16 %v749
          %v840 = vunpack.c.l.b16 %v750
          %v841 = vunpack.c.l.b16 %v751
          %v842 = vunpack.c.h.b16 %v750
          %v843 = vunpack.c.h.b16 %v751
          %v844 = vunpack.c.l.b16 %v752
          %v845 = vunpack.c.l.b16 %v753
          %v846 = vunpack.c.h.b16 %v752
          %v847 = vunpack.c.h.b16 %v753
          %v848 = vunpack.c.l.b16 %v754
          %v849 = vunpack.c.l.b16 %v755
          %v850 = vunpack.c.h.b16 %v754
          %v851 = vunpack.c.h.b16 %v755
          %v852 = vpack.c.b16 %v789, %v788
          %v853 = vpack.c.b16 %v791, %v790
          %v854 = vpack.c.b16 %v793, %v792
          %v855 = vpack.c.b16 %v795, %v794
          %v856 = vpack.c.b16 %v797, %v796
          %v857 = vpack.c.b16 %v799, %v798
          %v858 = vpack.c.b16 %v801, %v800
          %v859 = vpack.c.b16 %v803, %v802
          %v860 = vpack.c.b16 %v805, %v804
          %v861 = vpack.c.b16 %v807, %v806
          %v862 = vpack.c.b16 %v809, %v808
          %v863 = vpack.c.b16 %v811, %v810
          %v864 = vpack.c.b16 %v813, %v812
          %v865 = vpack.c.b16 %v815, %v814
          %v866 = vpack.c.b16 %v817, %v816
          %v867 = vpack.c.b16 %v819, %v818
          %v868 = vpack.c.b16 %v821, %v820
          %v869 = vpack.c.b16 %v823, %v822
          %v870 = vpack.c.b16 %v825, %v824
          %v871 = vpack.c.b16 %v827, %v826
          %v872 = vpack.c.b16 %v829, %v828
          %v873 = vpack.c.b16 %v831, %v830
          %v874 = vpack.c.b16 %v833, %v832
          %v875 = vpack.c.b16 %v835, %v834
          %v876 = vpack.c.b16 %v837, %v836
          %v877 = vpack.c.b16 %v839, %v838
          %v878 = vpack.c.b16 %v841, %v840
          %v879 = vpack.c.b16 %v843, %v842
          %v880 = vpack.c.b16 %v845, %v844
          %v881 = vpack.c.b16 %v847, %v846
          %v882 = vpack.c.b16 %v849, %v848
          %v883 = vpack.c.b16 %v851, %v850
          %916 = vst [vmem:[#allocation2] sm:$0xff] %v852
          %917 = vst [vmem:[#allocation2 + $0x8] sm:$0xff] %v853
          %918 = vst [vmem:[#allocation2 + $0x10] sm:$0xff] %v854
          %919 = vst [vmem:[#allocation2 + $0x18] sm:$0xff] %v855
          %920 = vst [vmem:[#allocation2 + $0x20] sm:$0xff] %v856
          %921 = vst [vmem:[#allocation2 + $0x28] sm:$0xff] %v857
          %922 = vst [vmem:[#allocation2 + $0x30] sm:$0xff] %v858
          %923 = vst [vmem:[#allocation2 + $0x38] sm:$0xff] %v859
          %924 = vst [vmem:[#allocation2 + $0x40] sm:$0xff] %v860
          %925 = vst [vmem:[#allocation2 + $0x48] sm:$0xff] %v861
          %926 = vst [vmem:[#allocation2 + $0x50] sm:$0xff] %v862
          %927 = vst [vmem:[#allocation2 + $0x58] sm:$0xff] %v863
          %928 = vst [vmem:[#allocation2 + $0x60] sm:$0xff] %v864
          %929 = vst [vmem:[#allocation2 + $0x68] sm:$0xff] %v865
          %930 = vst [vmem:[#allocation2 + $0x70] sm:$0xff] %v866
          %931 = vst [vmem:[#allocation2 + $0x78] sm:$0xff] %v867
          %932 = vst [vmem:[#allocation2 + $0x80] sm:$0xff] %v868
          %933 = vst [vmem:[#allocation2 + $0x88] sm:$0xff] %v869
          %934 = vst [vmem:[#allocation2 + $0x90] sm:$0xff] %v870
          %935 = vst [vmem:[#allocation2 + $0x98] sm:$0xff] %v871
          %936 = vst [vmem:[#allocation2 + $0xa0] sm:$0xff] %v872
          %937 = vst [vmem:[#allocation2 + $0xa8] sm:$0xff] %v873
          %938 = vst [vmem:[#allocation2 + $0xb0] sm:$0xff] %v874
          %939 = vst [vmem:[#allocation2 + $0xb8] sm:$0xff] %v875
          %940 = vst [vmem:[#allocation2 + $0xc0] sm:$0xff] %v876
          %941 = vst [vmem:[#allocation2 + $0xc8] sm:$0xff] %v877
          %942 = vst [vmem:[#allocation2 + $0xd0] sm:$0xff] %v878
          %943 = vst [vmem:[#allocation2 + $0xd8] sm:$0xff] %v879
          %944 = vst [vmem:[#allocation2 + $0xe0] sm:$0xff] %v880
          %945 = vst [vmem:[#allocation2 + $0xe8] sm:$0xff] %v881
          %946 = vst [vmem:[#allocation2 + $0xf0] sm:$0xff] %v882
          %947 = vst [vmem:[#allocation2 + $0xf8] sm:$0xff] %v883
        $region60: #{tpu_custom_call.1} parent=39 // pred_fallthru
          _
        %s948 = smul.u32 %s29, 128
        %s949 = sshra.s32 %s948, 3
        %s950 = sand.u32 %s948, 7
        %s951 = smul.addr %s949, 4
        %s952 = scalar_lea.vmem %s262, %s951 [#allocation3]
        %v953 = vld [vmem:[%s952] sm:$0xf]
        %v954 = vld [vmem:[%s952 + $0x4] sm:$0xf]
        %v955 = vld [vmem:[%s952 + $0x8] sm:$0xf]
        %v956 = vld [vmem:[%s952 + $0xc] sm:$0xf]
        %v957 = vld [vmem:[%s952 + $0x10] sm:$0xf]
        %v958 = vld [vmem:[%s952 + $0x14] sm:$0xf]
        %v959 = vld [vmem:[%s952 + $0x18] sm:$0xf]
        %v960 = vld [vmem:[%s952 + $0x1c] sm:$0xf]
        %v961 = vld [vmem:[%s952 + $0x20] sm:$0xf]
        %v962 = vld [vmem:[%s952 + $0x24] sm:$0xf]
        %v963 = vld [vmem:[%s952 + $0x28] sm:$0xf]
        %v964 = vld [vmem:[%s952 + $0x2c] sm:$0xf]
        %v965 = vld [vmem:[%s952 + $0x30] sm:$0xf]
        %v966 = vld [vmem:[%s952 + $0x34] sm:$0xf]
        %v967 = vld [vmem:[%s952 + $0x38] sm:$0xf]
        %v968 = vld [vmem:[%s952 + $0x3c] sm:$0xf]
        %v969 = vld [vmem:[#allocation6] sm:$0xf]
        %v970 = vld [vmem:[#allocation6 + $0x4] sm:$0xf]
        %v971 = vld [vmem:[#allocation6 + $0x8] sm:$0xf]
        %v972 = vld [vmem:[#allocation6 + $0xc] sm:$0xf]
        %v973 = vld [vmem:[#allocation6 + $0x10] sm:$0xf]
        %v974 = vld [vmem:[#allocation6 + $0x14] sm:$0xf]
        %v975 = vld [vmem:[#allocation6 + $0x18] sm:$0xf]
        %v976 = vld [vmem:[#allocation6 + $0x1c] sm:$0xf]
        %v977 = vld [vmem:[#allocation6 + $0x20] sm:$0xf]
        %v978 = vld [vmem:[#allocation6 + $0x24] sm:$0xf]
        %v979 = vld [vmem:[#allocation6 + $0x28] sm:$0xf]
        %v980 = vld [vmem:[#allocation6 + $0x2c] sm:$0xf]
        %v981 = vld [vmem:[#allocation6 + $0x30] sm:$0xf]
        %v982 = vld [vmem:[#allocation6 + $0x34] sm:$0xf]
        %v983 = vld [vmem:[#allocation6 + $0x38] sm:$0xf]
        %v984 = vld [vmem:[#allocation6 + $0x3c] sm:$0xf]
        %v1001 = vunpack.c.l.b16 %v953
        %v1002 = vunpack.c.l.b16 %v954
        %v1003 = vunpack.c.l.b16 %v955
        %v1004 = vunpack.c.l.b16 %v956
        %v1005 = vunpack.c.l.b16 %v957
        %v1006 = vunpack.c.l.b16 %v958
        %v1007 = vunpack.c.l.b16 %v959
        %v1008 = vunpack.c.l.b16 %v960
        %v1009 = vunpack.c.l.b16 %v961
        %v1010 = vunpack.c.l.b16 %v962
        %v1011 = vunpack.c.l.b16 %v963
        %v1012 = vunpack.c.l.b16 %v964
        %v1013 = vunpack.c.l.b16 %v965
        %v1014 = vunpack.c.l.b16 %v966
        %v1015 = vunpack.c.l.b16 %v967
        %v1016 = vunpack.c.l.b16 %v968
        %v1017 = vpack.c.b16 %v1002, %v1001
        %v1018 = vpack.c.b16 %v1004, %v1003
        %v1019 = vpack.c.b16 %v1006, %v1005
        %v1020 = vpack.c.b16 %v1008, %v1007
        %v1021 = vpack.c.b16 %v1010, %v1009
        %v1022 = vpack.c.b16 %v1012, %v1011
        %v1023 = vpack.c.b16 %v1014, %v1013
        %v1024 = vpack.c.b16 %v1016, %v1015
        %v1049 = vunpack.c.l.b16 %v969
        %v1050 = vunpack.c.l.b16 %v970
        %v1051 = vunpack.c.l.b16 %v971
        %v1052 = vunpack.c.l.b16 %v972
        %v1053 = vunpack.c.l.b16 %v973
        %v1054 = vunpack.c.l.b16 %v974
        %v1055 = vunpack.c.l.b16 %v975
        %v1056 = vunpack.c.l.b16 %v976
        %v1057 = vunpack.c.l.b16 %v977
        %v1058 = vunpack.c.l.b16 %v978
        %v1059 = vunpack.c.l.b16 %v979
        %v1060 = vunpack.c.l.b16 %v980
        %v1061 = vunpack.c.l.b16 %v981
        %v1062 = vunpack.c.l.b16 %v982
        %v1063 = vunpack.c.l.b16 %v983
        %v1064 = vunpack.c.l.b16 %v984
        %v1065 = vpack.c.b16 %v1050, %v1049
        %v1066 = vpack.c.b16 %v1052, %v1051
        %v1067 = vpack.c.b16 %v1054, %v1053
        %v1068 = vpack.c.b16 %v1056, %v1055
        %v1069 = vpack.c.b16 %v1058, %v1057
        %v1070 = vpack.c.b16 %v1060, %v1059
        %v1071 = vpack.c.b16 %v1062, %v1061
        %v1072 = vpack.c.b16 %v1064, %v1063
        %1081 = vmatprep.subr.bf16.mxu0 0
        %1082 = vmatpush1.bf16.msra.mxu0 %v1072
        %1083 = vmatprep.subr.bf16.mxu0 0
        %1084 = vmatpush1.bf16.msra.mxu0 %v1071
        %1085 = vmatprep.subr.bf16.mxu0 0
        %1086 = vmatpush1.bf16.msra.mxu0 %v1070
        %1087 = vmatprep.subr.bf16.mxu0 0
        %1088 = vmatpush1.bf16.msra.mxu0 %v1069
        %1089 = vmatprep.subr.bf16.mxu0 0
        %1090 = vmatpush1.bf16.msra.mxu0 %v1068
        %1091 = vmatprep.subr.bf16.mxu0 0
        %1092 = vmatpush1.bf16.msra.mxu0 %v1067
        %1093 = vmatprep.subr.bf16.mxu0 0
        %1094 = vmatpush1.bf16.msra.mxu0 %v1066
        %1095 = vmatprep.subr.bf16.mxu0 0
        %1096 = vmatpush1.bf16.msra.mxu0 %v1065
        %1097 = vmatprep.subr.bf16.mxu0 0
        %1098 = vmatpush2.bf16.msra.mxu0 0
        %1099 = vmatprep.subr.bf16.mxu0 0
        %1100 = vmatpush2.bf16.msra.mxu0 0
        %1101 = vmatprep.subr.bf16.mxu0 0
        %1102 = vmatpush2.bf16.msra.mxu0 0
        %1103 = vmatprep.subr.bf16.mxu0 0
        %1104 = vmatpush2.bf16.msra.mxu0 0
        %1105 = vmatprep.subr.bf16.mxu0 0
        %1106 = vmatpush2.bf16.msra.mxu0 0
        %1107 = vmatprep.subr.bf16.mxu0 0
        %1108 = vmatpush2.bf16.msra.mxu0 0
        %1109 = vmatprep.subr.bf16.mxu0 0
        %1110 = vmatpush2.bf16.msra.mxu0 0
        %1111 = vmatprep.subr.bf16.mxu0 0
        %1112 = vmatpush2.bf16.msra.mxu0 0
        %1113 = vmatprep.mubr.bf16.mxu0 0
        %1114 = vmatmul.mubr.bf16.gmra.mxu0 %v1017
        %v1115 = vpop.f32.mrf.mxu0
        %v1116 = vadd.f32 0.0, %v1115
        %v1117 = vpop.f32.mrf.mxu0
        %v1118 = vpop.f32.mrf.mxu0
        %v1119 = vadd.f32 0.0, %v1118
        %v1120 = vpop.f32.mrf.mxu0
        %1121 = vmatprep.mubr.bf16.mxu0 0
        %1122 = vmatmul.mubr.bf16.gmra.mxu0 %v1018
        %v1123 = vpop.f32.mrf.mxu0
        %v1124 = vadd.f32 0.0, %v1123
        %v1125 = vpop.f32.mrf.mxu0
        %v1126 = vpop.f32.mrf.mxu0
        %v1127 = vadd.f32 0.0, %v1126
        %v1128 = vpop.f32.mrf.mxu0
        %1129 = vmatprep.mubr.bf16.mxu0 0
        %1130 = vmatmul.mubr.bf16.gmra.mxu0 %v1019
        %v1131 = vpop.f32.mrf.mxu0
        %v1132 = vadd.f32 0.0, %v1131
        %v1133 = vpop.f32.mrf.mxu0
        %v1134 = vpop.f32.mrf.mxu0
        %v1135 = vadd.f32 0.0, %v1134
        %v1136 = vpop.f32.mrf.mxu0
        %1137 = vmatprep.mubr.bf16.mxu0 0
        %1138 = vmatmul.mubr.bf16.gmra.mxu0 %v1020
        %v1139 = vpop.f32.mrf.mxu0
        %v1140 = vadd.f32 0.0, %v1139
        %v1141 = vpop.f32.mrf.mxu0
        %v1142 = vpop.f32.mrf.mxu0
        %v1143 = vadd.f32 0.0, %v1142
        %v1144 = vpop.f32.mrf.mxu0
        %1145 = vmatprep.mubr.bf16.mxu0 0
        %1146 = vmatmul.mubr.bf16.gmra.mxu0 %v1021
        %v1147 = vpop.f32.mrf.mxu0
        %v1148 = vadd.f32 0.0, %v1147
        %v1149 = vpop.f32.mrf.mxu0
        %v1150 = vpop.f32.mrf.mxu0
        %v1151 = vadd.f32 0.0, %v1150
        %v1152 = vpop.f32.mrf.mxu0
        %1153 = vmatprep.mubr.bf16.mxu0 0
        %1154 = vmatmul.mubr.bf16.gmra.mxu0 %v1022
        %v1155 = vpop.f32.mrf.mxu0
        %v1156 = vadd.f32 0.0, %v1155
        %v1157 = vpop.f32.mrf.mxu0
        %v1158 = vpop.f32.mrf.mxu0
        %v1159 = vadd.f32 0.0, %v1158
        %v1160 = vpop.f32.mrf.mxu0
        %1161 = vmatprep.mubr.bf16.mxu0 0
        %1162 = vmatmul.mubr.bf16.gmra.mxu0 %v1023
        %v1163 = vpop.f32.mrf.mxu0
        %v1164 = vadd.f32 0.0, %v1163
        %v1165 = vpop.f32.mrf.mxu0
        %v1166 = vpop.f32.mrf.mxu0
        %v1167 = vadd.f32 0.0, %v1166
        %v1168 = vpop.f32.mrf.mxu0
        %1169 = vmatprep.mubr.bf16.mxu0 0
        %1170 = vmatmul.mubr.bf16.gmra.mxu0 %v1024
        %v1171 = vpop.f32.mrf.mxu0
        %v1172 = vadd.f32 0.0, %v1171
        %v1173 = vpop.f32.mrf.mxu0
        %v1174 = vpop.f32.mrf.mxu0
        %v1175 = vadd.f32 0.0, %v1174
        %v1176 = vpop.f32.mrf.mxu0
        %1177 = vdwg.mxu0
        %v1178 = vmul.f32 %v1116, 0.25
        %v1179 = vmul.f32 %v1119, 0.25
        %v1180 = vmul.f32 %v1124, 0.25
        %v1181 = vmul.f32 %v1127, 0.25
        %v1182 = vmul.f32 %v1132, 0.25
        %v1183 = vmul.f32 %v1135, 0.25
        %v1184 = vmul.f32 %v1140, 0.25
        %v1185 = vmul.f32 %v1143, 0.25
        %v1186 = vmul.f32 %v1148, 0.25
        %v1187 = vmul.f32 %v1151, 0.25
        %v1188 = vmul.f32 %v1156, 0.25
        %v1189 = vmul.f32 %v1159, 0.25
        %v1190 = vmul.f32 %v1164, 0.25
        %v1191 = vmul.f32 %v1167, 0.25
        %v1192 = vmul.f32 %v1172, 0.25
        %v1193 = vmul.f32 %v1175, 0.25
        %v1194 = vpack.c.bf16 %v1179, %v1178
        %v1195 = vpack.c.bf16 %v1181, %v1180
        %v1196 = vpack.c.bf16 %v1183, %v1182
        %v1197 = vpack.c.bf16 %v1185, %v1184
        %v1198 = vpack.c.bf16 %v1187, %v1186
        %v1199 = vpack.c.bf16 %v1189, %v1188
        %v1200 = vpack.c.bf16 %v1191, %v1190
        %v1201 = vpack.c.bf16 %v1193, %v1192
        %v1202 = vld [vmem:[#allocation2] sm:$0xff]
        %v1203 = vld [vmem:[#allocation2 + $0x8] sm:$0xff]
        %v1204 = vld [vmem:[#allocation2 + $0x10] sm:$0xff]
        %v1205 = vld [vmem:[#allocation2 + $0x18] sm:$0xff]
        %v1206 = vld [vmem:[#allocation2 + $0x20] sm:$0xff]
        %v1207 = vld [vmem:[#allocation2 + $0x28] sm:$0xff]
        %v1208 = vld [vmem:[#allocation2 + $0x30] sm:$0xff]
        %v1209 = vld [vmem:[#allocation2 + $0x38] sm:$0xff]
        %v1210 = vld [vmem:[#allocation2 + $0x40] sm:$0xff]
        %v1211 = vld [vmem:[#allocation2 + $0x48] sm:$0xff]
        %v1212 = vld [vmem:[#allocation2 + $0x50] sm:$0xff]
        %v1213 = vld [vmem:[#allocation2 + $0x58] sm:$0xff]
        %v1214 = vld [vmem:[#allocation2 + $0x60] sm:$0xff]
        %v1215 = vld [vmem:[#allocation2 + $0x68] sm:$0xff]
        %v1216 = vld [vmem:[#allocation2 + $0x70] sm:$0xff]
        %v1217 = vld [vmem:[#allocation2 + $0x78] sm:$0xff]
        %v1218 = vld [vmem:[#allocation2 + $0x80] sm:$0xff]
        %v1219 = vld [vmem:[#allocation2 + $0x88] sm:$0xff]
        %v1220 = vld [vmem:[#allocation2 + $0x90] sm:$0xff]
        %v1221 = vld [vmem:[#allocation2 + $0x98] sm:$0xff]
        %v1222 = vld [vmem:[#allocation2 + $0xa0] sm:$0xff]
        %v1223 = vld [vmem:[#allocation2 + $0xa8] sm:$0xff]
        %v1224 = vld [vmem:[#allocation2 + $0xb0] sm:$0xff]
        %v1225 = vld [vmem:[#allocation2 + $0xb8] sm:$0xff]
        %v1226 = vld [vmem:[#allocation2 + $0xc0] sm:$0xff]
        %v1227 = vld [vmem:[#allocation2 + $0xc8] sm:$0xff]
        %v1228 = vld [vmem:[#allocation2 + $0xd0] sm:$0xff]
        %v1229 = vld [vmem:[#allocation2 + $0xd8] sm:$0xff]
        %v1230 = vld [vmem:[#allocation2 + $0xe0] sm:$0xff]
        %v1231 = vld [vmem:[#allocation2 + $0xe8] sm:$0xff]
        %v1232 = vld [vmem:[#allocation2 + $0xf0] sm:$0xff]
        %v1233 = vld [vmem:[#allocation2 + $0xf8] sm:$0xff]
        %v1234 = vld [vmem:[#allocation9] sm:$0xf]
        %v1235 = vld [vmem:[#allocation9 + $0x4] sm:$0xf]
        %v1236 = vld [vmem:[#allocation9 + $0x8] sm:$0xf]
        %v1237 = vld [vmem:[#allocation9 + $0xc] sm:$0xf]
        %v1238 = vld [vmem:[#allocation9 + $0x10] sm:$0xf]
        %v1239 = vld [vmem:[#allocation9 + $0x14] sm:$0xf]
        %v1240 = vld [vmem:[#allocation9 + $0x18] sm:$0xf]
        %v1241 = vld [vmem:[#allocation9 + $0x1c] sm:$0xf]
        %v1242 = vld [vmem:[#allocation9 + $0x20] sm:$0xf]
        %v1243 = vld [vmem:[#allocation9 + $0x24] sm:$0xf]
        %v1244 = vld [vmem:[#allocation9 + $0x28] sm:$0xf]
        %v1245 = vld [vmem:[#allocation9 + $0x2c] sm:$0xf]
        %v1246 = vld [vmem:[#allocation9 + $0x30] sm:$0xf]
        %v1247 = vld [vmem:[#allocation9 + $0x34] sm:$0xf]
        %v1248 = vld [vmem:[#allocation9 + $0x38] sm:$0xf]
        %v1249 = vld [vmem:[#allocation9 + $0x3c] sm:$0xf]
        %v1282 = vunpack.c.l.b16 %v1202
        %v1283 = vunpack.c.l.b16 %v1203
        %v1284 = vunpack.c.l.b16 %v1204
        %v1285 = vunpack.c.l.b16 %v1205
        %v1286 = vunpack.c.l.b16 %v1206
        %v1287 = vunpack.c.l.b16 %v1207
        %v1288 = vunpack.c.l.b16 %v1208
        %v1289 = vunpack.c.l.b16 %v1209
        %v1290 = vunpack.c.l.b16 %v1210
        %v1291 = vunpack.c.l.b16 %v1211
        %v1292 = vunpack.c.l.b16 %v1212
        %v1293 = vunpack.c.l.b16 %v1213
        %v1294 = vunpack.c.l.b16 %v1214
        %v1295 = vunpack.c.l.b16 %v1215
        %v1296 = vunpack.c.l.b16 %v1216
        %v1297 = vunpack.c.l.b16 %v1217
        %v1298 = vunpack.c.l.b16 %v1218
        %v1299 = vunpack.c.l.b16 %v1219
        %v1300 = vunpack.c.l.b16 %v1220
        %v1301 = vunpack.c.l.b16 %v1221
        %v1302 = vunpack.c.l.b16 %v1222
        %v1303 = vunpack.c.l.b16 %v1223
        %v1304 = vunpack.c.l.b16 %v1224
        %v1305 = vunpack.c.l.b16 %v1225
        %v1306 = vunpack.c.l.b16 %v1226
        %v1307 = vunpack.c.l.b16 %v1227
        %v1308 = vunpack.c.l.b16 %v1228
        %v1309 = vunpack.c.l.b16 %v1229
        %v1310 = vunpack.c.l.b16 %v1230
        %v1311 = vunpack.c.l.b16 %v1231
        %v1312 = vunpack.c.l.b16 %v1232
        %v1313 = vunpack.c.l.b16 %v1233
        %v1314 = vpack.c.b16 %v1283, %v1282
        %v1315 = vpack.c.b16 %v1285, %v1284
        %v1316 = vpack.c.b16 %v1287, %v1286
        %v1317 = vpack.c.b16 %v1289, %v1288
        %v1318 = vpack.c.b16 %v1291, %v1290
        %v1319 = vpack.c.b16 %v1293, %v1292
        %v1320 = vpack.c.b16 %v1295, %v1294
        %v1321 = vpack.c.b16 %v1297, %v1296
        %v1322 = vpack.c.b16 %v1299, %v1298
        %v1323 = vpack.c.b16 %v1301, %v1300
        %v1324 = vpack.c.b16 %v1303, %v1302
        %v1325 = vpack.c.b16 %v1305, %v1304
        %v1326 = vpack.c.b16 %v1307, %v1306
        %v1327 = vpack.c.b16 %v1309, %v1308
        %v1328 = vpack.c.b16 %v1311, %v1310
        %v1329 = vpack.c.b16 %v1313, %v1312
        %vm1330 = vcmask 130048
        %v1332 = vsel %vm1330, %v1194, 0
        %v1335 = vsel %vm1330, %v1195, 0
        %v1338 = vsel %vm1330, %v1196, 0
        %v1341 = vsel %vm1330, %v1197, 0
        %v1344 = vsel %vm1330, %v1198, 0
        %v1347 = vsel %vm1330, %v1199, 0
        %v1350 = vsel %vm1330, %v1200, 0
        %v1353 = vsel %vm1330, %v1201, 0
        %v1356 = vsel %vm1330, %v1314, 0
        %v1359 = vsel %vm1330, %v1315, 0
        %v1362 = vsel %vm1330, %v1316, 0
        %v1365 = vsel %vm1330, %v1317, 0
        %v1368 = vsel %vm1330, %v1318, 0
        %v1371 = vsel %vm1330, %v1319, 0
        %v1374 = vsel %vm1330, %v1320, 0
        %v1377 = vsel %vm1330, %v1321, 0
        %v1380 = vsel %vm1330, %v1322, 0
        %v1383 = vsel %vm1330, %v1323, 0
        %v1386 = vsel %vm1330, %v1324, 0
        %v1389 = vsel %vm1330, %v1325, 0
        %v1392 = vsel %vm1330, %v1326, 0
        %v1395 = vsel %vm1330, %v1327, 0
        %v1398 = vsel %vm1330, %v1328, 0
        %v1401 = vsel %vm1330, %v1329, 0
        %1403 = vmatprep.subr.bf16.mxu0 0
        %1404 = vmatpush1.bf16.xpose.msra.mxu0 %v1377
        %1405 = vmatprep.subr.bf16.mxu0 0
        %1406 = vmatpush1.bf16.xpose.msra.mxu0 %v1374
        %1407 = vmatprep.subr.bf16.mxu0 0
        %1408 = vmatpush1.bf16.xpose.msra.mxu0 %v1371
        %1409 = vmatprep.subr.bf16.mxu0 0
        %1410 = vmatpush1.bf16.xpose.msra.mxu0 %v1368
        %1411 = vmatprep.subr.bf16.mxu0 0
        %1412 = vmatpush1.bf16.xpose.msra.mxu0 %v1365
        %1413 = vmatprep.subr.bf16.mxu0 0
        %1414 = vmatpush1.bf16.xpose.msra.mxu0 %v1362
        %1415 = vmatprep.subr.bf16.mxu0 0
        %1416 = vmatpush1.bf16.xpose.msra.mxu0 %v1359
        %1417 = vmatprep.subr.bf16.mxu0 0
        %1418 = vmatpush1.bf16.xpose.msra.mxu0 %v1356
        %1419 = vmatprep.subr.bf16.mxu0 0
        %1420 = vmatpush2.bf16.xpose.msra.mxu0 %v1401
        %1421 = vmatprep.subr.bf16.mxu0 0
        %1422 = vmatpush2.bf16.xpose.msra.mxu0 %v1398
        %1423 = vmatprep.subr.bf16.mxu0 0
        %1424 = vmatpush2.bf16.xpose.msra.mxu0 %v1395
        %1425 = vmatprep.subr.bf16.mxu0 0
        %1426 = vmatpush2.bf16.xpose.msra.mxu0 %v1392
        %1427 = vmatprep.subr.bf16.mxu0 0
        %1428 = vmatpush2.bf16.xpose.msra.mxu0 %v1389
        %1429 = vmatprep.subr.bf16.mxu0 0
        %1430 = vmatpush2.bf16.xpose.msra.mxu0 %v1386
        %1431 = vmatprep.subr.bf16.mxu0 0
        %1432 = vmatpush2.bf16.xpose.msra.mxu0 %v1383
        %1433 = vmatprep.subr.bf16.mxu0 0
        %1434 = vmatpush2.bf16.xpose.msra.mxu0 %v1380
        %1435 = vmatprep.mubr.bf16.mxu0 0
        %1436 = vmatmul.mubr.bf16.gmra.mxu0 %v1332
        %v1437 = vpop.f32.mrf.mxu0
        %v1438 = vadd.f32 0.0, %v1437
        %v1439 = vpop.f32.mrf.mxu0
        %v1440 = vadd.f32 0.0, %v1439
        %v1441 = vpop.f32.mrf.mxu0
        %v1442 = vadd.f32 0.0, %v1441
        %v1443 = vpop.f32.mrf.mxu0
        %v1444 = vadd.f32 0.0, %v1443
        %1445 = vmatprep.mubr.bf16.mxu0 0
        %1446 = vmatmul.mubr.bf16.gmra.mxu0 %v1335
        %v1447 = vpop.f32.mrf.mxu0
        %v1448 = vadd.f32 0.0, %v1447
        %v1449 = vpop.f32.mrf.mxu0
        %v1450 = vadd.f32 0.0, %v1449
        %v1451 = vpop.f32.mrf.mxu0
        %v1452 = vadd.f32 0.0, %v1451
        %v1453 = vpop.f32.mrf.mxu0
        %v1454 = vadd.f32 0.0, %v1453
        %1455 = vmatprep.mubr.bf16.mxu0 0
        %1456 = vmatmul.mubr.bf16.gmra.mxu0 %v1338
        %v1457 = vpop.f32.mrf.mxu0
        %v1458 = vadd.f32 0.0, %v1457
        %v1459 = vpop.f32.mrf.mxu0
        %v1460 = vadd.f32 0.0, %v1459
        %v1461 = vpop.f32.mrf.mxu0
        %v1462 = vadd.f32 0.0, %v1461
        %v1463 = vpop.f32.mrf.mxu0
        %v1464 = vadd.f32 0.0, %v1463
        %1465 = vmatprep.mubr.bf16.mxu0 0
        %1466 = vmatmul.mubr.bf16.gmra.mxu0 %v1341
        %v1467 = vpop.f32.mrf.mxu0
        %v1468 = vadd.f32 0.0, %v1467
        %v1469 = vpop.f32.mrf.mxu0
        %v1470 = vadd.f32 0.0, %v1469
        %v1471 = vpop.f32.mrf.mxu0
        %v1472 = vadd.f32 0.0, %v1471
        %v1473 = vpop.f32.mrf.mxu0
        %v1474 = vadd.f32 0.0, %v1473
        %1475 = vmatprep.mubr.bf16.mxu0 0
        %1476 = vmatmul.mubr.bf16.gmra.mxu0 %v1344
        %v1477 = vpop.f32.mrf.mxu0
        %v1478 = vadd.f32 0.0, %v1477
        %v1479 = vpop.f32.mrf.mxu0
        %v1480 = vadd.f32 0.0, %v1479
        %v1481 = vpop.f32.mrf.mxu0
        %v1482 = vadd.f32 0.0, %v1481
        %v1483 = vpop.f32.mrf.mxu0
        %v1484 = vadd.f32 0.0, %v1483
        %1485 = vmatprep.mubr.bf16.mxu0 0
        %1486 = vmatmul.mubr.bf16.gmra.mxu0 %v1347
        %v1487 = vpop.f32.mrf.mxu0
        %v1488 = vadd.f32 0.0, %v1487
        %v1489 = vpop.f32.mrf.mxu0
        %v1490 = vadd.f32 0.0, %v1489
        %v1491 = vpop.f32.mrf.mxu0
        %v1492 = vadd.f32 0.0, %v1491
        %v1493 = vpop.f32.mrf.mxu0
        %v1494 = vadd.f32 0.0, %v1493
        %1495 = vmatprep.mubr.bf16.mxu0 0
        %1496 = vmatmul.mubr.bf16.gmra.mxu0 %v1350
        %v1497 = vpop.f32.mrf.mxu0
        %v1498 = vadd.f32 0.0, %v1497
        %v1499 = vpop.f32.mrf.mxu0
        %v1500 = vadd.f32 0.0, %v1499
        %v1501 = vpop.f32.mrf.mxu0
        %v1502 = vadd.f32 0.0, %v1501
        %v1503 = vpop.f32.mrf.mxu0
        %v1504 = vadd.f32 0.0, %v1503
        %1505 = vmatprep.mubr.bf16.mxu0 0
        %1506 = vmatmul.mubr.bf16.gmra.mxu0 %v1353
        %v1507 = vpop.f32.mrf.mxu0
        %v1508 = vadd.f32 0.0, %v1507
        %v1509 = vpop.f32.mrf.mxu0
        %v1510 = vadd.f32 0.0, %v1509
        %v1511 = vpop.f32.mrf.mxu0
        %v1512 = vadd.f32 0.0, %v1511
        %v1513 = vpop.f32.mrf.mxu0
        %v1514 = vadd.f32 0.0, %v1513
        %1515 = vdwg.mxu0
        %v1516 = vmax.f32 %v1438, %v1440
        %1517 = vmax.xlane.f32.xlu0 %v1516
        %v1518 = vpop.xlane.xlu0 %1517
        %v1519 = vmax.f32 %v1442, %v1444
        %1520 = vmax.xlane.f32.xlu0 %v1519
        %v1521 = vpop.xlane.xlu0 %1520
        %v1522 = vmax.f32 %v1448, %v1450
        %1523 = vmax.xlane.f32.xlu0 %v1522
        %v1524 = vpop.xlane.xlu0 %1523
        %v1525 = vmax.f32 %v1452, %v1454
        %1526 = vmax.xlane.f32.xlu0 %v1525
        %v1527 = vpop.xlane.xlu0 %1526
        %v1528 = vmax.f32 %v1458, %v1460
        %1529 = vmax.xlane.f32.xlu0 %v1528
        %v1530 = vpop.xlane.xlu0 %1529
        %v1531 = vmax.f32 %v1462, %v1464
        %1532 = vmax.xlane.f32.xlu0 %v1531
        %v1533 = vpop.xlane.xlu0 %1532
        %v1534 = vmax.f32 %v1468, %v1470
        %1535 = vmax.xlane.f32.xlu0 %v1534
        %v1536 = vpop.xlane.xlu0 %1535
        %v1537 = vmax.f32 %v1472, %v1474
        %1538 = vmax.xlane.f32.xlu0 %v1537
        %v1539 = vpop.xlane.xlu0 %1538
        %v1540 = vmax.f32 %v1478, %v1480
        %1541 = vmax.xlane.f32.xlu0 %v1540
        %v1542 = vpop.xlane.xlu0 %1541
        %v1543 = vmax.f32 %v1482, %v1484
        %1544 = vmax.xlane.f32.xlu0 %v1543
        %v1545 = vpop.xlane.xlu0 %1544
        %v1546 = vmax.f32 %v1488, %v1490
        %1547 = vmax.xlane.f32.xlu0 %v1546
        %v1548 = vpop.xlane.xlu0 %1547
        %v1549 = vmax.f32 %v1492, %v1494
        %1550 = vmax.xlane.f32.xlu0 %v1549
        %v1551 = vpop.xlane.xlu0 %1550
        %v1552 = vmax.f32 %v1498, %v1500
        %1553 = vmax.xlane.f32.xlu0 %v1552
        %v1554 = vpop.xlane.xlu0 %1553
        %v1555 = vmax.f32 %v1502, %v1504
        %1556 = vmax.xlane.f32.xlu0 %v1555
        %v1557 = vpop.xlane.xlu0 %1556
        %v1558 = vmax.f32 %v1508, %v1510
        %1559 = vmax.xlane.f32.xlu0 %v1558
        %v1560 = vpop.xlane.xlu0 %1559
        %v1561 = vmax.f32 %v1512, %v1514
        %1562 = vmax.xlane.f32.xlu0 %v1561
        %v1563 = vpop.xlane.xlu0 %1562
        %v1564 = vsub.f32 %v1438, %v1518
        %v1565 = vsub.f32 %v1440, %v1518
        %v1566 = vsub.f32 %v1442, %v1521
        %v1567 = vsub.f32 %v1444, %v1521
        %v1568 = vsub.f32 %v1448, %v1524
        %v1569 = vsub.f32 %v1450, %v1524
        %v1570 = vsub.f32 %v1452, %v1527
        %v1571 = vsub.f32 %v1454, %v1527
        %v1572 = vsub.f32 %v1458, %v1530
        %v1573 = vsub.f32 %v1460, %v1530
        %v1574 = vsub.f32 %v1462, %v1533
        %v1575 = vsub.f32 %v1464, %v1533
        %v1576 = vsub.f32 %v1468, %v1536
        %v1577 = vsub.f32 %v1470, %v1536
        %v1578 = vsub.f32 %v1472, %v1539
        %v1579 = vsub.f32 %v1474, %v1539
        %v1580 = vsub.f32 %v1478, %v1542
        %v1581 = vsub.f32 %v1480, %v1542
        %v1582 = vsub.f32 %v1482, %v1545
        %v1583 = vsub.f32 %v1484, %v1545
        %v1584 = vsub.f32 %v1488, %v1548
        %v1585 = vsub.f32 %v1490, %v1548
        %v1586 = vsub.f32 %v1492, %v1551
        %v1587 = vsub.f32 %v1494, %v1551
        %v1588 = vsub.f32 %v1498, %v1554
        %v1589 = vsub.f32 %v1500, %v1554
        %v1590 = vsub.f32 %v1502, %v1557
        %v1591 = vsub.f32 %v1504, %v1557
        %v1592 = vsub.f32 %v1508, %v1560
        %v1593 = vsub.f32 %v1510, %v1560
        %v1594 = vsub.f32 %v1512, %v1563
        %v1595 = vsub.f32 %v1514, %v1563
        %v1596 = vmul.f32 %v1564, 1.442695
        %v1597 = vpow.pop %v1596
        %v1598 = vmul.f32 %v1565, 1.442695
        %v1599 = vpow.pop %v1598
        %v1600 = vmul.f32 %v1566, 1.442695
        %v1601 = vpow.pop %v1600
        %v1602 = vmul.f32 %v1567, 1.442695
        %v1603 = vpow.pop %v1602
        %v1604 = vmul.f32 %v1568, 1.442695
        %v1605 = vpow.pop %v1604
        %v1606 = vmul.f32 %v1569, 1.442695
        %v1607 = vpow.pop %v1606
        %v1608 = vmul.f32 %v1570, 1.442695
        %v1609 = vpow.pop %v1608
        %v1610 = vmul.f32 %v1571, 1.442695
        %v1611 = vpow.pop %v1610
        %v1612 = vmul.f32 %v1572, 1.442695
        %v1613 = vpow.pop %v1612
        %v1614 = vmul.f32 %v1573, 1.442695
        %v1615 = vpow.pop %v1614
        %v1616 = vmul.f32 %v1574, 1.442695
        %v1617 = vpow.pop %v1616
        %v1618 = vmul.f32 %v1575, 1.442695
        %v1619 = vpow.pop %v1618
        %v1620 = vmul.f32 %v1576, 1.442695
        %v1621 = vpow.pop %v1620
        %v1622 = vmul.f32 %v1577, 1.442695
        %v1623 = vpow.pop %v1622
        %v1624 = vmul.f32 %v1578, 1.442695
        %v1625 = vpow.pop %v1624
        %v1626 = vmul.f32 %v1579, 1.442695
        %v1627 = vpow.pop %v1626
        %v1628 = vmul.f32 %v1580, 1.442695
        %v1629 = vpow.pop %v1628
        %v1630 = vmul.f32 %v1581, 1.442695
        %v1631 = vpow.pop %v1630
        %v1632 = vmul.f32 %v1582, 1.442695
        %v1633 = vpow.pop %v1632
        %v1634 = vmul.f32 %v1583, 1.442695
        %v1635 = vpow.pop %v1634
        %v1636 = vmul.f32 %v1584, 1.442695
        %v1637 = vpow.pop %v1636
        %v1638 = vmul.f32 %v1585, 1.442695
        %v1639 = vpow.pop %v1638
        %v1640 = vmul.f32 %v1586, 1.442695
        %v1641 = vpow.pop %v1640
        %v1642 = vmul.f32 %v1587, 1.442695
        %v1643 = vpow.pop %v1642
        %v1644 = vmul.f32 %v1588, 1.442695
        %v1645 = vpow.pop %v1644
        %v1646 = vmul.f32 %v1589, 1.442695
        %v1647 = vpow.pop %v1646
        %v1648 = vmul.f32 %v1590, 1.442695
        %v1649 = vpow.pop %v1648
        %v1650 = vmul.f32 %v1591, 1.442695
        %v1651 = vpow.pop %v1650
        %v1652 = vmul.f32 %v1592, 1.442695
        %v1653 = vpow.pop %v1652
        %v1654 = vmul.f32 %v1593, 1.442695
        %v1655 = vpow.pop %v1654
        %v1656 = vmul.f32 %v1594, 1.442695
        %v1657 = vpow.pop %v1656
        %v1658 = vmul.f32 %v1595, 1.442695
        %v1659 = vpow.pop %v1658
        %v1660 = vadd.f32 %v1597, %v1599
        %1661 = vadd.xlane.f32.xlu0 %v1660
        %v1662 = vpop.xlane.xlu0 %1661
        %v1663 = vadd.f32 %v1601, %v1603
        %1664 = vadd.xlane.f32.xlu0 %v1663
        %v1665 = vpop.xlane.xlu0 %1664
        %v1666 = vadd.f32 %v1605, %v1607
        %1667 = vadd.xlane.f32.xlu0 %v1666
        %v1668 = vpop.xlane.xlu0 %1667
        %v1669 = vadd.f32 %v1609, %v1611
        %1670 = vadd.xlane.f32.xlu0 %v1669
        %v1671 = vpop.xlane.xlu0 %1670
        %v1672 = vadd.f32 %v1613, %v1615
        %1673 = vadd.xlane.f32.xlu0 %v1672
        %v1674 = vpop.xlane.xlu0 %1673
        %v1675 = vadd.f32 %v1617, %v1619
        %1676 = vadd.xlane.f32.xlu0 %v1675
        %v1677 = vpop.xlane.xlu0 %1676
        %v1678 = vadd.f32 %v1621, %v1623
        %1679 = vadd.xlane.f32.xlu0 %v1678
        %v1680 = vpop.xlane.xlu0 %1679
        %v1681 = vadd.f32 %v1625, %v1627
        %1682 = vadd.xlane.f32.xlu0 %v1681
        %v1683 = vpop.xlane.xlu0 %1682
        %v1684 = vadd.f32 %v1629, %v1631
        %1685 = vadd.xlane.f32.xlu0 %v1684
        %v1686 = vpop.xlane.xlu0 %1685
        %v1687 = vadd.f32 %v1633, %v1635
        %1688 = vadd.xlane.f32.xlu0 %v1687
        %v1689 = vpop.xlane.xlu0 %1688
        %v1690 = vadd.f32 %v1637, %v1639
        %1691 = vadd.xlane.f32.xlu0 %v1690
        %v1692 = vpop.xlane.xlu0 %1691
        %v1693 = vadd.f32 %v1641, %v1643
        %1694 = vadd.xlane.f32.xlu0 %v1693
        %v1695 = vpop.xlane.xlu0 %1694
        %v1696 = vadd.f32 %v1645, %v1647
        %1697 = vadd.xlane.f32.xlu0 %v1696
        %v1698 = vpop.xlane.xlu0 %1697
        %v1699 = vadd.f32 %v1649, %v1651
        %1700 = vadd.xlane.f32.xlu0 %v1699
        %v1701 = vpop.xlane.xlu0 %1700
        %v1702 = vadd.f32 %v1653, %v1655
        %1703 = vadd.xlane.f32.xlu0 %v1702
        %v1704 = vpop.xlane.xlu0 %1703
        %v1705 = vadd.f32 %v1657, %v1659
        %1706 = vadd.xlane.f32.xlu0 %v1705
        %v1707 = vpop.xlane.xlu0 %1706
        %v1708 = vpack.c.bf16 %v1601, %v1597
        %v1709 = vpack.c.bf16 %v1603, %v1599
        %v1710 = vpack.c.bf16 %v1609, %v1605
        %v1711 = vpack.c.bf16 %v1611, %v1607
        %v1712 = vpack.c.bf16 %v1617, %v1613
        %v1713 = vpack.c.bf16 %v1619, %v1615
        %v1714 = vpack.c.bf16 %v1625, %v1621
        %v1715 = vpack.c.bf16 %v1627, %v1623
        %v1716 = vpack.c.bf16 %v1633, %v1629
        %v1717 = vpack.c.bf16 %v1635, %v1631
        %v1718 = vpack.c.bf16 %v1641, %v1637
        %v1719 = vpack.c.bf16 %v1643, %v1639
        %v1720 = vpack.c.bf16 %v1649, %v1645
        %v1721 = vpack.c.bf16 %v1651, %v1647
        %v1722 = vpack.c.bf16 %v1657, %v1653
        %v1723 = vpack.c.bf16 %v1659, %v1655
        %v1724 = vunpack.c.h.b16 %v1202
        %v1725 = vunpack.c.h.b16 %v1203
        %v1726 = vunpack.c.h.b16 %v1204
        %v1727 = vunpack.c.h.b16 %v1205
        %v1728 = vunpack.c.h.b16 %v1206
        %v1729 = vunpack.c.h.b16 %v1207
        %v1730 = vunpack.c.h.b16 %v1208
        %v1731 = vunpack.c.h.b16 %v1209
        %v1732 = vunpack.c.h.b16 %v1210
        %v1733 = vunpack.c.h.b16 %v1211
        %v1734 = vunpack.c.h.b16 %v1212
        %v1735 = vunpack.c.h.b16 %v1213
        %v1736 = vunpack.c.h.b16 %v1214
        %v1737 = vunpack.c.h.b16 %v1215
        %v1738 = vunpack.c.h.b16 %v1216
        %v1739 = vunpack.c.h.b16 %v1217
        %v1740 = vunpack.c.h.b16 %v1218
        %v1741 = vunpack.c.h.b16 %v1219
        %v1742 = vunpack.c.h.b16 %v1220
        %v1743 = vunpack.c.h.b16 %v1221
        %v1744 = vunpack.c.h.b16 %v1222
        %v1745 = vunpack.c.h.b16 %v1223
        %v1746 = vunpack.c.h.b16 %v1224
        %v1747 = vunpack.c.h.b16 %v1225
        %v1748 = vunpack.c.h.b16 %v1226
        %v1749 = vunpack.c.h.b16 %v1227
        %v1750 = vunpack.c.h.b16 %v1228
        %v1751 = vunpack.c.h.b16 %v1229
        %v1752 = vunpack.c.h.b16 %v1230
        %v1753 = vunpack.c.h.b16 %v1231
        %v1754 = vunpack.c.h.b16 %v1232
        %v1755 = vunpack.c.h.b16 %v1233
        %v1756 = vpack.c.b16 %v1725, %v1724
        %v1757 = vpack.c.b16 %v1727, %v1726
        %v1758 = vpack.c.b16 %v1729, %v1728
        %v1759 = vpack.c.b16 %v1731, %v1730
        %v1760 = vpack.c.b16 %v1733, %v1732
        %v1761 = vpack.c.b16 %v1735, %v1734
        %v1762 = vpack.c.b16 %v1737, %v1736
        %v1763 = vpack.c.b16 %v1739, %v1738
        %v1764 = vpack.c.b16 %v1741, %v1740
        %v1765 = vpack.c.b16 %v1743, %v1742
        %v1766 = vpack.c.b16 %v1745, %v1744
        %v1767 = vpack.c.b16 %v1747, %v1746
        %v1768 = vpack.c.b16 %v1749, %v1748
        %v1769 = vpack.c.b16 %v1751, %v1750
        %v1770 = vpack.c.b16 %v1753, %v1752
        %v1771 = vpack.c.b16 %v1755, %v1754
        %1788 = vmatprep.subr.bf16.mxu0 0
        %1789 = vmatpush1.bf16.msra.mxu0 %v1763
        %1790 = vmatprep.subr.bf16.mxu0 0
        %1791 = vmatpush1.bf16.msra.mxu0 %v1762
        %1792 = vmatprep.subr.bf16.mxu0 0
        %1793 = vmatpush1.bf16.msra.mxu0 %v1761
        %1794 = vmatprep.subr.bf16.mxu0 0
        %1795 = vmatpush1.bf16.msra.mxu0 %v1760
        %1796 = vmatprep.subr.bf16.mxu0 0
        %1797 = vmatpush1.bf16.msra.mxu0 %v1759
        %1798 = vmatprep.subr.bf16.mxu0 0
        %1799 = vmatpush1.bf16.msra.mxu0 %v1758
        %1800 = vmatprep.subr.bf16.mxu0 0
        %1801 = vmatpush1.bf16.msra.mxu0 %v1757
        %1802 = vmatprep.subr.bf16.mxu0 0
        %1803 = vmatpush1.bf16.msra.mxu0 %v1756
        %1804 = vmatprep.subr.bf16.mxu0 0
        %1805 = vmatpush2.bf16.msra.mxu0 %v1771
        %1806 = vmatprep.subr.bf16.mxu0 0
        %1807 = vmatpush2.bf16.msra.mxu0 %v1770
        %1808 = vmatprep.subr.bf16.mxu0 0
        %1809 = vmatpush2.bf16.msra.mxu0 %v1769
        %1810 = vmatprep.subr.bf16.mxu0 0
        %1811 = vmatpush2.bf16.msra.mxu0 %v1768
        %1812 = vmatprep.subr.bf16.mxu0 0
        %1813 = vmatpush2.bf16.msra.mxu0 %v1767
        %1814 = vmatprep.subr.bf16.mxu0 0
        %1815 = vmatpush2.bf16.msra.mxu0 %v1766
        %1816 = vmatprep.subr.bf16.mxu0 0
        %1817 = vmatpush2.bf16.msra.mxu0 %v1765
        %1818 = vmatprep.subr.bf16.mxu0 0
        %1819 = vmatpush2.bf16.msra.mxu0 %v1764
        %1820 = vmatprep.mubr.bf16.mxu0 %v1709
        %1821 = vmatmul.mubr.bf16.gmra.mxu0 %v1708
        %v1822 = vpop.f32.mrf.mxu0
        %v1823 = vadd.f32 0.0, %v1822
        %v1824 = vpop.f32.mrf.mxu0
        %v1825 = vpop.f32.mrf.mxu0
        %v1826 = vadd.f32 0.0, %v1825
        %v1827 = vpop.f32.mrf.mxu0
        %1828 = vmatprep.mubr.bf16.mxu0 %v1711
        %1829 = vmatmul.mubr.bf16.gmra.mxu0 %v1710
        %v1830 = vpop.f32.mrf.mxu0
        %v1831 = vadd.f32 0.0, %v1830
        %v1832 = vpop.f32.mrf.mxu0
        %v1833 = vpop.f32.mrf.mxu0
        %v1834 = vadd.f32 0.0, %v1833
        %v1835 = vpop.f32.mrf.mxu0
        %1836 = vmatprep.mubr.bf16.mxu0 %v1713
        %1837 = vmatmul.mubr.bf16.gmra.mxu0 %v1712
        %v1838 = vpop.f32.mrf.mxu0
        %v1839 = vadd.f32 0.0, %v1838
        %v1840 = vpop.f32.mrf.mxu0
        %v1841 = vpop.f32.mrf.mxu0
        %v1842 = vadd.f32 0.0, %v1841
        %v1843 = vpop.f32.mrf.mxu0
        %1844 = vmatprep.mubr.bf16.mxu0 %v1715
        %1845 = vmatmul.mubr.bf16.gmra.mxu0 %v1714
        %v1846 = vpop.f32.mrf.mxu0
        %v1847 = vadd.f32 0.0, %v1846
        %v1848 = vpop.f32.mrf.mxu0
        %v1849 = vpop.f32.mrf.mxu0
        %v1850 = vadd.f32 0.0, %v1849
        %v1851 = vpop.f32.mrf.mxu0
        %1852 = vmatprep.mubr.bf16.mxu0 %v1717
        %1853 = vmatmul.mubr.bf16.gmra.mxu0 %v1716
        %v1854 = vpop.f32.mrf.mxu0
        %v1855 = vadd.f32 0.0, %v1854
        %v1856 = vpop.f32.mrf.mxu0
        %v1857 = vpop.f32.mrf.mxu0
        %v1858 = vadd.f32 0.0, %v1857
        %v1859 = vpop.f32.mrf.mxu0
        %1860 = vmatprep.mubr.bf16.mxu0 %v1719
        %1861 = vmatmul.mubr.bf16.gmra.mxu0 %v1718
        %v1862 = vpop.f32.mrf.mxu0
        %v1863 = vadd.f32 0.0, %v1862
        %v1864 = vpop.f32.mrf.mxu0
        %v1865 = vpop.f32.mrf.mxu0
        %v1866 = vadd.f32 0.0, %v1865
        %v1867 = vpop.f32.mrf.mxu0
        %1868 = vmatprep.mubr.bf16.mxu0 %v1721
        %1869 = vmatmul.mubr.bf16.gmra.mxu0 %v1720
        %v1870 = vpop.f32.mrf.mxu0
        %v1871 = vadd.f32 0.0, %v1870
        %v1872 = vpop.f32.mrf.mxu0
        %v1873 = vpop.f32.mrf.mxu0
        %v1874 = vadd.f32 0.0, %v1873
        %v1875 = vpop.f32.mrf.mxu0
        %1876 = vmatprep.mubr.bf16.mxu0 %v1723
        %1877 = vmatmul.mubr.bf16.gmra.mxu0 %v1722
        %v1878 = vpop.f32.mrf.mxu0
        %v1879 = vadd.f32 0.0, %v1878
        %v1880 = vpop.f32.mrf.mxu0
        %v1881 = vpop.f32.mrf.mxu0
        %v1882 = vadd.f32 0.0, %v1881
        %v1883 = vpop.f32.mrf.mxu0
        %1884 = vdwg.mxu0
        %v1885 = vrcp.pop %v1662
        %v1886 = vrcp.pop %v1665
        %v1887 = vrcp.pop %v1668
        %v1888 = vrcp.pop %v1671
        %v1889 = vrcp.pop %v1674
        %v1890 = vrcp.pop %v1677
        %v1891 = vrcp.pop %v1680
        %v1892 = vrcp.pop %v1683
        %v1893 = vrcp.pop %v1686
        %v1894 = vrcp.pop %v1689
        %v1895 = vrcp.pop %v1692
        %v1896 = vrcp.pop %v1695
        %v1897 = vrcp.pop %v1698
        %v1898 = vrcp.pop %v1701
        %v1899 = vrcp.pop %v1704
        %v1900 = vrcp.pop %v1707
        %v1901 = vmul.f32 %v1823, %v1885
        %v1902 = vmul.f32 %v1826, %v1886
        %v1903 = vmul.f32 %v1831, %v1887
        %v1904 = vmul.f32 %v1834, %v1888
        %v1905 = vmul.f32 %v1839, %v1889
        %v1906 = vmul.f32 %v1842, %v1890
        %v1907 = vmul.f32 %v1847, %v1891
        %v1908 = vmul.f32 %v1850, %v1892
        %v1909 = vmul.f32 %v1855, %v1893
        %v1910 = vmul.f32 %v1858, %v1894
        %v1911 = vmul.f32 %v1863, %v1895
        %v1912 = vmul.f32 %v1866, %v1896
        %v1913 = vmul.f32 %v1871, %v1897
        %v1914 = vmul.f32 %v1874, %v1898
        %v1915 = vmul.f32 %v1879, %v1899
        %v1916 = vmul.f32 %v1882, %v1900
        %v1917 = vpack.c.bf16 %v1902, %v1901
        %v1918 = vpack.c.bf16 %v1904, %v1903
        %v1919 = vpack.c.bf16 %v1906, %v1905
        %v1920 = vpack.c.bf16 %v1908, %v1907
        %v1921 = vpack.c.bf16 %v1910, %v1909
        %v1922 = vpack.c.bf16 %v1912, %v1911
        %v1923 = vpack.c.bf16 %v1914, %v1913
        %v1924 = vpack.c.bf16 %v1916, %v1915
        %1933 = vrot.lane.b32.xlu0 %v1194, 112
        %v1934 = vpop.permute.xlu0 %1933
        %1935 = vrot.lane.b32.xlu0 %v1195, 112
        %v1936 = vpop.permute.xlu0 %1935
        %1937 = vrot.lane.b32.xlu0 %v1196, 112
        %v1938 = vpop.permute.xlu0 %1937
        %1939 = vrot.lane.b32.xlu0 %v1197, 112
        %v1940 = vpop.permute.xlu0 %1939
        %1941 = vrot.lane.b32.xlu0 %v1198, 112
        %v1942 = vpop.permute.xlu0 %1941
        %1943 = vrot.lane.b32.xlu0 %v1199, 112
        %v1944 = vpop.permute.xlu0 %1943
        %1945 = vrot.lane.b32.xlu0 %v1200, 112
        %v1946 = vpop.permute.xlu0 %1945
        %1947 = vrot.lane.b32.xlu0 %v1201, 112
        %v1948 = vpop.permute.xlu0 %1947
        %1949 = vrot.lane.b32.xlu0 %v1314, 112
        %v1950 = vpop.permute.xlu0 %1949
        %1951 = vrot.lane.b32.xlu0 %v1315, 112
        %v1952 = vpop.permute.xlu0 %1951
        %1953 = vrot.lane.b32.xlu0 %v1316, 112
        %v1954 = vpop.permute.xlu0 %1953
        %1955 = vrot.lane.b32.xlu0 %v1317, 112
        %v1956 = vpop.permute.xlu0 %1955
        %1957 = vrot.lane.b32.xlu0 %v1318, 112
        %v1958 = vpop.permute.xlu0 %1957
        %1959 = vrot.lane.b32.xlu0 %v1319, 112
        %v1960 = vpop.permute.xlu0 %1959
        %1961 = vrot.lane.b32.xlu0 %v1320, 112
        %v1962 = vpop.permute.xlu0 %1961
        %1963 = vrot.lane.b32.xlu0 %v1321, 112
        %v1964 = vpop.permute.xlu0 %1963
        %1965 = vrot.lane.b32.xlu0 %v1322, 112
        %v1966 = vpop.permute.xlu0 %1965
        %1967 = vrot.lane.b32.xlu0 %v1323, 112
        %v1968 = vpop.permute.xlu0 %1967
        %1969 = vrot.lane.b32.xlu0 %v1324, 112
        %v1970 = vpop.permute.xlu0 %1969
        %1971 = vrot.lane.b32.xlu0 %v1325, 112
        %v1972 = vpop.permute.xlu0 %1971
        %1973 = vrot.lane.b32.xlu0 %v1326, 112
        %v1974 = vpop.permute.xlu0 %1973
        %1975 = vrot.lane.b32.xlu0 %v1327, 112
        %v1976 = vpop.permute.xlu0 %1975
        %1977 = vrot.lane.b32.xlu0 %v1328, 112
        %v1978 = vpop.permute.xlu0 %1977
        %1979 = vrot.lane.b32.xlu0 %v1329, 112
        %v1980 = vpop.permute.xlu0 %1979
        %v1982 = vsel %vm1330, %v1934, 0
        %v1985 = vsel %vm1330, %v1936, 0
        %v1988 = vsel %vm1330, %v1938, 0
        %v1991 = vsel %vm1330, %v1940, 0
        %v1994 = vsel %vm1330, %v1942, 0
        %v1997 = vsel %vm1330, %v1944, 0
        %v2000 = vsel %vm1330, %v1946, 0
        %v2003 = vsel %vm1330, %v1948, 0
        %v2006 = vsel %vm1330, %v1950, 0
        %v2009 = vsel %vm1330, %v1952, 0
        %v2012 = vsel %vm1330, %v1954, 0
        %v2015 = vsel %vm1330, %v1956, 0
        %v2018 = vsel %vm1330, %v1958, 0
        %v2021 = vsel %vm1330, %v1960, 0
        %v2024 = vsel %vm1330, %v1962, 0
        %v2027 = vsel %vm1330, %v1964, 0
        %v2030 = vsel %vm1330, %v1966, 0
        %v2033 = vsel %vm1330, %v1968, 0
        %v2036 = vsel %vm1330, %v1970, 0
        %v2039 = vsel %vm1330, %v1972, 0
        %v2042 = vsel %vm1330, %v1974, 0
        %v2045 = vsel %vm1330, %v1976, 0
        %v2048 = vsel %vm1330, %v1978, 0
        %v2051 = vsel %vm1330, %v1980, 0
        %2053 = vmatprep.subr.bf16.mxu0 0
        %2054 = vmatpush1.bf16.xpose.msra.mxu0 %v2027
        %2055 = vmatprep.subr.bf16.mxu0 0
        %2056 = vmatpush1.bf16.xpose.msra.mxu0 %v2024
        %2057 = vmatprep.subr.bf16.mxu0 0
        %2058 = vmatpush1.bf16.xpose.msra.mxu0 %v2021
        %2059 = vmatprep.subr.bf16.mxu0 0
        %2060 = vmatpush1.bf16.xpose.msra.mxu0 %v2018
        %2061 = vmatprep.subr.bf16.mxu0 0
        %2062 = vmatpush1.bf16.xpose.msra.mxu0 %v2015
        %2063 = vmatprep.subr.bf16.mxu0 0
        %2064 = vmatpush1.bf16.xpose.msra.mxu0 %v2012
        %2065 = vmatprep.subr.bf16.mxu0 0
        %2066 = vmatpush1.bf16.xpose.msra.mxu0 %v2009
        %2067 = vmatprep.subr.bf16.mxu0 0
        %2068 = vmatpush1.bf16.xpose.msra.mxu0 %v2006
        %2069 = vmatprep.subr.bf16.mxu0 0
        %2070 = vmatpush2.bf16.xpose.msra.mxu0 %v2051
        %2071 = vmatprep.subr.bf16.mxu0 0
        %2072 = vmatpush2.bf16.xpose.msra.mxu0 %v2048
        %2073 = vmatprep.subr.bf16.mxu0 0
        %2074 = vmatpush2.bf16.xpose.msra.mxu0 %v2045
        %2075 = vmatprep.subr.bf16.mxu0 0
        %2076 = vmatpush2.bf16.xpose.msra.mxu0 %v2042
        %2077 = vmatprep.subr.bf16.mxu0 0
        %2078 = vmatpush2.bf16.xpose.msra.mxu0 %v2039
        %2079 = vmatprep.subr.bf16.mxu0 0
        %2080 = vmatpush2.bf16.xpose.msra.mxu0 %v2036
        %2081 = vmatprep.subr.bf16.mxu0 0
        %2082 = vmatpush2.bf16.xpose.msra.mxu0 %v2033
        %2083 = vmatprep.subr.bf16.mxu0 0
        %2084 = vmatpush2.bf16.xpose.msra.mxu0 %v2030
        %2085 = vmatprep.mubr.bf16.mxu0 0
        %2086 = vmatmul.mubr.bf16.gmra.mxu0 %v1982
        %v2087 = vpop.f32.mrf.mxu0
        %v2088 = vadd.f32 0.0, %v2087
        %v2089 = vpop.f32.mrf.mxu0
        %v2090 = vadd.f32 0.0, %v2089
        %v2091 = vpop.f32.mrf.mxu0
        %v2092 = vadd.f32 0.0, %v2091
        %v2093 = vpop.f32.mrf.mxu0
        %v2094 = vadd.f32 0.0, %v2093
        %2095 = vmatprep.mubr.bf16.mxu0 0
        %2096 = vmatmul.mubr.bf16.gmra.mxu0 %v1985
        %v2097 = vpop.f32.mrf.mxu0
        %v2098 = vadd.f32 0.0, %v2097
        %v2099 = vpop.f32.mrf.mxu0
        %v2100 = vadd.f32 0.0, %v2099
        %v2101 = vpop.f32.mrf.mxu0
        %v2102 = vadd.f32 0.0, %v2101
        %v2103 = vpop.f32.mrf.mxu0
        %v2104 = vadd.f32 0.0, %v2103
        %2105 = vmatprep.mubr.bf16.mxu0 0
        %2106 = vmatmul.mubr.bf16.gmra.mxu0 %v1988
        %v2107 = vpop.f32.mrf.mxu0
        %v2108 = vadd.f32 0.0, %v2107
        %v2109 = vpop.f32.mrf.mxu0
        %v2110 = vadd.f32 0.0, %v2109
        %v2111 = vpop.f32.mrf.mxu0
        %v2112 = vadd.f32 0.0, %v2111
        %v2113 = vpop.f32.mrf.mxu0
        %v2114 = vadd.f32 0.0, %v2113
        %2115 = vmatprep.mubr.bf16.mxu0 0
        %2116 = vmatmul.mubr.bf16.gmra.mxu0 %v1991
        %v2117 = vpop.f32.mrf.mxu0
        %v2118 = vadd.f32 0.0, %v2117
        %v2119 = vpop.f32.mrf.mxu0
        %v2120 = vadd.f32 0.0, %v2119
        %v2121 = vpop.f32.mrf.mxu0
        %v2122 = vadd.f32 0.0, %v2121
        %v2123 = vpop.f32.mrf.mxu0
        %v2124 = vadd.f32 0.0, %v2123
        %2125 = vmatprep.mubr.bf16.mxu0 0
        %2126 = vmatmul.mubr.bf16.gmra.mxu0 %v1994
        %v2127 = vpop.f32.mrf.mxu0
        %v2128 = vadd.f32 0.0, %v2127
        %v2129 = vpop.f32.mrf.mxu0
        %v2130 = vadd.f32 0.0, %v2129
        %v2131 = vpop.f32.mrf.mxu0
        %v2132 = vadd.f32 0.0, %v2131
        %v2133 = vpop.f32.mrf.mxu0
        %v2134 = vadd.f32 0.0, %v2133
        %2135 = vmatprep.mubr.bf16.mxu0 0
        %2136 = vmatmul.mubr.bf16.gmra.mxu0 %v1997
        %v2137 = vpop.f32.mrf.mxu0
        %v2138 = vadd.f32 0.0, %v2137
        %v2139 = vpop.f32.mrf.mxu0
        %v2140 = vadd.f32 0.0, %v2139
        %v2141 = vpop.f32.mrf.mxu0
        %v2142 = vadd.f32 0.0, %v2141
        %v2143 = vpop.f32.mrf.mxu0
        %v2144 = vadd.f32 0.0, %v2143
        %2145 = vmatprep.mubr.bf16.mxu0 0
        %2146 = vmatmul.mubr.bf16.gmra.mxu0 %v2000
        %v2147 = vpop.f32.mrf.mxu0
        %v2148 = vadd.f32 0.0, %v2147
        %v2149 = vpop.f32.mrf.mxu0
        %v2150 = vadd.f32 0.0, %v2149
        %v2151 = vpop.f32.mrf.mxu0
        %v2152 = vadd.f32 0.0, %v2151
        %v2153 = vpop.f32.mrf.mxu0
        %v2154 = vadd.f32 0.0, %v2153
        %2155 = vmatprep.mubr.bf16.mxu0 0
        %2156 = vmatmul.mubr.bf16.gmra.mxu0 %v2003
        %v2157 = vpop.f32.mrf.mxu0
        %v2158 = vadd.f32 0.0, %v2157
        %v2159 = vpop.f32.mrf.mxu0
        %v2160 = vadd.f32 0.0, %v2159
        %v2161 = vpop.f32.mrf.mxu0
        %v2162 = vadd.f32 0.0, %v2161
        %v2163 = vpop.f32.mrf.mxu0
        %v2164 = vadd.f32 0.0, %v2163
        %2165 = vdwg.mxu0
        %v2166 = vmax.f32 %v2088, %v2090
        %2167 = vmax.xlane.f32.xlu0 %v2166
        %v2168 = vpop.xlane.xlu0 %2167
        %v2169 = vmax.f32 %v2092, %v2094
        %2170 = vmax.xlane.f32.xlu0 %v2169
        %v2171 = vpop.xlane.xlu0 %2170
        %v2172 = vmax.f32 %v2098, %v2100
        %2173 = vmax.xlane.f32.xlu0 %v2172
        %v2174 = vpop.xlane.xlu0 %2173
        %v2175 = vmax.f32 %v2102, %v2104
        %2176 = vmax.xlane.f32.xlu0 %v2175
        %v2177 = vpop.xlane.xlu0 %2176
        %v2178 = vmax.f32 %v2108, %v2110
        %2179 = vmax.xlane.f32.xlu0 %v2178
        %v2180 = vpop.xlane.xlu0 %2179
        %v2181 = vmax.f32 %v2112, %v2114
        %2182 = vmax.xlane.f32.xlu0 %v2181
        %v2183 = vpop.xlane.xlu0 %2182
        %v2184 = vmax.f32 %v2118, %v2120
        %2185 = vmax.xlane.f32.xlu0 %v2184
        %v2186 = vpop.xlane.xlu0 %2185
        %v2187 = vmax.f32 %v2122, %v2124
        %2188 = vmax.xlane.f32.xlu0 %v2187
        %v2189 = vpop.xlane.xlu0 %2188
        %v2190 = vmax.f32 %v2128, %v2130
        %2191 = vmax.xlane.f32.xlu0 %v2190
        %v2192 = vpop.xlane.xlu0 %2191
        %v2193 = vmax.f32 %v2132, %v2134
        %2194 = vmax.xlane.f32.xlu0 %v2193
        %v2195 = vpop.xlane.xlu0 %2194
        %v2196 = vmax.f32 %v2138, %v2140
        %2197 = vmax.xlane.f32.xlu0 %v2196
        %v2198 = vpop.xlane.xlu0 %2197
        %v2199 = vmax.f32 %v2142, %v2144
        %2200 = vmax.xlane.f32.xlu0 %v2199
        %v2201 = vpop.xlane.xlu0 %2200
        %v2202 = vmax.f32 %v2148, %v2150
        %2203 = vmax.xlane.f32.xlu0 %v2202
        %v2204 = vpop.xlane.xlu0 %2203
        %v2205 = vmax.f32 %v2152, %v2154
        %2206 = vmax.xlane.f32.xlu0 %v2205
        %v2207 = vpop.xlane.xlu0 %2206
        %v2208 = vmax.f32 %v2158, %v2160
        %2209 = vmax.xlane.f32.xlu0 %v2208
        %v2210 = vpop.xlane.xlu0 %2209
        %v2211 = vmax.f32 %v2162, %v2164
        %2212 = vmax.xlane.f32.xlu0 %v2211
        %v2213 = vpop.xlane.xlu0 %2212
        %v2214 = vsub.f32 %v2088, %v2168
        %v2215 = vsub.f32 %v2090, %v2168
        %v2216 = vsub.f32 %v2092, %v2171
        %v2217 = vsub.f32 %v2094, %v2171
        %v2218 = vsub.f32 %v2098, %v2174
        %v2219 = vsub.f32 %v2100, %v2174
        %v2220 = vsub.f32 %v2102, %v2177
        %v2221 = vsub.f32 %v2104, %v2177
        %v2222 = vsub.f32 %v2108, %v2180
        %v2223 = vsub.f32 %v2110, %v2180
        %v2224 = vsub.f32 %v2112, %v2183
        %v2225 = vsub.f32 %v2114, %v2183
        %v2226 = vsub.f32 %v2118, %v2186
        %v2227 = vsub.f32 %v2120, %v2186
        %v2228 = vsub.f32 %v2122, %v2189
        %v2229 = vsub.f32 %v2124, %v2189
        %v2230 = vsub.f32 %v2128, %v2192
        %v2231 = vsub.f32 %v2130, %v2192
        %v2232 = vsub.f32 %v2132, %v2195
        %v2233 = vsub.f32 %v2134, %v2195
        %v2234 = vsub.f32 %v2138, %v2198
        %v2235 = vsub.f32 %v2140, %v2198
        %v2236 = vsub.f32 %v2142, %v2201
        %v2237 = vsub.f32 %v2144, %v2201
        %v2238 = vsub.f32 %v2148, %v2204
        %v2239 = vsub.f32 %v2150, %v2204
        %v2240 = vsub.f32 %v2152, %v2207
        %v2241 = vsub.f32 %v2154, %v2207
        %v2242 = vsub.f32 %v2158, %v2210
        %v2243 = vsub.f32 %v2160, %v2210
        %v2244 = vsub.f32 %v2162, %v2213
        %v2245 = vsub.f32 %v2164, %v2213
        %v2246 = vmul.f32 %v2214, 1.442695
        %v2247 = vpow.pop %v2246
        %v2248 = vmul.f32 %v2215, 1.442695
        %v2249 = vpow.pop %v2248
        %v2250 = vmul.f32 %v2216, 1.442695
        %v2251 = vpow.pop %v2250
        %v2252 = vmul.f32 %v2217, 1.442695
        %v2253 = vpow.pop %v2252
        %v2254 = vmul.f32 %v2218, 1.442695
        %v2255 = vpow.pop %v2254
        %v2256 = vmul.f32 %v2219, 1.442695
        %v2257 = vpow.pop %v2256
        %v2258 = vmul.f32 %v2220, 1.442695
        %v2259 = vpow.pop %v2258
        %v2260 = vmul.f32 %v2221, 1.442695
        %v2261 = vpow.pop %v2260
        %v2262 = vmul.f32 %v2222, 1.442695
        %v2263 = vpow.pop %v2262
        %v2264 = vmul.f32 %v2223, 1.442695
        %v2265 = vpow.pop %v2264
        %v2266 = vmul.f32 %v2224, 1.442695
        %v2267 = vpow.pop %v2266
        %v2268 = vmul.f32 %v2225, 1.442695
        %v2269 = vpow.pop %v2268
        %v2270 = vmul.f32 %v2226, 1.442695
        %v2271 = vpow.pop %v2270
        %v2272 = vmul.f32 %v2227, 1.442695
        %v2273 = vpow.pop %v2272
        %v2274 = vmul.f32 %v2228, 1.442695
        %v2275 = vpow.pop %v2274
        %v2276 = vmul.f32 %v2229, 1.442695
        %v2277 = vpow.pop %v2276
        %v2278 = vmul.f32 %v2230, 1.442695
        %v2279 = vpow.pop %v2278
        %v2280 = vmul.f32 %v2231, 1.442695
        %v2281 = vpow.pop %v2280
        %v2282 = vmul.f32 %v2232, 1.442695
        %v2283 = vpow.pop %v2282
        %v2284 = vmul.f32 %v2233, 1.442695
        %v2285 = vpow.pop %v2284
        %v2286 = vmul.f32 %v2234, 1.442695
        %v2287 = vpow.pop %v2286
        %v2288 = vmul.f32 %v2235, 1.442695
        %v2289 = vpow.pop %v2288
        %v2290 = vmul.f32 %v2236, 1.442695
        %v2291 = vpow.pop %v2290
        %v2292 = vmul.f32 %v2237, 1.442695
        %v2293 = vpow.pop %v2292
        %v2294 = vmul.f32 %v2238, 1.442695
        %v2295 = vpow.pop %v2294
        %v2296 = vmul.f32 %v2239, 1.442695
        %v2297 = vpow.pop %v2296
        %v2298 = vmul.f32 %v2240, 1.442695
        %v2299 = vpow.pop %v2298
        %v2300 = vmul.f32 %v2241, 1.442695
        %v2301 = vpow.pop %v2300
        %v2302 = vmul.f32 %v2242, 1.442695
        %v2303 = vpow.pop %v2302
        %v2304 = vmul.f32 %v2243, 1.442695
        %v2305 = vpow.pop %v2304
        %v2306 = vmul.f32 %v2244, 1.442695
        %v2307 = vpow.pop %v2306
        %v2308 = vmul.f32 %v2245, 1.442695
        %v2309 = vpow.pop %v2308
        %v2310 = vadd.f32 %v2247, %v2249
        %2311 = vadd.xlane.f32.xlu0 %v2310
        %v2312 = vpop.xlane.xlu0 %2311
        %v2313 = vadd.f32 %v2251, %v2253
        %2314 = vadd.xlane.f32.xlu0 %v2313
        %v2315 = vpop.xlane.xlu0 %2314
        %v2316 = vadd.f32 %v2255, %v2257
        %2317 = vadd.xlane.f32.xlu0 %v2316
        %v2318 = vpop.xlane.xlu0 %2317
        %v2319 = vadd.f32 %v2259, %v2261
        %2320 = vadd.xlane.f32.xlu0 %v2319
        %v2321 = vpop.xlane.xlu0 %2320
        %v2322 = vadd.f32 %v2263, %v2265
        %2323 = vadd.xlane.f32.xlu0 %v2322
        %v2324 = vpop.xlane.xlu0 %2323
        %v2325 = vadd.f32 %v2267, %v2269
        %2326 = vadd.xlane.f32.xlu0 %v2325
        %v2327 = vpop.xlane.xlu0 %2326
        %v2328 = vadd.f32 %v2271, %v2273
        %2329 = vadd.xlane.f32.xlu0 %v2328
        %v2330 = vpop.xlane.xlu0 %2329
        %v2331 = vadd.f32 %v2275, %v2277
        %2332 = vadd.xlane.f32.xlu0 %v2331
        %v2333 = vpop.xlane.xlu0 %2332
        %v2334 = vadd.f32 %v2279, %v2281
        %2335 = vadd.xlane.f32.xlu0 %v2334
        %v2336 = vpop.xlane.xlu0 %2335
        %v2337 = vadd.f32 %v2283, %v2285
        %2338 = vadd.xlane.f32.xlu0 %v2337
        %v2339 = vpop.xlane.xlu0 %2338
        %v2340 = vadd.f32 %v2287, %v2289
        %2341 = vadd.xlane.f32.xlu0 %v2340
        %v2342 = vpop.xlane.xlu0 %2341
        %v2343 = vadd.f32 %v2291, %v2293
        %2344 = vadd.xlane.f32.xlu0 %v2343
        %v2345 = vpop.xlane.xlu0 %2344
        %v2346 = vadd.f32 %v2295, %v2297
        %2347 = vadd.xlane.f32.xlu0 %v2346
        %v2348 = vpop.xlane.xlu0 %2347
        %v2349 = vadd.f32 %v2299, %v2301
        %2350 = vadd.xlane.f32.xlu0 %v2349
        %v2351 = vpop.xlane.xlu0 %2350
        %v2352 = vadd.f32 %v2303, %v2305
        %2353 = vadd.xlane.f32.xlu0 %v2352
        %v2354 = vpop.xlane.xlu0 %2353
        %v2355 = vadd.f32 %v2307, %v2309
        %2356 = vadd.xlane.f32.xlu0 %v2355
        %v2357 = vpop.xlane.xlu0 %2356
        %v2358 = vpack.c.bf16 %v2251, %v2247
        %v2359 = vpack.c.bf16 %v2253, %v2249
        %v2360 = vpack.c.bf16 %v2259, %v2255
        %v2361 = vpack.c.bf16 %v2261, %v2257
        %v2362 = vpack.c.bf16 %v2267, %v2263
        %v2363 = vpack.c.bf16 %v2269, %v2265
        %v2364 = vpack.c.bf16 %v2275, %v2271
        %v2365 = vpack.c.bf16 %v2277, %v2273
        %v2366 = vpack.c.bf16 %v2283, %v2279
        %v2367 = vpack.c.bf16 %v2285, %v2281
        %v2368 = vpack.c.bf16 %v2291, %v2287
        %v2369 = vpack.c.bf16 %v2293, %v2289
        %v2370 = vpack.c.bf16 %v2299, %v2295
        %v2371 = vpack.c.bf16 %v2301, %v2297
        %v2372 = vpack.c.bf16 %v2307, %v2303
        %v2373 = vpack.c.bf16 %v2309, %v2305
        %2374 = vrot.lane.b32.xlu0 %v1756, 112
        %v2375 = vpop.permute.xlu0 %2374
        %2376 = vrot.lane.b32.xlu0 %v1757, 112
        %v2377 = vpop.permute.xlu0 %2376
        %2378 = vrot.lane.b32.xlu0 %v1758, 112
        %v2379 = vpop.permute.xlu0 %2378
        %2380 = vrot.lane.b32.xlu0 %v1759, 112
        %v2381 = vpop.permute.xlu0 %2380
        %2382 = vrot.lane.b32.xlu0 %v1760, 112
        %v2383 = vpop.permute.xlu0 %2382
        %2384 = vrot.lane.b32.xlu0 %v1761, 112
        %v2385 = vpop.permute.xlu0 %2384
        %2386 = vrot.lane.b32.xlu0 %v1762, 112
        %v2387 = vpop.permute.xlu0 %2386
        %2388 = vrot.lane.b32.xlu0 %v1763, 112
        %v2389 = vpop.permute.xlu0 %2388
        %2390 = vrot.lane.b32.xlu0 %v1764, 112
        %v2391 = vpop.permute.xlu0 %2390
        %2392 = vrot.lane.b32.xlu0 %v1765, 112
        %v2393 = vpop.permute.xlu0 %2392
        %2394 = vrot.lane.b32.xlu0 %v1766, 112
        %v2395 = vpop.permute.xlu0 %2394
        %2396 = vrot.lane.b32.xlu0 %v1767, 112
        %v2397 = vpop.permute.xlu0 %2396
        %2398 = vrot.lane.b32.xlu0 %v1768, 112
        %v2399 = vpop.permute.xlu0 %2398
        %2400 = vrot.lane.b32.xlu0 %v1769, 112
        %v2401 = vpop.permute.xlu0 %2400
        %2402 = vrot.lane.b32.xlu0 %v1770, 112
        %v2403 = vpop.permute.xlu0 %2402
        %2404 = vrot.lane.b32.xlu0 %v1771, 112
        %v2405 = vpop.permute.xlu0 %2404
        %2422 = vmatprep.subr.bf16.mxu0 0
        %2423 = vmatpush1.bf16.msra.mxu0 %v2389
        %2424 = vmatprep.subr.bf16.mxu0 0
        %2425 = vmatpush1.bf16.msra.mxu0 %v2387
        %2426 = vmatprep.subr.bf16.mxu0 0
        %2427 = vmatpush1.bf16.msra.mxu0 %v2385
        %2428 = vmatprep.subr.bf16.mxu0 0
        %2429 = vmatpush1.bf16.msra.mxu0 %v2383
        %2430 = vmatprep.subr.bf16.mxu0 0
        %2431 = vmatpush1.bf16.msra.mxu0 %v2381
        %2432 = vmatprep.subr.bf16.mxu0 0
        %2433 = vmatpush1.bf16.msra.mxu0 %v2379
        %2434 = vmatprep.subr.bf16.mxu0 0
        %2435 = vmatpush1.bf16.msra.mxu0 %v2377
        %2436 = vmatprep.subr.bf16.mxu0 0
        %2437 = vmatpush1.bf16.msra.mxu0 %v2375
        %2438 = vmatprep.subr.bf16.mxu0 0
        %2439 = vmatpush2.bf16.msra.mxu0 %v2405
        %2440 = vmatprep.subr.bf16.mxu0 0
        %2441 = vmatpush2.bf16.msra.mxu0 %v2403
        %2442 = vmatprep.subr.bf16.mxu0 0
        %2443 = vmatpush2.bf16.msra.mxu0 %v2401
        %2444 = vmatprep.subr.bf16.mxu0 0
        %2445 = vmatpush2.bf16.msra.mxu0 %v2399
        %2446 = vmatprep.subr.bf16.mxu0 0
        %2447 = vmatpush2.bf16.msra.mxu0 %v2397
        %2448 = vmatprep.subr.bf16.mxu0 0
        %2449 = vmatpush2.bf16.msra.mxu0 %v2395
        %2450 = vmatprep.subr.bf16.mxu0 0
        %2451 = vmatpush2.bf16.msra.mxu0 %v2393
        %2452 = vmatprep.subr.bf16.mxu0 0
        %2453 = vmatpush2.bf16.msra.mxu0 %v2391
        %2454 = vmatprep.mubr.bf16.mxu0 %v2359
        %2455 = vmatmul.mubr.bf16.gmra.mxu0 %v2358
        %v2456 = vpop.f32.mrf.mxu0
        %v2457 = vadd.f32 0.0, %v2456
        %v2458 = vpop.f32.mrf.mxu0
        %v2459 = vpop.f32.mrf.mxu0
        %v2460 = vadd.f32 0.0, %v2459
        %v2461 = vpop.f32.mrf.mxu0
        %2462 = vmatprep.mubr.bf16.mxu0 %v2361
        %2463 = vmatmul.mubr.bf16.gmra.mxu0 %v2360
        %v2464 = vpop.f32.mrf.mxu0
        %v2465 = vadd.f32 0.0, %v2464
        %v2466 = vpop.f32.mrf.mxu0
        %v2467 = vpop.f32.mrf.mxu0
        %v2468 = vadd.f32 0.0, %v2467
        %v2469 = vpop.f32.mrf.mxu0
        %2470 = vmatprep.mubr.bf16.mxu0 %v2363
        %2471 = vmatmul.mubr.bf16.gmra.mxu0 %v2362
        %v2472 = vpop.f32.mrf.mxu0
        %v2473 = vadd.f32 0.0, %v2472
        %v2474 = vpop.f32.mrf.mxu0
        %v2475 = vpop.f32.mrf.mxu0
        %v2476 = vadd.f32 0.0, %v2475
        %v2477 = vpop.f32.mrf.mxu0
        %2478 = vmatprep.mubr.bf16.mxu0 %v2365
        %2479 = vmatmul.mubr.bf16.gmra.mxu0 %v2364
        %v2480 = vpop.f32.mrf.mxu0
        %v2481 = vadd.f32 0.0, %v2480
        %v2482 = vpop.f32.mrf.mxu0
        %v2483 = vpop.f32.mrf.mxu0
        %v2484 = vadd.f32 0.0, %v2483
        %v2485 = vpop.f32.mrf.mxu0
        %2486 = vmatprep.mubr.bf16.mxu0 %v2367
        %2487 = vmatmul.mubr.bf16.gmra.mxu0 %v2366
        %v2488 = vpop.f32.mrf.mxu0
        %v2489 = vadd.f32 0.0, %v2488
        %v2490 = vpop.f32.mrf.mxu0
        %v2491 = vpop.f32.mrf.mxu0
        %v2492 = vadd.f32 0.0, %v2491
        %v2493 = vpop.f32.mrf.mxu0
        %2494 = vmatprep.mubr.bf16.mxu0 %v2369
        %2495 = vmatmul.mubr.bf16.gmra.mxu0 %v2368
        %v2496 = vpop.f32.mrf.mxu0
        %v2497 = vadd.f32 0.0, %v2496
        %v2498 = vpop.f32.mrf.mxu0
        %v2499 = vpop.f32.mrf.mxu0
        %v2500 = vadd.f32 0.0, %v2499
        %v2501 = vpop.f32.mrf.mxu0
        %2502 = vmatprep.mubr.bf16.mxu0 %v2371
        %2503 = vmatmul.mubr.bf16.gmra.mxu0 %v2370
        %v2504 = vpop.f32.mrf.mxu0
        %v2505 = vadd.f32 0.0, %v2504
        %v2506 = vpop.f32.mrf.mxu0
        %v2507 = vpop.f32.mrf.mxu0
        %v2508 = vadd.f32 0.0, %v2507
        %v2509 = vpop.f32.mrf.mxu0
        %2510 = vmatprep.mubr.bf16.mxu0 %v2373
        %2511 = vmatmul.mubr.bf16.gmra.mxu0 %v2372
        %v2512 = vpop.f32.mrf.mxu0
        %v2513 = vadd.f32 0.0, %v2512
        %v2514 = vpop.f32.mrf.mxu0
        %v2515 = vpop.f32.mrf.mxu0
        %v2516 = vadd.f32 0.0, %v2515
        %v2517 = vpop.f32.mrf.mxu0
        %2518 = vdwg.mxu0
        %v2519 = vrcp.pop %v2312
        %v2520 = vrcp.pop %v2315
        %v2521 = vrcp.pop %v2318
        %v2522 = vrcp.pop %v2321
        %v2523 = vrcp.pop %v2324
        %v2524 = vrcp.pop %v2327
        %v2525 = vrcp.pop %v2330
        %v2526 = vrcp.pop %v2333
        %v2527 = vrcp.pop %v2336
        %v2528 = vrcp.pop %v2339
        %v2529 = vrcp.pop %v2342
        %v2530 = vrcp.pop %v2345
        %v2531 = vrcp.pop %v2348
        %v2532 = vrcp.pop %v2351
        %v2533 = vrcp.pop %v2354
        %v2534 = vrcp.pop %v2357
        %v2535 = vmul.f32 %v2457, %v2519
        %v2536 = vmul.f32 %v2460, %v2520
        %v2537 = vmul.f32 %v2465, %v2521
        %v2538 = vmul.f32 %v2468, %v2522
        %v2539 = vmul.f32 %v2473, %v2523
        %v2540 = vmul.f32 %v2476, %v2524
        %v2541 = vmul.f32 %v2481, %v2525
        %v2542 = vmul.f32 %v2484, %v2526
        %v2543 = vmul.f32 %v2489, %v2527
        %v2544 = vmul.f32 %v2492, %v2528
        %v2545 = vmul.f32 %v2497, %v2529
        %v2546 = vmul.f32 %v2500, %v2530
        %v2547 = vmul.f32 %v2505, %v2531
        %v2548 = vmul.f32 %v2508, %v2532
        %v2549 = vmul.f32 %v2513, %v2533
        %v2550 = vmul.f32 %v2516, %v2534
        %v2551 = vpack.c.bf16 %v2536, %v2535
        %v2552 = vpack.c.bf16 %v2538, %v2537
        %v2553 = vpack.c.bf16 %v2540, %v2539
        %v2554 = vpack.c.bf16 %v2542, %v2541
        %v2555 = vpack.c.bf16 %v2544, %v2543
        %v2556 = vpack.c.bf16 %v2546, %v2545
        %v2557 = vpack.c.bf16 %v2548, %v2547
        %v2558 = vpack.c.bf16 %v2550, %v2549
        %v2561 = vunpack.c.l.b16 %v1236
        %v2562 = vunpack.c.l.b16 %v1237
        %v2563 = vpack.c.b16 %v2562, %v2561
        %v2566 = vsel %vm1330, %v2551, 0
        %v2569 = vsel %vm1330, %v2552, 0
        %v2572 = vsel %vm1330, %v2553, 0
        %v2575 = vsel %vm1330, %v2554, 0
        %v2578 = vsel %vm1330, %v2555, 0
        %v2581 = vsel %vm1330, %v2556, 0
        %v2584 = vsel %vm1330, %v2557, 0
        %v2587 = vsel %vm1330, %v2558, 0
        %2589 = vmatprep.subr.bf16.mxu0 0
        %2590 = vmatpush1.bf16.msra.mxu0 0
        %2591 = vmatprep.subr.bf16.mxu0 0
        %2592 = vmatpush1.bf16.msra.mxu0 0
        %2593 = vmatprep.subr.bf16.mxu0 0
        %2594 = vmatpush1.bf16.msra.mxu0 0
        %2595 = vmatprep.subr.bf16.mxu0 0
        %2596 = vmatpush1.bf16.msra.mxu0 0
        %2597 = vmatprep.subr.bf16.mxu0 0
        %2598 = vmatpush1.bf16.msra.mxu0 0
        %2599 = vmatprep.subr.bf16.mxu0 0
        %2600 = vmatpush1.bf16.msra.mxu0 0
        %2601 = vmatprep.subr.bf16.mxu0 0
        %2602 = vmatpush1.bf16.msra.mxu0 0
        %2603 = vmatprep.subr.bf16.mxu0 0
        %2604 = vmatpush1.bf16.msra.mxu0 %v2563
        %2605 = vmatprep.subr.bf16.mxu0 0
        %2606 = vmatpush2.bf16.msra.mxu0 0
        %2607 = vmatprep.subr.bf16.mxu0 0
        %2608 = vmatpush2.bf16.msra.mxu0 0
        %2609 = vmatprep.subr.bf16.mxu0 0
        %2610 = vmatpush2.bf16.msra.mxu0 0
        %2611 = vmatprep.subr.bf16.mxu0 0
        %2612 = vmatpush2.bf16.msra.mxu0 0
        %2613 = vmatprep.subr.bf16.mxu0 0
        %2614 = vmatpush2.bf16.msra.mxu0 0
        %2615 = vmatprep.subr.bf16.mxu0 0
        %2616 = vmatpush2.bf16.msra.mxu0 0
        %2617 = vmatprep.subr.bf16.mxu0 0
        %2618 = vmatpush2.bf16.msra.mxu0 0
        %2619 = vmatprep.subr.bf16.mxu0 0
        %2620 = vmatpush2.bf16.msra.mxu0 0
        %2621 = vmatprep.mubr.bf16.mxu0 0
        %2622 = vmatmul.mubr.bf16.gmra.mxu0 %v2566
        %v2623 = vpop.f32.mrf.mxu0
        %v2624 = vadd.f32 0.0, %v2623
        %v2625 = vpop.f32.mrf.mxu0
        %v2626 = vpop.f32.mrf.mxu0
        %v2627 = vadd.f32 0.0, %v2626
        %v2628 = vpop.f32.mrf.mxu0
        %2629 = vmatprep.mubr.bf16.mxu0 0
        %2630 = vmatmul.mubr.bf16.gmra.mxu0 %v2569
        %v2631 = vpop.f32.mrf.mxu0
        %v2632 = vadd.f32 0.0, %v2631
        %v2633 = vpop.f32.mrf.mxu0
        %v2634 = vpop.f32.mrf.mxu0
        %v2635 = vadd.f32 0.0, %v2634
        %v2636 = vpop.f32.mrf.mxu0
        %2637 = vmatprep.mubr.bf16.mxu0 0
        %2638 = vmatmul.mubr.bf16.gmra.mxu0 %v2572
        %v2639 = vpop.f32.mrf.mxu0
        %v2640 = vadd.f32 0.0, %v2639
        %v2641 = vpop.f32.mrf.mxu0
        %v2642 = vpop.f32.mrf.mxu0
        %v2643 = vadd.f32 0.0, %v2642
        %v2644 = vpop.f32.mrf.mxu0
        %2645 = vmatprep.mubr.bf16.mxu0 0
        %2646 = vmatmul.mubr.bf16.gmra.mxu0 %v2575
        %v2647 = vpop.f32.mrf.mxu0
        %v2648 = vadd.f32 0.0, %v2647
        %v2649 = vpop.f32.mrf.mxu0
        %v2650 = vpop.f32.mrf.mxu0
        %v2651 = vadd.f32 0.0, %v2650
        %v2652 = vpop.f32.mrf.mxu0
        %2653 = vmatprep.mubr.bf16.mxu0 0
        %2654 = vmatmul.mubr.bf16.gmra.mxu0 %v2578
        %v2655 = vpop.f32.mrf.mxu0
        %v2656 = vadd.f32 0.0, %v2655
        %v2657 = vpop.f32.mrf.mxu0
        %v2658 = vpop.f32.mrf.mxu0
        %v2659 = vadd.f32 0.0, %v2658
        %v2660 = vpop.f32.mrf.mxu0
        %2661 = vmatprep.mubr.bf16.mxu0 0
        %2662 = vmatmul.mubr.bf16.gmra.mxu0 %v2581
        %v2663 = vpop.f32.mrf.mxu0
        %v2664 = vadd.f32 0.0, %v2663
        %v2665 = vpop.f32.mrf.mxu0
        %v2666 = vpop.f32.mrf.mxu0
        %v2667 = vadd.f32 0.0, %v2666
        %v2668 = vpop.f32.mrf.mxu0
        %2669 = vmatprep.mubr.bf16.mxu0 0
        %2670 = vmatmul.mubr.bf16.gmra.mxu0 %v2584
        %v2671 = vpop.f32.mrf.mxu0
        %v2672 = vadd.f32 0.0, %v2671
        %v2673 = vpop.f32.mrf.mxu0
        %v2674 = vpop.f32.mrf.mxu0
        %v2675 = vadd.f32 0.0, %v2674
        %v2676 = vpop.f32.mrf.mxu0
        %2677 = vmatprep.mubr.bf16.mxu0 0
        %2678 = vmatmul.mubr.bf16.gmra.mxu0 %v2587
        %v2679 = vpop.f32.mrf.mxu0
        %v2680 = vadd.f32 0.0, %v2679
        %v2681 = vpop.f32.mrf.mxu0
        %v2682 = vpop.f32.mrf.mxu0
        %v2683 = vadd.f32 0.0, %v2682
        %v2684 = vpop.f32.mrf.mxu0
        %2685 = vdwg.mxu0
        %v2688 = vunpack.c.l.b16 %v1234
        %v2689 = vunpack.c.l.b16 %v1235
        %v2690 = vpack.c.b16 %v2689, %v2688
        %v2693 = vsel %vm1330, %v1917, 0
        %v2696 = vsel %vm1330, %v1918, 0
        %v2699 = vsel %vm1330, %v1919, 0
        %v2702 = vsel %vm1330, %v1920, 0
        %v2705 = vsel %vm1330, %v1921, 0
        %v2708 = vsel %vm1330, %v1922, 0
        %v2711 = vsel %vm1330, %v1923, 0
        %v2714 = vsel %vm1330, %v1924, 0
        %2716 = vmatprep.subr.bf16.mxu0 0
        %2717 = vmatpush1.bf16.msra.mxu0 0
        %2718 = vmatprep.subr.bf16.mxu0 0
        %2719 = vmatpush1.bf16.msra.mxu0 0
        %2720 = vmatprep.subr.bf16.mxu0 0
        %2721 = vmatpush1.bf16.msra.mxu0 0
        %2722 = vmatprep.subr.bf16.mxu0 0
        %2723 = vmatpush1.bf16.msra.mxu0 0
        %2724 = vmatprep.subr.bf16.mxu0 0
        %2725 = vmatpush1.bf16.msra.mxu0 0
        %2726 = vmatprep.subr.bf16.mxu0 0
        %2727 = vmatpush1.bf16.msra.mxu0 0
        %2728 = vmatprep.subr.bf16.mxu0 0
        %2729 = vmatpush1.bf16.msra.mxu0 0
        %2730 = vmatprep.subr.bf16.mxu0 0
        %2731 = vmatpush1.bf16.msra.mxu0 %v2690
        %2732 = vmatprep.subr.bf16.mxu0 0
        %2733 = vmatpush2.bf16.msra.mxu0 0
        %2734 = vmatprep.subr.bf16.mxu0 0
        %2735 = vmatpush2.bf16.msra.mxu0 0
        %2736 = vmatprep.subr.bf16.mxu0 0
        %2737 = vmatpush2.bf16.msra.mxu0 0
        %2738 = vmatprep.subr.bf16.mxu0 0
        %2739 = vmatpush2.bf16.msra.mxu0 0
        %2740 = vmatprep.subr.bf16.mxu0 0
        %2741 = vmatpush2.bf16.msra.mxu0 0
        %2742 = vmatprep.subr.bf16.mxu0 0
        %2743 = vmatpush2.bf16.msra.mxu0 0
        %2744 = vmatprep.subr.bf16.mxu0 0
        %2745 = vmatpush2.bf16.msra.mxu0 0
        %2746 = vmatprep.subr.bf16.mxu0 0
        %2747 = vmatpush2.bf16.msra.mxu0 0
        %2748 = vmatprep.mubr.bf16.mxu0 0
        %2749 = vmatmul.mubr.bf16.gmra.mxu0 %v2693
        %v2750 = vpop.f32.mrf.mxu0
        %v2751 = vadd.f32 %v2624, %v2750
        %v2752 = vpop.f32.mrf.mxu0
        %v2753 = vpop.f32.mrf.mxu0
        %v2754 = vadd.f32 %v2627, %v2753
        %v2755 = vpop.f32.mrf.mxu0
        %2756 = vmatprep.mubr.bf16.mxu0 0
        %2757 = vmatmul.mubr.bf16.gmra.mxu0 %v2696
        %v2758 = vpop.f32.mrf.mxu0
        %v2759 = vadd.f32 %v2632, %v2758
        %v2760 = vpop.f32.mrf.mxu0
        %v2761 = vpop.f32.mrf.mxu0
        %v2762 = vadd.f32 %v2635, %v2761
        %v2763 = vpop.f32.mrf.mxu0
        %2764 = vmatprep.mubr.bf16.mxu0 0
        %2765 = vmatmul.mubr.bf16.gmra.mxu0 %v2699
        %v2766 = vpop.f32.mrf.mxu0
        %v2767 = vadd.f32 %v2640, %v2766
        %v2768 = vpop.f32.mrf.mxu0
        %v2769 = vpop.f32.mrf.mxu0
        %v2770 = vadd.f32 %v2643, %v2769
        %v2771 = vpop.f32.mrf.mxu0
        %2772 = vmatprep.mubr.bf16.mxu0 0
        %2773 = vmatmul.mubr.bf16.gmra.mxu0 %v2702
        %v2774 = vpop.f32.mrf.mxu0
        %v2775 = vadd.f32 %v2648, %v2774
        %v2776 = vpop.f32.mrf.mxu0
        %v2777 = vpop.f32.mrf.mxu0
        %v2778 = vadd.f32 %v2651, %v2777
        %v2779 = vpop.f32.mrf.mxu0
        %2780 = vmatprep.mubr.bf16.mxu0 0
        %2781 = vmatmul.mubr.bf16.gmra.mxu0 %v2705
        %v2782 = vpop.f32.mrf.mxu0
        %v2783 = vadd.f32 %v2656, %v2782
        %v2784 = vpop.f32.mrf.mxu0
        %v2785 = vpop.f32.mrf.mxu0
        %v2786 = vadd.f32 %v2659, %v2785
        %v2787 = vpop.f32.mrf.mxu0
        %2788 = vmatprep.mubr.bf16.mxu0 0
        %2789 = vmatmul.mubr.bf16.gmra.mxu0 %v2708
        %v2790 = vpop.f32.mrf.mxu0
        %v2791 = vadd.f32 %v2664, %v2790
        %v2792 = vpop.f32.mrf.mxu0
        %v2793 = vpop.f32.mrf.mxu0
        %v2794 = vadd.f32 %v2667, %v2793
        %v2795 = vpop.f32.mrf.mxu0
        %2796 = vmatprep.mubr.bf16.mxu0 0
        %2797 = vmatmul.mubr.bf16.gmra.mxu0 %v2711
        %v2798 = vpop.f32.mrf.mxu0
        %v2799 = vadd.f32 %v2672, %v2798
        %v2800 = vpop.f32.mrf.mxu0
        %v2801 = vpop.f32.mrf.mxu0
        %v2802 = vadd.f32 %v2675, %v2801
        %v2803 = vpop.f32.mrf.mxu0
        %2804 = vmatprep.mubr.bf16.mxu0 0
        %2805 = vmatmul.mubr.bf16.gmra.mxu0 %v2714
        %v2806 = vpop.f32.mrf.mxu0
        %v2807 = vadd.f32 %v2680, %v2806
        %v2808 = vpop.f32.mrf.mxu0
        %v2809 = vpop.f32.mrf.mxu0
        %v2810 = vadd.f32 %v2683, %v2809
        %v2811 = vpop.f32.mrf.mxu0
        %2812 = vdwg.mxu0
        %2813 = vrot.lane.b32.xlu0 %v1194, 96
        %v2814 = vpop.permute.xlu0 %2813
        %2815 = vrot.lane.b32.xlu0 %v1195, 96
        %v2816 = vpop.permute.xlu0 %2815
        %2817 = vrot.lane.b32.xlu0 %v1196, 96
        %v2818 = vpop.permute.xlu0 %2817
        %2819 = vrot.lane.b32.xlu0 %v1197, 96
        %v2820 = vpop.permute.xlu0 %2819
        %2821 = vrot.lane.b32.xlu0 %v1198, 96
        %v2822 = vpop.permute.xlu0 %2821
        %2823 = vrot.lane.b32.xlu0 %v1199, 96
        %v2824 = vpop.permute.xlu0 %2823
        %2825 = vrot.lane.b32.xlu0 %v1200, 96
        %v2826 = vpop.permute.xlu0 %2825
        %2827 = vrot.lane.b32.xlu0 %v1201, 96
        %v2828 = vpop.permute.xlu0 %2827
        %2829 = vrot.lane.b32.xlu0 %v1314, 96
        %v2830 = vpop.permute.xlu0 %2829
        %2831 = vrot.lane.b32.xlu0 %v1315, 96
        %v2832 = vpop.permute.xlu0 %2831
        %2833 = vrot.lane.b32.xlu0 %v1316, 96
        %v2834 = vpop.permute.xlu0 %2833
        %2835 = vrot.lane.b32.xlu0 %v1317, 96
        %v2836 = vpop.permute.xlu0 %2835
        %2837 = vrot.lane.b32.xlu0 %v1318, 96
        %v2838 = vpop.permute.xlu0 %2837
        %2839 = vrot.lane.b32.xlu0 %v1319, 96
        %v2840 = vpop.permute.xlu0 %2839
        %2841 = vrot.lane.b32.xlu0 %v1320, 96
        %v2842 = vpop.permute.xlu0 %2841
        %2843 = vrot.lane.b32.xlu0 %v1321, 96
        %v2844 = vpop.permute.xlu0 %2843
        %2845 = vrot.lane.b32.xlu0 %v1322, 96
        %v2846 = vpop.permute.xlu0 %2845
        %2847 = vrot.lane.b32.xlu0 %v1323, 96
        %v2848 = vpop.permute.xlu0 %2847
        %2849 = vrot.lane.b32.xlu0 %v1324, 96
        %v2850 = vpop.permute.xlu0 %2849
        %2851 = vrot.lane.b32.xlu0 %v1325, 96
        %v2852 = vpop.permute.xlu0 %2851
        %2853 = vrot.lane.b32.xlu0 %v1326, 96
        %v2854 = vpop.permute.xlu0 %2853
        %2855 = vrot.lane.b32.xlu0 %v1327, 96
        %v2856 = vpop.permute.xlu0 %2855
        %2857 = vrot.lane.b32.xlu0 %v1328, 96
        %v2858 = vpop.permute.xlu0 %2857
        %2859 = vrot.lane.b32.xlu0 %v1329, 96
        %v2860 = vpop.permute.xlu0 %2859
        %v2862 = vsel %vm1330, %v2814, 0
        %v2865 = vsel %vm1330, %v2816, 0
        %v2868 = vsel %vm1330, %v2818, 0
        %v2871 = vsel %vm1330, %v2820, 0
        %v2874 = vsel %vm1330, %v2822, 0
        %v2877 = vsel %vm1330, %v2824, 0
        %v2880 = vsel %vm1330, %v2826, 0
        %v2883 = vsel %vm1330, %v2828, 0
        %v2886 = vsel %vm1330, %v2830, 0
        %v2889 = vsel %vm1330, %v2832, 0
        %v2892 = vsel %vm1330, %v2834, 0
        %v2895 = vsel %vm1330, %v2836, 0
        %v2898 = vsel %vm1330, %v2838, 0
        %v2901 = vsel %vm1330, %v2840, 0
        %v2904 = vsel %vm1330, %v2842, 0
        %v2907 = vsel %vm1330, %v2844, 0
        %v2910 = vsel %vm1330, %v2846, 0
        %v2913 = vsel %vm1330, %v2848, 0
        %v2916 = vsel %vm1330, %v2850, 0
        %v2919 = vsel %vm1330, %v2852, 0
        %v2922 = vsel %vm1330, %v2854, 0
        %v2925 = vsel %vm1330, %v2856, 0
        %v2928 = vsel %vm1330, %v2858, 0
        %v2931 = vsel %vm1330, %v2860, 0
        %2933 = vmatprep.subr.bf16.mxu0 0
        %2934 = vmatpush1.bf16.xpose.msra.mxu0 %v2907
        %2935 = vmatprep.subr.bf16.mxu0 0
        %2936 = vmatpush1.bf16.xpose.msra.mxu0 %v2904
        %2937 = vmatprep.subr.bf16.mxu0 0
        %2938 = vmatpush1.bf16.xpose.msra.mxu0 %v2901
        %2939 = vmatprep.subr.bf16.mxu0 0
        %2940 = vmatpush1.bf16.xpose.msra.mxu0 %v2898
        %2941 = vmatprep.subr.bf16.mxu0 0
        %2942 = vmatpush1.bf16.xpose.msra.mxu0 %v2895
        %2943 = vmatprep.subr.bf16.mxu0 0
        %2944 = vmatpush1.bf16.xpose.msra.mxu0 %v2892
        %2945 = vmatprep.subr.bf16.mxu0 0
        %2946 = vmatpush1.bf16.xpose.msra.mxu0 %v2889
        %2947 = vmatprep.subr.bf16.mxu0 0
        %2948 = vmatpush1.bf16.xpose.msra.mxu0 %v2886
        %2949 = vmatprep.subr.bf16.mxu0 0
        %2950 = vmatpush2.bf16.xpose.msra.mxu0 %v2931
        %2951 = vmatprep.subr.bf16.mxu0 0
        %2952 = vmatpush2.bf16.xpose.msra.mxu0 %v2928
        %2953 = vmatprep.subr.bf16.mxu0 0
        %2954 = vmatpush2.bf16.xpose.msra.mxu0 %v2925
        %2955 = vmatprep.subr.bf16.mxu0 0
        %2956 = vmatpush2.bf16.xpose.msra.mxu0 %v2922
        %2957 = vmatprep.subr.bf16.mxu0 0
        %2958 = vmatpush2.bf16.xpose.msra.mxu0 %v2919
        %2959 = vmatprep.subr.bf16.mxu0 0
        %2960 = vmatpush2.bf16.xpose.msra.mxu0 %v2916
        %2961 = vmatprep.subr.bf16.mxu0 0
        %2962 = vmatpush2.bf16.xpose.msra.mxu0 %v2913
        %2963 = vmatprep.subr.bf16.mxu0 0
        %2964 = vmatpush2.bf16.xpose.msra.mxu0 %v2910
        %2965 = vmatprep.mubr.bf16.mxu0 0
        %2966 = vmatmul.mubr.bf16.gmra.mxu0 %v2862
        %v2967 = vpop.f32.mrf.mxu0
        %v2968 = vadd.f32 0.0, %v2967
        %v2969 = vpop.f32.mrf.mxu0
        %v2970 = vadd.f32 0.0, %v2969
        %v2971 = vpop.f32.mrf.mxu0
        %v2972 = vadd.f32 0.0, %v2971
        %v2973 = vpop.f32.mrf.mxu0
        %v2974 = vadd.f32 0.0, %v2973
        %2975 = vmatprep.mubr.bf16.mxu0 0
        %2976 = vmatmul.mubr.bf16.gmra.mxu0 %v2865
        %v2977 = vpop.f32.mrf.mxu0
        %v2978 = vadd.f32 0.0, %v2977
        %v2979 = vpop.f32.mrf.mxu0
        %v2980 = vadd.f32 0.0, %v2979
        %v2981 = vpop.f32.mrf.mxu0
        %v2982 = vadd.f32 0.0, %v2981
        %v2983 = vpop.f32.mrf.mxu0
        %v2984 = vadd.f32 0.0, %v2983
        %2985 = vmatprep.mubr.bf16.mxu0 0
        %2986 = vmatmul.mubr.bf16.gmra.mxu0 %v2868
        %v2987 = vpop.f32.mrf.mxu0
        %v2988 = vadd.f32 0.0, %v2987
        %v2989 = vpop.f32.mrf.mxu0
        %v2990 = vadd.f32 0.0, %v2989
        %v2991 = vpop.f32.mrf.mxu0
        %v2992 = vadd.f32 0.0, %v2991
        %v2993 = vpop.f32.mrf.mxu0
        %v2994 = vadd.f32 0.0, %v2993
        %2995 = vmatprep.mubr.bf16.mxu0 0
        %2996 = vmatmul.mubr.bf16.gmra.mxu0 %v2871
        %v2997 = vpop.f32.mrf.mxu0
        %v2998 = vadd.f32 0.0, %v2997
        %v2999 = vpop.f32.mrf.mxu0
        %v3000 = vadd.f32 0.0, %v2999
        %v3001 = vpop.f32.mrf.mxu0
        %v3002 = vadd.f32 0.0, %v3001
        %v3003 = vpop.f32.mrf.mxu0
        %v3004 = vadd.f32 0.0, %v3003
        %3005 = vmatprep.mubr.bf16.mxu0 0
        %3006 = vmatmul.mubr.bf16.gmra.mxu0 %v2874
        %v3007 = vpop.f32.mrf.mxu0
        %v3008 = vadd.f32 0.0, %v3007
        %v3009 = vpop.f32.mrf.mxu0
        %v3010 = vadd.f32 0.0, %v3009
        %v3011 = vpop.f32.mrf.mxu0
        %v3012 = vadd.f32 0.0, %v3011
        %v3013 = vpop.f32.mrf.mxu0
        %v3014 = vadd.f32 0.0, %v3013
        %3015 = vmatprep.mubr.bf16.mxu0 0
        %3016 = vmatmul.mubr.bf16.gmra.mxu0 %v2877
        %v3017 = vpop.f32.mrf.mxu0
        %v3018 = vadd.f32 0.0, %v3017
        %v3019 = vpop.f32.mrf.mxu0
        %v3020 = vadd.f32 0.0, %v3019
        %v3021 = vpop.f32.mrf.mxu0
        %v3022 = vadd.f32 0.0, %v3021
        %v3023 = vpop.f32.mrf.mxu0
        %v3024 = vadd.f32 0.0, %v3023
        %3025 = vmatprep.mubr.bf16.mxu0 0
        %3026 = vmatmul.mubr.bf16.gmra.mxu0 %v2880
        %v3027 = vpop.f32.mrf.mxu0
        %v3028 = vadd.f32 0.0, %v3027
        %v3029 = vpop.f32.mrf.mxu0
        %v3030 = vadd.f32 0.0, %v3029
        %v3031 = vpop.f32.mrf.mxu0
        %v3032 = vadd.f32 0.0, %v3031
        %v3033 = vpop.f32.mrf.mxu0
        %v3034 = vadd.f32 0.0, %v3033
        %3035 = vmatprep.mubr.bf16.mxu0 0
        %3036 = vmatmul.mubr.bf16.gmra.mxu0 %v2883
        %v3037 = vpop.f32.mrf.mxu0
        %v3038 = vadd.f32 0.0, %v3037
        %v3039 = vpop.f32.mrf.mxu0
        %v3040 = vadd.f32 0.0, %v3039
        %v3041 = vpop.f32.mrf.mxu0
        %v3042 = vadd.f32 0.0, %v3041
        %v3043 = vpop.f32.mrf.mxu0
        %v3044 = vadd.f32 0.0, %v3043
        %3045 = vdwg.mxu0
        %v3046 = vmax.f32 %v2968, %v2970
        %3047 = vmax.xlane.f32.xlu0 %v3046
        %v3048 = vpop.xlane.xlu0 %3047
        %v3049 = vmax.f32 %v2972, %v2974
        %3050 = vmax.xlane.f32.xlu0 %v3049
        %v3051 = vpop.xlane.xlu0 %3050
        %v3052 = vmax.f32 %v2978, %v2980
        %3053 = vmax.xlane.f32.xlu0 %v3052
        %v3054 = vpop.xlane.xlu0 %3053
        %v3055 = vmax.f32 %v2982, %v2984
        %3056 = vmax.xlane.f32.xlu0 %v3055
        %v3057 = vpop.xlane.xlu0 %3056
        %v3058 = vmax.f32 %v2988, %v2990
        %3059 = vmax.xlane.f32.xlu0 %v3058
        %v3060 = vpop.xlane.xlu0 %3059
        %v3061 = vmax.f32 %v2992, %v2994
        %3062 = vmax.xlane.f32.xlu0 %v3061
        %v3063 = vpop.xlane.xlu0 %3062
        %v3064 = vmax.f32 %v2998, %v3000
        %3065 = vmax.xlane.f32.xlu0 %v3064
        %v3066 = vpop.xlane.xlu0 %3065
        %v3067 = vmax.f32 %v3002, %v3004
        %3068 = vmax.xlane.f32.xlu0 %v3067
        %v3069 = vpop.xlane.xlu0 %3068
        %v3070 = vmax.f32 %v3008, %v3010
        %3071 = vmax.xlane.f32.xlu0 %v3070
        %v3072 = vpop.xlane.xlu0 %3071
        %v3073 = vmax.f32 %v3012, %v3014
        %3074 = vmax.xlane.f32.xlu0 %v3073
        %v3075 = vpop.xlane.xlu0 %3074
        %v3076 = vmax.f32 %v3018, %v3020
        %3077 = vmax.xlane.f32.xlu0 %v3076
        %v3078 = vpop.xlane.xlu0 %3077
        %v3079 = vmax.f32 %v3022, %v3024
        %3080 = vmax.xlane.f32.xlu0 %v3079
        %v3081 = vpop.xlane.xlu0 %3080
        %v3082 = vmax.f32 %v3028, %v3030
        %3083 = vmax.xlane.f32.xlu0 %v3082
        %v3084 = vpop.xlane.xlu0 %3083
        %v3085 = vmax.f32 %v3032, %v3034
        %3086 = vmax.xlane.f32.xlu0 %v3085
        %v3087 = vpop.xlane.xlu0 %3086
        %v3088 = vmax.f32 %v3038, %v3040
        %3089 = vmax.xlane.f32.xlu0 %v3088
        %v3090 = vpop.xlane.xlu0 %3089
        %v3091 = vmax.f32 %v3042, %v3044
        %3092 = vmax.xlane.f32.xlu0 %v3091
        %v3093 = vpop.xlane.xlu0 %3092
        %v3094 = vsub.f32 %v2968, %v3048
        %v3095 = vsub.f32 %v2970, %v3048
        %v3096 = vsub.f32 %v2972, %v3051
        %v3097 = vsub.f32 %v2974, %v3051
        %v3098 = vsub.f32 %v2978, %v3054
        %v3099 = vsub.f32 %v2980, %v3054
        %v3100 = vsub.f32 %v2982, %v3057
        %v3101 = vsub.f32 %v2984, %v3057
        %v3102 = vsub.f32 %v2988, %v3060
        %v3103 = vsub.f32 %v2990, %v3060
        %v3104 = vsub.f32 %v2992, %v3063
        %v3105 = vsub.f32 %v2994, %v3063
        %v3106 = vsub.f32 %v2998, %v3066
        %v3107 = vsub.f32 %v3000, %v3066
        %v3108 = vsub.f32 %v3002, %v3069
        %v3109 = vsub.f32 %v3004, %v3069
        %v3110 = vsub.f32 %v3008, %v3072
        %v3111 = vsub.f32 %v3010, %v3072
        %v3112 = vsub.f32 %v3012, %v3075
        %v3113 = vsub.f32 %v3014, %v3075
        %v3114 = vsub.f32 %v3018, %v3078
        %v3115 = vsub.f32 %v3020, %v3078
        %v3116 = vsub.f32 %v3022, %v3081
        %v3117 = vsub.f32 %v3024, %v3081
        %v3118 = vsub.f32 %v3028, %v3084
        %v3119 = vsub.f32 %v3030, %v3084
        %v3120 = vsub.f32 %v3032, %v3087
        %v3121 = vsub.f32 %v3034, %v3087
        %v3122 = vsub.f32 %v3038, %v3090
        %v3123 = vsub.f32 %v3040, %v3090
        %v3124 = vsub.f32 %v3042, %v3093
        %v3125 = vsub.f32 %v3044, %v3093
        %v3126 = vmul.f32 %v3094, 1.442695
        %v3127 = vpow.pop %v3126
        %v3128 = vmul.f32 %v3095, 1.442695
        %v3129 = vpow.pop %v3128
        %v3130 = vmul.f32 %v3096, 1.442695
        %v3131 = vpow.pop %v3130
        %v3132 = vmul.f32 %v3097, 1.442695
        %v3133 = vpow.pop %v3132
        %v3134 = vmul.f32 %v3098, 1.442695
        %v3135 = vpow.pop %v3134
        %v3136 = vmul.f32 %v3099, 1.442695
        %v3137 = vpow.pop %v3136
        %v3138 = vmul.f32 %v3100, 1.442695
        %v3139 = vpow.pop %v3138
        %v3140 = vmul.f32 %v3101, 1.442695
        %v3141 = vpow.pop %v3140
        %v3142 = vmul.f32 %v3102, 1.442695
        %v3143 = vpow.pop %v3142
        %v3144 = vmul.f32 %v3103, 1.442695
        %v3145 = vpow.pop %v3144
        %v3146 = vmul.f32 %v3104, 1.442695
        %v3147 = vpow.pop %v3146
        %v3148 = vmul.f32 %v3105, 1.442695
        %v3149 = vpow.pop %v3148
        %v3150 = vmul.f32 %v3106, 1.442695
        %v3151 = vpow.pop %v3150
        %v3152 = vmul.f32 %v3107, 1.442695
        %v3153 = vpow.pop %v3152
        %v3154 = vmul.f32 %v3108, 1.442695
        %v3155 = vpow.pop %v3154
        %v3156 = vmul.f32 %v3109, 1.442695
        %v3157 = vpow.pop %v3156
        %v3158 = vmul.f32 %v3110, 1.442695
        %v3159 = vpow.pop %v3158
        %v3160 = vmul.f32 %v3111, 1.442695
        %v3161 = vpow.pop %v3160
        %v3162 = vmul.f32 %v3112, 1.442695
        %v3163 = vpow.pop %v3162
        %v3164 = vmul.f32 %v3113, 1.442695
        %v3165 = vpow.pop %v3164
        %v3166 = vmul.f32 %v3114, 1.442695
        %v3167 = vpow.pop %v3166
        %v3168 = vmul.f32 %v3115, 1.442695
        %v3169 = vpow.pop %v3168
        %v3170 = vmul.f32 %v3116, 1.442695
        %v3171 = vpow.pop %v3170
        %v3172 = vmul.f32 %v3117, 1.442695
        %v3173 = vpow.pop %v3172
        %v3174 = vmul.f32 %v3118, 1.442695
        %v3175 = vpow.pop %v3174
        %v3176 = vmul.f32 %v3119, 1.442695
        %v3177 = vpow.pop %v3176
        %v3178 = vmul.f32 %v3120, 1.442695
        %v3179 = vpow.pop %v3178
        %v3180 = vmul.f32 %v3121, 1.442695
        %v3181 = vpow.pop %v3180
        %v3182 = vmul.f32 %v3122, 1.442695
        %v3183 = vpow.pop %v3182
        %v3184 = vmul.f32 %v3123, 1.442695
        %v3185 = vpow.pop %v3184
        %v3186 = vmul.f32 %v3124, 1.442695
        %v3187 = vpow.pop %v3186
        %v3188 = vmul.f32 %v3125, 1.442695
        %v3189 = vpow.pop %v3188
        %v3190 = vadd.f32 %v3127, %v3129
        %3191 = vadd.xlane.f32.xlu0 %v3190
        %v3192 = vpop.xlane.xlu0 %3191
        %v3193 = vadd.f32 %v3131, %v3133
        %3194 = vadd.xlane.f32.xlu0 %v3193
        %v3195 = vpop.xlane.xlu0 %3194
        %v3196 = vadd.f32 %v3135, %v3137
        %3197 = vadd.xlane.f32.xlu0 %v3196
        %v3198 = vpop.xlane.xlu0 %3197
        %v3199 = vadd.f32 %v3139, %v3141
        %3200 = vadd.xlane.f32.xlu0 %v3199
        %v3201 = vpop.xlane.xlu0 %3200
        %v3202 = vadd.f32 %v3143, %v3145
        %3203 = vadd.xlane.f32.xlu0 %v3202
        %v3204 = vpop.xlane.xlu0 %3203
        %v3205 = vadd.f32 %v3147, %v3149
        %3206 = vadd.xlane.f32.xlu0 %v3205
        %v3207 = vpop.xlane.xlu0 %3206
        %v3208 = vadd.f32 %v3151, %v3153
        %3209 = vadd.xlane.f32.xlu0 %v3208
        %v3210 = vpop.xlane.xlu0 %3209
        %v3211 = vadd.f32 %v3155, %v3157
        %3212 = vadd.xlane.f32.xlu0 %v3211
        %v3213 = vpop.xlane.xlu0 %3212
        %v3214 = vadd.f32 %v3159, %v3161
        %3215 = vadd.xlane.f32.xlu0 %v3214
        %v3216 = vpop.xlane.xlu0 %3215
        %v3217 = vadd.f32 %v3163, %v3165
        %3218 = vadd.xlane.f32.xlu0 %v3217
        %v3219 = vpop.xlane.xlu0 %3218
        %v3220 = vadd.f32 %v3167, %v3169
        %3221 = vadd.xlane.f32.xlu0 %v3220
        %v3222 = vpop.xlane.xlu0 %3221
        %v3223 = vadd.f32 %v3171, %v3173
        %3224 = vadd.xlane.f32.xlu0 %v3223
        %v3225 = vpop.xlane.xlu0 %3224
        %v3226 = vadd.f32 %v3175, %v3177
        %3227 = vadd.xlane.f32.xlu0 %v3226
        %v3228 = vpop.xlane.xlu0 %3227
        %v3229 = vadd.f32 %v3179, %v3181
        %3230 = vadd.xlane.f32.xlu0 %v3229
        %v3231 = vpop.xlane.xlu0 %3230
        %v3232 = vadd.f32 %v3183, %v3185
        %3233 = vadd.xlane.f32.xlu0 %v3232
        %v3234 = vpop.xlane.xlu0 %3233
        %v3235 = vadd.f32 %v3187, %v3189
        %3236 = vadd.xlane.f32.xlu0 %v3235
        %v3237 = vpop.xlane.xlu0 %3236
        %v3238 = vpack.c.bf16 %v3131, %v3127
        %v3239 = vpack.c.bf16 %v3133, %v3129
        %v3240 = vpack.c.bf16 %v3139, %v3135
        %v3241 = vpack.c.bf16 %v3141, %v3137
        %v3242 = vpack.c.bf16 %v3147, %v3143
        %v3243 = vpack.c.bf16 %v3149, %v3145
        %v3244 = vpack.c.bf16 %v3155, %v3151
        %v3245 = vpack.c.bf16 %v3157, %v3153
        %v3246 = vpack.c.bf16 %v3163, %v3159
        %v3247 = vpack.c.bf16 %v3165, %v3161
        %v3248 = vpack.c.bf16 %v3171, %v3167
        %v3249 = vpack.c.bf16 %v3173, %v3169
        %v3250 = vpack.c.bf16 %v3179, %v3175
        %v3251 = vpack.c.bf16 %v3181, %v3177
        %v3252 = vpack.c.bf16 %v3187, %v3183
        %v3253 = vpack.c.bf16 %v3189, %v3185
        %3254 = vrot.lane.b32.xlu0 %v1756, 96
        %v3255 = vpop.permute.xlu0 %3254
        %3256 = vrot.lane.b32.xlu0 %v1757, 96
        %v3257 = vpop.permute.xlu0 %3256
        %3258 = vrot.lane.b32.xlu0 %v1758, 96
        %v3259 = vpop.permute.xlu0 %3258
        %3260 = vrot.lane.b32.xlu0 %v1759, 96
        %v3261 = vpop.permute.xlu0 %3260
        %3262 = vrot.lane.b32.xlu0 %v1760, 96
        %v3263 = vpop.permute.xlu0 %3262
        %3264 = vrot.lane.b32.xlu0 %v1761, 96
        %v3265 = vpop.permute.xlu0 %3264
        %3266 = vrot.lane.b32.xlu0 %v1762, 96
        %v3267 = vpop.permute.xlu0 %3266
        %3268 = vrot.lane.b32.xlu0 %v1763, 96
        %v3269 = vpop.permute.xlu0 %3268
        %3270 = vrot.lane.b32.xlu0 %v1764, 96
        %v3271 = vpop.permute.xlu0 %3270
        %3272 = vrot.lane.b32.xlu0 %v1765, 96
        %v3273 = vpop.permute.xlu0 %3272
        %3274 = vrot.lane.b32.xlu0 %v1766, 96
        %v3275 = vpop.permute.xlu0 %3274
        %3276 = vrot.lane.b32.xlu0 %v1767, 96
        %v3277 = vpop.permute.xlu0 %3276
        %3278 = vrot.lane.b32.xlu0 %v1768, 96
        %v3279 = vpop.permute.xlu0 %3278
        %3280 = vrot.lane.b32.xlu0 %v1769, 96
        %v3281 = vpop.permute.xlu0 %3280
        %3282 = vrot.lane.b32.xlu0 %v1770, 96
        %v3283 = vpop.permute.xlu0 %3282
        %3284 = vrot.lane.b32.xlu0 %v1771, 96
        %v3285 = vpop.permute.xlu0 %3284
        %3302 = vmatprep.subr.bf16.mxu0 0
        %3303 = vmatpush1.bf16.msra.mxu0 %v3269
        %3304 = vmatprep.subr.bf16.mxu0 0
        %3305 = vmatpush1.bf16.msra.mxu0 %v3267
        %3306 = vmatprep.subr.bf16.mxu0 0
        %3307 = vmatpush1.bf16.msra.mxu0 %v3265
        %3308 = vmatprep.subr.bf16.mxu0 0
        %3309 = vmatpush1.bf16.msra.mxu0 %v3263
        %3310 = vmatprep.subr.bf16.mxu0 0
        %3311 = vmatpush1.bf16.msra.mxu0 %v3261
        %3312 = vmatprep.subr.bf16.mxu0 0
        %3313 = vmatpush1.bf16.msra.mxu0 %v3259
        %3314 = vmatprep.subr.bf16.mxu0 0
        %3315 = vmatpush1.bf16.msra.mxu0 %v3257
        %3316 = vmatprep.subr.bf16.mxu0 0
        %3317 = vmatpush1.bf16.msra.mxu0 %v3255
        %3318 = vmatprep.subr.bf16.mxu0 0
        %3319 = vmatpush2.bf16.msra.mxu0 %v3285
        %3320 = vmatprep.subr.bf16.mxu0 0
        %3321 = vmatpush2.bf16.msra.mxu0 %v3283
        %3322 = vmatprep.subr.bf16.mxu0 0
        %3323 = vmatpush2.bf16.msra.mxu0 %v3281
        %3324 = vmatprep.subr.bf16.mxu0 0
        %3325 = vmatpush2.bf16.msra.mxu0 %v3279
        %3326 = vmatprep.subr.bf16.mxu0 0
        %3327 = vmatpush2.bf16.msra.mxu0 %v3277
        %3328 = vmatprep.subr.bf16.mxu0 0
        %3329 = vmatpush2.bf16.msra.mxu0 %v3275
        %3330 = vmatprep.subr.bf16.mxu0 0
        %3331 = vmatpush2.bf16.msra.mxu0 %v3273
        %3332 = vmatprep.subr.bf16.mxu0 0
        %3333 = vmatpush2.bf16.msra.mxu0 %v3271
        %3334 = vmatprep.mubr.bf16.mxu0 %v3239
        %3335 = vmatmul.mubr.bf16.gmra.mxu0 %v3238
        %v3336 = vpop.f32.mrf.mxu0
        %v3337 = vadd.f32 0.0, %v3336
        %v3338 = vpop.f32.mrf.mxu0
        %v3339 = vpop.f32.mrf.mxu0
        %v3340 = vadd.f32 0.0, %v3339
        %v3341 = vpop.f32.mrf.mxu0
        %3342 = vmatprep.mubr.bf16.mxu0 %v3241
        %3343 = vmatmul.mubr.bf16.gmra.mxu0 %v3240
        %v3344 = vpop.f32.mrf.mxu0
        %v3345 = vadd.f32 0.0, %v3344
        %v3346 = vpop.f32.mrf.mxu0
        %v3347 = vpop.f32.mrf.mxu0
        %v3348 = vadd.f32 0.0, %v3347
        %v3349 = vpop.f32.mrf.mxu0
        %3350 = vmatprep.mubr.bf16.mxu0 %v3243
        %3351 = vmatmul.mubr.bf16.gmra.mxu0 %v3242
        %v3352 = vpop.f32.mrf.mxu0
        %v3353 = vadd.f32 0.0, %v3352
        %v3354 = vpop.f32.mrf.mxu0
        %v3355 = vpop.f32.mrf.mxu0
        %v3356 = vadd.f32 0.0, %v3355
        %v3357 = vpop.f32.mrf.mxu0
        %3358 = vmatprep.mubr.bf16.mxu0 %v3245
        %3359 = vmatmul.mubr.bf16.gmra.mxu0 %v3244
        %v3360 = vpop.f32.mrf.mxu0
        %v3361 = vadd.f32 0.0, %v3360
        %v3362 = vpop.f32.mrf.mxu0
        %v3363 = vpop.f32.mrf.mxu0
        %v3364 = vadd.f32 0.0, %v3363
        %v3365 = vpop.f32.mrf.mxu0
        %3366 = vmatprep.mubr.bf16.mxu0 %v3247
        %3367 = vmatmul.mubr.bf16.gmra.mxu0 %v3246
        %v3368 = vpop.f32.mrf.mxu0
        %v3369 = vadd.f32 0.0, %v3368
        %v3370 = vpop.f32.mrf.mxu0
        %v3371 = vpop.f32.mrf.mxu0
        %v3372 = vadd.f32 0.0, %v3371
        %v3373 = vpop.f32.mrf.mxu0
        %3374 = vmatprep.mubr.bf16.mxu0 %v3249
        %3375 = vmatmul.mubr.bf16.gmra.mxu0 %v3248
        %v3376 = vpop.f32.mrf.mxu0
        %v3377 = vadd.f32 0.0, %v3376
        %v3378 = vpop.f32.mrf.mxu0
        %v3379 = vpop.f32.mrf.mxu0
        %v3380 = vadd.f32 0.0, %v3379
        %v3381 = vpop.f32.mrf.mxu0
        %3382 = vmatprep.mubr.bf16.mxu0 %v3251
        %3383 = vmatmul.mubr.bf16.gmra.mxu0 %v3250
        %v3384 = vpop.f32.mrf.mxu0
        %v3385 = vadd.f32 0.0, %v3384
        %v3386 = vpop.f32.mrf.mxu0
        %v3387 = vpop.f32.mrf.mxu0
        %v3388 = vadd.f32 0.0, %v3387
        %v3389 = vpop.f32.mrf.mxu0
        %3390 = vmatprep.mubr.bf16.mxu0 %v3253
        %3391 = vmatmul.mubr.bf16.gmra.mxu0 %v3252
        %v3392 = vpop.f32.mrf.mxu0
        %v3393 = vadd.f32 0.0, %v3392
        %v3394 = vpop.f32.mrf.mxu0
        %v3395 = vpop.f32.mrf.mxu0
        %v3396 = vadd.f32 0.0, %v3395
        %v3397 = vpop.f32.mrf.mxu0
        %3398 = vdwg.mxu0
        %v3399 = vrcp.pop %v3192
        %v3400 = vrcp.pop %v3195
        %v3401 = vrcp.pop %v3198
        %v3402 = vrcp.pop %v3201
        %v3403 = vrcp.pop %v3204
        %v3404 = vrcp.pop %v3207
        %v3405 = vrcp.pop %v3210
        %v3406 = vrcp.pop %v3213
        %v3407 = vrcp.pop %v3216
        %v3408 = vrcp.pop %v3219
        %v3409 = vrcp.pop %v3222
        %v3410 = vrcp.pop %v3225
        %v3411 = vrcp.pop %v3228
        %v3412 = vrcp.pop %v3231
        %v3413 = vrcp.pop %v3234
        %v3414 = vrcp.pop %v3237
        %v3415 = vmul.f32 %v3337, %v3399
        %v3416 = vmul.f32 %v3340, %v3400
        %v3417 = vmul.f32 %v3345, %v3401
        %v3418 = vmul.f32 %v3348, %v3402
        %v3419 = vmul.f32 %v3353, %v3403
        %v3420 = vmul.f32 %v3356, %v3404
        %v3421 = vmul.f32 %v3361, %v3405
        %v3422 = vmul.f32 %v3364, %v3406
        %v3423 = vmul.f32 %v3369, %v3407
        %v3424 = vmul.f32 %v3372, %v3408
        %v3425 = vmul.f32 %v3377, %v3409
        %v3426 = vmul.f32 %v3380, %v3410
        %v3427 = vmul.f32 %v3385, %v3411
        %v3428 = vmul.f32 %v3388, %v3412
        %v3429 = vmul.f32 %v3393, %v3413
        %v3430 = vmul.f32 %v3396, %v3414
        %v3431 = vpack.c.bf16 %v3416, %v3415
        %v3432 = vpack.c.bf16 %v3418, %v3417
        %v3433 = vpack.c.bf16 %v3420, %v3419
        %v3434 = vpack.c.bf16 %v3422, %v3421
        %v3435 = vpack.c.bf16 %v3424, %v3423
        %v3436 = vpack.c.bf16 %v3426, %v3425
        %v3437 = vpack.c.bf16 %v3428, %v3427
        %v3438 = vpack.c.bf16 %v3430, %v3429
        %v3441 = vunpack.c.l.b16 %v1238
        %v3442 = vunpack.c.l.b16 %v1239
        %v3443 = vpack.c.b16 %v3442, %v3441
        %v3446 = vsel %vm1330, %v3431, 0
        %v3449 = vsel %vm1330, %v3432, 0
        %v3452 = vsel %vm1330, %v3433, 0
        %v3455 = vsel %vm1330, %v3434, 0
        %v3458 = vsel %vm1330, %v3435, 0
        %v3461 = vsel %vm1330, %v3436, 0
        %v3464 = vsel %vm1330, %v3437, 0
        %v3467 = vsel %vm1330, %v3438, 0
        %3469 = vmatprep.subr.bf16.mxu0 0
        %3470 = vmatpush1.bf16.msra.mxu0 0
        %3471 = vmatprep.subr.bf16.mxu0 0
        %3472 = vmatpush1.bf16.msra.mxu0 0
        %3473 = vmatprep.subr.bf16.mxu0 0
        %3474 = vmatpush1.bf16.msra.mxu0 0
        %3475 = vmatprep.subr.bf16.mxu0 0
        %3476 = vmatpush1.bf16.msra.mxu0 0
        %3477 = vmatprep.subr.bf16.mxu0 0
        %3478 = vmatpush1.bf16.msra.mxu0 0
        %3479 = vmatprep.subr.bf16.mxu0 0
        %3480 = vmatpush1.bf16.msra.mxu0 0
        %3481 = vmatprep.subr.bf16.mxu0 0
        %3482 = vmatpush1.bf16.msra.mxu0 0
        %3483 = vmatprep.subr.bf16.mxu0 0
        %3484 = vmatpush1.bf16.msra.mxu0 %v3443
        %3485 = vmatprep.subr.bf16.mxu0 0
        %3486 = vmatpush2.bf16.msra.mxu0 0
        %3487 = vmatprep.subr.bf16.mxu0 0
        %3488 = vmatpush2.bf16.msra.mxu0 0
        %3489 = vmatprep.subr.bf16.mxu0 0
        %3490 = vmatpush2.bf16.msra.mxu0 0
        %3491 = vmatprep.subr.bf16.mxu0 0
        %3492 = vmatpush2.bf16.msra.mxu0 0
        %3493 = vmatprep.subr.bf16.mxu0 0
        %3494 = vmatpush2.bf16.msra.mxu0 0
        %3495 = vmatprep.subr.bf16.mxu0 0
        %3496 = vmatpush2.bf16.msra.mxu0 0
        %3497 = vmatprep.subr.bf16.mxu0 0
        %3498 = vmatpush2.bf16.msra.mxu0 0
        %3499 = vmatprep.subr.bf16.mxu0 0
        %3500 = vmatpush2.bf16.msra.mxu0 0
        %3501 = vmatprep.mubr.bf16.mxu0 0
        %3502 = vmatmul.mubr.bf16.gmra.mxu0 %v3446
        %v3503 = vpop.f32.mrf.mxu0
        %v3504 = vadd.f32 0.0, %v3503
        %v3505 = vpop.f32.mrf.mxu0
        %v3506 = vpop.f32.mrf.mxu0
        %v3507 = vadd.f32 0.0, %v3506
        %v3508 = vpop.f32.mrf.mxu0
        %3509 = vmatprep.mubr.bf16.mxu0 0
        %3510 = vmatmul.mubr.bf16.gmra.mxu0 %v3449
        %v3511 = vpop.f32.mrf.mxu0
        %v3512 = vadd.f32 0.0, %v3511
        %v3513 = vpop.f32.mrf.mxu0
        %v3514 = vpop.f32.mrf.mxu0
        %v3515 = vadd.f32 0.0, %v3514
        %v3516 = vpop.f32.mrf.mxu0
        %3517 = vmatprep.mubr.bf16.mxu0 0
        %3518 = vmatmul.mubr.bf16.gmra.mxu0 %v3452
        %v3519 = vpop.f32.mrf.mxu0
        %v3520 = vadd.f32 0.0, %v3519
        %v3521 = vpop.f32.mrf.mxu0
        %v3522 = vpop.f32.mrf.mxu0
        %v3523 = vadd.f32 0.0, %v3522
        %v3524 = vpop.f32.mrf.mxu0
        %3525 = vmatprep.mubr.bf16.mxu0 0
        %3526 = vmatmul.mubr.bf16.gmra.mxu0 %v3455
        %v3527 = vpop.f32.mrf.mxu0
        %v3528 = vadd.f32 0.0, %v3527
        %v3529 = vpop.f32.mrf.mxu0
        %v3530 = vpop.f32.mrf.mxu0
        %v3531 = vadd.f32 0.0, %v3530
        %v3532 = vpop.f32.mrf.mxu0
        %3533 = vmatprep.mubr.bf16.mxu0 0
        %3534 = vmatmul.mubr.bf16.gmra.mxu0 %v3458
        %v3535 = vpop.f32.mrf.mxu0
        %v3536 = vadd.f32 0.0, %v3535
        %v3537 = vpop.f32.mrf.mxu0
        %v3538 = vpop.f32.mrf.mxu0
        %v3539 = vadd.f32 0.0, %v3538
        %v3540 = vpop.f32.mrf.mxu0
        %3541 = vmatprep.mubr.bf16.mxu0 0
        %3542 = vmatmul.mubr.bf16.gmra.mxu0 %v3461
        %v3543 = vpop.f32.mrf.mxu0
        %v3544 = vadd.f32 0.0, %v3543
        %v3545 = vpop.f32.mrf.mxu0
        %v3546 = vpop.f32.mrf.mxu0
        %v3547 = vadd.f32 0.0, %v3546
        %v3548 = vpop.f32.mrf.mxu0
        %3549 = vmatprep.mubr.bf16.mxu0 0
        %3550 = vmatmul.mubr.bf16.gmra.mxu0 %v3464
        %v3551 = vpop.f32.mrf.mxu0
        %v3552 = vadd.f32 0.0, %v3551
        %v3553 = vpop.f32.mrf.mxu0
        %v3554 = vpop.f32.mrf.mxu0
        %v3555 = vadd.f32 0.0, %v3554
        %v3556 = vpop.f32.mrf.mxu0
        %3557 = vmatprep.mubr.bf16.mxu0 0
        %3558 = vmatmul.mubr.bf16.gmra.mxu0 %v3467
        %v3559 = vpop.f32.mrf.mxu0
        %v3560 = vadd.f32 0.0, %v3559
        %v3561 = vpop.f32.mrf.mxu0
        %v3562 = vpop.f32.mrf.mxu0
        %v3563 = vadd.f32 0.0, %v3562
        %v3564 = vpop.f32.mrf.mxu0
        %3565 = vdwg.mxu0
        %v3566 = vadd.f32 %v2751, %v3504
        %v3567 = vadd.f32 %v2754, %v3507
        %v3568 = vadd.f32 %v2759, %v3512
        %v3569 = vadd.f32 %v2762, %v3515
        %v3570 = vadd.f32 %v2767, %v3520
        %v3571 = vadd.f32 %v2770, %v3523
        %v3572 = vadd.f32 %v2775, %v3528
        %v3573 = vadd.f32 %v2778, %v3531
        %v3574 = vadd.f32 %v2783, %v3536
        %v3575 = vadd.f32 %v2786, %v3539
        %v3576 = vadd.f32 %v2791, %v3544
        %v3577 = vadd.f32 %v2794, %v3547
        %v3578 = vadd.f32 %v2799, %v3552
        %v3579 = vadd.f32 %v2802, %v3555
        %v3580 = vadd.f32 %v2807, %v3560
        %v3581 = vadd.f32 %v2810, %v3563
        %3582 = vrot.lane.b32.xlu0 %v1194, 80
        %v3583 = vpop.permute.xlu0 %3582
        %3584 = vrot.lane.b32.xlu0 %v1195, 80
        %v3585 = vpop.permute.xlu0 %3584
        %3586 = vrot.lane.b32.xlu0 %v1196, 80
        %v3587 = vpop.permute.xlu0 %3586
        %3588 = vrot.lane.b32.xlu0 %v1197, 80
        %v3589 = vpop.permute.xlu0 %3588
        %3590 = vrot.lane.b32.xlu0 %v1198, 80
        %v3591 = vpop.permute.xlu0 %3590
        %3592 = vrot.lane.b32.xlu0 %v1199, 80
        %v3593 = vpop.permute.xlu0 %3592
        %3594 = vrot.lane.b32.xlu0 %v1200, 80
        %v3595 = vpop.permute.xlu0 %3594
        %3596 = vrot.lane.b32.xlu0 %v1201, 80
        %v3597 = vpop.permute.xlu0 %3596
        %3598 = vrot.lane.b32.xlu0 %v1314, 80
        %v3599 = vpop.permute.xlu0 %3598
        %3600 = vrot.lane.b32.xlu0 %v1315, 80
        %v3601 = vpop.permute.xlu0 %3600
        %3602 = vrot.lane.b32.xlu0 %v1316, 80
        %v3603 = vpop.permute.xlu0 %3602
        %3604 = vrot.lane.b32.xlu0 %v1317, 80
        %v3605 = vpop.permute.xlu0 %3604
        %3606 = vrot.lane.b32.xlu0 %v1318, 80
        %v3607 = vpop.permute.xlu0 %3606
        %3608 = vrot.lane.b32.xlu0 %v1319, 80
        %v3609 = vpop.permute.xlu0 %3608
        %3610 = vrot.lane.b32.xlu0 %v1320, 80
        %v3611 = vpop.permute.xlu0 %3610
        %3612 = vrot.lane.b32.xlu0 %v1321, 80
        %v3613 = vpop.permute.xlu0 %3612
        %3614 = vrot.lane.b32.xlu0 %v1322, 80
        %v3615 = vpop.permute.xlu0 %3614
        %3616 = vrot.lane.b32.xlu0 %v1323, 80
        %v3617 = vpop.permute.xlu0 %3616
        %3618 = vrot.lane.b32.xlu0 %v1324, 80
        %v3619 = vpop.permute.xlu0 %3618
        %3620 = vrot.lane.b32.xlu0 %v1325, 80
        %v3621 = vpop.permute.xlu0 %3620
        %3622 = vrot.lane.b32.xlu0 %v1326, 80
        %v3623 = vpop.permute.xlu0 %3622
        %3624 = vrot.lane.b32.xlu0 %v1327, 80
        %v3625 = vpop.permute.xlu0 %3624
        %3626 = vrot.lane.b32.xlu0 %v1328, 80
        %v3627 = vpop.permute.xlu0 %3626
        %3628 = vrot.lane.b32.xlu0 %v1329, 80
        %v3629 = vpop.permute.xlu0 %3628
        %v3631 = vsel %vm1330, %v3583, 0
        %v3634 = vsel %vm1330, %v3585, 0
        %v3637 = vsel %vm1330, %v3587, 0
        %v3640 = vsel %vm1330, %v3589, 0
        %v3643 = vsel %vm1330, %v3591, 0
        %v3646 = vsel %vm1330, %v3593, 0
        %v3649 = vsel %vm1330, %v3595, 0
        %v3652 = vsel %vm1330, %v3597, 0
        %v3655 = vsel %vm1330, %v3599, 0
        %v3658 = vsel %vm1330, %v3601, 0
        %v3661 = vsel %vm1330, %v3603, 0
        %v3664 = vsel %vm1330, %v3605, 0
        %v3667 = vsel %vm1330, %v3607, 0
        %v3670 = vsel %vm1330, %v3609, 0
        %v3673 = vsel %vm1330, %v3611, 0
        %v3676 = vsel %vm1330, %v3613, 0
        %v3679 = vsel %vm1330, %v3615, 0
        %v3682 = vsel %vm1330, %v3617, 0
        %v3685 = vsel %vm1330, %v3619, 0
        %v3688 = vsel %vm1330, %v3621, 0
        %v3691 = vsel %vm1330, %v3623, 0
        %v3694 = vsel %vm1330, %v3625, 0
        %v3697 = vsel %vm1330, %v3627, 0
        %v3700 = vsel %vm1330, %v3629, 0
        %3702 = vmatprep.subr.bf16.mxu0 0
        %3703 = vmatpush1.bf16.xpose.msra.mxu0 %v3676
        %3704 = vmatprep.subr.bf16.mxu0 0
        %3705 = vmatpush1.bf16.xpose.msra.mxu0 %v3673
        %3706 = vmatprep.subr.bf16.mxu0 0
        %3707 = vmatpush1.bf16.xpose.msra.mxu0 %v3670
        %3708 = vmatprep.subr.bf16.mxu0 0
        %3709 = vmatpush1.bf16.xpose.msra.mxu0 %v3667
        %3710 = vmatprep.subr.bf16.mxu0 0
        %3711 = vmatpush1.bf16.xpose.msra.mxu0 %v3664
        %3712 = vmatprep.subr.bf16.mxu0 0
        %3713 = vmatpush1.bf16.xpose.msra.mxu0 %v3661
        %3714 = vmatprep.subr.bf16.mxu0 0
        %3715 = vmatpush1.bf16.xpose.msra.mxu0 %v3658
        %3716 = vmatprep.subr.bf16.mxu0 0
        %3717 = vmatpush1.bf16.xpose.msra.mxu0 %v3655
        %3718 = vmatprep.subr.bf16.mxu0 0
        %3719 = vmatpush2.bf16.xpose.msra.mxu0 %v3700
        %3720 = vmatprep.subr.bf16.mxu0 0
        %3721 = vmatpush2.bf16.xpose.msra.mxu0 %v3697
        %3722 = vmatprep.subr.bf16.mxu0 0
        %3723 = vmatpush2.bf16.xpose.msra.mxu0 %v3694
        %3724 = vmatprep.subr.bf16.mxu0 0
        %3725 = vmatpush2.bf16.xpose.msra.mxu0 %v3691
        %3726 = vmatprep.subr.bf16.mxu0 0
        %3727 = vmatpush2.bf16.xpose.msra.mxu0 %v3688
        %3728 = vmatprep.subr.bf16.mxu0 0
        %3729 = vmatpush2.bf16.xpose.msra.mxu0 %v3685
        %3730 = vmatprep.subr.bf16.mxu0 0
        %3731 = vmatpush2.bf16.xpose.msra.mxu0 %v3682
        %3732 = vmatprep.subr.bf16.mxu0 0
        %3733 = vmatpush2.bf16.xpose.msra.mxu0 %v3679
        %3734 = vmatprep.mubr.bf16.mxu0 0
        %3735 = vmatmul.mubr.bf16.gmra.mxu0 %v3631
        %v3736 = vpop.f32.mrf.mxu0
        %v3737 = vadd.f32 0.0, %v3736
        %v3738 = vpop.f32.mrf.mxu0
        %v3739 = vadd.f32 0.0, %v3738
        %v3740 = vpop.f32.mrf.mxu0
        %v3741 = vadd.f32 0.0, %v3740
        %v3742 = vpop.f32.mrf.mxu0
        %v3743 = vadd.f32 0.0, %v3742
        %3744 = vmatprep.mubr.bf16.mxu0 0
        %3745 = vmatmul.mubr.bf16.gmra.mxu0 %v3634
        %v3746 = vpop.f32.mrf.mxu0
        %v3747 = vadd.f32 0.0, %v3746
        %v3748 = vpop.f32.mrf.mxu0
        %v3749 = vadd.f32 0.0, %v3748
        %v3750 = vpop.f32.mrf.mxu0
        %v3751 = vadd.f32 0.0, %v3750
        %v3752 = vpop.f32.mrf.mxu0
        %v3753 = vadd.f32 0.0, %v3752
        %3754 = vmatprep.mubr.bf16.mxu0 0
        %3755 = vmatmul.mubr.bf16.gmra.mxu0 %v3637
        %v3756 = vpop.f32.mrf.mxu0
        %v3757 = vadd.f32 0.0, %v3756
        %v3758 = vpop.f32.mrf.mxu0
        %v3759 = vadd.f32 0.0, %v3758
        %v3760 = vpop.f32.mrf.mxu0
        %v3761 = vadd.f32 0.0, %v3760
        %v3762 = vpop.f32.mrf.mxu0
        %v3763 = vadd.f32 0.0, %v3762
        %3764 = vmatprep.mubr.bf16.mxu0 0
        %3765 = vmatmul.mubr.bf16.gmra.mxu0 %v3640
        %v3766 = vpop.f32.mrf.mxu0
        %v3767 = vadd.f32 0.0, %v3766
        %v3768 = vpop.f32.mrf.mxu0
        %v3769 = vadd.f32 0.0, %v3768
        %v3770 = vpop.f32.mrf.mxu0
        %v3771 = vadd.f32 0.0, %v3770
        %v3772 = vpop.f32.mrf.mxu0
        %v3773 = vadd.f32 0.0, %v3772
        %3774 = vmatprep.mubr.bf16.mxu0 0
        %3775 = vmatmul.mubr.bf16.gmra.mxu0 %v3643
        %v3776 = vpop.f32.mrf.mxu0
        %v3777 = vadd.f32 0.0, %v3776
        %v3778 = vpop.f32.mrf.mxu0
        %v3779 = vadd.f32 0.0, %v3778
        %v3780 = vpop.f32.mrf.mxu0
        %v3781 = vadd.f32 0.0, %v3780
        %v3782 = vpop.f32.mrf.mxu0
        %v3783 = vadd.f32 0.0, %v3782
        %3784 = vmatprep.mubr.bf16.mxu0 0
        %3785 = vmatmul.mubr.bf16.gmra.mxu0 %v3646
        %v3786 = vpop.f32.mrf.mxu0
        %v3787 = vadd.f32 0.0, %v3786
        %v3788 = vpop.f32.mrf.mxu0
        %v3789 = vadd.f32 0.0, %v3788
        %v3790 = vpop.f32.mrf.mxu0
        %v3791 = vadd.f32 0.0, %v3790
        %v3792 = vpop.f32.mrf.mxu0
        %v3793 = vadd.f32 0.0, %v3792
        %3794 = vmatprep.mubr.bf16.mxu0 0
        %3795 = vmatmul.mubr.bf16.gmra.mxu0 %v3649
        %v3796 = vpop.f32.mrf.mxu0
        %v3797 = vadd.f32 0.0, %v3796
        %v3798 = vpop.f32.mrf.mxu0
        %v3799 = vadd.f32 0.0, %v3798
        %v3800 = vpop.f32.mrf.mxu0
        %v3801 = vadd.f32 0.0, %v3800
        %v3802 = vpop.f32.mrf.mxu0
        %v3803 = vadd.f32 0.0, %v3802
        %3804 = vmatprep.mubr.bf16.mxu0 0
        %3805 = vmatmul.mubr.bf16.gmra.mxu0 %v3652
        %v3806 = vpop.f32.mrf.mxu0
        %v3807 = vadd.f32 0.0, %v3806
        %v3808 = vpop.f32.mrf.mxu0
        %v3809 = vadd.f32 0.0, %v3808
        %v3810 = vpop.f32.mrf.mxu0
        %v3811 = vadd.f32 0.0, %v3810
        %v3812 = vpop.f32.mrf.mxu0
        %v3813 = vadd.f32 0.0, %v3812
        %3814 = vdwg.mxu0
        %v3815 = vmax.f32 %v3737, %v3739
        %3816 = vmax.xlane.f32.xlu0 %v3815
        %v3817 = vpop.xlane.xlu0 %3816
        %v3818 = vmax.f32 %v3741, %v3743
        %3819 = vmax.xlane.f32.xlu0 %v3818
        %v3820 = vpop.xlane.xlu0 %3819
        %v3821 = vmax.f32 %v3747, %v3749
        %3822 = vmax.xlane.f32.xlu0 %v3821
        %v3823 = vpop.xlane.xlu0 %3822
        %v3824 = vmax.f32 %v3751, %v3753
        %3825 = vmax.xlane.f32.xlu0 %v3824
        %v3826 = vpop.xlane.xlu0 %3825
        %v3827 = vmax.f32 %v3757, %v3759
        %3828 = vmax.xlane.f32.xlu0 %v3827
        %v3829 = vpop.xlane.xlu0 %3828
        %v3830 = vmax.f32 %v3761, %v3763
        %3831 = vmax.xlane.f32.xlu0 %v3830
        %v3832 = vpop.xlane.xlu0 %3831
        %v3833 = vmax.f32 %v3767, %v3769
        %3834 = vmax.xlane.f32.xlu0 %v3833
        %v3835 = vpop.xlane.xlu0 %3834
        %v3836 = vmax.f32 %v3771, %v3773
        %3837 = vmax.xlane.f32.xlu0 %v3836
        %v3838 = vpop.xlane.xlu0 %3837
        %v3839 = vmax.f32 %v3777, %v3779
        %3840 = vmax.xlane.f32.xlu0 %v3839
        %v3841 = vpop.xlane.xlu0 %3840
        %v3842 = vmax.f32 %v3781, %v3783
        %3843 = vmax.xlane.f32.xlu0 %v3842
        %v3844 = vpop.xlane.xlu0 %3843
        %v3845 = vmax.f32 %v3787, %v3789
        %3846 = vmax.xlane.f32.xlu0 %v3845
        %v3847 = vpop.xlane.xlu0 %3846
        %v3848 = vmax.f32 %v3791, %v3793
        %3849 = vmax.xlane.f32.xlu0 %v3848
        %v3850 = vpop.xlane.xlu0 %3849
        %v3851 = vmax.f32 %v3797, %v3799
        %3852 = vmax.xlane.f32.xlu0 %v3851
        %v3853 = vpop.xlane.xlu0 %3852
        %v3854 = vmax.f32 %v3801, %v3803
        %3855 = vmax.xlane.f32.xlu0 %v3854
        %v3856 = vpop.xlane.xlu0 %3855
        %v3857 = vmax.f32 %v3807, %v3809
        %3858 = vmax.xlane.f32.xlu0 %v3857
        %v3859 = vpop.xlane.xlu0 %3858
        %v3860 = vmax.f32 %v3811, %v3813
        %3861 = vmax.xlane.f32.xlu0 %v3860
        %v3862 = vpop.xlane.xlu0 %3861
        %v3863 = vsub.f32 %v3737, %v3817
        %v3864 = vsub.f32 %v3739, %v3817
        %v3865 = vsub.f32 %v3741, %v3820
        %v3866 = vsub.f32 %v3743, %v3820
        %v3867 = vsub.f32 %v3747, %v3823
        %v3868 = vsub.f32 %v3749, %v3823
        %v3869 = vsub.f32 %v3751, %v3826
        %v3870 = vsub.f32 %v3753, %v3826
        %v3871 = vsub.f32 %v3757, %v3829
        %v3872 = vsub.f32 %v3759, %v3829
        %v3873 = vsub.f32 %v3761, %v3832
        %v3874 = vsub.f32 %v3763, %v3832
        %v3875 = vsub.f32 %v3767, %v3835
        %v3876 = vsub.f32 %v3769, %v3835
        %v3877 = vsub.f32 %v3771, %v3838
        %v3878 = vsub.f32 %v3773, %v3838
        %v3879 = vsub.f32 %v3777, %v3841
        %v3880 = vsub.f32 %v3779, %v3841
        %v3881 = vsub.f32 %v3781, %v3844
        %v3882 = vsub.f32 %v3783, %v3844
        %v3883 = vsub.f32 %v3787, %v3847
        %v3884 = vsub.f32 %v3789, %v3847
        %v3885 = vsub.f32 %v3791, %v3850
        %v3886 = vsub.f32 %v3793, %v3850
        %v3887 = vsub.f32 %v3797, %v3853
        %v3888 = vsub.f32 %v3799, %v3853
        %v3889 = vsub.f32 %v3801, %v3856
        %v3890 = vsub.f32 %v3803, %v3856
        %v3891 = vsub.f32 %v3807, %v3859
        %v3892 = vsub.f32 %v3809, %v3859
        %v3893 = vsub.f32 %v3811, %v3862
        %v3894 = vsub.f32 %v3813, %v3862
        %v3895 = vmul.f32 %v3863, 1.442695
        %v3896 = vpow.pop %v3895
        %v3897 = vmul.f32 %v3864, 1.442695
        %v3898 = vpow.pop %v3897
        %v3899 = vmul.f32 %v3865, 1.442695
        %v3900 = vpow.pop %v3899
        %v3901 = vmul.f32 %v3866, 1.442695
        %v3902 = vpow.pop %v3901
        %v3903 = vmul.f32 %v3867, 1.442695
        %v3904 = vpow.pop %v3903
        %v3905 = vmul.f32 %v3868, 1.442695
        %v3906 = vpow.pop %v3905
        %v3907 = vmul.f32 %v3869, 1.442695
        %v3908 = vpow.pop %v3907
        %v3909 = vmul.f32 %v3870, 1.442695
        %v3910 = vpow.pop %v3909
        %v3911 = vmul.f32 %v3871, 1.442695
        %v3912 = vpow.pop %v3911
        %v3913 = vmul.f32 %v3872, 1.442695
        %v3914 = vpow.pop %v3913
        %v3915 = vmul.f32 %v3873, 1.442695
        %v3916 = vpow.pop %v3915
        %v3917 = vmul.f32 %v3874, 1.442695
        %v3918 = vpow.pop %v3917
        %v3919 = vmul.f32 %v3875, 1.442695
        %v3920 = vpow.pop %v3919
        %v3921 = vmul.f32 %v3876, 1.442695
        %v3922 = vpow.pop %v3921
        %v3923 = vmul.f32 %v3877, 1.442695
        %v3924 = vpow.pop %v3923
        %v3925 = vmul.f32 %v3878, 1.442695
        %v3926 = vpow.pop %v3925
        %v3927 = vmul.f32 %v3879, 1.442695
        %v3928 = vpow.pop %v3927
        %v3929 = vmul.f32 %v3880, 1.442695
        %v3930 = vpow.pop %v3929
        %v3931 = vmul.f32 %v3881, 1.442695
        %v3932 = vpow.pop %v3931
        %v3933 = vmul.f32 %v3882, 1.442695
        %v3934 = vpow.pop %v3933
        %v3935 = vmul.f32 %v3883, 1.442695
        %v3936 = vpow.pop %v3935
        %v3937 = vmul.f32 %v3884, 1.442695
        %v3938 = vpow.pop %v3937
        %v3939 = vmul.f32 %v3885, 1.442695
        %v3940 = vpow.pop %v3939
        %v3941 = vmul.f32 %v3886, 1.442695
        %v3942 = vpow.pop %v3941
        %v3943 = vmul.f32 %v3887, 1.442695
        %v3944 = vpow.pop %v3943
        %v3945 = vmul.f32 %v3888, 1.442695
        %v3946 = vpow.pop %v3945
        %v3947 = vmul.f32 %v3889, 1.442695
        %v3948 = vpow.pop %v3947
        %v3949 = vmul.f32 %v3890, 1.442695
        %v3950 = vpow.pop %v3949
        %v3951 = vmul.f32 %v3891, 1.442695
        %v3952 = vpow.pop %v3951
        %v3953 = vmul.f32 %v3892, 1.442695
        %v3954 = vpow.pop %v3953
        %v3955 = vmul.f32 %v3893, 1.442695
        %v3956 = vpow.pop %v3955
        %v3957 = vmul.f32 %v3894, 1.442695
        %v3958 = vpow.pop %v3957
        %v3959 = vadd.f32 %v3896, %v3898
        %3960 = vadd.xlane.f32.xlu0 %v3959
        %v3961 = vpop.xlane.xlu0 %3960
        %v3962 = vadd.f32 %v3900, %v3902
        %3963 = vadd.xlane.f32.xlu0 %v3962
        %v3964 = vpop.xlane.xlu0 %3963
        %v3965 = vadd.f32 %v3904, %v3906
        %3966 = vadd.xlane.f32.xlu0 %v3965
        %v3967 = vpop.xlane.xlu0 %3966
        %v3968 = vadd.f32 %v3908, %v3910
        %3969 = vadd.xlane.f32.xlu0 %v3968
        %v3970 = vpop.xlane.xlu0 %3969
        %v3971 = vadd.f32 %v3912, %v3914
        %3972 = vadd.xlane.f32.xlu0 %v3971
        %v3973 = vpop.xlane.xlu0 %3972
        %v3974 = vadd.f32 %v3916, %v3918
        %3975 = vadd.xlane.f32.xlu0 %v3974
        %v3976 = vpop.xlane.xlu0 %3975
        %v3977 = vadd.f32 %v3920, %v3922
        %3978 = vadd.xlane.f32.xlu0 %v3977
        %v3979 = vpop.xlane.xlu0 %3978
        %v3980 = vadd.f32 %v3924, %v3926
        %3981 = vadd.xlane.f32.xlu0 %v3980
        %v3982 = vpop.xlane.xlu0 %3981
        %v3983 = vadd.f32 %v3928, %v3930
        %3984 = vadd.xlane.f32.xlu0 %v3983
        %v3985 = vpop.xlane.xlu0 %3984
        %v3986 = vadd.f32 %v3932, %v3934
        %3987 = vadd.xlane.f32.xlu0 %v3986
        %v3988 = vpop.xlane.xlu0 %3987
        %v3989 = vadd.f32 %v3936, %v3938
        %3990 = vadd.xlane.f32.xlu0 %v3989
        %v3991 = vpop.xlane.xlu0 %3990
        %v3992 = vadd.f32 %v3940, %v3942
        %3993 = vadd.xlane.f32.xlu0 %v3992
        %v3994 = vpop.xlane.xlu0 %3993
        %v3995 = vadd.f32 %v3944, %v3946
        %3996 = vadd.xlane.f32.xlu0 %v3995
        %v3997 = vpop.xlane.xlu0 %3996
        %v3998 = vadd.f32 %v3948, %v3950
        %3999 = vadd.xlane.f32.xlu0 %v3998
        %v4000 = vpop.xlane.xlu0 %3999
        %v4001 = vadd.f32 %v3952, %v3954
        %4002 = vadd.xlane.f32.xlu0 %v4001
        %v4003 = vpop.xlane.xlu0 %4002
        %v4004 = vadd.f32 %v3956, %v3958
        %4005 = vadd.xlane.f32.xlu0 %v4004
        %v4006 = vpop.xlane.xlu0 %4005
        %v4007 = vpack.c.bf16 %v3900, %v3896
        %v4008 = vpack.c.bf16 %v3902, %v3898
        %v4009 = vpack.c.bf16 %v3908, %v3904
        %v4010 = vpack.c.bf16 %v3910, %v3906
        %v4011 = vpack.c.bf16 %v3916, %v3912
        %v4012 = vpack.c.bf16 %v3918, %v3914
        %v4013 = vpack.c.bf16 %v3924, %v3920
        %v4014 = vpack.c.bf16 %v3926, %v3922
        %v4015 = vpack.c.bf16 %v3932, %v3928
        %v4016 = vpack.c.bf16 %v3934, %v3930
        %v4017 = vpack.c.bf16 %v3940, %v3936
        %v4018 = vpack.c.bf16 %v3942, %v3938
        %v4019 = vpack.c.bf16 %v3948, %v3944
        %v4020 = vpack.c.bf16 %v3950, %v3946
        %v4021 = vpack.c.bf16 %v3956, %v3952
        %v4022 = vpack.c.bf16 %v3958, %v3954
        %4023 = vrot.lane.b32.xlu0 %v1756, 80
        %v4024 = vpop.permute.xlu0 %4023
        %4025 = vrot.lane.b32.xlu0 %v1757, 80
        %v4026 = vpop.permute.xlu0 %4025
        %4027 = vrot.lane.b32.xlu0 %v1758, 80
        %v4028 = vpop.permute.xlu0 %4027
        %4029 = vrot.lane.b32.xlu0 %v1759, 80
        %v4030 = vpop.permute.xlu0 %4029
        %4031 = vrot.lane.b32.xlu0 %v1760, 80
        %v4032 = vpop.permute.xlu0 %4031
        %4033 = vrot.lane.b32.xlu0 %v1761, 80
        %v4034 = vpop.permute.xlu0 %4033
        %4035 = vrot.lane.b32.xlu0 %v1762, 80
        %v4036 = vpop.permute.xlu0 %4035
        %4037 = vrot.lane.b32.xlu0 %v1763, 80
        %v4038 = vpop.permute.xlu0 %4037
        %4039 = vrot.lane.b32.xlu0 %v1764, 80
        %v4040 = vpop.permute.xlu0 %4039
        %4041 = vrot.lane.b32.xlu0 %v1765, 80
        %v4042 = vpop.permute.xlu0 %4041
        %4043 = vrot.lane.b32.xlu0 %v1766, 80
        %v4044 = vpop.permute.xlu0 %4043
        %4045 = vrot.lane.b32.xlu0 %v1767, 80
        %v4046 = vpop.permute.xlu0 %4045
        %4047 = vrot.lane.b32.xlu0 %v1768, 80
        %v4048 = vpop.permute.xlu0 %4047
        %4049 = vrot.lane.b32.xlu0 %v1769, 80
        %v4050 = vpop.permute.xlu0 %4049
        %4051 = vrot.lane.b32.xlu0 %v1770, 80
        %v4052 = vpop.permute.xlu0 %4051
        %4053 = vrot.lane.b32.xlu0 %v1771, 80
        %v4054 = vpop.permute.xlu0 %4053
        %4071 = vmatprep.subr.bf16.mxu0 0
        %4072 = vmatpush1.bf16.msra.mxu0 %v4038
        %4073 = vmatprep.subr.bf16.mxu0 0
        %4074 = vmatpush1.bf16.msra.mxu0 %v4036
        %4075 = vmatprep.subr.bf16.mxu0 0
        %4076 = vmatpush1.bf16.msra.mxu0 %v4034
        %4077 = vmatprep.subr.bf16.mxu0 0
        %4078 = vmatpush1.bf16.msra.mxu0 %v4032
        %4079 = vmatprep.subr.bf16.mxu0 0
        %4080 = vmatpush1.bf16.msra.mxu0 %v4030
        %4081 = vmatprep.subr.bf16.mxu0 0
        %4082 = vmatpush1.bf16.msra.mxu0 %v4028
        %4083 = vmatprep.subr.bf16.mxu0 0
        %4084 = vmatpush1.bf16.msra.mxu0 %v4026
        %4085 = vmatprep.subr.bf16.mxu0 0
        %4086 = vmatpush1.bf16.msra.mxu0 %v4024
        %4087 = vmatprep.subr.bf16.mxu0 0
        %4088 = vmatpush2.bf16.msra.mxu0 %v4054
        %4089 = vmatprep.subr.bf16.mxu0 0
        %4090 = vmatpush2.bf16.msra.mxu0 %v4052
        %4091 = vmatprep.subr.bf16.mxu0 0
        %4092 = vmatpush2.bf16.msra.mxu0 %v4050
        %4093 = vmatprep.subr.bf16.mxu0 0
        %4094 = vmatpush2.bf16.msra.mxu0 %v4048
        %4095 = vmatprep.subr.bf16.mxu0 0
        %4096 = vmatpush2.bf16.msra.mxu0 %v4046
        %4097 = vmatprep.subr.bf16.mxu0 0
        %4098 = vmatpush2.bf16.msra.mxu0 %v4044
        %4099 = vmatprep.subr.bf16.mxu0 0
        %4100 = vmatpush2.bf16.msra.mxu0 %v4042
        %4101 = vmatprep.subr.bf16.mxu0 0
        %4102 = vmatpush2.bf16.msra.mxu0 %v4040
        %4103 = vmatprep.mubr.bf16.mxu0 %v4008
        %4104 = vmatmul.mubr.bf16.gmra.mxu0 %v4007
        %v4105 = vpop.f32.mrf.mxu0
        %v4106 = vadd.f32 0.0, %v4105
        %v4107 = vpop.f32.mrf.mxu0
        %v4108 = vpop.f32.mrf.mxu0
        %v4109 = vadd.f32 0.0, %v4108
        %v4110 = vpop.f32.mrf.mxu0
        %4111 = vmatprep.mubr.bf16.mxu0 %v4010
        %4112 = vmatmul.mubr.bf16.gmra.mxu0 %v4009
        %v4113 = vpop.f32.mrf.mxu0
        %v4114 = vadd.f32 0.0, %v4113
        %v4115 = vpop.f32.mrf.mxu0
        %v4116 = vpop.f32.mrf.mxu0
        %v4117 = vadd.f32 0.0, %v4116
        %v4118 = vpop.f32.mrf.mxu0
        %4119 = vmatprep.mubr.bf16.mxu0 %v4012
        %4120 = vmatmul.mubr.bf16.gmra.mxu0 %v4011
        %v4121 = vpop.f32.mrf.mxu0
        %v4122 = vadd.f32 0.0, %v4121
        %v4123 = vpop.f32.mrf.mxu0
        %v4124 = vpop.f32.mrf.mxu0
        %v4125 = vadd.f32 0.0, %v4124
        %v4126 = vpop.f32.mrf.mxu0
        %4127 = vmatprep.mubr.bf16.mxu0 %v4014
        %4128 = vmatmul.mubr.bf16.gmra.mxu0 %v4013
        %v4129 = vpop.f32.mrf.mxu0
        %v4130 = vadd.f32 0.0, %v4129
        %v4131 = vpop.f32.mrf.mxu0
        %v4132 = vpop.f32.mrf.mxu0
        %v4133 = vadd.f32 0.0, %v4132
        %v4134 = vpop.f32.mrf.mxu0
        %4135 = vmatprep.mubr.bf16.mxu0 %v4016
        %4136 = vmatmul.mubr.bf16.gmra.mxu0 %v4015
        %v4137 = vpop.f32.mrf.mxu0
        %v4138 = vadd.f32 0.0, %v4137
        %v4139 = vpop.f32.mrf.mxu0
        %v4140 = vpop.f32.mrf.mxu0
        %v4141 = vadd.f32 0.0, %v4140
        %v4142 = vpop.f32.mrf.mxu0
        %4143 = vmatprep.mubr.bf16.mxu0 %v4018
        %4144 = vmatmul.mubr.bf16.gmra.mxu0 %v4017
        %v4145 = vpop.f32.mrf.mxu0
        %v4146 = vadd.f32 0.0, %v4145
        %v4147 = vpop.f32.mrf.mxu0
        %v4148 = vpop.f32.mrf.mxu0
        %v4149 = vadd.f32 0.0, %v4148
        %v4150 = vpop.f32.mrf.mxu0
        %4151 = vmatprep.mubr.bf16.mxu0 %v4020
        %4152 = vmatmul.mubr.bf16.gmra.mxu0 %v4019
        %v4153 = vpop.f32.mrf.mxu0
        %v4154 = vadd.f32 0.0, %v4153
        %v4155 = vpop.f32.mrf.mxu0
        %v4156 = vpop.f32.mrf.mxu0
        %v4157 = vadd.f32 0.0, %v4156
        %v4158 = vpop.f32.mrf.mxu0
        %4159 = vmatprep.mubr.bf16.mxu0 %v4022
        %4160 = vmatmul.mubr.bf16.gmra.mxu0 %v4021
        %v4161 = vpop.f32.mrf.mxu0
        %v4162 = vadd.f32 0.0, %v4161
        %v4163 = vpop.f32.mrf.mxu0
        %v4164 = vpop.f32.mrf.mxu0
        %v4165 = vadd.f32 0.0, %v4164
        %v4166 = vpop.f32.mrf.mxu0
        %4167 = vdwg.mxu0
        %v4168 = vrcp.pop %v3961
        %v4169 = vrcp.pop %v3964
        %v4170 = vrcp.pop %v3967
        %v4171 = vrcp.pop %v3970
        %v4172 = vrcp.pop %v3973
        %v4173 = vrcp.pop %v3976
        %v4174 = vrcp.pop %v3979
        %v4175 = vrcp.pop %v3982
        %v4176 = vrcp.pop %v3985
        %v4177 = vrcp.pop %v3988
        %v4178 = vrcp.pop %v3991
        %v4179 = vrcp.pop %v3994
        %v4180 = vrcp.pop %v3997
        %v4181 = vrcp.pop %v4000
        %v4182 = vrcp.pop %v4003
        %v4183 = vrcp.pop %v4006
        %v4184 = vmul.f32 %v4106, %v4168
        %v4185 = vmul.f32 %v4109, %v4169
        %v4186 = vmul.f32 %v4114, %v4170
        %v4187 = vmul.f32 %v4117, %v4171
        %v4188 = vmul.f32 %v4122, %v4172
        %v4189 = vmul.f32 %v4125, %v4173
        %v4190 = vmul.f32 %v4130, %v4174
        %v4191 = vmul.f32 %v4133, %v4175
        %v4192 = vmul.f32 %v4138, %v4176
        %v4193 = vmul.f32 %v4141, %v4177
        %v4194 = vmul.f32 %v4146, %v4178
        %v4195 = vmul.f32 %v4149, %v4179
        %v4196 = vmul.f32 %v4154, %v4180
        %v4197 = vmul.f32 %v4157, %v4181
        %v4198 = vmul.f32 %v4162, %v4182
        %v4199 = vmul.f32 %v4165, %v4183
        %v4200 = vpack.c.bf16 %v4185, %v4184
        %v4201 = vpack.c.bf16 %v4187, %v4186
        %v4202 = vpack.c.bf16 %v4189, %v4188
        %v4203 = vpack.c.bf16 %v4191, %v4190
        %v4204 = vpack.c.bf16 %v4193, %v4192
        %v4205 = vpack.c.bf16 %v4195, %v4194
        %v4206 = vpack.c.bf16 %v4197, %v4196
        %v4207 = vpack.c.bf16 %v4199, %v4198
        %v4210 = vunpack.c.l.b16 %v1240
        %v4211 = vunpack.c.l.b16 %v1241
        %v4212 = vpack.c.b16 %v4211, %v4210
        %v4215 = vsel %vm1330, %v4200, 0
        %v4218 = vsel %vm1330, %v4201, 0
        %v4221 = vsel %vm1330, %v4202, 0
        %v4224 = vsel %vm1330, %v4203, 0
        %v4227 = vsel %vm1330, %v4204, 0
        %v4230 = vsel %vm1330, %v4205, 0
        %v4233 = vsel %vm1330, %v4206, 0
        %v4236 = vsel %vm1330, %v4207, 0
        %4238 = vmatprep.subr.bf16.mxu0 0
        %4239 = vmatpush1.bf16.msra.mxu0 0
        %4240 = vmatprep.subr.bf16.mxu0 0
        %4241 = vmatpush1.bf16.msra.mxu0 0
        %4242 = vmatprep.subr.bf16.mxu0 0
        %4243 = vmatpush1.bf16.msra.mxu0 0
        %4244 = vmatprep.subr.bf16.mxu0 0
        %4245 = vmatpush1.bf16.msra.mxu0 0
        %4246 = vmatprep.subr.bf16.mxu0 0
        %4247 = vmatpush1.bf16.msra.mxu0 0
        %4248 = vmatprep.subr.bf16.mxu0 0
        %4249 = vmatpush1.bf16.msra.mxu0 0
        %4250 = vmatprep.subr.bf16.mxu0 0
        %4251 = vmatpush1.bf16.msra.mxu0 0
        %4252 = vmatprep.subr.bf16.mxu0 0
        %4253 = vmatpush1.bf16.msra.mxu0 %v4212
        %4254 = vmatprep.subr.bf16.mxu0 0
        %4255 = vmatpush2.bf16.msra.mxu0 0
        %4256 = vmatprep.subr.bf16.mxu0 0
        %4257 = vmatpush2.bf16.msra.mxu0 0
        %4258 = vmatprep.subr.bf16.mxu0 0
        %4259 = vmatpush2.bf16.msra.mxu0 0
        %4260 = vmatprep.subr.bf16.mxu0 0
        %4261 = vmatpush2.bf16.msra.mxu0 0
        %4262 = vmatprep.subr.bf16.mxu0 0
        %4263 = vmatpush2.bf16.msra.mxu0 0
        %4264 = vmatprep.subr.bf16.mxu0 0
        %4265 = vmatpush2.bf16.msra.mxu0 0
        %4266 = vmatprep.subr.bf16.mxu0 0
        %4267 = vmatpush2.bf16.msra.mxu0 0
        %4268 = vmatprep.subr.bf16.mxu0 0
        %4269 = vmatpush2.bf16.msra.mxu0 0
        %4270 = vmatprep.mubr.bf16.mxu0 0
        %4271 = vmatmul.mubr.bf16.gmra.mxu0 %v4215
        %v4272 = vpop.f32.mrf.mxu0
        %v4273 = vadd.f32 0.0, %v4272
        %v4274 = vpop.f32.mrf.mxu0
        %v4275 = vpop.f32.mrf.mxu0
        %v4276 = vadd.f32 0.0, %v4275
        %v4277 = vpop.f32.mrf.mxu0
        %4278 = vmatprep.mubr.bf16.mxu0 0
        %4279 = vmatmul.mubr.bf16.gmra.mxu0 %v4218
        %v4280 = vpop.f32.mrf.mxu0
        %v4281 = vadd.f32 0.0, %v4280
        %v4282 = vpop.f32.mrf.mxu0
        %v4283 = vpop.f32.mrf.mxu0
        %v4284 = vadd.f32 0.0, %v4283
        %v4285 = vpop.f32.mrf.mxu0
        %4286 = vmatprep.mubr.bf16.mxu0 0
        %4287 = vmatmul.mubr.bf16.gmra.mxu0 %v4221
        %v4288 = vpop.f32.mrf.mxu0
        %v4289 = vadd.f32 0.0, %v4288
        %v4290 = vpop.f32.mrf.mxu0
        %v4291 = vpop.f32.mrf.mxu0
        %v4292 = vadd.f32 0.0, %v4291
        %v4293 = vpop.f32.mrf.mxu0
        %4294 = vmatprep.mubr.bf16.mxu0 0
        %4295 = vmatmul.mubr.bf16.gmra.mxu0 %v4224
        %v4296 = vpop.f32.mrf.mxu0
        %v4297 = vadd.f32 0.0, %v4296
        %v4298 = vpop.f32.mrf.mxu0
        %v4299 = vpop.f32.mrf.mxu0
        %v4300 = vadd.f32 0.0, %v4299
        %v4301 = vpop.f32.mrf.mxu0
        %4302 = vmatprep.mubr.bf16.mxu0 0
        %4303 = vmatmul.mubr.bf16.gmra.mxu0 %v4227
        %v4304 = vpop.f32.mrf.mxu0
        %v4305 = vadd.f32 0.0, %v4304
        %v4306 = vpop.f32.mrf.mxu0
        %v4307 = vpop.f32.mrf.mxu0
        %v4308 = vadd.f32 0.0, %v4307
        %v4309 = vpop.f32.mrf.mxu0
        %4310 = vmatprep.mubr.bf16.mxu0 0
        %4311 = vmatmul.mubr.bf16.gmra.mxu0 %v4230
        %v4312 = vpop.f32.mrf.mxu0
        %v4313 = vadd.f32 0.0, %v4312
        %v4314 = vpop.f32.mrf.mxu0
        %v4315 = vpop.f32.mrf.mxu0
        %v4316 = vadd.f32 0.0, %v4315
        %v4317 = vpop.f32.mrf.mxu0
        %4318 = vmatprep.mubr.bf16.mxu0 0
        %4319 = vmatmul.mubr.bf16.gmra.mxu0 %v4233
        %v4320 = vpop.f32.mrf.mxu0
        %v4321 = vadd.f32 0.0, %v4320
        %v4322 = vpop.f32.mrf.mxu0
        %v4323 = vpop.f32.mrf.mxu0
        %v4324 = vadd.f32 0.0, %v4323
        %v4325 = vpop.f32.mrf.mxu0
        %4326 = vmatprep.mubr.bf16.mxu0 0
        %4327 = vmatmul.mubr.bf16.gmra.mxu0 %v4236
        %v4328 = vpop.f32.mrf.mxu0
        %v4329 = vadd.f32 0.0, %v4328
        %v4330 = vpop.f32.mrf.mxu0
        %v4331 = vpop.f32.mrf.mxu0
        %v4332 = vadd.f32 0.0, %v4331
        %v4333 = vpop.f32.mrf.mxu0
        %4334 = vdwg.mxu0
        %v4335 = vadd.f32 %v3566, %v4273
        %v4336 = vadd.f32 %v3567, %v4276
        %v4337 = vadd.f32 %v3568, %v4281
        %v4338 = vadd.f32 %v3569, %v4284
        %v4339 = vadd.f32 %v3570, %v4289
        %v4340 = vadd.f32 %v3571, %v4292
        %v4341 = vadd.f32 %v3572, %v4297
        %v4342 = vadd.f32 %v3573, %v4300
        %v4343 = vadd.f32 %v3574, %v4305
        %v4344 = vadd.f32 %v3575, %v4308
        %v4345 = vadd.f32 %v3576, %v4313
        %v4346 = vadd.f32 %v3577, %v4316
        %v4347 = vadd.f32 %v3578, %v4321
        %v4348 = vadd.f32 %v3579, %v4324
        %v4349 = vadd.f32 %v3580, %v4329
        %v4350 = vadd.f32 %v3581, %v4332
        %4351 = vrot.lane.b32.xlu0 %v1194, 64
        %v4352 = vpop.permute.xlu0 %4351
        %4353 = vrot.lane.b32.xlu0 %v1195, 64
        %v4354 = vpop.permute.xlu0 %4353
        %4355 = vrot.lane.b32.xlu0 %v1196, 64
        %v4356 = vpop.permute.xlu0 %4355
        %4357 = vrot.lane.b32.xlu0 %v1197, 64
        %v4358 = vpop.permute.xlu0 %4357
        %4359 = vrot.lane.b32.xlu0 %v1198, 64
        %v4360 = vpop.permute.xlu0 %4359
        %4361 = vrot.lane.b32.xlu0 %v1199, 64
        %v4362 = vpop.permute.xlu0 %4361
        %4363 = vrot.lane.b32.xlu0 %v1200, 64
        %v4364 = vpop.permute.xlu0 %4363
        %4365 = vrot.lane.b32.xlu0 %v1201, 64
        %v4366 = vpop.permute.xlu0 %4365
        %4367 = vrot.lane.b32.xlu0 %v1314, 64
        %v4368 = vpop.permute.xlu0 %4367
        %4369 = vrot.lane.b32.xlu0 %v1315, 64
        %v4370 = vpop.permute.xlu0 %4369
        %4371 = vrot.lane.b32.xlu0 %v1316, 64
        %v4372 = vpop.permute.xlu0 %4371
        %4373 = vrot.lane.b32.xlu0 %v1317, 64
        %v4374 = vpop.permute.xlu0 %4373
        %4375 = vrot.lane.b32.xlu0 %v1318, 64
        %v4376 = vpop.permute.xlu0 %4375
        %4377 = vrot.lane.b32.xlu0 %v1319, 64
        %v4378 = vpop.permute.xlu0 %4377
        %4379 = vrot.lane.b32.xlu0 %v1320, 64
        %v4380 = vpop.permute.xlu0 %4379
        %4381 = vrot.lane.b32.xlu0 %v1321, 64
        %v4382 = vpop.permute.xlu0 %4381
        %4383 = vrot.lane.b32.xlu0 %v1322, 64
        %v4384 = vpop.permute.xlu0 %4383
        %4385 = vrot.lane.b32.xlu0 %v1323, 64
        %v4386 = vpop.permute.xlu0 %4385
        %4387 = vrot.lane.b32.xlu0 %v1324, 64
        %v4388 = vpop.permute.xlu0 %4387
        %4389 = vrot.lane.b32.xlu0 %v1325, 64
        %v4390 = vpop.permute.xlu0 %4389
        %4391 = vrot.lane.b32.xlu0 %v1326, 64
        %v4392 = vpop.permute.xlu0 %4391
        %4393 = vrot.lane.b32.xlu0 %v1327, 64
        %v4394 = vpop.permute.xlu0 %4393
        %4395 = vrot.lane.b32.xlu0 %v1328, 64
        %v4396 = vpop.permute.xlu0 %4395
        %4397 = vrot.lane.b32.xlu0 %v1329, 64
        %v4398 = vpop.permute.xlu0 %4397
        %v4400 = vsel %vm1330, %v4352, 0
        %v4403 = vsel %vm1330, %v4354, 0
        %v4406 = vsel %vm1330, %v4356, 0
        %v4409 = vsel %vm1330, %v4358, 0
        %v4412 = vsel %vm1330, %v4360, 0
        %v4415 = vsel %vm1330, %v4362, 0
        %v4418 = vsel %vm1330, %v4364, 0
        %v4421 = vsel %vm1330, %v4366, 0
        %v4424 = vsel %vm1330, %v4368, 0
        %v4427 = vsel %vm1330, %v4370, 0
        %v4430 = vsel %vm1330, %v4372, 0
        %v4433 = vsel %vm1330, %v4374, 0
        %v4436 = vsel %vm1330, %v4376, 0
        %v4439 = vsel %vm1330, %v4378, 0
        %v4442 = vsel %vm1330, %v4380, 0
        %v4445 = vsel %vm1330, %v4382, 0
        %v4448 = vsel %vm1330, %v4384, 0
        %v4451 = vsel %vm1330, %v4386, 0
        %v4454 = vsel %vm1330, %v4388, 0
        %v4457 = vsel %vm1330, %v4390, 0
        %v4460 = vsel %vm1330, %v4392, 0
        %v4463 = vsel %vm1330, %v4394, 0
        %v4466 = vsel %vm1330, %v4396, 0
        %v4469 = vsel %vm1330, %v4398, 0
        %4471 = vmatprep.subr.bf16.mxu0 0
        %4472 = vmatpush1.bf16.xpose.msra.mxu0 %v4445
        %4473 = vmatprep.subr.bf16.mxu0 0
        %4474 = vmatpush1.bf16.xpose.msra.mxu0 %v4442
        %4475 = vmatprep.subr.bf16.mxu0 0
        %4476 = vmatpush1.bf16.xpose.msra.mxu0 %v4439
        %4477 = vmatprep.subr.bf16.mxu0 0
        %4478 = vmatpush1.bf16.xpose.msra.mxu0 %v4436
        %4479 = vmatprep.subr.bf16.mxu0 0
        %4480 = vmatpush1.bf16.xpose.msra.mxu0 %v4433
        %4481 = vmatprep.subr.bf16.mxu0 0
        %4482 = vmatpush1.bf16.xpose.msra.mxu0 %v4430
        %4483 = vmatprep.subr.bf16.mxu0 0
        %4484 = vmatpush1.bf16.xpose.msra.mxu0 %v4427
        %4485 = vmatprep.subr.bf16.mxu0 0
        %4486 = vmatpush1.bf16.xpose.msra.mxu0 %v4424
        %4487 = vmatprep.subr.bf16.mxu0 0
        %4488 = vmatpush2.bf16.xpose.msra.mxu0 %v4469
        %4489 = vmatprep.subr.bf16.mxu0 0
        %4490 = vmatpush2.bf16.xpose.msra.mxu0 %v4466
        %4491 = vmatprep.subr.bf16.mxu0 0
        %4492 = vmatpush2.bf16.xpose.msra.mxu0 %v4463
        %4493 = vmatprep.subr.bf16.mxu0 0
        %4494 = vmatpush2.bf16.xpose.msra.mxu0 %v4460
        %4495 = vmatprep.subr.bf16.mxu0 0
        %4496 = vmatpush2.bf16.xpose.msra.mxu0 %v4457
        %4497 = vmatprep.subr.bf16.mxu0 0
        %4498 = vmatpush2.bf16.xpose.msra.mxu0 %v4454
        %4499 = vmatprep.subr.bf16.mxu0 0
        %4500 = vmatpush2.bf16.xpose.msra.mxu0 %v4451
        %4501 = vmatprep.subr.bf16.mxu0 0
        %4502 = vmatpush2.bf16.xpose.msra.mxu0 %v4448
        %4503 = vmatprep.mubr.bf16.mxu0 0
        %4504 = vmatmul.mubr.bf16.gmra.mxu0 %v4400
        %v4505 = vpop.f32.mrf.mxu0
        %v4506 = vadd.f32 0.0, %v4505
        %v4507 = vpop.f32.mrf.mxu0
        %v4508 = vadd.f32 0.0, %v4507
        %v4509 = vpop.f32.mrf.mxu0
        %v4510 = vadd.f32 0.0, %v4509
        %v4511 = vpop.f32.mrf.mxu0
        %v4512 = vadd.f32 0.0, %v4511
        %4513 = vmatprep.mubr.bf16.mxu0 0
        %4514 = vmatmul.mubr.bf16.gmra.mxu0 %v4403
        %v4515 = vpop.f32.mrf.mxu0
        %v4516 = vadd.f32 0.0, %v4515
        %v4517 = vpop.f32.mrf.mxu0
        %v4518 = vadd.f32 0.0, %v4517
        %v4519 = vpop.f32.mrf.mxu0
        %v4520 = vadd.f32 0.0, %v4519
        %v4521 = vpop.f32.mrf.mxu0
        %v4522 = vadd.f32 0.0, %v4521
        %4523 = vmatprep.mubr.bf16.mxu0 0
        %4524 = vmatmul.mubr.bf16.gmra.mxu0 %v4406
        %v4525 = vpop.f32.mrf.mxu0
        %v4526 = vadd.f32 0.0, %v4525
        %v4527 = vpop.f32.mrf.mxu0
        %v4528 = vadd.f32 0.0, %v4527
        %v4529 = vpop.f32.mrf.mxu0
        %v4530 = vadd.f32 0.0, %v4529
        %v4531 = vpop.f32.mrf.mxu0
        %v4532 = vadd.f32 0.0, %v4531
        %4533 = vmatprep.mubr.bf16.mxu0 0
        %4534 = vmatmul.mubr.bf16.gmra.mxu0 %v4409
        %v4535 = vpop.f32.mrf.mxu0
        %v4536 = vadd.f32 0.0, %v4535
        %v4537 = vpop.f32.mrf.mxu0
        %v4538 = vadd.f32 0.0, %v4537
        %v4539 = vpop.f32.mrf.mxu0
        %v4540 = vadd.f32 0.0, %v4539
        %v4541 = vpop.f32.mrf.mxu0
        %v4542 = vadd.f32 0.0, %v4541
        %4543 = vmatprep.mubr.bf16.mxu0 0
        %4544 = vmatmul.mubr.bf16.gmra.mxu0 %v4412
        %v4545 = vpop.f32.mrf.mxu0
        %v4546 = vadd.f32 0.0, %v4545
        %v4547 = vpop.f32.mrf.mxu0
        %v4548 = vadd.f32 0.0, %v4547
        %v4549 = vpop.f32.mrf.mxu0
        %v4550 = vadd.f32 0.0, %v4549
        %v4551 = vpop.f32.mrf.mxu0
        %v4552 = vadd.f32 0.0, %v4551
        %4553 = vmatprep.mubr.bf16.mxu0 0
        %4554 = vmatmul.mubr.bf16.gmra.mxu0 %v4415
        %v4555 = vpop.f32.mrf.mxu0
        %v4556 = vadd.f32 0.0, %v4555
        %v4557 = vpop.f32.mrf.mxu0
        %v4558 = vadd.f32 0.0, %v4557
        %v4559 = vpop.f32.mrf.mxu0
        %v4560 = vadd.f32 0.0, %v4559
        %v4561 = vpop.f32.mrf.mxu0
        %v4562 = vadd.f32 0.0, %v4561
        %4563 = vmatprep.mubr.bf16.mxu0 0
        %4564 = vmatmul.mubr.bf16.gmra.mxu0 %v4418
        %v4565 = vpop.f32.mrf.mxu0
        %v4566 = vadd.f32 0.0, %v4565
        %v4567 = vpop.f32.mrf.mxu0
        %v4568 = vadd.f32 0.0, %v4567
        %v4569 = vpop.f32.mrf.mxu0
        %v4570 = vadd.f32 0.0, %v4569
        %v4571 = vpop.f32.mrf.mxu0
        %v4572 = vadd.f32 0.0, %v4571
        %4573 = vmatprep.mubr.bf16.mxu0 0
        %4574 = vmatmul.mubr.bf16.gmra.mxu0 %v4421
        %v4575 = vpop.f32.mrf.mxu0
        %v4576 = vadd.f32 0.0, %v4575
        %v4577 = vpop.f32.mrf.mxu0
        %v4578 = vadd.f32 0.0, %v4577
        %v4579 = vpop.f32.mrf.mxu0
        %v4580 = vadd.f32 0.0, %v4579
        %v4581 = vpop.f32.mrf.mxu0
        %v4582 = vadd.f32 0.0, %v4581
        %4583 = vdwg.mxu0
        %v4584 = vmax.f32 %v4506, %v4508
        %4585 = vmax.xlane.f32.xlu0 %v4584
        %v4586 = vpop.xlane.xlu0 %4585
        %v4587 = vmax.f32 %v4510, %v4512
        %4588 = vmax.xlane.f32.xlu0 %v4587
        %v4589 = vpop.xlane.xlu0 %4588
        %v4590 = vmax.f32 %v4516, %v4518
        %4591 = vmax.xlane.f32.xlu0 %v4590
        %v4592 = vpop.xlane.xlu0 %4591
        %v4593 = vmax.f32 %v4520, %v4522
        %4594 = vmax.xlane.f32.xlu0 %v4593
        %v4595 = vpop.xlane.xlu0 %4594
        %v4596 = vmax.f32 %v4526, %v4528
        %4597 = vmax.xlane.f32.xlu0 %v4596
        %v4598 = vpop.xlane.xlu0 %4597
        %v4599 = vmax.f32 %v4530, %v4532
        %4600 = vmax.xlane.f32.xlu0 %v4599
        %v4601 = vpop.xlane.xlu0 %4600
        %v4602 = vmax.f32 %v4536, %v4538
        %4603 = vmax.xlane.f32.xlu0 %v4602
        %v4604 = vpop.xlane.xlu0 %4603
        %v4605 = vmax.f32 %v4540, %v4542
        %4606 = vmax.xlane.f32.xlu0 %v4605
        %v4607 = vpop.xlane.xlu0 %4606
        %v4608 = vmax.f32 %v4546, %v4548
        %4609 = vmax.xlane.f32.xlu0 %v4608
        %v4610 = vpop.xlane.xlu0 %4609
        %v4611 = vmax.f32 %v4550, %v4552
        %4612 = vmax.xlane.f32.xlu0 %v4611
        %v4613 = vpop.xlane.xlu0 %4612
        %v4614 = vmax.f32 %v4556, %v4558
        %4615 = vmax.xlane.f32.xlu0 %v4614
        %v4616 = vpop.xlane.xlu0 %4615
        %v4617 = vmax.f32 %v4560, %v4562
        %4618 = vmax.xlane.f32.xlu0 %v4617
        %v4619 = vpop.xlane.xlu0 %4618
        %v4620 = vmax.f32 %v4566, %v4568
        %4621 = vmax.xlane.f32.xlu0 %v4620
        %v4622 = vpop.xlane.xlu0 %4621
        %v4623 = vmax.f32 %v4570, %v4572
        %4624 = vmax.xlane.f32.xlu0 %v4623
        %v4625 = vpop.xlane.xlu0 %4624
        %v4626 = vmax.f32 %v4576, %v4578
        %4627 = vmax.xlane.f32.xlu0 %v4626
        %v4628 = vpop.xlane.xlu0 %4627
        %v4629 = vmax.f32 %v4580, %v4582
        %4630 = vmax.xlane.f32.xlu0 %v4629
        %v4631 = vpop.xlane.xlu0 %4630
        %v4632 = vsub.f32 %v4506, %v4586
        %v4633 = vsub.f32 %v4508, %v4586
        %v4634 = vsub.f32 %v4510, %v4589
        %v4635 = vsub.f32 %v4512, %v4589
        %v4636 = vsub.f32 %v4516, %v4592
        %v4637 = vsub.f32 %v4518, %v4592
        %v4638 = vsub.f32 %v4520, %v4595
        %v4639 = vsub.f32 %v4522, %v4595
        %v4640 = vsub.f32 %v4526, %v4598
        %v4641 = vsub.f32 %v4528, %v4598
        %v4642 = vsub.f32 %v4530, %v4601
        %v4643 = vsub.f32 %v4532, %v4601
        %v4644 = vsub.f32 %v4536, %v4604
        %v4645 = vsub.f32 %v4538, %v4604
        %v4646 = vsub.f32 %v4540, %v4607
        %v4647 = vsub.f32 %v4542, %v4607
        %v4648 = vsub.f32 %v4546, %v4610
        %v4649 = vsub.f32 %v4548, %v4610
        %v4650 = vsub.f32 %v4550, %v4613
        %v4651 = vsub.f32 %v4552, %v4613
        %v4652 = vsub.f32 %v4556, %v4616
        %v4653 = vsub.f32 %v4558, %v4616
        %v4654 = vsub.f32 %v4560, %v4619
        %v4655 = vsub.f32 %v4562, %v4619
        %v4656 = vsub.f32 %v4566, %v4622
        %v4657 = vsub.f32 %v4568, %v4622
        %v4658 = vsub.f32 %v4570, %v4625
        %v4659 = vsub.f32 %v4572, %v4625
        %v4660 = vsub.f32 %v4576, %v4628
        %v4661 = vsub.f32 %v4578, %v4628
        %v4662 = vsub.f32 %v4580, %v4631
        %v4663 = vsub.f32 %v4582, %v4631
        %v4664 = vmul.f32 %v4632, 1.442695
        %v4665 = vpow.pop %v4664
        %v4666 = vmul.f32 %v4633, 1.442695
        %v4667 = vpow.pop %v4666
        %v4668 = vmul.f32 %v4634, 1.442695
        %v4669 = vpow.pop %v4668
        %v4670 = vmul.f32 %v4635, 1.442695
        %v4671 = vpow.pop %v4670
        %v4672 = vmul.f32 %v4636, 1.442695
        %v4673 = vpow.pop %v4672
        %v4674 = vmul.f32 %v4637, 1.442695
        %v4675 = vpow.pop %v4674
        %v4676 = vmul.f32 %v4638, 1.442695
        %v4677 = vpow.pop %v4676
        %v4678 = vmul.f32 %v4639, 1.442695
        %v4679 = vpow.pop %v4678
        %v4680 = vmul.f32 %v4640, 1.442695
        %v4681 = vpow.pop %v4680
        %v4682 = vmul.f32 %v4641, 1.442695
        %v4683 = vpow.pop %v4682
        %v4684 = vmul.f32 %v4642, 1.442695
        %v4685 = vpow.pop %v4684
        %v4686 = vmul.f32 %v4643, 1.442695
        %v4687 = vpow.pop %v4686
        %v4688 = vmul.f32 %v4644, 1.442695
        %v4689 = vpow.pop %v4688
        %v4690 = vmul.f32 %v4645, 1.442695
        %v4691 = vpow.pop %v4690
        %v4692 = vmul.f32 %v4646, 1.442695
        %v4693 = vpow.pop %v4692
        %v4694 = vmul.f32 %v4647, 1.442695
        %v4695 = vpow.pop %v4694
        %v4696 = vmul.f32 %v4648, 1.442695
        %v4697 = vpow.pop %v4696
        %v4698 = vmul.f32 %v4649, 1.442695
        %v4699 = vpow.pop %v4698
        %v4700 = vmul.f32 %v4650, 1.442695
        %v4701 = vpow.pop %v4700
        %v4702 = vmul.f32 %v4651, 1.442695
        %v4703 = vpow.pop %v4702
        %v4704 = vmul.f32 %v4652, 1.442695
        %v4705 = vpow.pop %v4704
        %v4706 = vmul.f32 %v4653, 1.442695
        %v4707 = vpow.pop %v4706
        %v4708 = vmul.f32 %v4654, 1.442695
        %v4709 = vpow.pop %v4708
        %v4710 = vmul.f32 %v4655, 1.442695
        %v4711 = vpow.pop %v4710
        %v4712 = vmul.f32 %v4656, 1.442695
        %v4713 = vpow.pop %v4712
        %v4714 = vmul.f32 %v4657, 1.442695
        %v4715 = vpow.pop %v4714
        %v4716 = vmul.f32 %v4658, 1.442695
        %v4717 = vpow.pop %v4716
        %v4718 = vmul.f32 %v4659, 1.442695
        %v4719 = vpow.pop %v4718
        %v4720 = vmul.f32 %v4660, 1.442695
        %v4721 = vpow.pop %v4720
        %v4722 = vmul.f32 %v4661, 1.442695
        %v4723 = vpow.pop %v4722
        %v4724 = vmul.f32 %v4662, 1.442695
        %v4725 = vpow.pop %v4724
        %v4726 = vmul.f32 %v4663, 1.442695
        %v4727 = vpow.pop %v4726
        %v4728 = vadd.f32 %v4665, %v4667
        %4729 = vadd.xlane.f32.xlu0 %v4728
        %v4730 = vpop.xlane.xlu0 %4729
        %v4731 = vadd.f32 %v4669, %v4671
        %4732 = vadd.xlane.f32.xlu0 %v4731
        %v4733 = vpop.xlane.xlu0 %4732
        %v4734 = vadd.f32 %v4673, %v4675
        %4735 = vadd.xlane.f32.xlu0 %v4734
        %v4736 = vpop.xlane.xlu0 %4735
        %v4737 = vadd.f32 %v4677, %v4679
        %4738 = vadd.xlane.f32.xlu0 %v4737
        %v4739 = vpop.xlane.xlu0 %4738
        %v4740 = vadd.f32 %v4681, %v4683
        %4741 = vadd.xlane.f32.xlu0 %v4740
        %v4742 = vpop.xlane.xlu0 %4741
        %v4743 = vadd.f32 %v4685, %v4687
        %4744 = vadd.xlane.f32.xlu0 %v4743
        %v4745 = vpop.xlane.xlu0 %4744
        %v4746 = vadd.f32 %v4689, %v4691
        %4747 = vadd.xlane.f32.xlu0 %v4746
        %v4748 = vpop.xlane.xlu0 %4747
        %v4749 = vadd.f32 %v4693, %v4695
        %4750 = vadd.xlane.f32.xlu0 %v4749
        %v4751 = vpop.xlane.xlu0 %4750
        %v4752 = vadd.f32 %v4697, %v4699
        %4753 = vadd.xlane.f32.xlu0 %v4752
        %v4754 = vpop.xlane.xlu0 %4753
        %v4755 = vadd.f32 %v4701, %v4703
        %4756 = vadd.xlane.f32.xlu0 %v4755
        %v4757 = vpop.xlane.xlu0 %4756
        %v4758 = vadd.f32 %v4705, %v4707
        %4759 = vadd.xlane.f32.xlu0 %v4758
        %v4760 = vpop.xlane.xlu0 %4759
        %v4761 = vadd.f32 %v4709, %v4711
        %4762 = vadd.xlane.f32.xlu0 %v4761
        %v4763 = vpop.xlane.xlu0 %4762
        %v4764 = vadd.f32 %v4713, %v4715
        %4765 = vadd.xlane.f32.xlu0 %v4764
        %v4766 = vpop.xlane.xlu0 %4765
        %v4767 = vadd.f32 %v4717, %v4719
        %4768 = vadd.xlane.f32.xlu0 %v4767
        %v4769 = vpop.xlane.xlu0 %4768
        %v4770 = vadd.f32 %v4721, %v4723
        %4771 = vadd.xlane.f32.xlu0 %v4770
        %v4772 = vpop.xlane.xlu0 %4771
        %v4773 = vadd.f32 %v4725, %v4727
        %4774 = vadd.xlane.f32.xlu0 %v4773
        %v4775 = vpop.xlane.xlu0 %4774
        %v4776 = vpack.c.bf16 %v4669, %v4665
        %v4777 = vpack.c.bf16 %v4671, %v4667
        %v4778 = vpack.c.bf16 %v4677, %v4673
        %v4779 = vpack.c.bf16 %v4679, %v4675
        %v4780 = vpack.c.bf16 %v4685, %v4681
        %v4781 = vpack.c.bf16 %v4687, %v4683
        %v4782 = vpack.c.bf16 %v4693, %v4689
        %v4783 = vpack.c.bf16 %v4695, %v4691
        %v4784 = vpack.c.bf16 %v4701, %v4697
        %v4785 = vpack.c.bf16 %v4703, %v4699
        %v4786 = vpack.c.bf16 %v4709, %v4705
        %v4787 = vpack.c.bf16 %v4711, %v4707
        %v4788 = vpack.c.bf16 %v4717, %v4713
        %v4789 = vpack.c.bf16 %v4719, %v4715
        %v4790 = vpack.c.bf16 %v4725, %v4721
        %v4791 = vpack.c.bf16 %v4727, %v4723
        %4792 = vrot.lane.b32.xlu0 %v1756, 64
        %v4793 = vpop.permute.xlu0 %4792
        %4794 = vrot.lane.b32.xlu0 %v1757, 64
        %v4795 = vpop.permute.xlu0 %4794
        %4796 = vrot.lane.b32.xlu0 %v1758, 64
        %v4797 = vpop.permute.xlu0 %4796
        %4798 = vrot.lane.b32.xlu0 %v1759, 64
        %v4799 = vpop.permute.xlu0 %4798
        %4800 = vrot.lane.b32.xlu0 %v1760, 64
        %v4801 = vpop.permute.xlu0 %4800
        %4802 = vrot.lane.b32.xlu0 %v1761, 64
        %v4803 = vpop.permute.xlu0 %4802
        %4804 = vrot.lane.b32.xlu0 %v1762, 64
        %v4805 = vpop.permute.xlu0 %4804
        %4806 = vrot.lane.b32.xlu0 %v1763, 64
        %v4807 = vpop.permute.xlu0 %4806
        %4808 = vrot.lane.b32.xlu0 %v1764, 64
        %v4809 = vpop.permute.xlu0 %4808
        %4810 = vrot.lane.b32.xlu0 %v1765, 64
        %v4811 = vpop.permute.xlu0 %4810
        %4812 = vrot.lane.b32.xlu0 %v1766, 64
        %v4813 = vpop.permute.xlu0 %4812
        %4814 = vrot.lane.b32.xlu0 %v1767, 64
        %v4815 = vpop.permute.xlu0 %4814
        %4816 = vrot.lane.b32.xlu0 %v1768, 64
        %v4817 = vpop.permute.xlu0 %4816
        %4818 = vrot.lane.b32.xlu0 %v1769, 64
        %v4819 = vpop.permute.xlu0 %4818
        %4820 = vrot.lane.b32.xlu0 %v1770, 64
        %v4821 = vpop.permute.xlu0 %4820
        %4822 = vrot.lane.b32.xlu0 %v1771, 64
        %v4823 = vpop.permute.xlu0 %4822
        %4840 = vmatprep.subr.bf16.mxu0 0
        %4841 = vmatpush1.bf16.msra.mxu0 %v4807
        %4842 = vmatprep.subr.bf16.mxu0 0
        %4843 = vmatpush1.bf16.msra.mxu0 %v4805
        %4844 = vmatprep.subr.bf16.mxu0 0
        %4845 = vmatpush1.bf16.msra.mxu0 %v4803
        %4846 = vmatprep.subr.bf16.mxu0 0
        %4847 = vmatpush1.bf16.msra.mxu0 %v4801
        %4848 = vmatprep.subr.bf16.mxu0 0
        %4849 = vmatpush1.bf16.msra.mxu0 %v4799
        %4850 = vmatprep.subr.bf16.mxu0 0
        %4851 = vmatpush1.bf16.msra.mxu0 %v4797
        %4852 = vmatprep.subr.bf16.mxu0 0
        %4853 = vmatpush1.bf16.msra.mxu0 %v4795
        %4854 = vmatprep.subr.bf16.mxu0 0
        %4855 = vmatpush1.bf16.msra.mxu0 %v4793
        %4856 = vmatprep.subr.bf16.mxu0 0
        %4857 = vmatpush2.bf16.msra.mxu0 %v4823
        %4858 = vmatprep.subr.bf16.mxu0 0
        %4859 = vmatpush2.bf16.msra.mxu0 %v4821
        %4860 = vmatprep.subr.bf16.mxu0 0
        %4861 = vmatpush2.bf16.msra.mxu0 %v4819
        %4862 = vmatprep.subr.bf16.mxu0 0
        %4863 = vmatpush2.bf16.msra.mxu0 %v4817
        %4864 = vmatprep.subr.bf16.mxu0 0
        %4865 = vmatpush2.bf16.msra.mxu0 %v4815
        %4866 = vmatprep.subr.bf16.mxu0 0
        %4867 = vmatpush2.bf16.msra.mxu0 %v4813
        %4868 = vmatprep.subr.bf16.mxu0 0
        %4869 = vmatpush2.bf16.msra.mxu0 %v4811
        %4870 = vmatprep.subr.bf16.mxu0 0
        %4871 = vmatpush2.bf16.msra.mxu0 %v4809
        %4872 = vmatprep.mubr.bf16.mxu0 %v4777
        %4873 = vmatmul.mubr.bf16.gmra.mxu0 %v4776
        %v4874 = vpop.f32.mrf.mxu0
        %v4875 = vadd.f32 0.0, %v4874
        %v4876 = vpop.f32.mrf.mxu0
        %v4877 = vpop.f32.mrf.mxu0
        %v4878 = vadd.f32 0.0, %v4877
        %v4879 = vpop.f32.mrf.mxu0
        %4880 = vmatprep.mubr.bf16.mxu0 %v4779
        %4881 = vmatmul.mubr.bf16.gmra.mxu0 %v4778
        %v4882 = vpop.f32.mrf.mxu0
        %v4883 = vadd.f32 0.0, %v4882
        %v4884 = vpop.f32.mrf.mxu0
        %v4885 = vpop.f32.mrf.mxu0
        %v4886 = vadd.f32 0.0, %v4885
        %v4887 = vpop.f32.mrf.mxu0
        %4888 = vmatprep.mubr.bf16.mxu0 %v4781
        %4889 = vmatmul.mubr.bf16.gmra.mxu0 %v4780
        %v4890 = vpop.f32.mrf.mxu0
        %v4891 = vadd.f32 0.0, %v4890
        %v4892 = vpop.f32.mrf.mxu0
        %v4893 = vpop.f32.mrf.mxu0
        %v4894 = vadd.f32 0.0, %v4893
        %v4895 = vpop.f32.mrf.mxu0
        %4896 = vmatprep.mubr.bf16.mxu0 %v4783
        %4897 = vmatmul.mubr.bf16.gmra.mxu0 %v4782
        %v4898 = vpop.f32.mrf.mxu0
        %v4899 = vadd.f32 0.0, %v4898
        %v4900 = vpop.f32.mrf.mxu0
        %v4901 = vpop.f32.mrf.mxu0
        %v4902 = vadd.f32 0.0, %v4901
        %v4903 = vpop.f32.mrf.mxu0
        %4904 = vmatprep.mubr.bf16.mxu0 %v4785
        %4905 = vmatmul.mubr.bf16.gmra.mxu0 %v4784
        %v4906 = vpop.f32.mrf.mxu0
        %v4907 = vadd.f32 0.0, %v4906
        %v4908 = vpop.f32.mrf.mxu0
        %v4909 = vpop.f32.mrf.mxu0
        %v4910 = vadd.f32 0.0, %v4909
        %v4911 = vpop.f32.mrf.mxu0
        %4912 = vmatprep.mubr.bf16.mxu0 %v4787
        %4913 = vmatmul.mubr.bf16.gmra.mxu0 %v4786
        %v4914 = vpop.f32.mrf.mxu0
        %v4915 = vadd.f32 0.0, %v4914
        %v4916 = vpop.f32.mrf.mxu0
        %v4917 = vpop.f32.mrf.mxu0
        %v4918 = vadd.f32 0.0, %v4917
        %v4919 = vpop.f32.mrf.mxu0
        %4920 = vmatprep.mubr.bf16.mxu0 %v4789
        %4921 = vmatmul.mubr.bf16.gmra.mxu0 %v4788
        %v4922 = vpop.f32.mrf.mxu0
        %v4923 = vadd.f32 0.0, %v4922
        %v4924 = vpop.f32.mrf.mxu0
        %v4925 = vpop.f32.mrf.mxu0
        %v4926 = vadd.f32 0.0, %v4925
        %v4927 = vpop.f32.mrf.mxu0
        %4928 = vmatprep.mubr.bf16.mxu0 %v4791
        %4929 = vmatmul.mubr.bf16.gmra.mxu0 %v4790
        %v4930 = vpop.f32.mrf.mxu0
        %v4931 = vadd.f32 0.0, %v4930
        %v4932 = vpop.f32.mrf.mxu0
        %v4933 = vpop.f32.mrf.mxu0
        %v4934 = vadd.f32 0.0, %v4933
        %v4935 = vpop.f32.mrf.mxu0
        %4936 = vdwg.mxu0
        %v4937 = vrcp.pop %v4730
        %v4938 = vrcp.pop %v4733
        %v4939 = vrcp.pop %v4736
        %v4940 = vrcp.pop %v4739
        %v4941 = vrcp.pop %v4742
        %v4942 = vrcp.pop %v4745
        %v4943 = vrcp.pop %v4748
        %v4944 = vrcp.pop %v4751
        %v4945 = vrcp.pop %v4754
        %v4946 = vrcp.pop %v4757
        %v4947 = vrcp.pop %v4760
        %v4948 = vrcp.pop %v4763
        %v4949 = vrcp.pop %v4766
        %v4950 = vrcp.pop %v4769
        %v4951 = vrcp.pop %v4772
        %v4952 = vrcp.pop %v4775
        %v4953 = vmul.f32 %v4875, %v4937
        %v4954 = vmul.f32 %v4878, %v4938
        %v4955 = vmul.f32 %v4883, %v4939
        %v4956 = vmul.f32 %v4886, %v4940
        %v4957 = vmul.f32 %v4891, %v4941
        %v4958 = vmul.f32 %v4894, %v4942
        %v4959 = vmul.f32 %v4899, %v4943
        %v4960 = vmul.f32 %v4902, %v4944
        %v4961 = vmul.f32 %v4907, %v4945
        %v4962 = vmul.f32 %v4910, %v4946
        %v4963 = vmul.f32 %v4915, %v4947
        %v4964 = vmul.f32 %v4918, %v4948
        %v4965 = vmul.f32 %v4923, %v4949
        %v4966 = vmul.f32 %v4926, %v4950
        %v4967 = vmul.f32 %v4931, %v4951
        %v4968 = vmul.f32 %v4934, %v4952
        %v4969 = vpack.c.bf16 %v4954, %v4953
        %v4970 = vpack.c.bf16 %v4956, %v4955
        %v4971 = vpack.c.bf16 %v4958, %v4957
        %v4972 = vpack.c.bf16 %v4960, %v4959
        %v4973 = vpack.c.bf16 %v4962, %v4961
        %v4974 = vpack.c.bf16 %v4964, %v4963
        %v4975 = vpack.c.bf16 %v4966, %v4965
        %v4976 = vpack.c.bf16 %v4968, %v4967
        %v4979 = vunpack.c.l.b16 %v1242
        %v4980 = vunpack.c.l.b16 %v1243
        %v4981 = vpack.c.b16 %v4980, %v4979
        %v4984 = vsel %vm1330, %v4969, 0
        %v4987 = vsel %vm1330, %v4970, 0
        %v4990 = vsel %vm1330, %v4971, 0
        %v4993 = vsel %vm1330, %v4972, 0
        %v4996 = vsel %vm1330, %v4973, 0
        %v4999 = vsel %vm1330, %v4974, 0
        %v5002 = vsel %vm1330, %v4975, 0
        %v5005 = vsel %vm1330, %v4976, 0
        %5007 = vmatprep.subr.bf16.mxu0 0
        %5008 = vmatpush1.bf16.msra.mxu0 0
        %5009 = vmatprep.subr.bf16.mxu0 0
        %5010 = vmatpush1.bf16.msra.mxu0 0
        %5011 = vmatprep.subr.bf16.mxu0 0
        %5012 = vmatpush1.bf16.msra.mxu0 0
        %5013 = vmatprep.subr.bf16.mxu0 0
        %5014 = vmatpush1.bf16.msra.mxu0 0
        %5015 = vmatprep.subr.bf16.mxu0 0
        %5016 = vmatpush1.bf16.msra.mxu0 0
        %5017 = vmatprep.subr.bf16.mxu0 0
        %5018 = vmatpush1.bf16.msra.mxu0 0
        %5019 = vmatprep.subr.bf16.mxu0 0
        %5020 = vmatpush1.bf16.msra.mxu0 0
        %5021 = vmatprep.subr.bf16.mxu0 0
        %5022 = vmatpush1.bf16.msra.mxu0 %v4981
        %5023 = vmatprep.subr.bf16.mxu0 0
        %5024 = vmatpush2.bf16.msra.mxu0 0
        %5025 = vmatprep.subr.bf16.mxu0 0
        %5026 = vmatpush2.bf16.msra.mxu0 0
        %5027 = vmatprep.subr.bf16.mxu0 0
        %5028 = vmatpush2.bf16.msra.mxu0 0
        %5029 = vmatprep.subr.bf16.mxu0 0
        %5030 = vmatpush2.bf16.msra.mxu0 0
        %5031 = vmatprep.subr.bf16.mxu0 0
        %5032 = vmatpush2.bf16.msra.mxu0 0
        %5033 = vmatprep.subr.bf16.mxu0 0
        %5034 = vmatpush2.bf16.msra.mxu0 0
        %5035 = vmatprep.subr.bf16.mxu0 0
        %5036 = vmatpush2.bf16.msra.mxu0 0
        %5037 = vmatprep.subr.bf16.mxu0 0
        %5038 = vmatpush2.bf16.msra.mxu0 0
        %5039 = vmatprep.mubr.bf16.mxu0 0
        %5040 = vmatmul.mubr.bf16.gmra.mxu0 %v4984
        %v5041 = vpop.f32.mrf.mxu0
        %v5042 = vadd.f32 0.0, %v5041
        %v5043 = vpop.f32.mrf.mxu0
        %v5044 = vpop.f32.mrf.mxu0
        %v5045 = vadd.f32 0.0, %v5044
        %v5046 = vpop.f32.mrf.mxu0
        %5047 = vmatprep.mubr.bf16.mxu0 0
        %5048 = vmatmul.mubr.bf16.gmra.mxu0 %v4987
        %v5049 = vpop.f32.mrf.mxu0
        %v5050 = vadd.f32 0.0, %v5049
        %v5051 = vpop.f32.mrf.mxu0
        %v5052 = vpop.f32.mrf.mxu0
        %v5053 = vadd.f32 0.0, %v5052
        %v5054 = vpop.f32.mrf.mxu0
        %5055 = vmatprep.mubr.bf16.mxu0 0
        %5056 = vmatmul.mubr.bf16.gmra.mxu0 %v4990
        %v5057 = vpop.f32.mrf.mxu0
        %v5058 = vadd.f32 0.0, %v5057
        %v5059 = vpop.f32.mrf.mxu0
        %v5060 = vpop.f32.mrf.mxu0
        %v5061 = vadd.f32 0.0, %v5060
        %v5062 = vpop.f32.mrf.mxu0
        %5063 = vmatprep.mubr.bf16.mxu0 0
        %5064 = vmatmul.mubr.bf16.gmra.mxu0 %v4993
        %v5065 = vpop.f32.mrf.mxu0
        %v5066 = vadd.f32 0.0, %v5065
        %v5067 = vpop.f32.mrf.mxu0
        %v5068 = vpop.f32.mrf.mxu0
        %v5069 = vadd.f32 0.0, %v5068
        %v5070 = vpop.f32.mrf.mxu0
        %5071 = vmatprep.mubr.bf16.mxu0 0
        %5072 = vmatmul.mubr.bf16.gmra.mxu0 %v4996
        %v5073 = vpop.f32.mrf.mxu0
        %v5074 = vadd.f32 0.0, %v5073
        %v5075 = vpop.f32.mrf.mxu0
        %v5076 = vpop.f32.mrf.mxu0
        %v5077 = vadd.f32 0.0, %v5076
        %v5078 = vpop.f32.mrf.mxu0
        %5079 = vmatprep.mubr.bf16.mxu0 0
        %5080 = vmatmul.mubr.bf16.gmra.mxu0 %v4999
        %v5081 = vpop.f32.mrf.mxu0
        %v5082 = vadd.f32 0.0, %v5081
        %v5083 = vpop.f32.mrf.mxu0
        %v5084 = vpop.f32.mrf.mxu0
        %v5085 = vadd.f32 0.0, %v5084
        %v5086 = vpop.f32.mrf.mxu0
        %5087 = vmatprep.mubr.bf16.mxu0 0
        %5088 = vmatmul.mubr.bf16.gmra.mxu0 %v5002
        %v5089 = vpop.f32.mrf.mxu0
        %v5090 = vadd.f32 0.0, %v5089
        %v5091 = vpop.f32.mrf.mxu0
        %v5092 = vpop.f32.mrf.mxu0
        %v5093 = vadd.f32 0.0, %v5092
        %v5094 = vpop.f32.mrf.mxu0
        %5095 = vmatprep.mubr.bf16.mxu0 0
        %5096 = vmatmul.mubr.bf16.gmra.mxu0 %v5005
        %v5097 = vpop.f32.mrf.mxu0
        %v5098 = vadd.f32 0.0, %v5097
        %v5099 = vpop.f32.mrf.mxu0
        %v5100 = vpop.f32.mrf.mxu0
        %v5101 = vadd.f32 0.0, %v5100
        %v5102 = vpop.f32.mrf.mxu0
        %5103 = vdwg.mxu0
        %v5104 = vadd.f32 %v4335, %v5042
        %v5105 = vadd.f32 %v4336, %v5045
        %v5106 = vadd.f32 %v4337, %v5050
        %v5107 = vadd.f32 %v4338, %v5053
        %v5108 = vadd.f32 %v4339, %v5058
        %v5109 = vadd.f32 %v4340, %v5061
        %v5110 = vadd.f32 %v4341, %v5066
        %v5111 = vadd.f32 %v4342, %v5069
        %v5112 = vadd.f32 %v4343, %v5074
        %v5113 = vadd.f32 %v4344, %v5077
        %v5114 = vadd.f32 %v4345, %v5082
        %v5115 = vadd.f32 %v4346, %v5085
        %v5116 = vadd.f32 %v4347, %v5090
        %v5117 = vadd.f32 %v4348, %v5093
        %v5118 = vadd.f32 %v4349, %v5098
        %v5119 = vadd.f32 %v4350, %v5101
        %5120 = vrot.lane.b32.xlu0 %v1194, 48
        %v5121 = vpop.permute.xlu0 %5120
        %5122 = vrot.lane.b32.xlu0 %v1195, 48
        %v5123 = vpop.permute.xlu0 %5122
        %5124 = vrot.lane.b32.xlu0 %v1196, 48
        %v5125 = vpop.permute.xlu0 %5124
        %5126 = vrot.lane.b32.xlu0 %v1197, 48
        %v5127 = vpop.permute.xlu0 %5126
        %5128 = vrot.lane.b32.xlu0 %v1198, 48
        %v5129 = vpop.permute.xlu0 %5128
        %5130 = vrot.lane.b32.xlu0 %v1199, 48
        %v5131 = vpop.permute.xlu0 %5130
        %5132 = vrot.lane.b32.xlu0 %v1200, 48
        %v5133 = vpop.permute.xlu0 %5132
        %5134 = vrot.lane.b32.xlu0 %v1201, 48
        %v5135 = vpop.permute.xlu0 %5134
        %5136 = vrot.lane.b32.xlu0 %v1314, 48
        %v5137 = vpop.permute.xlu0 %5136
        %5138 = vrot.lane.b32.xlu0 %v1315, 48
        %v5139 = vpop.permute.xlu0 %5138
        %5140 = vrot.lane.b32.xlu0 %v1316, 48
        %v5141 = vpop.permute.xlu0 %5140
        %5142 = vrot.lane.b32.xlu0 %v1317, 48
        %v5143 = vpop.permute.xlu0 %5142
        %5144 = vrot.lane.b32.xlu0 %v1318, 48
        %v5145 = vpop.permute.xlu0 %5144
        %5146 = vrot.lane.b32.xlu0 %v1319, 48
        %v5147 = vpop.permute.xlu0 %5146
        %5148 = vrot.lane.b32.xlu0 %v1320, 48
        %v5149 = vpop.permute.xlu0 %5148
        %5150 = vrot.lane.b32.xlu0 %v1321, 48
        %v5151 = vpop.permute.xlu0 %5150
        %5152 = vrot.lane.b32.xlu0 %v1322, 48
        %v5153 = vpop.permute.xlu0 %5152
        %5154 = vrot.lane.b32.xlu0 %v1323, 48
        %v5155 = vpop.permute.xlu0 %5154
        %5156 = vrot.lane.b32.xlu0 %v1324, 48
        %v5157 = vpop.permute.xlu0 %5156
        %5158 = vrot.lane.b32.xlu0 %v1325, 48
        %v5159 = vpop.permute.xlu0 %5158
        %5160 = vrot.lane.b32.xlu0 %v1326, 48
        %v5161 = vpop.permute.xlu0 %5160
        %5162 = vrot.lane.b32.xlu0 %v1327, 48
        %v5163 = vpop.permute.xlu0 %5162
        %5164 = vrot.lane.b32.xlu0 %v1328, 48
        %v5165 = vpop.permute.xlu0 %5164
        %5166 = vrot.lane.b32.xlu0 %v1329, 48
        %v5167 = vpop.permute.xlu0 %5166
        %v5169 = vsel %vm1330, %v5121, 0
        %v5172 = vsel %vm1330, %v5123, 0
        %v5175 = vsel %vm1330, %v5125, 0
        %v5178 = vsel %vm1330, %v5127, 0
        %v5181 = vsel %vm1330, %v5129, 0
        %v5184 = vsel %vm1330, %v5131, 0
        %v5187 = vsel %vm1330, %v5133, 0
        %v5190 = vsel %vm1330, %v5135, 0
        %v5193 = vsel %vm1330, %v5137, 0
        %v5196 = vsel %vm1330, %v5139, 0
        %v5199 = vsel %vm1330, %v5141, 0
        %v5202 = vsel %vm1330, %v5143, 0
        %v5205 = vsel %vm1330, %v5145, 0
        %v5208 = vsel %vm1330, %v5147, 0
        %v5211 = vsel %vm1330, %v5149, 0
        %v5214 = vsel %vm1330, %v5151, 0
        %v5217 = vsel %vm1330, %v5153, 0
        %v5220 = vsel %vm1330, %v5155, 0
        %v5223 = vsel %vm1330, %v5157, 0
        %v5226 = vsel %vm1330, %v5159, 0
        %v5229 = vsel %vm1330, %v5161, 0
        %v5232 = vsel %vm1330, %v5163, 0
        %v5235 = vsel %vm1330, %v5165, 0
        %v5238 = vsel %vm1330, %v5167, 0
        %5240 = vmatprep.subr.bf16.mxu0 0
        %5241 = vmatpush1.bf16.xpose.msra.mxu0 %v5214
        %5242 = vmatprep.subr.bf16.mxu0 0
        %5243 = vmatpush1.bf16.xpose.msra.mxu0 %v5211
        %5244 = vmatprep.subr.bf16.mxu0 0
        %5245 = vmatpush1.bf16.xpose.msra.mxu0 %v5208
        %5246 = vmatprep.subr.bf16.mxu0 0
        %5247 = vmatpush1.bf16.xpose.msra.mxu0 %v5205
        %5248 = vmatprep.subr.bf16.mxu0 0
        %5249 = vmatpush1.bf16.xpose.msra.mxu0 %v5202
        %5250 = vmatprep.subr.bf16.mxu0 0
        %5251 = vmatpush1.bf16.xpose.msra.mxu0 %v5199
        %5252 = vmatprep.subr.bf16.mxu0 0
        %5253 = vmatpush1.bf16.xpose.msra.mxu0 %v5196
        %5254 = vmatprep.subr.bf16.mxu0 0
        %5255 = vmatpush1.bf16.xpose.msra.mxu0 %v5193
        %5256 = vmatprep.subr.bf16.mxu0 0
        %5257 = vmatpush2.bf16.xpose.msra.mxu0 %v5238
        %5258 = vmatprep.subr.bf16.mxu0 0
        %5259 = vmatpush2.bf16.xpose.msra.mxu0 %v5235
        %5260 = vmatprep.subr.bf16.mxu0 0
        %5261 = vmatpush2.bf16.xpose.msra.mxu0 %v5232
        %5262 = vmatprep.subr.bf16.mxu0 0
        %5263 = vmatpush2.bf16.xpose.msra.mxu0 %v5229
        %5264 = vmatprep.subr.bf16.mxu0 0
        %5265 = vmatpush2.bf16.xpose.msra.mxu0 %v5226
        %5266 = vmatprep.subr.bf16.mxu0 0
        %5267 = vmatpush2.bf16.xpose.msra.mxu0 %v5223
        %5268 = vmatprep.subr.bf16.mxu0 0
        %5269 = vmatpush2.bf16.xpose.msra.mxu0 %v5220
        %5270 = vmatprep.subr.bf16.mxu0 0
        %5271 = vmatpush2.bf16.xpose.msra.mxu0 %v5217
        %5272 = vmatprep.mubr.bf16.mxu0 0
        %5273 = vmatmul.mubr.bf16.gmra.mxu0 %v5169
        %v5274 = vpop.f32.mrf.mxu0
        %v5275 = vadd.f32 0.0, %v5274
        %v5276 = vpop.f32.mrf.mxu0
        %v5277 = vadd.f32 0.0, %v5276
        %v5278 = vpop.f32.mrf.mxu0
        %v5279 = vadd.f32 0.0, %v5278
        %v5280 = vpop.f32.mrf.mxu0
        %v5281 = vadd.f32 0.0, %v5280
        %5282 = vmatprep.mubr.bf16.mxu0 0
        %5283 = vmatmul.mubr.bf16.gmra.mxu0 %v5172
        %v5284 = vpop.f32.mrf.mxu0
        %v5285 = vadd.f32 0.0, %v5284
        %v5286 = vpop.f32.mrf.mxu0
        %v5287 = vadd.f32 0.0, %v5286
        %v5288 = vpop.f32.mrf.mxu0
        %v5289 = vadd.f32 0.0, %v5288
        %v5290 = vpop.f32.mrf.mxu0
        %v5291 = vadd.f32 0.0, %v5290
        %5292 = vmatprep.mubr.bf16.mxu0 0
        %5293 = vmatmul.mubr.bf16.gmra.mxu0 %v5175
        %v5294 = vpop.f32.mrf.mxu0
        %v5295 = vadd.f32 0.0, %v5294
        %v5296 = vpop.f32.mrf.mxu0
        %v5297 = vadd.f32 0.0, %v5296
        %v5298 = vpop.f32.mrf.mxu0
        %v5299 = vadd.f32 0.0, %v5298
        %v5300 = vpop.f32.mrf.mxu0
        %v5301 = vadd.f32 0.0, %v5300
        %5302 = vmatprep.mubr.bf16.mxu0 0
        %5303 = vmatmul.mubr.bf16.gmra.mxu0 %v5178
        %v5304 = vpop.f32.mrf.mxu0
        %v5305 = vadd.f32 0.0, %v5304
        %v5306 = vpop.f32.mrf.mxu0
        %v5307 = vadd.f32 0.0, %v5306
        %v5308 = vpop.f32.mrf.mxu0
        %v5309 = vadd.f32 0.0, %v5308
        %v5310 = vpop.f32.mrf.mxu0
        %v5311 = vadd.f32 0.0, %v5310
        %5312 = vmatprep.mubr.bf16.mxu0 0
        %5313 = vmatmul.mubr.bf16.gmra.mxu0 %v5181
        %v5314 = vpop.f32.mrf.mxu0
        %v5315 = vadd.f32 0.0, %v5314
        %v5316 = vpop.f32.mrf.mxu0
        %v5317 = vadd.f32 0.0, %v5316
        %v5318 = vpop.f32.mrf.mxu0
        %v5319 = vadd.f32 0.0, %v5318
        %v5320 = vpop.f32.mrf.mxu0
        %v5321 = vadd.f32 0.0, %v5320
        %5322 = vmatprep.mubr.bf16.mxu0 0
        %5323 = vmatmul.mubr.bf16.gmra.mxu0 %v5184
        %v5324 = vpop.f32.mrf.mxu0
        %v5325 = vadd.f32 0.0, %v5324
        %v5326 = vpop.f32.mrf.mxu0
        %v5327 = vadd.f32 0.0, %v5326
        %v5328 = vpop.f32.mrf.mxu0
        %v5329 = vadd.f32 0.0, %v5328
        %v5330 = vpop.f32.mrf.mxu0
        %v5331 = vadd.f32 0.0, %v5330
        %5332 = vmatprep.mubr.bf16.mxu0 0
        %5333 = vmatmul.mubr.bf16.gmra.mxu0 %v5187
        %v5334 = vpop.f32.mrf.mxu0
        %v5335 = vadd.f32 0.0, %v5334
        %v5336 = vpop.f32.mrf.mxu0
        %v5337 = vadd.f32 0.0, %v5336
        %v5338 = vpop.f32.mrf.mxu0
        %v5339 = vadd.f32 0.0, %v5338
        %v5340 = vpop.f32.mrf.mxu0
        %v5341 = vadd.f32 0.0, %v5340
        %5342 = vmatprep.mubr.bf16.mxu0 0
        %5343 = vmatmul.mubr.bf16.gmra.mxu0 %v5190
        %v5344 = vpop.f32.mrf.mxu0
        %v5345 = vadd.f32 0.0, %v5344
        %v5346 = vpop.f32.mrf.mxu0
        %v5347 = vadd.f32 0.0, %v5346
        %v5348 = vpop.f32.mrf.mxu0
        %v5349 = vadd.f32 0.0, %v5348
        %v5350 = vpop.f32.mrf.mxu0
        %v5351 = vadd.f32 0.0, %v5350
        %5352 = vdwg.mxu0
        %v5353 = vmax.f32 %v5275, %v5277
        %5354 = vmax.xlane.f32.xlu0 %v5353
        %v5355 = vpop.xlane.xlu0 %5354
        %v5356 = vmax.f32 %v5279, %v5281
        %5357 = vmax.xlane.f32.xlu0 %v5356
        %v5358 = vpop.xlane.xlu0 %5357
        %v5359 = vmax.f32 %v5285, %v5287
        %5360 = vmax.xlane.f32.xlu0 %v5359
        %v5361 = vpop.xlane.xlu0 %5360
        %v5362 = vmax.f32 %v5289, %v5291
        %5363 = vmax.xlane.f32.xlu0 %v5362
        %v5364 = vpop.xlane.xlu0 %5363
        %v5365 = vmax.f32 %v5295, %v5297
        %5366 = vmax.xlane.f32.xlu0 %v5365
        %v5367 = vpop.xlane.xlu0 %5366
        %v5368 = vmax.f32 %v5299, %v5301
        %5369 = vmax.xlane.f32.xlu0 %v5368
        %v5370 = vpop.xlane.xlu0 %5369
        %v5371 = vmax.f32 %v5305, %v5307
        %5372 = vmax.xlane.f32.xlu0 %v5371
        %v5373 = vpop.xlane.xlu0 %5372
        %v5374 = vmax.f32 %v5309, %v5311
        %5375 = vmax.xlane.f32.xlu0 %v5374
        %v5376 = vpop.xlane.xlu0 %5375
        %v5377 = vmax.f32 %v5315, %v5317
        %5378 = vmax.xlane.f32.xlu0 %v5377
        %v5379 = vpop.xlane.xlu0 %5378
        %v5380 = vmax.f32 %v5319, %v5321
        %5381 = vmax.xlane.f32.xlu0 %v5380
        %v5382 = vpop.xlane.xlu0 %5381
        %v5383 = vmax.f32 %v5325, %v5327
        %5384 = vmax.xlane.f32.xlu0 %v5383
        %v5385 = vpop.xlane.xlu0 %5384
        %v5386 = vmax.f32 %v5329, %v5331
        %5387 = vmax.xlane.f32.xlu0 %v5386
        %v5388 = vpop.xlane.xlu0 %5387
        %v5389 = vmax.f32 %v5335, %v5337
        %5390 = vmax.xlane.f32.xlu0 %v5389
        %v5391 = vpop.xlane.xlu0 %5390
        %v5392 = vmax.f32 %v5339, %v5341
        %5393 = vmax.xlane.f32.xlu0 %v5392
        %v5394 = vpop.xlane.xlu0 %5393
        %v5395 = vmax.f32 %v5345, %v5347
        %5396 = vmax.xlane.f32.xlu0 %v5395
        %v5397 = vpop.xlane.xlu0 %5396
        %v5398 = vmax.f32 %v5349, %v5351
        %5399 = vmax.xlane.f32.xlu0 %v5398
        %v5400 = vpop.xlane.xlu0 %5399
        %v5401 = vsub.f32 %v5275, %v5355
        %v5402 = vsub.f32 %v5277, %v5355
        %v5403 = vsub.f32 %v5279, %v5358
        %v5404 = vsub.f32 %v5281, %v5358
        %v5405 = vsub.f32 %v5285, %v5361
        %v5406 = vsub.f32 %v5287, %v5361
        %v5407 = vsub.f32 %v5289, %v5364
        %v5408 = vsub.f32 %v5291, %v5364
        %v5409 = vsub.f32 %v5295, %v5367
        %v5410 = vsub.f32 %v5297, %v5367
        %v5411 = vsub.f32 %v5299, %v5370
        %v5412 = vsub.f32 %v5301, %v5370
        %v5413 = vsub.f32 %v5305, %v5373
        %v5414 = vsub.f32 %v5307, %v5373
        %v5415 = vsub.f32 %v5309, %v5376
        %v5416 = vsub.f32 %v5311, %v5376
        %v5417 = vsub.f32 %v5315, %v5379
        %v5418 = vsub.f32 %v5317, %v5379
        %v5419 = vsub.f32 %v5319, %v5382
        %v5420 = vsub.f32 %v5321, %v5382
        %v5421 = vsub.f32 %v5325, %v5385
        %v5422 = vsub.f32 %v5327, %v5385
        %v5423 = vsub.f32 %v5329, %v5388
        %v5424 = vsub.f32 %v5331, %v5388
        %v5425 = vsub.f32 %v5335, %v5391
        %v5426 = vsub.f32 %v5337, %v5391
        %v5427 = vsub.f32 %v5339, %v5394
        %v5428 = vsub.f32 %v5341, %v5394
        %v5429 = vsub.f32 %v5345, %v5397
        %v5430 = vsub.f32 %v5347, %v5397
        %v5431 = vsub.f32 %v5349, %v5400
        %v5432 = vsub.f32 %v5351, %v5400
        %v5433 = vmul.f32 %v5401, 1.442695
        %v5434 = vpow.pop %v5433
        %v5435 = vmul.f32 %v5402, 1.442695
        %v5436 = vpow.pop %v5435
        %v5437 = vmul.f32 %v5403, 1.442695
        %v5438 = vpow.pop %v5437
        %v5439 = vmul.f32 %v5404, 1.442695
        %v5440 = vpow.pop %v5439
        %v5441 = vmul.f32 %v5405, 1.442695
        %v5442 = vpow.pop %v5441
        %v5443 = vmul.f32 %v5406, 1.442695
        %v5444 = vpow.pop %v5443
        %v5445 = vmul.f32 %v5407, 1.442695
        %v5446 = vpow.pop %v5445
        %v5447 = vmul.f32 %v5408, 1.442695
        %v5448 = vpow.pop %v5447
        %v5449 = vmul.f32 %v5409, 1.442695
        %v5450 = vpow.pop %v5449
        %v5451 = vmul.f32 %v5410, 1.442695
        %v5452 = vpow.pop %v5451
        %v5453 = vmul.f32 %v5411, 1.442695
        %v5454 = vpow.pop %v5453
        %v5455 = vmul.f32 %v5412, 1.442695
        %v5456 = vpow.pop %v5455
        %v5457 = vmul.f32 %v5413, 1.442695
        %v5458 = vpow.pop %v5457
        %v5459 = vmul.f32 %v5414, 1.442695
        %v5460 = vpow.pop %v5459
        %v5461 = vmul.f32 %v5415, 1.442695
        %v5462 = vpow.pop %v5461
        %v5463 = vmul.f32 %v5416, 1.442695
        %v5464 = vpow.pop %v5463
        %v5465 = vmul.f32 %v5417, 1.442695
        %v5466 = vpow.pop %v5465
        %v5467 = vmul.f32 %v5418, 1.442695
        %v5468 = vpow.pop %v5467
        %v5469 = vmul.f32 %v5419, 1.442695
        %v5470 = vpow.pop %v5469
        %v5471 = vmul.f32 %v5420, 1.442695
        %v5472 = vpow.pop %v5471
        %v5473 = vmul.f32 %v5421, 1.442695
        %v5474 = vpow.pop %v5473
        %v5475 = vmul.f32 %v5422, 1.442695
        %v5476 = vpow.pop %v5475
        %v5477 = vmul.f32 %v5423, 1.442695
        %v5478 = vpow.pop %v5477
        %v5479 = vmul.f32 %v5424, 1.442695
        %v5480 = vpow.pop %v5479
        %v5481 = vmul.f32 %v5425, 1.442695
        %v5482 = vpow.pop %v5481
        %v5483 = vmul.f32 %v5426, 1.442695
        %v5484 = vpow.pop %v5483
        %v5485 = vmul.f32 %v5427, 1.442695
        %v5486 = vpow.pop %v5485
        %v5487 = vmul.f32 %v5428, 1.442695
        %v5488 = vpow.pop %v5487
        %v5489 = vmul.f32 %v5429, 1.442695
        %v5490 = vpow.pop %v5489
        %v5491 = vmul.f32 %v5430, 1.442695
        %v5492 = vpow.pop %v5491
        %v5493 = vmul.f32 %v5431, 1.442695
        %v5494 = vpow.pop %v5493
        %v5495 = vmul.f32 %v5432, 1.442695
        %v5496 = vpow.pop %v5495
        %v5497 = vadd.f32 %v5434, %v5436
        %5498 = vadd.xlane.f32.xlu0 %v5497
        %v5499 = vpop.xlane.xlu0 %5498
        %v5500 = vadd.f32 %v5438, %v5440
        %5501 = vadd.xlane.f32.xlu0 %v5500
        %v5502 = vpop.xlane.xlu0 %5501
        %v5503 = vadd.f32 %v5442, %v5444
        %5504 = vadd.xlane.f32.xlu0 %v5503
        %v5505 = vpop.xlane.xlu0 %5504
        %v5506 = vadd.f32 %v5446, %v5448
        %5507 = vadd.xlane.f32.xlu0 %v5506
        %v5508 = vpop.xlane.xlu0 %5507
        %v5509 = vadd.f32 %v5450, %v5452
        %5510 = vadd.xlane.f32.xlu0 %v5509
        %v5511 = vpop.xlane.xlu0 %5510
        %v5512 = vadd.f32 %v5454, %v5456
        %5513 = vadd.xlane.f32.xlu0 %v5512
        %v5514 = vpop.xlane.xlu0 %5513
        %v5515 = vadd.f32 %v5458, %v5460
        %5516 = vadd.xlane.f32.xlu0 %v5515
        %v5517 = vpop.xlane.xlu0 %5516
        %v5518 = vadd.f32 %v5462, %v5464
        %5519 = vadd.xlane.f32.xlu0 %v5518
        %v5520 = vpop.xlane.xlu0 %5519
        %v5521 = vadd.f32 %v5466, %v5468
        %5522 = vadd.xlane.f32.xlu0 %v5521
        %v5523 = vpop.xlane.xlu0 %5522
        %v5524 = vadd.f32 %v5470, %v5472
        %5525 = vadd.xlane.f32.xlu0 %v5524
        %v5526 = vpop.xlane.xlu0 %5525
        %v5527 = vadd.f32 %v5474, %v5476
        %5528 = vadd.xlane.f32.xlu0 %v5527
        %v5529 = vpop.xlane.xlu0 %5528
        %v5530 = vadd.f32 %v5478, %v5480
        %5531 = vadd.xlane.f32.xlu0 %v5530
        %v5532 = vpop.xlane.xlu0 %5531
        %v5533 = vadd.f32 %v5482, %v5484
        %5534 = vadd.xlane.f32.xlu0 %v5533
        %v5535 = vpop.xlane.xlu0 %5534
        %v5536 = vadd.f32 %v5486, %v5488
        %5537 = vadd.xlane.f32.xlu0 %v5536
        %v5538 = vpop.xlane.xlu0 %5537
        %v5539 = vadd.f32 %v5490, %v5492
        %5540 = vadd.xlane.f32.xlu0 %v5539
        %v5541 = vpop.xlane.xlu0 %5540
        %v5542 = vadd.f32 %v5494, %v5496
        %5543 = vadd.xlane.f32.xlu0 %v5542
        %v5544 = vpop.xlane.xlu0 %5543
        %v5545 = vpack.c.bf16 %v5438, %v5434
        %v5546 = vpack.c.bf16 %v5440, %v5436
        %v5547 = vpack.c.bf16 %v5446, %v5442
        %v5548 = vpack.c.bf16 %v5448, %v5444
        %v5549 = vpack.c.bf16 %v5454, %v5450
        %v5550 = vpack.c.bf16 %v5456, %v5452
        %v5551 = vpack.c.bf16 %v5462, %v5458
        %v5552 = vpack.c.bf16 %v5464, %v5460
        %v5553 = vpack.c.bf16 %v5470, %v5466
        %v5554 = vpack.c.bf16 %v5472, %v5468
        %v5555 = vpack.c.bf16 %v5478, %v5474
        %v5556 = vpack.c.bf16 %v5480, %v5476
        %v5557 = vpack.c.bf16 %v5486, %v5482
        %v5558 = vpack.c.bf16 %v5488, %v5484
        %v5559 = vpack.c.bf16 %v5494, %v5490
        %v5560 = vpack.c.bf16 %v5496, %v5492
        %5561 = vrot.lane.b32.xlu0 %v1756, 48
        %v5562 = vpop.permute.xlu0 %5561
        %5563 = vrot.lane.b32.xlu0 %v1757, 48
        %v5564 = vpop.permute.xlu0 %5563
        %5565 = vrot.lane.b32.xlu0 %v1758, 48
        %v5566 = vpop.permute.xlu0 %5565
        %5567 = vrot.lane.b32.xlu0 %v1759, 48
        %v5568 = vpop.permute.xlu0 %5567
        %5569 = vrot.lane.b32.xlu0 %v1760, 48
        %v5570 = vpop.permute.xlu0 %5569
        %5571 = vrot.lane.b32.xlu0 %v1761, 48
        %v5572 = vpop.permute.xlu0 %5571
        %5573 = vrot.lane.b32.xlu0 %v1762, 48
        %v5574 = vpop.permute.xlu0 %5573
        %5575 = vrot.lane.b32.xlu0 %v1763, 48
        %v5576 = vpop.permute.xlu0 %5575
        %5577 = vrot.lane.b32.xlu0 %v1764, 48
        %v5578 = vpop.permute.xlu0 %5577
        %5579 = vrot.lane.b32.xlu0 %v1765, 48
        %v5580 = vpop.permute.xlu0 %5579
        %5581 = vrot.lane.b32.xlu0 %v1766, 48
        %v5582 = vpop.permute.xlu0 %5581
        %5583 = vrot.lane.b32.xlu0 %v1767, 48
        %v5584 = vpop.permute.xlu0 %5583
        %5585 = vrot.lane.b32.xlu0 %v1768, 48
        %v5586 = vpop.permute.xlu0 %5585
        %5587 = vrot.lane.b32.xlu0 %v1769, 48
        %v5588 = vpop.permute.xlu0 %5587
        %5589 = vrot.lane.b32.xlu0 %v1770, 48
        %v5590 = vpop.permute.xlu0 %5589
        %5591 = vrot.lane.b32.xlu0 %v1771, 48
        %v5592 = vpop.permute.xlu0 %5591
        %5609 = vmatprep.subr.bf16.mxu0 0
        %5610 = vmatpush1.bf16.msra.mxu0 %v5576
        %5611 = vmatprep.subr.bf16.mxu0 0
        %5612 = vmatpush1.bf16.msra.mxu0 %v5574
        %5613 = vmatprep.subr.bf16.mxu0 0
        %5614 = vmatpush1.bf16.msra.mxu0 %v5572
        %5615 = vmatprep.subr.bf16.mxu0 0
        %5616 = vmatpush1.bf16.msra.mxu0 %v5570
        %5617 = vmatprep.subr.bf16.mxu0 0
        %5618 = vmatpush1.bf16.msra.mxu0 %v5568
        %5619 = vmatprep.subr.bf16.mxu0 0
        %5620 = vmatpush1.bf16.msra.mxu0 %v5566
        %5621 = vmatprep.subr.bf16.mxu0 0
        %5622 = vmatpush1.bf16.msra.mxu0 %v5564
        %5623 = vmatprep.subr.bf16.mxu0 0
        %5624 = vmatpush1.bf16.msra.mxu0 %v5562
        %5625 = vmatprep.subr.bf16.mxu0 0
        %5626 = vmatpush2.bf16.msra.mxu0 %v5592
        %5627 = vmatprep.subr.bf16.mxu0 0
        %5628 = vmatpush2.bf16.msra.mxu0 %v5590
        %5629 = vmatprep.subr.bf16.mxu0 0
        %5630 = vmatpush2.bf16.msra.mxu0 %v5588
        %5631 = vmatprep.subr.bf16.mxu0 0
        %5632 = vmatpush2.bf16.msra.mxu0 %v5586
        %5633 = vmatprep.subr.bf16.mxu0 0
        %5634 = vmatpush2.bf16.msra.mxu0 %v5584
        %5635 = vmatprep.subr.bf16.mxu0 0
        %5636 = vmatpush2.bf16.msra.mxu0 %v5582
        %5637 = vmatprep.subr.bf16.mxu0 0
        %5638 = vmatpush2.bf16.msra.mxu0 %v5580
        %5639 = vmatprep.subr.bf16.mxu0 0
        %5640 = vmatpush2.bf16.msra.mxu0 %v5578
        %5641 = vmatprep.mubr.bf16.mxu0 %v5546
        %5642 = vmatmul.mubr.bf16.gmra.mxu0 %v5545
        %v5643 = vpop.f32.mrf.mxu0
        %v5644 = vadd.f32 0.0, %v5643
        %v5645 = vpop.f32.mrf.mxu0
        %v5646 = vpop.f32.mrf.mxu0
        %v5647 = vadd.f32 0.0, %v5646
        %v5648 = vpop.f32.mrf.mxu0
        %5649 = vmatprep.mubr.bf16.mxu0 %v5548
        %5650 = vmatmul.mubr.bf16.gmra.mxu0 %v5547
        %v5651 = vpop.f32.mrf.mxu0
        %v5652 = vadd.f32 0.0, %v5651
        %v5653 = vpop.f32.mrf.mxu0
        %v5654 = vpop.f32.mrf.mxu0
        %v5655 = vadd.f32 0.0, %v5654
        %v5656 = vpop.f32.mrf.mxu0
        %5657 = vmatprep.mubr.bf16.mxu0 %v5550
        %5658 = vmatmul.mubr.bf16.gmra.mxu0 %v5549
        %v5659 = vpop.f32.mrf.mxu0
        %v5660 = vadd.f32 0.0, %v5659
        %v5661 = vpop.f32.mrf.mxu0
        %v5662 = vpop.f32.mrf.mxu0
        %v5663 = vadd.f32 0.0, %v5662
        %v5664 = vpop.f32.mrf.mxu0
        %5665 = vmatprep.mubr.bf16.mxu0 %v5552
        %5666 = vmatmul.mubr.bf16.gmra.mxu0 %v5551
        %v5667 = vpop.f32.mrf.mxu0
        %v5668 = vadd.f32 0.0, %v5667
        %v5669 = vpop.f32.mrf.mxu0
        %v5670 = vpop.f32.mrf.mxu0
        %v5671 = vadd.f32 0.0, %v5670
        %v5672 = vpop.f32.mrf.mxu0
        %5673 = vmatprep.mubr.bf16.mxu0 %v5554
        %5674 = vmatmul.mubr.bf16.gmra.mxu0 %v5553
        %v5675 = vpop.f32.mrf.mxu0
        %v5676 = vadd.f32 0.0, %v5675
        %v5677 = vpop.f32.mrf.mxu0
        %v5678 = vpop.f32.mrf.mxu0
        %v5679 = vadd.f32 0.0, %v5678
        %v5680 = vpop.f32.mrf.mxu0
        %5681 = vmatprep.mubr.bf16.mxu0 %v5556
        %5682 = vmatmul.mubr.bf16.gmra.mxu0 %v5555
        %v5683 = vpop.f32.mrf.mxu0
        %v5684 = vadd.f32 0.0, %v5683
        %v5685 = vpop.f32.mrf.mxu0
        %v5686 = vpop.f32.mrf.mxu0
        %v5687 = vadd.f32 0.0, %v5686
        %v5688 = vpop.f32.mrf.mxu0
        %5689 = vmatprep.mubr.bf16.mxu0 %v5558
        %5690 = vmatmul.mubr.bf16.gmra.mxu0 %v5557
        %v5691 = vpop.f32.mrf.mxu0
        %v5692 = vadd.f32 0.0, %v5691
        %v5693 = vpop.f32.mrf.mxu0
        %v5694 = vpop.f32.mrf.mxu0
        %v5695 = vadd.f32 0.0, %v5694
        %v5696 = vpop.f32.mrf.mxu0
        %5697 = vmatprep.mubr.bf16.mxu0 %v5560
        %5698 = vmatmul.mubr.bf16.gmra.mxu0 %v5559
        %v5699 = vpop.f32.mrf.mxu0
        %v5700 = vadd.f32 0.0, %v5699
        %v5701 = vpop.f32.mrf.mxu0
        %v5702 = vpop.f32.mrf.mxu0
        %v5703 = vadd.f32 0.0, %v5702
        %v5704 = vpop.f32.mrf.mxu0
        %5705 = vdwg.mxu0
        %v5706 = vrcp.pop %v5499
        %v5707 = vrcp.pop %v5502
        %v5708 = vrcp.pop %v5505
        %v5709 = vrcp.pop %v5508
        %v5710 = vrcp.pop %v5511
        %v5711 = vrcp.pop %v5514
        %v5712 = vrcp.pop %v5517
        %v5713 = vrcp.pop %v5520
        %v5714 = vrcp.pop %v5523
        %v5715 = vrcp.pop %v5526
        %v5716 = vrcp.pop %v5529
        %v5717 = vrcp.pop %v5532
        %v5718 = vrcp.pop %v5535
        %v5719 = vrcp.pop %v5538
        %v5720 = vrcp.pop %v5541
        %v5721 = vrcp.pop %v5544
        %v5722 = vmul.f32 %v5644, %v5706
        %v5723 = vmul.f32 %v5647, %v5707
        %v5724 = vmul.f32 %v5652, %v5708
        %v5725 = vmul.f32 %v5655, %v5709
        %v5726 = vmul.f32 %v5660, %v5710
        %v5727 = vmul.f32 %v5663, %v5711
        %v5728 = vmul.f32 %v5668, %v5712
        %v5729 = vmul.f32 %v5671, %v5713
        %v5730 = vmul.f32 %v5676, %v5714
        %v5731 = vmul.f32 %v5679, %v5715
        %v5732 = vmul.f32 %v5684, %v5716
        %v5733 = vmul.f32 %v5687, %v5717
        %v5734 = vmul.f32 %v5692, %v5718
        %v5735 = vmul.f32 %v5695, %v5719
        %v5736 = vmul.f32 %v5700, %v5720
        %v5737 = vmul.f32 %v5703, %v5721
        %v5738 = vpack.c.bf16 %v5723, %v5722
        %v5739 = vpack.c.bf16 %v5725, %v5724
        %v5740 = vpack.c.bf16 %v5727, %v5726
        %v5741 = vpack.c.bf16 %v5729, %v5728
        %v5742 = vpack.c.bf16 %v5731, %v5730
        %v5743 = vpack.c.bf16 %v5733, %v5732
        %v5744 = vpack.c.bf16 %v5735, %v5734
        %v5745 = vpack.c.bf16 %v5737, %v5736
        %v5748 = vunpack.c.l.b16 %v1244
        %v5749 = vunpack.c.l.b16 %v1245
        %v5750 = vpack.c.b16 %v5749, %v5748
        %v5753 = vsel %vm1330, %v5738, 0
        %v5756 = vsel %vm1330, %v5739, 0
        %v5759 = vsel %vm1330, %v5740, 0
        %v5762 = vsel %vm1330, %v5741, 0
        %v5765 = vsel %vm1330, %v5742, 0
        %v5768 = vsel %vm1330, %v5743, 0
        %v5771 = vsel %vm1330, %v5744, 0
        %v5774 = vsel %vm1330, %v5745, 0
        %5776 = vmatprep.subr.bf16.mxu0 0
        %5777 = vmatpush1.bf16.msra.mxu0 0
        %5778 = vmatprep.subr.bf16.mxu0 0
        %5779 = vmatpush1.bf16.msra.mxu0 0
        %5780 = vmatprep.subr.bf16.mxu0 0
        %5781 = vmatpush1.bf16.msra.mxu0 0
        %5782 = vmatprep.subr.bf16.mxu0 0
        %5783 = vmatpush1.bf16.msra.mxu0 0
        %5784 = vmatprep.subr.bf16.mxu0 0
        %5785 = vmatpush1.bf16.msra.mxu0 0
        %5786 = vmatprep.subr.bf16.mxu0 0
        %5787 = vmatpush1.bf16.msra.mxu0 0
        %5788 = vmatprep.subr.bf16.mxu0 0
        %5789 = vmatpush1.bf16.msra.mxu0 0
        %5790 = vmatprep.subr.bf16.mxu0 0
        %5791 = vmatpush1.bf16.msra.mxu0 %v5750
        %5792 = vmatprep.subr.bf16.mxu0 0
        %5793 = vmatpush2.bf16.msra.mxu0 0
        %5794 = vmatprep.subr.bf16.mxu0 0
        %5795 = vmatpush2.bf16.msra.mxu0 0
        %5796 = vmatprep.subr.bf16.mxu0 0
        %5797 = vmatpush2.bf16.msra.mxu0 0
        %5798 = vmatprep.subr.bf16.mxu0 0
        %5799 = vmatpush2.bf16.msra.mxu0 0
        %5800 = vmatprep.subr.bf16.mxu0 0
        %5801 = vmatpush2.bf16.msra.mxu0 0
        %5802 = vmatprep.subr.bf16.mxu0 0
        %5803 = vmatpush2.bf16.msra.mxu0 0
        %5804 = vmatprep.subr.bf16.mxu0 0
        %5805 = vmatpush2.bf16.msra.mxu0 0
        %5806 = vmatprep.subr.bf16.mxu0 0
        %5807 = vmatpush2.bf16.msra.mxu0 0
        %5808 = vmatprep.mubr.bf16.mxu0 0
        %5809 = vmatmul.mubr.bf16.gmra.mxu0 %v5753
        %v5810 = vpop.f32.mrf.mxu0
        %v5811 = vadd.f32 0.0, %v5810
        %v5812 = vpop.f32.mrf.mxu0
        %v5813 = vpop.f32.mrf.mxu0
        %v5814 = vadd.f32 0.0, %v5813
        %v5815 = vpop.f32.mrf.mxu0
        %5816 = vmatprep.mubr.bf16.mxu0 0
        %5817 = vmatmul.mubr.bf16.gmra.mxu0 %v5756
        %v5818 = vpop.f32.mrf.mxu0
        %v5819 = vadd.f32 0.0, %v5818
        %v5820 = vpop.f32.mrf.mxu0
        %v5821 = vpop.f32.mrf.mxu0
        %v5822 = vadd.f32 0.0, %v5821
        %v5823 = vpop.f32.mrf.mxu0
        %5824 = vmatprep.mubr.bf16.mxu0 0
        %5825 = vmatmul.mubr.bf16.gmra.mxu0 %v5759
        %v5826 = vpop.f32.mrf.mxu0
        %v5827 = vadd.f32 0.0, %v5826
        %v5828 = vpop.f32.mrf.mxu0
        %v5829 = vpop.f32.mrf.mxu0
        %v5830 = vadd.f32 0.0, %v5829
        %v5831 = vpop.f32.mrf.mxu0
        %5832 = vmatprep.mubr.bf16.mxu0 0
        %5833 = vmatmul.mubr.bf16.gmra.mxu0 %v5762
        %v5834 = vpop.f32.mrf.mxu0
        %v5835 = vadd.f32 0.0, %v5834
        %v5836 = vpop.f32.mrf.mxu0
        %v5837 = vpop.f32.mrf.mxu0
        %v5838 = vadd.f32 0.0, %v5837
        %v5839 = vpop.f32.mrf.mxu0
        %5840 = vmatprep.mubr.bf16.mxu0 0
        %5841 = vmatmul.mubr.bf16.gmra.mxu0 %v5765
        %v5842 = vpop.f32.mrf.mxu0
        %v5843 = vadd.f32 0.0, %v5842
        %v5844 = vpop.f32.mrf.mxu0
        %v5845 = vpop.f32.mrf.mxu0
        %v5846 = vadd.f32 0.0, %v5845
        %v5847 = vpop.f32.mrf.mxu0
        %5848 = vmatprep.mubr.bf16.mxu0 0
        %5849 = vmatmul.mubr.bf16.gmra.mxu0 %v5768
        %v5850 = vpop.f32.mrf.mxu0
        %v5851 = vadd.f32 0.0, %v5850
        %v5852 = vpop.f32.mrf.mxu0
        %v5853 = vpop.f32.mrf.mxu0
        %v5854 = vadd.f32 0.0, %v5853
        %v5855 = vpop.f32.mrf.mxu0
        %5856 = vmatprep.mubr.bf16.mxu0 0
        %5857 = vmatmul.mubr.bf16.gmra.mxu0 %v5771
        %v5858 = vpop.f32.mrf.mxu0
        %v5859 = vadd.f32 0.0, %v5858
        %v5860 = vpop.f32.mrf.mxu0
        %v5861 = vpop.f32.mrf.mxu0
        %v5862 = vadd.f32 0.0, %v5861
        %v5863 = vpop.f32.mrf.mxu0
        %5864 = vmatprep.mubr.bf16.mxu0 0
        %5865 = vmatmul.mubr.bf16.gmra.mxu0 %v5774
        %v5866 = vpop.f32.mrf.mxu0
        %v5867 = vadd.f32 0.0, %v5866
        %v5868 = vpop.f32.mrf.mxu0
        %v5869 = vpop.f32.mrf.mxu0
        %v5870 = vadd.f32 0.0, %v5869
        %v5871 = vpop.f32.mrf.mxu0
        %5872 = vdwg.mxu0
        %v5873 = vadd.f32 %v5104, %v5811
        %v5874 = vadd.f32 %v5105, %v5814
        %v5875 = vadd.f32 %v5106, %v5819
        %v5876 = vadd.f32 %v5107, %v5822
        %v5877 = vadd.f32 %v5108, %v5827
        %v5878 = vadd.f32 %v5109, %v5830
        %v5879 = vadd.f32 %v5110, %v5835
        %v5880 = vadd.f32 %v5111, %v5838
        %v5881 = vadd.f32 %v5112, %v5843
        %v5882 = vadd.f32 %v5113, %v5846
        %v5883 = vadd.f32 %v5114, %v5851
        %v5884 = vadd.f32 %v5115, %v5854
        %v5885 = vadd.f32 %v5116, %v5859
        %v5886 = vadd.f32 %v5117, %v5862
        %v5887 = vadd.f32 %v5118, %v5867
        %v5888 = vadd.f32 %v5119, %v5870
        %5889 = vrot.lane.b32.xlu0 %v1194, 32
        %v5890 = vpop.permute.xlu0 %5889
        %5891 = vrot.lane.b32.xlu0 %v1195, 32
        %v5892 = vpop.permute.xlu0 %5891
        %5893 = vrot.lane.b32.xlu0 %v1196, 32
        %v5894 = vpop.permute.xlu0 %5893
        %5895 = vrot.lane.b32.xlu0 %v1197, 32
        %v5896 = vpop.permute.xlu0 %5895
        %5897 = vrot.lane.b32.xlu0 %v1198, 32
        %v5898 = vpop.permute.xlu0 %5897
        %5899 = vrot.lane.b32.xlu0 %v1199, 32
        %v5900 = vpop.permute.xlu0 %5899
        %5901 = vrot.lane.b32.xlu0 %v1200, 32
        %v5902 = vpop.permute.xlu0 %5901
        %5903 = vrot.lane.b32.xlu0 %v1201, 32
        %v5904 = vpop.permute.xlu0 %5903
        %5905 = vrot.lane.b32.xlu0 %v1314, 32
        %v5906 = vpop.permute.xlu0 %5905
        %5907 = vrot.lane.b32.xlu0 %v1315, 32
        %v5908 = vpop.permute.xlu0 %5907
        %5909 = vrot.lane.b32.xlu0 %v1316, 32
        %v5910 = vpop.permute.xlu0 %5909
        %5911 = vrot.lane.b32.xlu0 %v1317, 32
        %v5912 = vpop.permute.xlu0 %5911
        %5913 = vrot.lane.b32.xlu0 %v1318, 32
        %v5914 = vpop.permute.xlu0 %5913
        %5915 = vrot.lane.b32.xlu0 %v1319, 32
        %v5916 = vpop.permute.xlu0 %5915
        %5917 = vrot.lane.b32.xlu0 %v1320, 32
        %v5918 = vpop.permute.xlu0 %5917
        %5919 = vrot.lane.b32.xlu0 %v1321, 32
        %v5920 = vpop.permute.xlu0 %5919
        %5921 = vrot.lane.b32.xlu0 %v1322, 32
        %v5922 = vpop.permute.xlu0 %5921
        %5923 = vrot.lane.b32.xlu0 %v1323, 32
        %v5924 = vpop.permute.xlu0 %5923
        %5925 = vrot.lane.b32.xlu0 %v1324, 32
        %v5926 = vpop.permute.xlu0 %5925
        %5927 = vrot.lane.b32.xlu0 %v1325, 32
        %v5928 = vpop.permute.xlu0 %5927
        %5929 = vrot.lane.b32.xlu0 %v1326, 32
        %v5930 = vpop.permute.xlu0 %5929
        %5931 = vrot.lane.b32.xlu0 %v1327, 32
        %v5932 = vpop.permute.xlu0 %5931
        %5933 = vrot.lane.b32.xlu0 %v1328, 32
        %v5934 = vpop.permute.xlu0 %5933
        %5935 = vrot.lane.b32.xlu0 %v1329, 32
        %v5936 = vpop.permute.xlu0 %5935
        %v5938 = vsel %vm1330, %v5890, 0
        %v5941 = vsel %vm1330, %v5892, 0
        %v5944 = vsel %vm1330, %v5894, 0
        %v5947 = vsel %vm1330, %v5896, 0
        %v5950 = vsel %vm1330, %v5898, 0
        %v5953 = vsel %vm1330, %v5900, 0
        %v5956 = vsel %vm1330, %v5902, 0
        %v5959 = vsel %vm1330, %v5904, 0
        %v5962 = vsel %vm1330, %v5906, 0
        %v5965 = vsel %vm1330, %v5908, 0
        %v5968 = vsel %vm1330, %v5910, 0
        %v5971 = vsel %vm1330, %v5912, 0
        %v5974 = vsel %vm1330, %v5914, 0
        %v5977 = vsel %vm1330, %v5916, 0
        %v5980 = vsel %vm1330, %v5918, 0
        %v5983 = vsel %vm1330, %v5920, 0
        %v5986 = vsel %vm1330, %v5922, 0
        %v5989 = vsel %vm1330, %v5924, 0
        %v5992 = vsel %vm1330, %v5926, 0
        %v5995 = vsel %vm1330, %v5928, 0
        %v5998 = vsel %vm1330, %v5930, 0
        %v6001 = vsel %vm1330, %v5932, 0
        %v6004 = vsel %vm1330, %v5934, 0
        %v6007 = vsel %vm1330, %v5936, 0
        %6009 = vmatprep.subr.bf16.mxu0 0
        %6010 = vmatpush1.bf16.xpose.msra.mxu0 %v5983
        %6011 = vmatprep.subr.bf16.mxu0 0
        %6012 = vmatpush1.bf16.xpose.msra.mxu0 %v5980
        %6013 = vmatprep.subr.bf16.mxu0 0
        %6014 = vmatpush1.bf16.xpose.msra.mxu0 %v5977
        %6015 = vmatprep.subr.bf16.mxu0 0
        %6016 = vmatpush1.bf16.xpose.msra.mxu0 %v5974
        %6017 = vmatprep.subr.bf16.mxu0 0
        %6018 = vmatpush1.bf16.xpose.msra.mxu0 %v5971
        %6019 = vmatprep.subr.bf16.mxu0 0
        %6020 = vmatpush1.bf16.xpose.msra.mxu0 %v5968
        %6021 = vmatprep.subr.bf16.mxu0 0
        %6022 = vmatpush1.bf16.xpose.msra.mxu0 %v5965
        %6023 = vmatprep.subr.bf16.mxu0 0
        %6024 = vmatpush1.bf16.xpose.msra.mxu0 %v5962
        %6025 = vmatprep.subr.bf16.mxu0 0
        %6026 = vmatpush2.bf16.xpose.msra.mxu0 %v6007
        %6027 = vmatprep.subr.bf16.mxu0 0
        %6028 = vmatpush2.bf16.xpose.msra.mxu0 %v6004
        %6029 = vmatprep.subr.bf16.mxu0 0
        %6030 = vmatpush2.bf16.xpose.msra.mxu0 %v6001
        %6031 = vmatprep.subr.bf16.mxu0 0
        %6032 = vmatpush2.bf16.xpose.msra.mxu0 %v5998
        %6033 = vmatprep.subr.bf16.mxu0 0
        %6034 = vmatpush2.bf16.xpose.msra.mxu0 %v5995
        %6035 = vmatprep.subr.bf16.mxu0 0
        %6036 = vmatpush2.bf16.xpose.msra.mxu0 %v5992
        %6037 = vmatprep.subr.bf16.mxu0 0
        %6038 = vmatpush2.bf16.xpose.msra.mxu0 %v5989
        %6039 = vmatprep.subr.bf16.mxu0 0
        %6040 = vmatpush2.bf16.xpose.msra.mxu0 %v5986
        %6041 = vmatprep.mubr.bf16.mxu0 0
        %6042 = vmatmul.mubr.bf16.gmra.mxu0 %v5938
        %v6043 = vpop.f32.mrf.mxu0
        %v6044 = vadd.f32 0.0, %v6043
        %v6045 = vpop.f32.mrf.mxu0
        %v6046 = vadd.f32 0.0, %v6045
        %v6047 = vpop.f32.mrf.mxu0
        %v6048 = vadd.f32 0.0, %v6047
        %v6049 = vpop.f32.mrf.mxu0
        %v6050 = vadd.f32 0.0, %v6049
        %6051 = vmatprep.mubr.bf16.mxu0 0
        %6052 = vmatmul.mubr.bf16.gmra.mxu0 %v5941
        %v6053 = vpop.f32.mrf.mxu0
        %v6054 = vadd.f32 0.0, %v6053
        %v6055 = vpop.f32.mrf.mxu0
        %v6056 = vadd.f32 0.0, %v6055
        %v6057 = vpop.f32.mrf.mxu0
        %v6058 = vadd.f32 0.0, %v6057
        %v6059 = vpop.f32.mrf.mxu0
        %v6060 = vadd.f32 0.0, %v6059
        %6061 = vmatprep.mubr.bf16.mxu0 0
        %6062 = vmatmul.mubr.bf16.gmra.mxu0 %v5944
        %v6063 = vpop.f32.mrf.mxu0
        %v6064 = vadd.f32 0.0, %v6063
        %v6065 = vpop.f32.mrf.mxu0
        %v6066 = vadd.f32 0.0, %v6065
        %v6067 = vpop.f32.mrf.mxu0
        %v6068 = vadd.f32 0.0, %v6067
        %v6069 = vpop.f32.mrf.mxu0
        %v6070 = vadd.f32 0.0, %v6069
        %6071 = vmatprep.mubr.bf16.mxu0 0
        %6072 = vmatmul.mubr.bf16.gmra.mxu0 %v5947
        %v6073 = vpop.f32.mrf.mxu0
        %v6074 = vadd.f32 0.0, %v6073
        %v6075 = vpop.f32.mrf.mxu0
        %v6076 = vadd.f32 0.0, %v6075
        %v6077 = vpop.f32.mrf.mxu0
        %v6078 = vadd.f32 0.0, %v6077
        %v6079 = vpop.f32.mrf.mxu0
        %v6080 = vadd.f32 0.0, %v6079
        %6081 = vmatprep.mubr.bf16.mxu0 0
        %6082 = vmatmul.mubr.bf16.gmra.mxu0 %v5950
        %v6083 = vpop.f32.mrf.mxu0
        %v6084 = vadd.f32 0.0, %v6083
        %v6085 = vpop.f32.mrf.mxu0
        %v6086 = vadd.f32 0.0, %v6085
        %v6087 = vpop.f32.mrf.mxu0
        %v6088 = vadd.f32 0.0, %v6087
        %v6089 = vpop.f32.mrf.mxu0
        %v6090 = vadd.f32 0.0, %v6089
        %6091 = vmatprep.mubr.bf16.mxu0 0
        %6092 = vmatmul.mubr.bf16.gmra.mxu0 %v5953
        %v6093 = vpop.f32.mrf.mxu0
        %v6094 = vadd.f32 0.0, %v6093
        %v6095 = vpop.f32.mrf.mxu0
        %v6096 = vadd.f32 0.0, %v6095
        %v6097 = vpop.f32.mrf.mxu0
        %v6098 = vadd.f32 0.0, %v6097
        %v6099 = vpop.f32.mrf.mxu0
        %v6100 = vadd.f32 0.0, %v6099
        %6101 = vmatprep.mubr.bf16.mxu0 0
        %6102 = vmatmul.mubr.bf16.gmra.mxu0 %v5956
        %v6103 = vpop.f32.mrf.mxu0
        %v6104 = vadd.f32 0.0, %v6103
        %v6105 = vpop.f32.mrf.mxu0
        %v6106 = vadd.f32 0.0, %v6105
        %v6107 = vpop.f32.mrf.mxu0
        %v6108 = vadd.f32 0.0, %v6107
        %v6109 = vpop.f32.mrf.mxu0
        %v6110 = vadd.f32 0.0, %v6109
        %6111 = vmatprep.mubr.bf16.mxu0 0
        %6112 = vmatmul.mubr.bf16.gmra.mxu0 %v5959
        %v6113 = vpop.f32.mrf.mxu0
        %v6114 = vadd.f32 0.0, %v6113
        %v6115 = vpop.f32.mrf.mxu0
        %v6116 = vadd.f32 0.0, %v6115
        %v6117 = vpop.f32.mrf.mxu0
        %v6118 = vadd.f32 0.0, %v6117
        %v6119 = vpop.f32.mrf.mxu0
        %v6120 = vadd.f32 0.0, %v6119
        %6121 = vdwg.mxu0
        %v6122 = vmax.f32 %v6044, %v6046
        %6123 = vmax.xlane.f32.xlu0 %v6122
        %v6124 = vpop.xlane.xlu0 %6123
        %v6125 = vmax.f32 %v6048, %v6050
        %6126 = vmax.xlane.f32.xlu0 %v6125
        %v6127 = vpop.xlane.xlu0 %6126
        %v6128 = vmax.f32 %v6054, %v6056
        %6129 = vmax.xlane.f32.xlu0 %v6128
        %v6130 = vpop.xlane.xlu0 %6129
        %v6131 = vmax.f32 %v6058, %v6060
        %6132 = vmax.xlane.f32.xlu0 %v6131
        %v6133 = vpop.xlane.xlu0 %6132
        %v6134 = vmax.f32 %v6064, %v6066
        %6135 = vmax.xlane.f32.xlu0 %v6134
        %v6136 = vpop.xlane.xlu0 %6135
        %v6137 = vmax.f32 %v6068, %v6070
        %6138 = vmax.xlane.f32.xlu0 %v6137
        %v6139 = vpop.xlane.xlu0 %6138
        %v6140 = vmax.f32 %v6074, %v6076
        %6141 = vmax.xlane.f32.xlu0 %v6140
        %v6142 = vpop.xlane.xlu0 %6141
        %v6143 = vmax.f32 %v6078, %v6080
        %6144 = vmax.xlane.f32.xlu0 %v6143
        %v6145 = vpop.xlane.xlu0 %6144
        %v6146 = vmax.f32 %v6084, %v6086
        %6147 = vmax.xlane.f32.xlu0 %v6146
        %v6148 = vpop.xlane.xlu0 %6147
        %v6149 = vmax.f32 %v6088, %v6090
        %6150 = vmax.xlane.f32.xlu0 %v6149
        %v6151 = vpop.xlane.xlu0 %6150
        %v6152 = vmax.f32 %v6094, %v6096
        %6153 = vmax.xlane.f32.xlu0 %v6152
        %v6154 = vpop.xlane.xlu0 %6153
        %v6155 = vmax.f32 %v6098, %v6100
        %6156 = vmax.xlane.f32.xlu0 %v6155
        %v6157 = vpop.xlane.xlu0 %6156
        %v6158 = vmax.f32 %v6104, %v6106
        %6159 = vmax.xlane.f32.xlu0 %v6158
        %v6160 = vpop.xlane.xlu0 %6159
        %v6161 = vmax.f32 %v6108, %v6110
        %6162 = vmax.xlane.f32.xlu0 %v6161
        %v6163 = vpop.xlane.xlu0 %6162
        %v6164 = vmax.f32 %v6114, %v6116
        %6165 = vmax.xlane.f32.xlu0 %v6164
        %v6166 = vpop.xlane.xlu0 %6165
        %v6167 = vmax.f32 %v6118, %v6120
        %6168 = vmax.xlane.f32.xlu0 %v6167
        %v6169 = vpop.xlane.xlu0 %6168
        %v6170 = vsub.f32 %v6044, %v6124
        %v6171 = vsub.f32 %v6046, %v6124
        %v6172 = vsub.f32 %v6048, %v6127
        %v6173 = vsub.f32 %v6050, %v6127
        %v6174 = vsub.f32 %v6054, %v6130
        %v6175 = vsub.f32 %v6056, %v6130
        %v6176 = vsub.f32 %v6058, %v6133
        %v6177 = vsub.f32 %v6060, %v6133
        %v6178 = vsub.f32 %v6064, %v6136
        %v6179 = vsub.f32 %v6066, %v6136
        %v6180 = vsub.f32 %v6068, %v6139
        %v6181 = vsub.f32 %v6070, %v6139
        %v6182 = vsub.f32 %v6074, %v6142
        %v6183 = vsub.f32 %v6076, %v6142
        %v6184 = vsub.f32 %v6078, %v6145
        %v6185 = vsub.f32 %v6080, %v6145
        %v6186 = vsub.f32 %v6084, %v6148
        %v6187 = vsub.f32 %v6086, %v6148
        %v6188 = vsub.f32 %v6088, %v6151
        %v6189 = vsub.f32 %v6090, %v6151
        %v6190 = vsub.f32 %v6094, %v6154
        %v6191 = vsub.f32 %v6096, %v6154
        %v6192 = vsub.f32 %v6098, %v6157
        %v6193 = vsub.f32 %v6100, %v6157
        %v6194 = vsub.f32 %v6104, %v6160
        %v6195 = vsub.f32 %v6106, %v6160
        %v6196 = vsub.f32 %v6108, %v6163
        %v6197 = vsub.f32 %v6110, %v6163
        %v6198 = vsub.f32 %v6114, %v6166
        %v6199 = vsub.f32 %v6116, %v6166
        %v6200 = vsub.f32 %v6118, %v6169
        %v6201 = vsub.f32 %v6120, %v6169
        %v6202 = vmul.f32 %v6170, 1.442695
        %v6203 = vpow.pop %v6202
        %v6204 = vmul.f32 %v6171, 1.442695
        %v6205 = vpow.pop %v6204
        %v6206 = vmul.f32 %v6172, 1.442695
        %v6207 = vpow.pop %v6206
        %v6208 = vmul.f32 %v6173, 1.442695
        %v6209 = vpow.pop %v6208
        %v6210 = vmul.f32 %v6174, 1.442695
        %v6211 = vpow.pop %v6210
        %v6212 = vmul.f32 %v6175, 1.442695
        %v6213 = vpow.pop %v6212
        %v6214 = vmul.f32 %v6176, 1.442695
        %v6215 = vpow.pop %v6214
        %v6216 = vmul.f32 %v6177, 1.442695
        %v6217 = vpow.pop %v6216
        %v6218 = vmul.f32 %v6178, 1.442695
        %v6219 = vpow.pop %v6218
        %v6220 = vmul.f32 %v6179, 1.442695
        %v6221 = vpow.pop %v6220
        %v6222 = vmul.f32 %v6180, 1.442695
        %v6223 = vpow.pop %v6222
        %v6224 = vmul.f32 %v6181, 1.442695
        %v6225 = vpow.pop %v6224
        %v6226 = vmul.f32 %v6182, 1.442695
        %v6227 = vpow.pop %v6226
        %v6228 = vmul.f32 %v6183, 1.442695
        %v6229 = vpow.pop %v6228
        %v6230 = vmul.f32 %v6184, 1.442695
        %v6231 = vpow.pop %v6230
        %v6232 = vmul.f32 %v6185, 1.442695
        %v6233 = vpow.pop %v6232
        %v6234 = vmul.f32 %v6186, 1.442695
        %v6235 = vpow.pop %v6234
        %v6236 = vmul.f32 %v6187, 1.442695
        %v6237 = vpow.pop %v6236
        %v6238 = vmul.f32 %v6188, 1.442695
        %v6239 = vpow.pop %v6238
        %v6240 = vmul.f32 %v6189, 1.442695
        %v6241 = vpow.pop %v6240
        %v6242 = vmul.f32 %v6190, 1.442695
        %v6243 = vpow.pop %v6242
        %v6244 = vmul.f32 %v6191, 1.442695
        %v6245 = vpow.pop %v6244
        %v6246 = vmul.f32 %v6192, 1.442695
        %v6247 = vpow.pop %v6246
        %v6248 = vmul.f32 %v6193, 1.442695
        %v6249 = vpow.pop %v6248
        %v6250 = vmul.f32 %v6194, 1.442695
        %v6251 = vpow.pop %v6250
        %v6252 = vmul.f32 %v6195, 1.442695
        %v6253 = vpow.pop %v6252
        %v6254 = vmul.f32 %v6196, 1.442695
        %v6255 = vpow.pop %v6254
        %v6256 = vmul.f32 %v6197, 1.442695
        %v6257 = vpow.pop %v6256
        %v6258 = vmul.f32 %v6198, 1.442695
        %v6259 = vpow.pop %v6258
        %v6260 = vmul.f32 %v6199, 1.442695
        %v6261 = vpow.pop %v6260
        %v6262 = vmul.f32 %v6200, 1.442695
        %v6263 = vpow.pop %v6262
        %v6264 = vmul.f32 %v6201, 1.442695
        %v6265 = vpow.pop %v6264
        %v6266 = vadd.f32 %v6203, %v6205
        %6267 = vadd.xlane.f32.xlu0 %v6266
        %v6268 = vpop.xlane.xlu0 %6267
        %v6269 = vadd.f32 %v6207, %v6209
        %6270 = vadd.xlane.f32.xlu0 %v6269
        %v6271 = vpop.xlane.xlu0 %6270
        %v6272 = vadd.f32 %v6211, %v6213
        %6273 = vadd.xlane.f32.xlu0 %v6272
        %v6274 = vpop.xlane.xlu0 %6273
        %v6275 = vadd.f32 %v6215, %v6217
        %6276 = vadd.xlane.f32.xlu0 %v6275
        %v6277 = vpop.xlane.xlu0 %6276
        %v6278 = vadd.f32 %v6219, %v6221
        %6279 = vadd.xlane.f32.xlu0 %v6278
        %v6280 = vpop.xlane.xlu0 %6279
        %v6281 = vadd.f32 %v6223, %v6225
        %6282 = vadd.xlane.f32.xlu0 %v6281
        %v6283 = vpop.xlane.xlu0 %6282
        %v6284 = vadd.f32 %v6227, %v6229
        %6285 = vadd.xlane.f32.xlu0 %v6284
        %v6286 = vpop.xlane.xlu0 %6285
        %v6287 = vadd.f32 %v6231, %v6233
        %6288 = vadd.xlane.f32.xlu0 %v6287
        %v6289 = vpop.xlane.xlu0 %6288
        %v6290 = vadd.f32 %v6235, %v6237
        %6291 = vadd.xlane.f32.xlu0 %v6290
        %v6292 = vpop.xlane.xlu0 %6291
        %v6293 = vadd.f32 %v6239, %v6241
        %6294 = vadd.xlane.f32.xlu0 %v6293
        %v6295 = vpop.xlane.xlu0 %6294
        %v6296 = vadd.f32 %v6243, %v6245
        %6297 = vadd.xlane.f32.xlu0 %v6296
        %v6298 = vpop.xlane.xlu0 %6297
        %v6299 = vadd.f32 %v6247, %v6249
        %6300 = vadd.xlane.f32.xlu0 %v6299
        %v6301 = vpop.xlane.xlu0 %6300
        %v6302 = vadd.f32 %v6251, %v6253
        %6303 = vadd.xlane.f32.xlu0 %v6302
        %v6304 = vpop.xlane.xlu0 %6303
        %v6305 = vadd.f32 %v6255, %v6257
        %6306 = vadd.xlane.f32.xlu0 %v6305
        %v6307 = vpop.xlane.xlu0 %6306
        %v6308 = vadd.f32 %v6259, %v6261
        %6309 = vadd.xlane.f32.xlu0 %v6308
        %v6310 = vpop.xlane.xlu0 %6309
        %v6311 = vadd.f32 %v6263, %v6265
        %6312 = vadd.xlane.f32.xlu0 %v6311
        %v6313 = vpop.xlane.xlu0 %6312
        %v6314 = vpack.c.bf16 %v6207, %v6203
        %v6315 = vpack.c.bf16 %v6209, %v6205
        %v6316 = vpack.c.bf16 %v6215, %v6211
        %v6317 = vpack.c.bf16 %v6217, %v6213
        %v6318 = vpack.c.bf16 %v6223, %v6219
        %v6319 = vpack.c.bf16 %v6225, %v6221
        %v6320 = vpack.c.bf16 %v6231, %v6227
        %v6321 = vpack.c.bf16 %v6233, %v6229
        %v6322 = vpack.c.bf16 %v6239, %v6235
        %v6323 = vpack.c.bf16 %v6241, %v6237
        %v6324 = vpack.c.bf16 %v6247, %v6243
        %v6325 = vpack.c.bf16 %v6249, %v6245
        %v6326 = vpack.c.bf16 %v6255, %v6251
        %v6327 = vpack.c.bf16 %v6257, %v6253
        %v6328 = vpack.c.bf16 %v6263, %v6259
        %v6329 = vpack.c.bf16 %v6265, %v6261
        %6330 = vrot.lane.b32.xlu0 %v1756, 32
        %v6331 = vpop.permute.xlu0 %6330
        %6332 = vrot.lane.b32.xlu0 %v1757, 32
        %v6333 = vpop.permute.xlu0 %6332
        %6334 = vrot.lane.b32.xlu0 %v1758, 32
        %v6335 = vpop.permute.xlu0 %6334
        %6336 = vrot.lane.b32.xlu0 %v1759, 32
        %v6337 = vpop.permute.xlu0 %6336
        %6338 = vrot.lane.b32.xlu0 %v1760, 32
        %v6339 = vpop.permute.xlu0 %6338
        %6340 = vrot.lane.b32.xlu0 %v1761, 32
        %v6341 = vpop.permute.xlu0 %6340
        %6342 = vrot.lane.b32.xlu0 %v1762, 32
        %v6343 = vpop.permute.xlu0 %6342
        %6344 = vrot.lane.b32.xlu0 %v1763, 32
        %v6345 = vpop.permute.xlu0 %6344
        %6346 = vrot.lane.b32.xlu0 %v1764, 32
        %v6347 = vpop.permute.xlu0 %6346
        %6348 = vrot.lane.b32.xlu0 %v1765, 32
        %v6349 = vpop.permute.xlu0 %6348
        %6350 = vrot.lane.b32.xlu0 %v1766, 32
        %v6351 = vpop.permute.xlu0 %6350
        %6352 = vrot.lane.b32.xlu0 %v1767, 32
        %v6353 = vpop.permute.xlu0 %6352
        %6354 = vrot.lane.b32.xlu0 %v1768, 32
        %v6355 = vpop.permute.xlu0 %6354
        %6356 = vrot.lane.b32.xlu0 %v1769, 32
        %v6357 = vpop.permute.xlu0 %6356
        %6358 = vrot.lane.b32.xlu0 %v1770, 32
        %v6359 = vpop.permute.xlu0 %6358
        %6360 = vrot.lane.b32.xlu0 %v1771, 32
        %v6361 = vpop.permute.xlu0 %6360
        %6378 = vmatprep.subr.bf16.mxu0 0
        %6379 = vmatpush1.bf16.msra.mxu0 %v6345
        %6380 = vmatprep.subr.bf16.mxu0 0
        %6381 = vmatpush1.bf16.msra.mxu0 %v6343
        %6382 = vmatprep.subr.bf16.mxu0 0
        %6383 = vmatpush1.bf16.msra.mxu0 %v6341
        %6384 = vmatprep.subr.bf16.mxu0 0
        %6385 = vmatpush1.bf16.msra.mxu0 %v6339
        %6386 = vmatprep.subr.bf16.mxu0 0
        %6387 = vmatpush1.bf16.msra.mxu0 %v6337
        %6388 = vmatprep.subr.bf16.mxu0 0
        %6389 = vmatpush1.bf16.msra.mxu0 %v6335
        %6390 = vmatprep.subr.bf16.mxu0 0
        %6391 = vmatpush1.bf16.msra.mxu0 %v6333
        %6392 = vmatprep.subr.bf16.mxu0 0
        %6393 = vmatpush1.bf16.msra.mxu0 %v6331
        %6394 = vmatprep.subr.bf16.mxu0 0
        %6395 = vmatpush2.bf16.msra.mxu0 %v6361
        %6396 = vmatprep.subr.bf16.mxu0 0
        %6397 = vmatpush2.bf16.msra.mxu0 %v6359
        %6398 = vmatprep.subr.bf16.mxu0 0
        %6399 = vmatpush2.bf16.msra.mxu0 %v6357
        %6400 = vmatprep.subr.bf16.mxu0 0
        %6401 = vmatpush2.bf16.msra.mxu0 %v6355
        %6402 = vmatprep.subr.bf16.mxu0 0
        %6403 = vmatpush2.bf16.msra.mxu0 %v6353
        %6404 = vmatprep.subr.bf16.mxu0 0
        %6405 = vmatpush2.bf16.msra.mxu0 %v6351
        %6406 = vmatprep.subr.bf16.mxu0 0
        %6407 = vmatpush2.bf16.msra.mxu0 %v6349
        %6408 = vmatprep.subr.bf16.mxu0 0
        %6409 = vmatpush2.bf16.msra.mxu0 %v6347
        %6410 = vmatprep.mubr.bf16.mxu0 %v6315
        %6411 = vmatmul.mubr.bf16.gmra.mxu0 %v6314
        %v6412 = vpop.f32.mrf.mxu0
        %v6413 = vadd.f32 0.0, %v6412
        %v6414 = vpop.f32.mrf.mxu0
        %v6415 = vpop.f32.mrf.mxu0
        %v6416 = vadd.f32 0.0, %v6415
        %v6417 = vpop.f32.mrf.mxu0
        %6418 = vmatprep.mubr.bf16.mxu0 %v6317
        %6419 = vmatmul.mubr.bf16.gmra.mxu0 %v6316
        %v6420 = vpop.f32.mrf.mxu0
        %v6421 = vadd.f32 0.0, %v6420
        %v6422 = vpop.f32.mrf.mxu0
        %v6423 = vpop.f32.mrf.mxu0
        %v6424 = vadd.f32 0.0, %v6423
        %v6425 = vpop.f32.mrf.mxu0
        %6426 = vmatprep.mubr.bf16.mxu0 %v6319
        %6427 = vmatmul.mubr.bf16.gmra.mxu0 %v6318
        %v6428 = vpop.f32.mrf.mxu0
        %v6429 = vadd.f32 0.0, %v6428
        %v6430 = vpop.f32.mrf.mxu0
        %v6431 = vpop.f32.mrf.mxu0
        %v6432 = vadd.f32 0.0, %v6431
        %v6433 = vpop.f32.mrf.mxu0
        %6434 = vmatprep.mubr.bf16.mxu0 %v6321
        %6435 = vmatmul.mubr.bf16.gmra.mxu0 %v6320
        %v6436 = vpop.f32.mrf.mxu0
        %v6437 = vadd.f32 0.0, %v6436
        %v6438 = vpop.f32.mrf.mxu0
        %v6439 = vpop.f32.mrf.mxu0
        %v6440 = vadd.f32 0.0, %v6439
        %v6441 = vpop.f32.mrf.mxu0
        %6442 = vmatprep.mubr.bf16.mxu0 %v6323
        %6443 = vmatmul.mubr.bf16.gmra.mxu0 %v6322
        %v6444 = vpop.f32.mrf.mxu0
        %v6445 = vadd.f32 0.0, %v6444
        %v6446 = vpop.f32.mrf.mxu0
        %v6447 = vpop.f32.mrf.mxu0
        %v6448 = vadd.f32 0.0, %v6447
        %v6449 = vpop.f32.mrf.mxu0
        %6450 = vmatprep.mubr.bf16.mxu0 %v6325
        %6451 = vmatmul.mubr.bf16.gmra.mxu0 %v6324
        %v6452 = vpop.f32.mrf.mxu0
        %v6453 = vadd.f32 0.0, %v6452
        %v6454 = vpop.f32.mrf.mxu0
        %v6455 = vpop.f32.mrf.mxu0
        %v6456 = vadd.f32 0.0, %v6455
        %v6457 = vpop.f32.mrf.mxu0
        %6458 = vmatprep.mubr.bf16.mxu0 %v6327
        %6459 = vmatmul.mubr.bf16.gmra.mxu0 %v6326
        %v6460 = vpop.f32.mrf.mxu0
        %v6461 = vadd.f32 0.0, %v6460
        %v6462 = vpop.f32.mrf.mxu0
        %v6463 = vpop.f32.mrf.mxu0
        %v6464 = vadd.f32 0.0, %v6463
        %v6465 = vpop.f32.mrf.mxu0
        %6466 = vmatprep.mubr.bf16.mxu0 %v6329
        %6467 = vmatmul.mubr.bf16.gmra.mxu0 %v6328
        %v6468 = vpop.f32.mrf.mxu0
        %v6469 = vadd.f32 0.0, %v6468
        %v6470 = vpop.f32.mrf.mxu0
        %v6471 = vpop.f32.mrf.mxu0
        %v6472 = vadd.f32 0.0, %v6471
        %v6473 = vpop.f32.mrf.mxu0
        %6474 = vdwg.mxu0
        %v6475 = vrcp.pop %v6268
        %v6476 = vrcp.pop %v6271
        %v6477 = vrcp.pop %v6274
        %v6478 = vrcp.pop %v6277
        %v6479 = vrcp.pop %v6280
        %v6480 = vrcp.pop %v6283
        %v6481 = vrcp.pop %v6286
        %v6482 = vrcp.pop %v6289
        %v6483 = vrcp.pop %v6292
        %v6484 = vrcp.pop %v6295
        %v6485 = vrcp.pop %v6298
        %v6486 = vrcp.pop %v6301
        %v6487 = vrcp.pop %v6304
        %v6488 = vrcp.pop %v6307
        %v6489 = vrcp.pop %v6310
        %v6490 = vrcp.pop %v6313
        %v6491 = vmul.f32 %v6413, %v6475
        %v6492 = vmul.f32 %v6416, %v6476
        %v6493 = vmul.f32 %v6421, %v6477
        %v6494 = vmul.f32 %v6424, %v6478
        %v6495 = vmul.f32 %v6429, %v6479
        %v6496 = vmul.f32 %v6432, %v6480
        %v6497 = vmul.f32 %v6437, %v6481
        %v6498 = vmul.f32 %v6440, %v6482
        %v6499 = vmul.f32 %v6445, %v6483
        %v6500 = vmul.f32 %v6448, %v6484
        %v6501 = vmul.f32 %v6453, %v6485
        %v6502 = vmul.f32 %v6456, %v6486
        %v6503 = vmul.f32 %v6461, %v6487
        %v6504 = vmul.f32 %v6464, %v6488
        %v6505 = vmul.f32 %v6469, %v6489
        %v6506 = vmul.f32 %v6472, %v6490
        %v6507 = vpack.c.bf16 %v6492, %v6491
        %v6508 = vpack.c.bf16 %v6494, %v6493
        %v6509 = vpack.c.bf16 %v6496, %v6495
        %v6510 = vpack.c.bf16 %v6498, %v6497
        %v6511 = vpack.c.bf16 %v6500, %v6499
        %v6512 = vpack.c.bf16 %v6502, %v6501
        %v6513 = vpack.c.bf16 %v6504, %v6503
        %v6514 = vpack.c.bf16 %v6506, %v6505
        %v6517 = vunpack.c.l.b16 %v1246
        %v6518 = vunpack.c.l.b16 %v1247
        %v6519 = vpack.c.b16 %v6518, %v6517
        %v6522 = vsel %vm1330, %v6507, 0
        %v6525 = vsel %vm1330, %v6508, 0
        %v6528 = vsel %vm1330, %v6509, 0
        %v6531 = vsel %vm1330, %v6510, 0
        %v6534 = vsel %vm1330, %v6511, 0
        %v6537 = vsel %vm1330, %v6512, 0
        %v6540 = vsel %vm1330, %v6513, 0
        %v6543 = vsel %vm1330, %v6514, 0
        %6545 = vmatprep.subr.bf16.mxu0 0
        %6546 = vmatpush1.bf16.msra.mxu0 0
        %6547 = vmatprep.subr.bf16.mxu0 0
        %6548 = vmatpush1.bf16.msra.mxu0 0
        %6549 = vmatprep.subr.bf16.mxu0 0
        %6550 = vmatpush1.bf16.msra.mxu0 0
        %6551 = vmatprep.subr.bf16.mxu0 0
        %6552 = vmatpush1.bf16.msra.mxu0 0
        %6553 = vmatprep.subr.bf16.mxu0 0
        %6554 = vmatpush1.bf16.msra.mxu0 0
        %6555 = vmatprep.subr.bf16.mxu0 0
        %6556 = vmatpush1.bf16.msra.mxu0 0
        %6557 = vmatprep.subr.bf16.mxu0 0
        %6558 = vmatpush1.bf16.msra.mxu0 0
        %6559 = vmatprep.subr.bf16.mxu0 0
        %6560 = vmatpush1.bf16.msra.mxu0 %v6519
        %6561 = vmatprep.subr.bf16.mxu0 0
        %6562 = vmatpush2.bf16.msra.mxu0 0
        %6563 = vmatprep.subr.bf16.mxu0 0
        %6564 = vmatpush2.bf16.msra.mxu0 0
        %6565 = vmatprep.subr.bf16.mxu0 0
        %6566 = vmatpush2.bf16.msra.mxu0 0
        %6567 = vmatprep.subr.bf16.mxu0 0
        %6568 = vmatpush2.bf16.msra.mxu0 0
        %6569 = vmatprep.subr.bf16.mxu0 0
        %6570 = vmatpush2.bf16.msra.mxu0 0
        %6571 = vmatprep.subr.bf16.mxu0 0
        %6572 = vmatpush2.bf16.msra.mxu0 0
        %6573 = vmatprep.subr.bf16.mxu0 0
        %6574 = vmatpush2.bf16.msra.mxu0 0
        %6575 = vmatprep.subr.bf16.mxu0 0
        %6576 = vmatpush2.bf16.msra.mxu0 0
        %6577 = vmatprep.mubr.bf16.mxu0 0
        %6578 = vmatmul.mubr.bf16.gmra.mxu0 %v6522
        %v6579 = vpop.f32.mrf.mxu0
        %v6580 = vadd.f32 0.0, %v6579
        %v6581 = vpop.f32.mrf.mxu0
        %v6582 = vpop.f32.mrf.mxu0
        %v6583 = vadd.f32 0.0, %v6582
        %v6584 = vpop.f32.mrf.mxu0
        %6585 = vmatprep.mubr.bf16.mxu0 0
        %6586 = vmatmul.mubr.bf16.gmra.mxu0 %v6525
        %v6587 = vpop.f32.mrf.mxu0
        %v6588 = vadd.f32 0.0, %v6587
        %v6589 = vpop.f32.mrf.mxu0
        %v6590 = vpop.f32.mrf.mxu0
        %v6591 = vadd.f32 0.0, %v6590
        %v6592 = vpop.f32.mrf.mxu0
        %6593 = vmatprep.mubr.bf16.mxu0 0
        %6594 = vmatmul.mubr.bf16.gmra.mxu0 %v6528
        %v6595 = vpop.f32.mrf.mxu0
        %v6596 = vadd.f32 0.0, %v6595
        %v6597 = vpop.f32.mrf.mxu0
        %v6598 = vpop.f32.mrf.mxu0
        %v6599 = vadd.f32 0.0, %v6598
        %v6600 = vpop.f32.mrf.mxu0
        %6601 = vmatprep.mubr.bf16.mxu0 0
        %6602 = vmatmul.mubr.bf16.gmra.mxu0 %v6531
        %v6603 = vpop.f32.mrf.mxu0
        %v6604 = vadd.f32 0.0, %v6603
        %v6605 = vpop.f32.mrf.mxu0
        %v6606 = vpop.f32.mrf.mxu0
        %v6607 = vadd.f32 0.0, %v6606
        %v6608 = vpop.f32.mrf.mxu0
        %6609 = vmatprep.mubr.bf16.mxu0 0
        %6610 = vmatmul.mubr.bf16.gmra.mxu0 %v6534
        %v6611 = vpop.f32.mrf.mxu0
        %v6612 = vadd.f32 0.0, %v6611
        %v6613 = vpop.f32.mrf.mxu0
        %v6614 = vpop.f32.mrf.mxu0
        %v6615 = vadd.f32 0.0, %v6614
        %v6616 = vpop.f32.mrf.mxu0
        %6617 = vmatprep.mubr.bf16.mxu0 0
        %6618 = vmatmul.mubr.bf16.gmra.mxu0 %v6537
        %v6619 = vpop.f32.mrf.mxu0
        %v6620 = vadd.f32 0.0, %v6619
        %v6621 = vpop.f32.mrf.mxu0
        %v6622 = vpop.f32.mrf.mxu0
        %v6623 = vadd.f32 0.0, %v6622
        %v6624 = vpop.f32.mrf.mxu0
        %6625 = vmatprep.mubr.bf16.mxu0 0
        %6626 = vmatmul.mubr.bf16.gmra.mxu0 %v6540
        %v6627 = vpop.f32.mrf.mxu0
        %v6628 = vadd.f32 0.0, %v6627
        %v6629 = vpop.f32.mrf.mxu0
        %v6630 = vpop.f32.mrf.mxu0
        %v6631 = vadd.f32 0.0, %v6630
        %v6632 = vpop.f32.mrf.mxu0
        %6633 = vmatprep.mubr.bf16.mxu0 0
        %6634 = vmatmul.mubr.bf16.gmra.mxu0 %v6543
        %v6635 = vpop.f32.mrf.mxu0
        %v6636 = vadd.f32 0.0, %v6635
        %v6637 = vpop.f32.mrf.mxu0
        %v6638 = vpop.f32.mrf.mxu0
        %v6639 = vadd.f32 0.0, %v6638
        %v6640 = vpop.f32.mrf.mxu0
        %6641 = vdwg.mxu0
        %v6642 = vadd.f32 %v5873, %v6580
        %v6643 = vadd.f32 %v5874, %v6583
        %v6644 = vadd.f32 %v5875, %v6588
        %v6645 = vadd.f32 %v5876, %v6591
        %v6646 = vadd.f32 %v5877, %v6596
        %v6647 = vadd.f32 %v5878, %v6599
        %v6648 = vadd.f32 %v5879, %v6604
        %v6649 = vadd.f32 %v5880, %v6607
        %v6650 = vadd.f32 %v5881, %v6612
        %v6651 = vadd.f32 %v5882, %v6615
        %v6652 = vadd.f32 %v5883, %v6620
        %v6653 = vadd.f32 %v5884, %v6623
        %v6654 = vadd.f32 %v5885, %v6628
        %v6655 = vadd.f32 %v5886, %v6631
        %v6656 = vadd.f32 %v5887, %v6636
        %v6657 = vadd.f32 %v5888, %v6639
        %6658 = vrot.lane.b32.xlu0 %v1194, 16
        %v6659 = vpop.permute.xlu0 %6658
        %6660 = vrot.lane.b32.xlu0 %v1195, 16
        %v6661 = vpop.permute.xlu0 %6660
        %6662 = vrot.lane.b32.xlu0 %v1196, 16
        %v6663 = vpop.permute.xlu0 %6662
        %6664 = vrot.lane.b32.xlu0 %v1197, 16
        %v6665 = vpop.permute.xlu0 %6664
        %6666 = vrot.lane.b32.xlu0 %v1198, 16
        %v6667 = vpop.permute.xlu0 %6666
        %6668 = vrot.lane.b32.xlu0 %v1199, 16
        %v6669 = vpop.permute.xlu0 %6668
        %6670 = vrot.lane.b32.xlu0 %v1200, 16
        %v6671 = vpop.permute.xlu0 %6670
        %6672 = vrot.lane.b32.xlu0 %v1201, 16
        %v6673 = vpop.permute.xlu0 %6672
        %6674 = vrot.lane.b32.xlu0 %v1314, 16
        %v6675 = vpop.permute.xlu0 %6674
        %6676 = vrot.lane.b32.xlu0 %v1315, 16
        %v6677 = vpop.permute.xlu0 %6676
        %6678 = vrot.lane.b32.xlu0 %v1316, 16
        %v6679 = vpop.permute.xlu0 %6678
        %6680 = vrot.lane.b32.xlu0 %v1317, 16
        %v6681 = vpop.permute.xlu0 %6680
        %6682 = vrot.lane.b32.xlu0 %v1318, 16
        %v6683 = vpop.permute.xlu0 %6682
        %6684 = vrot.lane.b32.xlu0 %v1319, 16
        %v6685 = vpop.permute.xlu0 %6684
        %6686 = vrot.lane.b32.xlu0 %v1320, 16
        %v6687 = vpop.permute.xlu0 %6686
        %6688 = vrot.lane.b32.xlu0 %v1321, 16
        %v6689 = vpop.permute.xlu0 %6688
        %6690 = vrot.lane.b32.xlu0 %v1322, 16
        %v6691 = vpop.permute.xlu0 %6690
        %6692 = vrot.lane.b32.xlu0 %v1323, 16
        %v6693 = vpop.permute.xlu0 %6692
        %6694 = vrot.lane.b32.xlu0 %v1324, 16
        %v6695 = vpop.permute.xlu0 %6694
        %6696 = vrot.lane.b32.xlu0 %v1325, 16
        %v6697 = vpop.permute.xlu0 %6696
        %6698 = vrot.lane.b32.xlu0 %v1326, 16
        %v6699 = vpop.permute.xlu0 %6698
        %6700 = vrot.lane.b32.xlu0 %v1327, 16
        %v6701 = vpop.permute.xlu0 %6700
        %6702 = vrot.lane.b32.xlu0 %v1328, 16
        %v6703 = vpop.permute.xlu0 %6702
        %6704 = vrot.lane.b32.xlu0 %v1329, 16
        %v6705 = vpop.permute.xlu0 %6704
        %v6707 = vsel %vm1330, %v6659, 0
        %v6710 = vsel %vm1330, %v6661, 0
        %v6713 = vsel %vm1330, %v6663, 0
        %v6716 = vsel %vm1330, %v6665, 0
        %v6719 = vsel %vm1330, %v6667, 0
        %v6722 = vsel %vm1330, %v6669, 0
        %v6725 = vsel %vm1330, %v6671, 0
        %v6728 = vsel %vm1330, %v6673, 0
        %v6731 = vsel %vm1330, %v6675, 0
        %v6734 = vsel %vm1330, %v6677, 0
        %v6737 = vsel %vm1330, %v6679, 0
        %v6740 = vsel %vm1330, %v6681, 0
        %v6743 = vsel %vm1330, %v6683, 0
        %v6746 = vsel %vm1330, %v6685, 0
        %v6749 = vsel %vm1330, %v6687, 0
        %v6752 = vsel %vm1330, %v6689, 0
        %v6755 = vsel %vm1330, %v6691, 0
        %v6758 = vsel %vm1330, %v6693, 0
        %v6761 = vsel %vm1330, %v6695, 0
        %v6764 = vsel %vm1330, %v6697, 0
        %v6767 = vsel %vm1330, %v6699, 0
        %v6770 = vsel %vm1330, %v6701, 0
        %v6773 = vsel %vm1330, %v6703, 0
        %v6776 = vsel %vm1330, %v6705, 0
        %6778 = vmatprep.subr.bf16.mxu0 0
        %6779 = vmatpush1.bf16.xpose.msra.mxu0 %v6752
        %6780 = vmatprep.subr.bf16.mxu0 0
        %6781 = vmatpush1.bf16.xpose.msra.mxu0 %v6749
        %6782 = vmatprep.subr.bf16.mxu0 0
        %6783 = vmatpush1.bf16.xpose.msra.mxu0 %v6746
        %6784 = vmatprep.subr.bf16.mxu0 0
        %6785 = vmatpush1.bf16.xpose.msra.mxu0 %v6743
        %6786 = vmatprep.subr.bf16.mxu0 0
        %6787 = vmatpush1.bf16.xpose.msra.mxu0 %v6740
        %6788 = vmatprep.subr.bf16.mxu0 0
        %6789 = vmatpush1.bf16.xpose.msra.mxu0 %v6737
        %6790 = vmatprep.subr.bf16.mxu0 0
        %6791 = vmatpush1.bf16.xpose.msra.mxu0 %v6734
        %6792 = vmatprep.subr.bf16.mxu0 0
        %6793 = vmatpush1.bf16.xpose.msra.mxu0 %v6731
        %6794 = vmatprep.subr.bf16.mxu0 0
        %6795 = vmatpush2.bf16.xpose.msra.mxu0 %v6776
        %6796 = vmatprep.subr.bf16.mxu0 0
        %6797 = vmatpush2.bf16.xpose.msra.mxu0 %v6773
        %6798 = vmatprep.subr.bf16.mxu0 0
        %6799 = vmatpush2.bf16.xpose.msra.mxu0 %v6770
        %6800 = vmatprep.subr.bf16.mxu0 0
        %6801 = vmatpush2.bf16.xpose.msra.mxu0 %v6767
        %6802 = vmatprep.subr.bf16.mxu0 0
        %6803 = vmatpush2.bf16.xpose.msra.mxu0 %v6764
        %6804 = vmatprep.subr.bf16.mxu0 0
        %6805 = vmatpush2.bf16.xpose.msra.mxu0 %v6761
        %6806 = vmatprep.subr.bf16.mxu0 0
        %6807 = vmatpush2.bf16.xpose.msra.mxu0 %v6758
        %6808 = vmatprep.subr.bf16.mxu0 0
        %6809 = vmatpush2.bf16.xpose.msra.mxu0 %v6755
        %6810 = vmatprep.mubr.bf16.mxu0 0
        %6811 = vmatmul.mubr.bf16.gmra.mxu0 %v6707
        %v6812 = vpop.f32.mrf.mxu0
        %v6813 = vadd.f32 0.0, %v6812
        %v6814 = vpop.f32.mrf.mxu0
        %v6815 = vadd.f32 0.0, %v6814
        %v6816 = vpop.f32.mrf.mxu0
        %v6817 = vadd.f32 0.0, %v6816
        %v6818 = vpop.f32.mrf.mxu0
        %v6819 = vadd.f32 0.0, %v6818
        %6820 = vmatprep.mubr.bf16.mxu0 0
        %6821 = vmatmul.mubr.bf16.gmra.mxu0 %v6710
        %v6822 = vpop.f32.mrf.mxu0
        %v6823 = vadd.f32 0.0, %v6822
        %v6824 = vpop.f32.mrf.mxu0
        %v6825 = vadd.f32 0.0, %v6824
        %v6826 = vpop.f32.mrf.mxu0
        %v6827 = vadd.f32 0.0, %v6826
        %v6828 = vpop.f32.mrf.mxu0
        %v6829 = vadd.f32 0.0, %v6828
        %6830 = vmatprep.mubr.bf16.mxu0 0
        %6831 = vmatmul.mubr.bf16.gmra.mxu0 %v6713
        %v6832 = vpop.f32.mrf.mxu0
        %v6833 = vadd.f32 0.0, %v6832
        %v6834 = vpop.f32.mrf.mxu0
        %v6835 = vadd.f32 0.0, %v6834
        %v6836 = vpop.f32.mrf.mxu0
        %v6837 = vadd.f32 0.0, %v6836
        %v6838 = vpop.f32.mrf.mxu0
        %v6839 = vadd.f32 0.0, %v6838
        %6840 = vmatprep.mubr.bf16.mxu0 0
        %6841 = vmatmul.mubr.bf16.gmra.mxu0 %v6716
        %v6842 = vpop.f32.mrf.mxu0
        %v6843 = vadd.f32 0.0, %v6842
        %v6844 = vpop.f32.mrf.mxu0
        %v6845 = vadd.f32 0.0, %v6844
        %v6846 = vpop.f32.mrf.mxu0
        %v6847 = vadd.f32 0.0, %v6846
        %v6848 = vpop.f32.mrf.mxu0
        %v6849 = vadd.f32 0.0, %v6848
        %6850 = vmatprep.mubr.bf16.mxu0 0
        %6851 = vmatmul.mubr.bf16.gmra.mxu0 %v6719
        %v6852 = vpop.f32.mrf.mxu0
        %v6853 = vadd.f32 0.0, %v6852
        %v6854 = vpop.f32.mrf.mxu0
        %v6855 = vadd.f32 0.0, %v6854
        %v6856 = vpop.f32.mrf.mxu0
        %v6857 = vadd.f32 0.0, %v6856
        %v6858 = vpop.f32.mrf.mxu0
        %v6859 = vadd.f32 0.0, %v6858
        %6860 = vmatprep.mubr.bf16.mxu0 0
        %6861 = vmatmul.mubr.bf16.gmra.mxu0 %v6722
        %v6862 = vpop.f32.mrf.mxu0
        %v6863 = vadd.f32 0.0, %v6862
        %v6864 = vpop.f32.mrf.mxu0
        %v6865 = vadd.f32 0.0, %v6864
        %v6866 = vpop.f32.mrf.mxu0
        %v6867 = vadd.f32 0.0, %v6866
        %v6868 = vpop.f32.mrf.mxu0
        %v6869 = vadd.f32 0.0, %v6868
        %6870 = vmatprep.mubr.bf16.mxu0 0
        %6871 = vmatmul.mubr.bf16.gmra.mxu0 %v6725
        %v6872 = vpop.f32.mrf.mxu0
        %v6873 = vadd.f32 0.0, %v6872
        %v6874 = vpop.f32.mrf.mxu0
        %v6875 = vadd.f32 0.0, %v6874
        %v6876 = vpop.f32.mrf.mxu0
        %v6877 = vadd.f32 0.0, %v6876
        %v6878 = vpop.f32.mrf.mxu0
        %v6879 = vadd.f32 0.0, %v6878
        %6880 = vmatprep.mubr.bf16.mxu0 0
        %6881 = vmatmul.mubr.bf16.gmra.mxu0 %v6728
        %v6882 = vpop.f32.mrf.mxu0
        %v6883 = vadd.f32 0.0, %v6882
        %v6884 = vpop.f32.mrf.mxu0
        %v6885 = vadd.f32 0.0, %v6884
        %v6886 = vpop.f32.mrf.mxu0
        %v6887 = vadd.f32 0.0, %v6886
        %v6888 = vpop.f32.mrf.mxu0
        %v6889 = vadd.f32 0.0, %v6888
        %6890 = vdwg.mxu0
        %v6891 = vmax.f32 %v6813, %v6815
        %6892 = vmax.xlane.f32.xlu0 %v6891
        %v6893 = vpop.xlane.xlu0 %6892
        %v6894 = vmax.f32 %v6817, %v6819
        %6895 = vmax.xlane.f32.xlu0 %v6894
        %v6896 = vpop.xlane.xlu0 %6895
        %v6897 = vmax.f32 %v6823, %v6825
        %6898 = vmax.xlane.f32.xlu0 %v6897
        %v6899 = vpop.xlane.xlu0 %6898
        %v6900 = vmax.f32 %v6827, %v6829
        %6901 = vmax.xlane.f32.xlu0 %v6900
        %v6902 = vpop.xlane.xlu0 %6901
        %v6903 = vmax.f32 %v6833, %v6835
        %6904 = vmax.xlane.f32.xlu0 %v6903
        %v6905 = vpop.xlane.xlu0 %6904
        %v6906 = vmax.f32 %v6837, %v6839
        %6907 = vmax.xlane.f32.xlu0 %v6906
        %v6908 = vpop.xlane.xlu0 %6907
        %v6909 = vmax.f32 %v6843, %v6845
        %6910 = vmax.xlane.f32.xlu0 %v6909
        %v6911 = vpop.xlane.xlu0 %6910
        %v6912 = vmax.f32 %v6847, %v6849
        %6913 = vmax.xlane.f32.xlu0 %v6912
        %v6914 = vpop.xlane.xlu0 %6913
        %v6915 = vmax.f32 %v6853, %v6855
        %6916 = vmax.xlane.f32.xlu0 %v6915
        %v6917 = vpop.xlane.xlu0 %6916
        %v6918 = vmax.f32 %v6857, %v6859
        %6919 = vmax.xlane.f32.xlu0 %v6918
        %v6920 = vpop.xlane.xlu0 %6919
        %v6921 = vmax.f32 %v6863, %v6865
        %6922 = vmax.xlane.f32.xlu0 %v6921
        %v6923 = vpop.xlane.xlu0 %6922
        %v6924 = vmax.f32 %v6867, %v6869
        %6925 = vmax.xlane.f32.xlu0 %v6924
        %v6926 = vpop.xlane.xlu0 %6925
        %v6927 = vmax.f32 %v6873, %v6875
        %6928 = vmax.xlane.f32.xlu0 %v6927
        %v6929 = vpop.xlane.xlu0 %6928
        %v6930 = vmax.f32 %v6877, %v6879
        %6931 = vmax.xlane.f32.xlu0 %v6930
        %v6932 = vpop.xlane.xlu0 %6931
        %v6933 = vmax.f32 %v6883, %v6885
        %6934 = vmax.xlane.f32.xlu0 %v6933
        %v6935 = vpop.xlane.xlu0 %6934
        %v6936 = vmax.f32 %v6887, %v6889
        %6937 = vmax.xlane.f32.xlu0 %v6936
        %v6938 = vpop.xlane.xlu0 %6937
        %v6939 = vsub.f32 %v6813, %v6893
        %v6940 = vsub.f32 %v6815, %v6893
        %v6941 = vsub.f32 %v6817, %v6896
        %v6942 = vsub.f32 %v6819, %v6896
        %v6943 = vsub.f32 %v6823, %v6899
        %v6944 = vsub.f32 %v6825, %v6899
        %v6945 = vsub.f32 %v6827, %v6902
        %v6946 = vsub.f32 %v6829, %v6902
        %v6947 = vsub.f32 %v6833, %v6905
        %v6948 = vsub.f32 %v6835, %v6905
        %v6949 = vsub.f32 %v6837, %v6908
        %v6950 = vsub.f32 %v6839, %v6908
        %v6951 = vsub.f32 %v6843, %v6911
        %v6952 = vsub.f32 %v6845, %v6911
        %v6953 = vsub.f32 %v6847, %v6914
        %v6954 = vsub.f32 %v6849, %v6914
        %v6955 = vsub.f32 %v6853, %v6917
        %v6956 = vsub.f32 %v6855, %v6917
        %v6957 = vsub.f32 %v6857, %v6920
        %v6958 = vsub.f32 %v6859, %v6920
        %v6959 = vsub.f32 %v6863, %v6923
        %v6960 = vsub.f32 %v6865, %v6923
        %v6961 = vsub.f32 %v6867, %v6926
        %v6962 = vsub.f32 %v6869, %v6926
        %v6963 = vsub.f32 %v6873, %v6929
        %v6964 = vsub.f32 %v6875, %v6929
        %v6965 = vsub.f32 %v6877, %v6932
        %v6966 = vsub.f32 %v6879, %v6932
        %v6967 = vsub.f32 %v6883, %v6935
        %v6968 = vsub.f32 %v6885, %v6935
        %v6969 = vsub.f32 %v6887, %v6938
        %v6970 = vsub.f32 %v6889, %v6938
        %v6971 = vmul.f32 %v6939, 1.442695
        %v6972 = vpow.pop %v6971
        %v6973 = vmul.f32 %v6940, 1.442695
        %v6974 = vpow.pop %v6973
        %v6975 = vmul.f32 %v6941, 1.442695
        %v6976 = vpow.pop %v6975
        %v6977 = vmul.f32 %v6942, 1.442695
        %v6978 = vpow.pop %v6977
        %v6979 = vmul.f32 %v6943, 1.442695
        %v6980 = vpow.pop %v6979
        %v6981 = vmul.f32 %v6944, 1.442695
        %v6982 = vpow.pop %v6981
        %v6983 = vmul.f32 %v6945, 1.442695
        %v6984 = vpow.pop %v6983
        %v6985 = vmul.f32 %v6946, 1.442695
        %v6986 = vpow.pop %v6985
        %v6987 = vmul.f32 %v6947, 1.442695
        %v6988 = vpow.pop %v6987
        %v6989 = vmul.f32 %v6948, 1.442695
        %v6990 = vpow.pop %v6989
        %v6991 = vmul.f32 %v6949, 1.442695
        %v6992 = vpow.pop %v6991
        %v6993 = vmul.f32 %v6950, 1.442695
        %v6994 = vpow.pop %v6993
        %v6995 = vmul.f32 %v6951, 1.442695
        %v6996 = vpow.pop %v6995
        %v6997 = vmul.f32 %v6952, 1.442695
        %v6998 = vpow.pop %v6997
        %v6999 = vmul.f32 %v6953, 1.442695
        %v7000 = vpow.pop %v6999
        %v7001 = vmul.f32 %v6954, 1.442695
        %v7002 = vpow.pop %v7001
        %v7003 = vmul.f32 %v6955, 1.442695
        %v7004 = vpow.pop %v7003
        %v7005 = vmul.f32 %v6956, 1.442695
        %v7006 = vpow.pop %v7005
        %v7007 = vmul.f32 %v6957, 1.442695
        %v7008 = vpow.pop %v7007
        %v7009 = vmul.f32 %v6958, 1.442695
        %v7010 = vpow.pop %v7009
        %v7011 = vmul.f32 %v6959, 1.442695
        %v7012 = vpow.pop %v7011
        %v7013 = vmul.f32 %v6960, 1.442695
        %v7014 = vpow.pop %v7013
        %v7015 = vmul.f32 %v6961, 1.442695
        %v7016 = vpow.pop %v7015
        %v7017 = vmul.f32 %v6962, 1.442695
        %v7018 = vpow.pop %v7017
        %v7019 = vmul.f32 %v6963, 1.442695
        %v7020 = vpow.pop %v7019
        %v7021 = vmul.f32 %v6964, 1.442695
        %v7022 = vpow.pop %v7021
        %v7023 = vmul.f32 %v6965, 1.442695
        %v7024 = vpow.pop %v7023
        %v7025 = vmul.f32 %v6966, 1.442695
        %v7026 = vpow.pop %v7025
        %v7027 = vmul.f32 %v6967, 1.442695
        %v7028 = vpow.pop %v7027
        %v7029 = vmul.f32 %v6968, 1.442695
        %v7030 = vpow.pop %v7029
        %v7031 = vmul.f32 %v6969, 1.442695
        %v7032 = vpow.pop %v7031
        %v7033 = vmul.f32 %v6970, 1.442695
        %v7034 = vpow.pop %v7033
        %v7035 = vadd.f32 %v6972, %v6974
        %7036 = vadd.xlane.f32.xlu0 %v7035
        %v7037 = vpop.xlane.xlu0 %7036
        %v7038 = vadd.f32 %v6976, %v6978
        %7039 = vadd.xlane.f32.xlu0 %v7038
        %v7040 = vpop.xlane.xlu0 %7039
        %v7041 = vadd.f32 %v6980, %v6982
        %7042 = vadd.xlane.f32.xlu0 %v7041
        %v7043 = vpop.xlane.xlu0 %7042
        %v7044 = vadd.f32 %v6984, %v6986
        %7045 = vadd.xlane.f32.xlu0 %v7044
        %v7046 = vpop.xlane.xlu0 %7045
        %v7047 = vadd.f32 %v6988, %v6990
        %7048 = vadd.xlane.f32.xlu0 %v7047
        %v7049 = vpop.xlane.xlu0 %7048
        %v7050 = vadd.f32 %v6992, %v6994
        %7051 = vadd.xlane.f32.xlu0 %v7050
        %v7052 = vpop.xlane.xlu0 %7051
        %v7053 = vadd.f32 %v6996, %v6998
        %7054 = vadd.xlane.f32.xlu0 %v7053
        %v7055 = vpop.xlane.xlu0 %7054
        %v7056 = vadd.f32 %v7000, %v7002
        %7057 = vadd.xlane.f32.xlu0 %v7056
        %v7058 = vpop.xlane.xlu0 %7057
        %v7059 = vadd.f32 %v7004, %v7006
        %7060 = vadd.xlane.f32.xlu0 %v7059
        %v7061 = vpop.xlane.xlu0 %7060
        %v7062 = vadd.f32 %v7008, %v7010
        %7063 = vadd.xlane.f32.xlu0 %v7062
        %v7064 = vpop.xlane.xlu0 %7063
        %v7065 = vadd.f32 %v7012, %v7014
        %7066 = vadd.xlane.f32.xlu0 %v7065
        %v7067 = vpop.xlane.xlu0 %7066
        %v7068 = vadd.f32 %v7016, %v7018
        %7069 = vadd.xlane.f32.xlu0 %v7068
        %v7070 = vpop.xlane.xlu0 %7069
        %v7071 = vadd.f32 %v7020, %v7022
        %7072 = vadd.xlane.f32.xlu0 %v7071
        %v7073 = vpop.xlane.xlu0 %7072
        %v7074 = vadd.f32 %v7024, %v7026
        %7075 = vadd.xlane.f32.xlu0 %v7074
        %v7076 = vpop.xlane.xlu0 %7075
        %v7077 = vadd.f32 %v7028, %v7030
        %7078 = vadd.xlane.f32.xlu0 %v7077
        %v7079 = vpop.xlane.xlu0 %7078
        %v7080 = vadd.f32 %v7032, %v7034
        %7081 = vadd.xlane.f32.xlu0 %v7080
        %v7082 = vpop.xlane.xlu0 %7081
        %v7083 = vpack.c.bf16 %v6976, %v6972
        %v7084 = vpack.c.bf16 %v6978, %v6974
        %v7085 = vpack.c.bf16 %v6984, %v6980
        %v7086 = vpack.c.bf16 %v6986, %v6982
        %v7087 = vpack.c.bf16 %v6992, %v6988
        %v7088 = vpack.c.bf16 %v6994, %v6990
        %v7089 = vpack.c.bf16 %v7000, %v6996
        %v7090 = vpack.c.bf16 %v7002, %v6998
        %v7091 = vpack.c.bf16 %v7008, %v7004
        %v7092 = vpack.c.bf16 %v7010, %v7006
        %v7093 = vpack.c.bf16 %v7016, %v7012
        %v7094 = vpack.c.bf16 %v7018, %v7014
        %v7095 = vpack.c.bf16 %v7024, %v7020
        %v7096 = vpack.c.bf16 %v7026, %v7022
        %v7097 = vpack.c.bf16 %v7032, %v7028
        %v7098 = vpack.c.bf16 %v7034, %v7030
        %7099 = vrot.lane.b32.xlu0 %v1756, 16
        %v7100 = vpop.permute.xlu0 %7099
        %7101 = vrot.lane.b32.xlu0 %v1757, 16
        %v7102 = vpop.permute.xlu0 %7101
        %7103 = vrot.lane.b32.xlu0 %v1758, 16
        %v7104 = vpop.permute.xlu0 %7103
        %7105 = vrot.lane.b32.xlu0 %v1759, 16
        %v7106 = vpop.permute.xlu0 %7105
        %7107 = vrot.lane.b32.xlu0 %v1760, 16
        %v7108 = vpop.permute.xlu0 %7107
        %7109 = vrot.lane.b32.xlu0 %v1761, 16
        %v7110 = vpop.permute.xlu0 %7109
        %7111 = vrot.lane.b32.xlu0 %v1762, 16
        %v7112 = vpop.permute.xlu0 %7111
        %7113 = vrot.lane.b32.xlu0 %v1763, 16
        %v7114 = vpop.permute.xlu0 %7113
        %7115 = vrot.lane.b32.xlu0 %v1764, 16
        %v7116 = vpop.permute.xlu0 %7115
        %7117 = vrot.lane.b32.xlu0 %v1765, 16
        %v7118 = vpop.permute.xlu0 %7117
        %7119 = vrot.lane.b32.xlu0 %v1766, 16
        %v7120 = vpop.permute.xlu0 %7119
        %7121 = vrot.lane.b32.xlu0 %v1767, 16
        %v7122 = vpop.permute.xlu0 %7121
        %7123 = vrot.lane.b32.xlu0 %v1768, 16
        %v7124 = vpop.permute.xlu0 %7123
        %7125 = vrot.lane.b32.xlu0 %v1769, 16
        %v7126 = vpop.permute.xlu0 %7125
        %7127 = vrot.lane.b32.xlu0 %v1770, 16
        %v7128 = vpop.permute.xlu0 %7127
        %7129 = vrot.lane.b32.xlu0 %v1771, 16
        %v7130 = vpop.permute.xlu0 %7129
        %7147 = vmatprep.subr.bf16.mxu0 0
        %7148 = vmatpush1.bf16.msra.mxu0 %v7114
        %7149 = vmatprep.subr.bf16.mxu0 0
        %7150 = vmatpush1.bf16.msra.mxu0 %v7112
        %7151 = vmatprep.subr.bf16.mxu0 0
        %7152 = vmatpush1.bf16.msra.mxu0 %v7110
        %7153 = vmatprep.subr.bf16.mxu0 0
        %7154 = vmatpush1.bf16.msra.mxu0 %v7108
        %7155 = vmatprep.subr.bf16.mxu0 0
        %7156 = vmatpush1.bf16.msra.mxu0 %v7106
        %7157 = vmatprep.subr.bf16.mxu0 0
        %7158 = vmatpush1.bf16.msra.mxu0 %v7104
        %7159 = vmatprep.subr.bf16.mxu0 0
        %7160 = vmatpush1.bf16.msra.mxu0 %v7102
        %7161 = vmatprep.subr.bf16.mxu0 0
        %7162 = vmatpush1.bf16.msra.mxu0 %v7100
        %7163 = vmatprep.subr.bf16.mxu0 0
        %7164 = vmatpush2.bf16.msra.mxu0 %v7130
        %7165 = vmatprep.subr.bf16.mxu0 0
        %7166 = vmatpush2.bf16.msra.mxu0 %v7128
        %7167 = vmatprep.subr.bf16.mxu0 0
        %7168 = vmatpush2.bf16.msra.mxu0 %v7126
        %7169 = vmatprep.subr.bf16.mxu0 0
        %7170 = vmatpush2.bf16.msra.mxu0 %v7124
        %7171 = vmatprep.subr.bf16.mxu0 0
        %7172 = vmatpush2.bf16.msra.mxu0 %v7122
        %7173 = vmatprep.subr.bf16.mxu0 0
        %7174 = vmatpush2.bf16.msra.mxu0 %v7120
        %7175 = vmatprep.subr.bf16.mxu0 0
        %7176 = vmatpush2.bf16.msra.mxu0 %v7118
        %7177 = vmatprep.subr.bf16.mxu0 0
        %7178 = vmatpush2.bf16.msra.mxu0 %v7116
        %7179 = vmatprep.mubr.bf16.mxu0 %v7084
        %7180 = vmatmul.mubr.bf16.gmra.mxu0 %v7083
        %v7181 = vpop.f32.mrf.mxu0
        %v7182 = vadd.f32 0.0, %v7181
        %v7183 = vpop.f32.mrf.mxu0
        %v7184 = vpop.f32.mrf.mxu0
        %v7185 = vadd.f32 0.0, %v7184
        %v7186 = vpop.f32.mrf.mxu0
        %7187 = vmatprep.mubr.bf16.mxu0 %v7086
        %7188 = vmatmul.mubr.bf16.gmra.mxu0 %v7085
        %v7189 = vpop.f32.mrf.mxu0
        %v7190 = vadd.f32 0.0, %v7189
        %v7191 = vpop.f32.mrf.mxu0
        %v7192 = vpop.f32.mrf.mxu0
        %v7193 = vadd.f32 0.0, %v7192
        %v7194 = vpop.f32.mrf.mxu0
        %7195 = vmatprep.mubr.bf16.mxu0 %v7088
        %7196 = vmatmul.mubr.bf16.gmra.mxu0 %v7087
        %v7197 = vpop.f32.mrf.mxu0
        %v7198 = vadd.f32 0.0, %v7197
        %v7199 = vpop.f32.mrf.mxu0
        %v7200 = vpop.f32.mrf.mxu0
        %v7201 = vadd.f32 0.0, %v7200
        %v7202 = vpop.f32.mrf.mxu0
        %7203 = vmatprep.mubr.bf16.mxu0 %v7090
        %7204 = vmatmul.mubr.bf16.gmra.mxu0 %v7089
        %v7205 = vpop.f32.mrf.mxu0
        %v7206 = vadd.f32 0.0, %v7205
        %v7207 = vpop.f32.mrf.mxu0
        %v7208 = vpop.f32.mrf.mxu0
        %v7209 = vadd.f32 0.0, %v7208
        %v7210 = vpop.f32.mrf.mxu0
        %7211 = vmatprep.mubr.bf16.mxu0 %v7092
        %7212 = vmatmul.mubr.bf16.gmra.mxu0 %v7091
        %v7213 = vpop.f32.mrf.mxu0
        %v7214 = vadd.f32 0.0, %v7213
        %v7215 = vpop.f32.mrf.mxu0
        %v7216 = vpop.f32.mrf.mxu0
        %v7217 = vadd.f32 0.0, %v7216
        %v7218 = vpop.f32.mrf.mxu0
        %7219 = vmatprep.mubr.bf16.mxu0 %v7094
        %7220 = vmatmul.mubr.bf16.gmra.mxu0 %v7093
        %v7221 = vpop.f32.mrf.mxu0
        %v7222 = vadd.f32 0.0, %v7221
        %v7223 = vpop.f32.mrf.mxu0
        %v7224 = vpop.f32.mrf.mxu0
        %v7225 = vadd.f32 0.0, %v7224
        %v7226 = vpop.f32.mrf.mxu0
        %7227 = vmatprep.mubr.bf16.mxu0 %v7096
        %7228 = vmatmul.mubr.bf16.gmra.mxu0 %v7095
        %v7229 = vpop.f32.mrf.mxu0
        %v7230 = vadd.f32 0.0, %v7229
        %v7231 = vpop.f32.mrf.mxu0
        %v7232 = vpop.f32.mrf.mxu0
        %v7233 = vadd.f32 0.0, %v7232
        %v7234 = vpop.f32.mrf.mxu0
        %7235 = vmatprep.mubr.bf16.mxu0 %v7098
        %7236 = vmatmul.mubr.bf16.gmra.mxu0 %v7097
        %v7237 = vpop.f32.mrf.mxu0
        %v7238 = vadd.f32 0.0, %v7237
        %v7239 = vpop.f32.mrf.mxu0
        %v7240 = vpop.f32.mrf.mxu0
        %v7241 = vadd.f32 0.0, %v7240
        %v7242 = vpop.f32.mrf.mxu0
        %7243 = vdwg.mxu0
        %v7244 = vrcp.pop %v7037
        %v7245 = vrcp.pop %v7040
        %v7246 = vrcp.pop %v7043
        %v7247 = vrcp.pop %v7046
        %v7248 = vrcp.pop %v7049
        %v7249 = vrcp.pop %v7052
        %v7250 = vrcp.pop %v7055
        %v7251 = vrcp.pop %v7058
        %v7252 = vrcp.pop %v7061
        %v7253 = vrcp.pop %v7064
        %v7254 = vrcp.pop %v7067
        %v7255 = vrcp.pop %v7070
        %v7256 = vrcp.pop %v7073
        %v7257 = vrcp.pop %v7076
        %v7258 = vrcp.pop %v7079
        %v7259 = vrcp.pop %v7082
        %v7260 = vmul.f32 %v7182, %v7244
        %v7261 = vmul.f32 %v7185, %v7245
        %v7262 = vmul.f32 %v7190, %v7246
        %v7263 = vmul.f32 %v7193, %v7247
        %v7264 = vmul.f32 %v7198, %v7248
        %v7265 = vmul.f32 %v7201, %v7249
        %v7266 = vmul.f32 %v7206, %v7250
        %v7267 = vmul.f32 %v7209, %v7251
        %v7268 = vmul.f32 %v7214, %v7252
        %v7269 = vmul.f32 %v7217, %v7253
        %v7270 = vmul.f32 %v7222, %v7254
        %v7271 = vmul.f32 %v7225, %v7255
        %v7272 = vmul.f32 %v7230, %v7256
        %v7273 = vmul.f32 %v7233, %v7257
        %v7274 = vmul.f32 %v7238, %v7258
        %v7275 = vmul.f32 %v7241, %v7259
        %v7276 = vpack.c.bf16 %v7261, %v7260
        %v7277 = vpack.c.bf16 %v7263, %v7262
        %v7278 = vpack.c.bf16 %v7265, %v7264
        %v7279 = vpack.c.bf16 %v7267, %v7266
        %v7280 = vpack.c.bf16 %v7269, %v7268
        %v7281 = vpack.c.bf16 %v7271, %v7270
        %v7282 = vpack.c.bf16 %v7273, %v7272
        %v7283 = vpack.c.bf16 %v7275, %v7274
        %v7286 = vunpack.c.l.b16 %v1248
        %v7287 = vunpack.c.l.b16 %v1249
        %v7288 = vpack.c.b16 %v7287, %v7286
        %v7291 = vsel %vm1330, %v7276, 0
        %v7294 = vsel %vm1330, %v7277, 0
        %v7297 = vsel %vm1330, %v7278, 0
        %v7300 = vsel %vm1330, %v7279, 0
        %v7303 = vsel %vm1330, %v7280, 0
        %v7306 = vsel %vm1330, %v7281, 0
        %v7309 = vsel %vm1330, %v7282, 0
        %v7312 = vsel %vm1330, %v7283, 0
        %7314 = vmatprep.subr.bf16.mxu0 0
        %7315 = vmatpush1.bf16.msra.mxu0 0
        %7316 = vmatprep.subr.bf16.mxu0 0
        %7317 = vmatpush1.bf16.msra.mxu0 0
        %7318 = vmatprep.subr.bf16.mxu0 0
        %7319 = vmatpush1.bf16.msra.mxu0 0
        %7320 = vmatprep.subr.bf16.mxu0 0
        %7321 = vmatpush1.bf16.msra.mxu0 0
        %7322 = vmatprep.subr.bf16.mxu0 0
        %7323 = vmatpush1.bf16.msra.mxu0 0
        %7324 = vmatprep.subr.bf16.mxu0 0
        %7325 = vmatpush1.bf16.msra.mxu0 0
        %7326 = vmatprep.subr.bf16.mxu0 0
        %7327 = vmatpush1.bf16.msra.mxu0 0
        %7328 = vmatprep.subr.bf16.mxu0 0
        %7329 = vmatpush1.bf16.msra.mxu0 %v7288
        %7330 = vmatprep.subr.bf16.mxu0 0
        %7331 = vmatpush2.bf16.msra.mxu0 0
        %7332 = vmatprep.subr.bf16.mxu0 0
        %7333 = vmatpush2.bf16.msra.mxu0 0
        %7334 = vmatprep.subr.bf16.mxu0 0
        %7335 = vmatpush2.bf16.msra.mxu0 0
        %7336 = vmatprep.subr.bf16.mxu0 0
        %7337 = vmatpush2.bf16.msra.mxu0 0
        %7338 = vmatprep.subr.bf16.mxu0 0
        %7339 = vmatpush2.bf16.msra.mxu0 0
        %7340 = vmatprep.subr.bf16.mxu0 0
        %7341 = vmatpush2.bf16.msra.mxu0 0
        %7342 = vmatprep.subr.bf16.mxu0 0
        %7343 = vmatpush2.bf16.msra.mxu0 0
        %7344 = vmatprep.subr.bf16.mxu0 0
        %7345 = vmatpush2.bf16.msra.mxu0 0
        %7346 = vmatprep.mubr.bf16.mxu0 0
        %7347 = vmatmul.mubr.bf16.gmra.mxu0 %v7291
        %v7348 = vpop.f32.mrf.mxu0
        %v7349 = vadd.f32 0.0, %v7348
        %v7350 = vpop.f32.mrf.mxu0
        %v7351 = vpop.f32.mrf.mxu0
        %v7352 = vadd.f32 0.0, %v7351
        %v7353 = vpop.f32.mrf.mxu0
        %7354 = vmatprep.mubr.bf16.mxu0 0
        %7355 = vmatmul.mubr.bf16.gmra.mxu0 %v7294
        %v7356 = vpop.f32.mrf.mxu0
        %v7357 = vadd.f32 0.0, %v7356
        %v7358 = vpop.f32.mrf.mxu0
        %v7359 = vpop.f32.mrf.mxu0
        %v7360 = vadd.f32 0.0, %v7359
        %v7361 = vpop.f32.mrf.mxu0
        %7362 = vmatprep.mubr.bf16.mxu0 0
        %7363 = vmatmul.mubr.bf16.gmra.mxu0 %v7297
        %v7364 = vpop.f32.mrf.mxu0
        %v7365 = vadd.f32 0.0, %v7364
        %v7366 = vpop.f32.mrf.mxu0
        %v7367 = vpop.f32.mrf.mxu0
        %v7368 = vadd.f32 0.0, %v7367
        %v7369 = vpop.f32.mrf.mxu0
        %7370 = vmatprep.mubr.bf16.mxu0 0
        %7371 = vmatmul.mubr.bf16.gmra.mxu0 %v7300
        %v7372 = vpop.f32.mrf.mxu0
        %v7373 = vadd.f32 0.0, %v7372
        %v7374 = vpop.f32.mrf.mxu0
        %v7375 = vpop.f32.mrf.mxu0
        %v7376 = vadd.f32 0.0, %v7375
        %v7377 = vpop.f32.mrf.mxu0
        %7378 = vmatprep.mubr.bf16.mxu0 0
        %7379 = vmatmul.mubr.bf16.gmra.mxu0 %v7303
        %v7380 = vpop.f32.mrf.mxu0
        %v7381 = vadd.f32 0.0, %v7380
        %v7382 = vpop.f32.mrf.mxu0
        %v7383 = vpop.f32.mrf.mxu0
        %v7384 = vadd.f32 0.0, %v7383
        %v7385 = vpop.f32.mrf.mxu0
        %7386 = vmatprep.mubr.bf16.mxu0 0
        %7387 = vmatmul.mubr.bf16.gmra.mxu0 %v7306
        %v7388 = vpop.f32.mrf.mxu0
        %v7389 = vadd.f32 0.0, %v7388
        %v7390 = vpop.f32.mrf.mxu0
        %v7391 = vpop.f32.mrf.mxu0
        %v7392 = vadd.f32 0.0, %v7391
        %v7393 = vpop.f32.mrf.mxu0
        %7394 = vmatprep.mubr.bf16.mxu0 0
        %7395 = vmatmul.mubr.bf16.gmra.mxu0 %v7309
        %v7396 = vpop.f32.mrf.mxu0
        %v7397 = vadd.f32 0.0, %v7396
        %v7398 = vpop.f32.mrf.mxu0
        %v7399 = vpop.f32.mrf.mxu0
        %v7400 = vadd.f32 0.0, %v7399
        %v7401 = vpop.f32.mrf.mxu0
        %7402 = vmatprep.mubr.bf16.mxu0 0
        %7403 = vmatmul.mubr.bf16.gmra.mxu0 %v7312
        %v7404 = vpop.f32.mrf.mxu0
        %v7405 = vadd.f32 0.0, %v7404
        %v7406 = vpop.f32.mrf.mxu0
        %v7407 = vpop.f32.mrf.mxu0
        %v7408 = vadd.f32 0.0, %v7407
        %v7409 = vpop.f32.mrf.mxu0
        %7410 = vdwg.mxu0
        %v7411 = vadd.f32 %v6642, %v7349
        %v7412 = vadd.f32 %v6643, %v7352
        %v7413 = vadd.f32 %v6644, %v7357
        %v7414 = vadd.f32 %v6645, %v7360
        %v7415 = vadd.f32 %v6646, %v7365
        %v7416 = vadd.f32 %v6647, %v7368
        %v7417 = vadd.f32 %v6648, %v7373
        %v7418 = vadd.f32 %v6649, %v7376
        %v7419 = vadd.f32 %v6650, %v7381
        %v7420 = vadd.f32 %v6651, %v7384
        %v7421 = vadd.f32 %v6652, %v7389
        %v7422 = vadd.f32 %v6653, %v7392
        %v7423 = vadd.f32 %v6654, %v7397
        %v7424 = vadd.f32 %v6655, %v7400
        %v7425 = vadd.f32 %v6656, %v7405
        %v7426 = vadd.f32 %v6657, %v7408
        %v7427 = vld [vmem:[%s4] sm:$0x1]
        %v7429 = vlaneseq
        %v7430 = vshrl.u32 %v7429, 7
        %v7431 = vsub.s32 0, %v7430
        %v7432 = vrot.slane %v7427, %v7431
        %v7434 = vadd.f32 %v7411, %v7432
        %v7435 = vadd.f32 %v7412, %v7432
        %v7436 = vadd.f32 %v7413, %v7432
        %v7437 = vadd.f32 %v7414, %v7432
        %v7438 = vadd.f32 %v7415, %v7432
        %v7439 = vadd.f32 %v7416, %v7432
        %v7440 = vadd.f32 %v7417, %v7432
        %v7441 = vadd.f32 %v7418, %v7432
        %v7442 = vadd.f32 %v7419, %v7432
        %v7443 = vadd.f32 %v7420, %v7432
        %v7444 = vadd.f32 %v7421, %v7432
        %v7445 = vadd.f32 %v7422, %v7432
        %v7446 = vadd.f32 %v7423, %v7432
        %v7447 = vadd.f32 %v7424, %v7432
        %v7448 = vadd.f32 %v7425, %v7432
        %v7449 = vadd.f32 %v7426, %v7432
        %7450 = vst [vmem:[%s300] sm:$0xff] %v7434
        %7451 = vst [vmem:[%s300 + $0x8] sm:$0xff] %v7435
        %7452 = vst [vmem:[%s300 + $0x10] sm:$0xff] %v7436
        %7453 = vst [vmem:[%s300 + $0x18] sm:$0xff] %v7437
        %7454 = vst [vmem:[%s300 + $0x20] sm:$0xff] %v7438
        %7455 = vst [vmem:[%s300 + $0x28] sm:$0xff] %v7439
        %7456 = vst [vmem:[%s300 + $0x30] sm:$0xff] %v7440
        %7457 = vst [vmem:[%s300 + $0x38] sm:$0xff] %v7441
        %7458 = vst [vmem:[%s300 + $0x40] sm:$0xff] %v7442
        %7459 = vst [vmem:[%s300 + $0x48] sm:$0xff] %v7443
        %7460 = vst [vmem:[%s300 + $0x50] sm:$0xff] %v7444
        %7461 = vst [vmem:[%s300 + $0x58] sm:$0xff] %v7445
        %7462 = vst [vmem:[%s300 + $0x60] sm:$0xff] %v7446
        %7463 = vst [vmem:[%s300 + $0x68] sm:$0xff] %v7447
        %7464 = vst [vmem:[%s300 + $0x70] sm:$0xff] %v7448
        %7465 = vst [vmem:[%s300 + $0x78] sm:$0xff] %v7449
        %s7466 = sand.u32 %s156, 1
        %s7467 = scalar_lea.sflag [#allocation5], %s7466
        %s7468 = sand.u32 %s156, 1
        %s7469 = smul.addr %s7468, 128
        %s7470 = scalar_lea.vmem [#allocation11], %s7469
        // Predicated region
        $region61: #{tpu_custom_call.1} parent=39 // pred_check
          %p7471 = pneg %p166
        $region62: #{tpu_custom_call.1} parent=39 // pred_check_branch
          %7473 = sbr.rel (%p7471) target = $region64
        $region63: #{tpu_custom_call.1} parent=39 // pred_region
          %s7474 = smul.u32 16, %s29
          %s7476 = ssub.s32 2048, 2048
          %7477 = vsyncadd %s7467, %s7476
          %s7478 = smul.addr %s28, 32
          %s7479 = sadd.s32 %s7474, %s7478
          %s7480 = smul.addr %s7479, 128
          %s7481 = scalar_lea.hbm %s5, %s7480
          %s7482 = sshll.u32 %s7470, 4
          %s7483 = int_to_ptr.vmem [resolvable:$true] %s7482
          %7488 = dma.vmem_to_hbm [thread:$0]  %s7483, 2048, %s7481, %s7467, 128, 128, 8
        $region64: #{tpu_custom_call.1} parent=39 // pred_fallthru
          _
      $region40: #{tpu_custom_call.1} parent=5 // pred_fallthru
        _
      %p7489 = scmp.le.s32.totalorder 2, %s19
      // Predicated region
      $region65: #{tpu_custom_call.1} parent=5 // pred_check
        %p7490 = pneg %p7489
      $region66: #{tpu_custom_call.1} parent=5 // pred_check_branch
        %7492 = sbr.rel (%p7490) target = $region68
      $region67: #{tpu_custom_call.1} parent=5 // pred_region
        %s7493 = ssub.s32 %s19, 2
        // Predicated region
        $region69: #{tpu_custom_call.1} parent=67 // pred_check
          %p7494 = pneg %p172
        $region70: #{tpu_custom_call.1} parent=67 // pred_check_branch
          %7496 = sbr.rel (%p7494) target = $region72
        $region71: #{tpu_custom_call.1} parent=67 // pred_region
          %s7497 = sand.u32 %s157, 1
          %s7498 = scalar_lea.sflag [#allocation5], %s7497
          %s7499 = sand.u32 %s157, 1
          %s7500 = smul.addr %s7499, 128
          %s7501 = scalar_lea.vmem [#allocation11], %s7500
          %7502 = dma.done %s7498, 2048
        $region72: #{tpu_custom_call.1} parent=67 // pred_fallthru
          _
      $region68: #{tpu_custom_call.1} parent=5 // pred_fallthru
        _
    $region6: #{tpu_custom_call.1} parent=1 // loop_footer
      %s23 = sadd.s32 1, %s19
    $region7: #{tpu_custom_call.1} parent=1 // loop_footer_branch
      %18 = sbr.rel target = $region3
    $region8: #{tpu_custom_call.1} parent=1 // loop_exit
      _
    %7503 = vsyncpa [#allocation4], 1
    %s7504 = scalar_lea.sflag [#allocation4], 1
    %7505 = vsyncpa %s7504, 1
    %7506 = vsyncpa [#allocation7], 1
    %7507 = vsyncpa [#allocation10], 1
    %7508 = vsyncpa [#allocation5], 1
    %s7509 = scalar_lea.sflag [#allocation5], 1
    %7510 = vsyncpa %s7509, 1

</llo_original>
